<compile_context>
chip_gen: v6e
topology: v6e:2x2x1
jax: 0.10.0
libtpu: 0.0.40
codegen_flags: <defaults>
</compile_context>

<pallas_src>
import functools

import jax
import jax.numpy as jnp
from jax.experimental import pallas as pl
from jax.experimental.pallas import tpu as pltpu


# -----------------------------------------------------------------------------
# 3x3 conv (stride 1, padding 1) + bias (+ optional fused ReLU), NHWC layout.
# -----------------------------------------------------------------------------
def _conv3x3_kernel(x_ref, w_ref, b_ref, o_ref, *, relu):
    """x_ref: (1, H+2, W+2, Cin), w_ref: (9, Cin, Cout), b_ref: (1, Cout),
    o_ref: (1, H, W, Cout)."""
    _, H, W, Cout = o_ref.shape
    Cin = x_ref.shape[3]

    acc = jnp.zeros((H * W, Cout), jnp.float32)
    for dh in range(3):
        for dw in range(3):
            patch = x_ref[0, dh:dh + H, dw:dw + W, :]            # (H, W, Cin)
            acc = acc + jnp.dot(patch.reshape(H * W, Cin),
                                w_ref[dh * 3 + dw],
                                preferred_element_type=jnp.float32)
    acc = acc + b_ref[...].astype(jnp.float32)                    # broadcast (1, Cout)
    if relu:
        acc = jnp.maximum(acc, 0.0)
    o_ref[...] = acc.reshape(1, H, W, Cout).astype(o_ref.dtype)


def _conv3x3(x_nhwc, w_hwio, b, *, relu):
    N, H, W, Cin = x_nhwc.shape
    Cout = w_hwio.shape[-1]
    xp = jnp.pad(x_nhwc, ((0, 0), (1, 1), (1, 1), (0, 0)))        # spatial zero-pad
    w9 = w_hwio.reshape(9, Cin, Cout)                             # free reshape
    b2 = b.reshape(1, Cout)

    return pl.pallas_call(
        functools.partial(_conv3x3_kernel, relu=relu),
        out_shape=jax.ShapeDtypeStruct((N, H, W, Cout), jnp.float32),
        grid=(N,),
        in_specs=[
            pl.BlockSpec((1, H + 2, W + 2, Cin), lambda n: (n, 0, 0, 0)),
            pl.BlockSpec((9, Cin, Cout), lambda n: (0, 0, 0)),
            pl.BlockSpec((1, Cout), lambda n: (0, 0)),
        ],
        out_specs=pl.BlockSpec((1, H, W, Cout), lambda n: (n, 0, 0, 0)),
        compiler_params=pltpu.CompilerParams(dimension_semantics=("parallel",)),
    )(xp, w9, b2)


# -----------------------------------------------------------------------------
# 2x2 max-pool, stride 2. W-pair is folded into lanes by a free wrapper reshape.
# -----------------------------------------------------------------------------
def _maxpool2x2_kernel(x_ref, o_ref):
    """x_ref: (1, 2, W/2, 2C)  (lanes = [even-col channels | odd-col channels]),
    o_ref: (1, 1, W/2, C)."""
    C = o_ref.shape[3]
    hmax = jnp.maximum(x_ref[0, 0], x_ref[0, 1])                  # pool the H pair
    o_ref[0, 0] = jnp.maximum(hmax[:, :C], hmax[:, C:])           # pool the W pair


def _maxpool2x2(x_nhwc):
    N, H, W, C = x_nhwc.shape
    xr = x_nhwc.reshape(N, H, W // 2, 2 * C)                      # free reshape
    return pl.pallas_call(
        _maxpool2x2_kernel,
        out_shape=jax.ShapeDtypeStruct((N, H // 2, W // 2, C), x_nhwc.dtype),
        grid=(N, H // 2),
        in_specs=[pl.BlockSpec((1, 2, W // 2, 2 * C), lambda n, i: (n, i, 0, 0))],
        out_specs=pl.BlockSpec((1, 1, W // 2, C), lambda n, i: (n, i, 0, 0)),
        compiler_params=pltpu.CompilerParams(
            dimension_semantics=("parallel", "parallel")),
    )(xr)


# -----------------------------------------------------------------------------
# MSE over two feature maps: accumulator-carrying grid over batch.
# -----------------------------------------------------------------------------
def _mse_kernel(a_ref, b_ref, o_ref, *, inv_count):
    @pl.when(pl.program_id(0) == 0)
    def _():
        o_ref[0, 0] = 0.0

    d = a_ref[...].astype(jnp.float32) - b_ref[...].astype(jnp.float32)
    o_ref[0, 0] += jnp.sum(d * d)

    @pl.when(pl.program_id(0) == pl.num_programs(0) - 1)
    def _():
        o_ref[0, 0] = o_ref[0, 0] * inv_count


def _mse_loss(a, b):
    N, H, W, C = a.shape
    inv_count = 1.0 / float(N * H * W * C)
    out = pl.pallas_call(
        functools.partial(_mse_kernel, inv_count=inv_count),
        out_shape=jax.ShapeDtypeStruct((1, 1), jnp.float32),
        grid=(N,),
        in_specs=[
            pl.BlockSpec((1, H, W, C), lambda n: (n, 0, 0, 0)),
            pl.BlockSpec((1, H, W, C), lambda n: (n, 0, 0, 0)),
        ],
        out_specs=pl.BlockSpec((1, 1), lambda n: (0, 0),
                               memory_space=pltpu.MemorySpace.SMEM),
        compiler_params=pltpu.CompilerParams(dimension_semantics=("arbitrary",)),
    )(a, b)
    return out[0, 0]


# -----------------------------------------------------------------------------
# Full module: VGG19.features[:8] + MSE.
# -----------------------------------------------------------------------------
def _prep_nhwc(x_nchw):
    if x_nchw.shape[1] == 1:                                      # input.repeat(1,3,1,1)
        x_nchw = jnp.repeat(x_nchw, 3, axis=1)
    return jnp.transpose(x_nchw, (0, 2, 3, 1))                    # NCHW -> NHWC (lane-dense C)


def _vgg_features(x_nchw, p):
    x = _prep_nhwc(x_nchw)
    x = _conv3x3(x, p["w1"], p["b1"], relu=True)     # features[0:2]
    x = _conv3x3(x, p["w2"], p["b2"], relu=True)     # features[2:4]
    x = _maxpool2x2(x)                               # features[4]
    x = _conv3x3(x, p["w3"], p["b3"], relu=True)     # features[5:7]
    x = _conv3x3(x, p["w4"], p["b4"], relu=False)    # features[7]  (no ReLU: [:8] stops here)
    return x


def feature_reconstruction_loss(input_nchw, target_nchw, params):
    fa = _vgg_features(input_nchw, params)
    fb = _vgg_features(target_nchw, params)
    return _mse_loss(fa, fb)


def init_vgg_params(key):
    # TODO(synk): replace with pretrained torchvision VGG19 weights (not fetchable here).
    dims = [(3, 64), (64, 64), (64, 128), (128, 128)]
    params = {}
    for idx, (cin, cout) in enumerate(dims, start=1):
        key, kw = jax.random.split(key)
        key, kb = jax.random.split(key)
        std = (2.0 / (9 * cin)) ** 0.5
        params[f"w{idx}"] = std * jax.random.normal(kw, (3, 3, cin, cout), jnp.float32)
        params[f"b{idx}"] = 0.01 * jax.random.normal(kb, (cout,), jnp.float32)
    return params


# -----------------------------------------------------------------------------
# Pure-JAX reference (matches torch semantics) for correctness checking.
# -----------------------------------------------------------------------------
def _reference(x_nchw, y_nchw, params):
    def prep(v):
        if v.shape[1] == 1:
            v = jnp.repeat(v, 3, axis=1)
        return jnp.transpose(v.astype(jnp.float32), (0, 2, 3, 1))

    def conv(v, w, b, relu):
        out = jax.lax.conv_general_dilated(
            v, w, window_strides=(1, 1), padding="SAME",
            dimension_numbers=("NHWC", "HWIO", "NHWC")) + b
        return jnp.maximum(out, 0.0) if relu else out

    def pool(v):
        return jax.lax.reduce_window(v, -jnp.inf, jax.lax.max,
                                     (1, 2, 2, 1), (1, 2, 2, 1), "VALID")

    def feats(v):
        v = conv(v, params["w1"], params["b1"], True)
        v = conv(v, params["w2"], params["b2"], True)
        v = pool(v)
        v = conv(v, params["w3"], params["b3"], True)
        v = conv(v, params["w4"], params["b4"], False)
        return v

    fa = feats(prep(x_nchw))
    fb = feats(prep(y_nchw))
    return jnp.mean((fa - fb) ** 2)


if __name__ == "__main__":
    key = jax.random.PRNGKey(0)
    kp, k1, k2 = jax.random.split(key, 3)
    params = init_vgg_params(kp)

    # Single-channel NCHW inputs exercise the repeat(1,3,1,1) branch of the module.
    N, C, H, W = 2, 1, 16, 16
    x = jax.random.normal(k1, (N, C, H, W), jnp.float32)
    y = jax.random.normal(k2, (N, C, H, W), jnp.float32)

    loss_fn = jax.jit(feature_reconstruction_loss)
    loss = loss_fn(x, y, params)
    jax.block_until_ready(loss)

    ref = _reference(x, y, params)
    assert jnp.isfinite(loss), loss
    # Loose tolerance: Pallas (9-tap MXU matmuls) and XLA conv use slightly different
    # f32-on-MXU decompositions; real indexing bugs would be orders of magnitude larger.
    assert jnp.allclose(loss, ref, rtol=5e-2, atol=1e-3), (loss, ref)

    print("KERNEL_OK")
</pallas_src>

<mosaic_0001>
module attributes {stable_mosaic.version = 11 : i64} {
  func.func @_conv3x3_kernel(%arg0: i32, %arg1: memref<1x18x18x3xf32, #tpu.memory_space<vmem>>, %arg2: memref<9x3x64xf32, #tpu.memory_space<vmem>>, %arg3: memref<1x64xf32, #tpu.memory_space<vmem>>, %arg4: memref<1x16x16x64xf32, #tpu.memory_space<vmem>>) attributes {dimension_semantics = [#tpu.dimension_semantics<parallel>], iteration_bounds = array<i64: 2>, scalar_prefetch = 0 : i64, scratch_operands = 0 : i64, tpu.core_type = #tpu.core_type<tc>, window_params = [{transform_indices = @transform_0, window_bounds = array<i64: 1, 18, 18, 3>}, {pipeline_mode = #tpu.pipeline_mode<synchronous>, transform_indices = @transform_1, window_bounds = array<i64: 9, 3, 64>}, {pipeline_mode = #tpu.pipeline_mode<synchronous>, transform_indices = @transform_2, window_bounds = array<i64: 1, 64>}, {transform_indices = @transform_3, window_bounds = array<i64: 1, 16, 16, 64>}]} {
    %cst = arith.constant 0.000000e+00 : f32
    %0 = vector.broadcast %cst : f32 to vector<256x64xf32>
    %c0 = arith.constant 0 : index
    %c0_0 = arith.constant 0 : index
    %c0_1 = arith.constant 0 : index
    %c0_2 = arith.constant 0 : index
    %1 = vector.load %arg1[%c0, %c0_0, %c0_1, %c0_2] : memref<1x18x18x3xf32, #tpu.memory_space<vmem>>, vector<1x16x16x3xf32>
    %2 = vector.shape_cast %1 : vector<1x16x16x3xf32> to vector<16x16x3xf32>
    %3 = vector.shape_cast %2 : vector<16x16x3xf32> to vector<256x3xf32>
    %c0_3 = arith.constant 0 : index
    %c0_4 = arith.constant 0 : index
    %c0_5 = arith.constant 0 : index
    %4 = vector.load %arg2[%c0_3, %c0_4, %c0_5] : memref<9x3x64xf32, #tpu.memory_space<vmem>>, vector<1x3x64xf32>
    %5 = vector.shape_cast %4 : vector<1x3x64xf32> to vector<3x64xf32>
    %cst_6 = arith.constant dense<0.000000e+00> : vector<256x64xf32>
    %6 = tpu.matmul %3, %5, %cst_6 {dimension_numbers = #tpu.dot_dimension_numbers<[1], [0], [0], [1], [0, 0, 1, 1], [], []>} : vector<256x3xf32>, vector<3x64xf32>, vector<256x64xf32> -> vector<256x64xf32>
    %7 = arith.addf %0, %6 : vector<256x64xf32>
    %c0_7 = arith.constant 0 : index
    %c0_8 = arith.constant 0 : index
    %c1 = arith.constant 1 : index
    %c0_9 = arith.constant 0 : index
    %8 = vector.load %arg1[%c0_7, %c0_8, %c1, %c0_9] : memref<1x18x18x3xf32, #tpu.memory_space<vmem>>, vector<1x16x16x3xf32>
    %9 = vector.shape_cast %8 : vector<1x16x16x3xf32> to vector<16x16x3xf32>
    %10 = vector.shape_cast %9 : vector<16x16x3xf32> to vector<256x3xf32>
    %c1_10 = arith.constant 1 : index
    %c0_11 = arith.constant 0 : index
    %c0_12 = arith.constant 0 : index
    %11 = vector.load %arg2[%c1_10, %c0_11, %c0_12] : memref<9x3x64xf32, #tpu.memory_space<vmem>>, vector<1x3x64xf32>
    %12 = vector.shape_cast %11 : vector<1x3x64xf32> to vector<3x64xf32>
    %cst_13 = arith.constant dense<0.000000e+00> : vector<256x64xf32>
    %13 = tpu.matmul %10, %12, %cst_13 {dimension_numbers = #tpu.dot_dimension_numbers<[1], [0], [0], [1], [0, 0, 1, 1], [], []>} : vector<256x3xf32>, vector<3x64xf32>, vector<256x64xf32> -> vector<256x64xf32>
    %14 = arith.addf %7, %13 : vector<256x64xf32>
    %c0_14 = arith.constant 0 : index
    %c0_15 = arith.constant 0 : index
    %c2 = arith.constant 2 : index
    %c0_16 = arith.constant 0 : index
    %15 = vector.load %arg1[%c0_14, %c0_15, %c2, %c0_16] : memref<1x18x18x3xf32, #tpu.memory_space<vmem>>, vector<1x16x16x3xf32>
    %16 = vector.shape_cast %15 : vector<1x16x16x3xf32> to vector<16x16x3xf32>
    %17 = vector.shape_cast %16 : vector<16x16x3xf32> to vector<256x3xf32>
    %c2_17 = arith.constant 2 : index
    %c0_18 = arith.constant 0 : index
    %c0_19 = arith.constant 0 : index
    %18 = vector.load %arg2[%c2_17, %c0_18, %c0_19] : memref<9x3x64xf32, #tpu.memory_space<vmem>>, vector<1x3x64xf32>
    %19 = vector.shape_cast %18 : vector<1x3x64xf32> to vector<3x64xf32>
    %cst_20 = arith.constant dense<0.000000e+00> : vector<256x64xf32>
    %20 = tpu.matmul %17, %19, %cst_20 {dimension_numbers = #tpu.dot_dimension_numbers<[1], [0], [0], [1], [0, 0, 1, 1], [], []>} : vector<256x3xf32>, vector<3x64xf32>, vector<256x64xf32> -> vector<256x64xf32>
    %21 = arith.addf %14, %20 : vector<256x64xf32>
    %c0_21 = arith.constant 0 : index
    %c1_22 = arith.constant 1 : index
    %c0_23 = arith.constant 0 : index
    %c0_24 = arith.constant 0 : index
    %22 = vector.load %arg1[%c0_21, %c1_22, %c0_23, %c0_24] : memref<1x18x18x3xf32, #tpu.memory_space<vmem>>, vector<1x16x16x3xf32>
    %23 = vector.shape_cast %22 : vector<1x16x16x3xf32> to vector<16x16x3xf32>
    %24 = vector.shape_cast %23 : vector<16x16x3xf32> to vector<256x3xf32>
    %c3 = arith.constant 3 : index
    %c0_25 = arith.constant 0 : index
    %c0_26 = arith.constant 0 : index
    %25 = vector.load %arg2[%c3, %c0_25, %c0_26] : memref<9x3x64xf32, #tpu.memory_space<vmem>>, vector<1x3x64xf32>
    %26 = vector.shape_cast %25 : vector<1x3x64xf32> to vector<3x64xf32>
    %cst_27 = arith.constant dense<0.000000e+00> : vector<256x64xf32>
    %27 = tpu.matmul %24, %26, %cst_27 {dimension_numbers = #tpu.dot_dimension_numbers<[1], [0], [0], [1], [0, 0, 1, 1], [], []>} : vector<256x3xf32>, vector<3x64xf32>, vector<256x64xf32> -> vector<256x64xf32>
    %28 = arith.addf %21, %27 : vector<256x64xf32>
    %c0_28 = arith.constant 0 : index
    %c1_29 = arith.constant 1 : index
    %c1_30 = arith.constant 1 : index
    %c0_31 = arith.constant 0 : index
    %29 = vector.load %arg1[%c0_28, %c1_29, %c1_30, %c0_31] : memref<1x18x18x3xf32, #tpu.memory_space<vmem>>, vector<1x16x16x3xf32>
    %30 = vector.shape_cast %29 : vector<1x16x16x3xf32> to vector<16x16x3xf32>
    %31 = vector.shape_cast %30 : vector<16x16x3xf32> to vector<256x3xf32>
    %c4 = arith.constant 4 : index
    %c0_32 = arith.constant 0 : index
    %c0_33 = arith.constant 0 : index
    %32 = vector.load %arg2[%c4, %c0_32, %c0_33] : memref<9x3x64xf32, #tpu.memory_space<vmem>>, vector<1x3x64xf32>
    %33 = vector.shape_cast %32 : vector<1x3x64xf32> to vector<3x64xf32>
    %cst_34 = arith.constant dense<0.000000e+00> : vector<256x64xf32>
    %34 = tpu.matmul %31, %33, %cst_34 {dimension_numbers = #tpu.dot_dimension_numbers<[1], [0], [0], [1], [0, 0, 1, 1], [], []>} : vector<256x3xf32>, vector<3x64xf32>, vector<256x64xf32> -> vector<256x64xf32>
    %35 = arith.addf %28, %34 : vector<256x64xf32>
    %c0_35 = arith.constant 0 : index
    %c1_36 = arith.constant 1 : index
    %c2_37 = arith.constant 2 : index
    %c0_38 = arith.constant 0 : index
    %36 = vector.load %arg1[%c0_35, %c1_36, %c2_37, %c0_38] : memref<1x18x18x3xf32, #tpu.memory_space<vmem>>, vector<1x16x16x3xf32>
    %37 = vector.shape_cast %36 : vector<1x16x16x3xf32> to vector<16x16x3xf32>
    %38 = vector.shape_cast %37 : vector<16x16x3xf32> to vector<256x3xf32>
    %c5 = arith.constant 5 : index
    %c0_39 = arith.constant 0 : index
    %c0_40 = arith.constant 0 : index
    %39 = vector.load %arg2[%c5, %c0_39, %c0_40] : memref<9x3x64xf32, #tpu.memory_space<vmem>>, vector<1x3x64xf32>
    %40 = vector.shape_cast %39 : vector<1x3x64xf32> to vector<3x64xf32>
    %cst_41 = arith.constant dense<0.000000e+00> : vector<256x64xf32>
    %41 = tpu.matmul %38, %40, %cst_41 {dimension_numbers = #tpu.dot_dimension_numbers<[1], [0], [0], [1], [0, 0, 1, 1], [], []>} : vector<256x3xf32>, vector<3x64xf32>, vector<256x64xf32> -> vector<256x64xf32>
    %42 = arith.addf %35, %41 : vector<256x64xf32>
    %c0_42 = arith.constant 0 : index
    %c2_43 = arith.constant 2 : index
    %c0_44 = arith.constant 0 : index
    %c0_45 = arith.constant 0 : index
    %43 = vector.load %arg1[%c0_42, %c2_43, %c0_44, %c0_45] : memref<1x18x18x3xf32, #tpu.memory_space<vmem>>, vector<1x16x16x3xf32>
    %44 = vector.shape_cast %43 : vector<1x16x16x3xf32> to vector<16x16x3xf32>
    %45 = vector.shape_cast %44 : vector<16x16x3xf32> to vector<256x3xf32>
    %c6 = arith.constant 6 : index
    %c0_46 = arith.constant 0 : index
    %c0_47 = arith.constant 0 : index
    %46 = vector.load %arg2[%c6, %c0_46, %c0_47] : memref<9x3x64xf32, #tpu.memory_space<vmem>>, vector<1x3x64xf32>
    %47 = vector.shape_cast %46 : vector<1x3x64xf32> to vector<3x64xf32>
    %cst_48 = arith.constant dense<0.000000e+00> : vector<256x64xf32>
    %48 = tpu.matmul %45, %47, %cst_48 {dimension_numbers = #tpu.dot_dimension_numbers<[1], [0], [0], [1], [0, 0, 1, 1], [], []>} : vector<256x3xf32>, vector<3x64xf32>, vector<256x64xf32> -> vector<256x64xf32>
    %49 = arith.addf %42, %48 : vector<256x64xf32>
    %c0_49 = arith.constant 0 : index
    %c2_50 = arith.constant 2 : index
    %c1_51 = arith.constant 1 : index
    %c0_52 = arith.constant 0 : index
    %50 = vector.load %arg1[%c0_49, %c2_50, %c1_51, %c0_52] : memref<1x18x18x3xf32, #tpu.memory_space<vmem>>, vector<1x16x16x3xf32>
    %51 = vector.shape_cast %50 : vector<1x16x16x3xf32> to vector<16x16x3xf32>
    %52 = vector.shape_cast %51 : vector<16x16x3xf32> to vector<256x3xf32>
    %c7 = arith.constant 7 : index
    %c0_53 = arith.constant 0 : index
    %c0_54 = arith.constant 0 : index
    %53 = vector.load %arg2[%c7, %c0_53, %c0_54] : memref<9x3x64xf32, #tpu.memory_space<vmem>>, vector<1x3x64xf32>
    %54 = vector.shape_cast %53 : vector<1x3x64xf32> to vector<3x64xf32>
    %cst_55 = arith.constant dense<0.000000e+00> : vector<256x64xf32>
    %55 = tpu.matmul %52, %54, %cst_55 {dimension_numbers = #tpu.dot_dimension_numbers<[1], [0], [0], [1], [0, 0, 1, 1], [], []>} : vector<256x3xf32>, vector<3x64xf32>, vector<256x64xf32> -> vector<256x64xf32>
    %56 = arith.addf %49, %55 : vector<256x64xf32>
    %c0_56 = arith.constant 0 : index
    %c2_57 = arith.constant 2 : index
    %c2_58 = arith.constant 2 : index
    %c0_59 = arith.constant 0 : index
    %57 = vector.load %arg1[%c0_56, %c2_57, %c2_58, %c0_59] : memref<1x18x18x3xf32, #tpu.memory_space<vmem>>, vector<1x16x16x3xf32>
    %58 = vector.shape_cast %57 : vector<1x16x16x3xf32> to vector<16x16x3xf32>
    %59 = vector.shape_cast %58 : vector<16x16x3xf32> to vector<256x3xf32>
    %c8 = arith.constant 8 : index
    %c0_60 = arith.constant 0 : index
    %c0_61 = arith.constant 0 : index
    %60 = vector.load %arg2[%c8, %c0_60, %c0_61] : memref<9x3x64xf32, #tpu.memory_space<vmem>>, vector<1x3x64xf32>
    %61 = vector.shape_cast %60 : vector<1x3x64xf32> to vector<3x64xf32>
    %cst_62 = arith.constant dense<0.000000e+00> : vector<256x64xf32>
    %62 = tpu.matmul %59, %61, %cst_62 {dimension_numbers = #tpu.dot_dimension_numbers<[1], [0], [0], [1], [0, 0, 1, 1], [], []>} : vector<256x3xf32>, vector<3x64xf32>, vector<256x64xf32> -> vector<256x64xf32>
    %63 = arith.addf %56, %62 : vector<256x64xf32>
    %c0_63 = arith.constant 0 : index
    %c0_64 = arith.constant 0 : index
    %64 = vector.load %arg3[%c0_63, %c0_64] : memref<1x64xf32, #tpu.memory_space<vmem>>, vector<1x64xf32>
    %65 = vector.broadcast %64 : vector<1x64xf32> to vector<256x64xf32>
    %66 = arith.addf %63, %65 : vector<256x64xf32>
    %cst_65 = arith.constant 0.000000e+00 : f32
    %67 = vector.broadcast %cst_65 : f32 to vector<256x64xf32>
    %68 = arith.maximumf %66, %67 : vector<256x64xf32>
    %69 = vector.shape_cast %68 : vector<256x64xf32> to vector<1x16x16x64xf32>
    %c0_66 = arith.constant 0 : index
    %c0_67 = arith.constant 0 : index
    %c0_68 = arith.constant 0 : index
    %c0_69 = arith.constant 0 : index
    %70 = vector.load %arg4[%c0_66, %c0_67, %c0_68, %c0_69] : memref<1x16x16x64xf32, #tpu.memory_space<vmem>>, vector<1x16x16x64xf32>
    tpu.vector_store %arg4[%c0_66, %c0_67, %c0_68, %c0_69], %69 {strides = array<i32>} : memref<1x16x16x64xf32, #tpu.memory_space<vmem>>, vector<1x16x16x64xf32>,
    return
  }
  func.func @transform_0(%arg0: i32) -> (i32, i32, i32, i32) {
    %c0_i32 = arith.constant 0 : i32
    %c0_i32_0 = arith.constant 0 : i32
    %c0_i32_1 = arith.constant 0 : i32
    %c0_i32_2 = arith.constant 0 : i32
    return %arg0, %c0_i32, %c0_i32_0, %c0_i32_1 : i32, i32, i32, i32
  }
  func.func @transform_1(%arg0: i32) -> (i32, i32, i32) {
    %c0_i32 = arith.constant 0 : i32
    %c0_i32_0 = arith.constant 0 : i32
    %c0_i32_1 = arith.constant 0 : i32
    %c0_i32_2 = arith.constant 0 : i32
    return %c0_i32, %c0_i32_0, %c0_i32_1 : i32, i32, i32
  }
  func.func @transform_2(%arg0: i32) -> (i32, i32) {
    %c0_i32 = arith.constant 0 : i32
    %c0_i32_0 = arith.constant 0 : i32
    %c0_i32_1 = arith.constant 0 : i32
    return %c0_i32, %c0_i32_0 : i32, i32
  }
  func.func @transform_3(%arg0: i32) -> (i32, i32, i32, i32) {
    %c0_i32 = arith.constant 0 : i32
    %c0_i32_0 = arith.constant 0 : i32
    %c0_i32_1 = arith.constant 0 : i32
    %c0_i32_2 = arith.constant 0 : i32
    return %arg0, %c0_i32, %c0_i32_0, %c0_i32_1 : i32, i32, i32, i32
  }
}

module attributes {stable_mosaic.version = 11 : i64} {
  func.func @_conv3x3_kernel(%arg0: i32, %arg1: memref<1x18x18x64xf32, #tpu.memory_space<vmem>>, %arg2: memref<9x64x64xf32, #tpu.memory_space<vmem>>, %arg3: memref<1x64xf32, #tpu.memory_space<vmem>>, %arg4: memref<1x16x16x64xf32, #tpu.memory_space<vmem>>) attributes {dimension_semantics = [#tpu.dimension_semantics<parallel>], iteration_bounds = array<i64: 2>, scalar_prefetch = 0 : i64, scratch_operands = 0 : i64, tpu.core_type = #tpu.core_type<tc>, window_params = [{transform_indices = @transform_0, window_bounds = array<i64: 1, 18, 18, 64>}, {pipeline_mode = #tpu.pipeline_mode<synchronous>, transform_indices = @transform_1, window_bounds = array<i64: 9, 64, 64>}, {pipeline_mode = #tpu.pipeline_mode<synchronous>, transform_indices = @transform_2, window_bounds = array<i64: 1, 64>}, {transform_indices = @transform_3, window_bounds = array<i64: 1, 16, 16, 64>}]} {
    %cst = arith.constant 0.000000e+00 : f32
    %0 = vector.broadcast %cst : f32 to vector<256x64xf32>
    %c0 = arith.constant 0 : index
    %c0_0 = arith.constant 0 : index
    %c0_1 = arith.constant 0 : index
    %c0_2 = arith.constant 0 : index
    %1 = vector.load %arg1[%c0, %c0_0, %c0_1, %c0_2] : memref<1x18x18x64xf32, #tpu.memory_space<vmem>>, vector<1x16x16x64xf32>
    %2 = vector.shape_cast %1 : vector<1x16x16x64xf32> to vector<16x16x64xf32>
    %3 = vector.shape_cast %2 : vector<16x16x64xf32> to vector<256x64xf32>
    %c0_3 = arith.constant 0 : index
    %c0_4 = arith.constant 0 : index
    %c0_5 = arith.constant 0 : index
    %4 = vector.load %arg2[%c0_3, %c0_4, %c0_5] : memref<9x64x64xf32, #tpu.memory_space<vmem>>, vector<1x64x64xf32>
    %5 = vector.shape_cast %4 : vector<1x64x64xf32> to vector<64x64xf32>
    %cst_6 = arith.constant dense<0.000000e+00> : vector<256x64xf32>
    %6 = tpu.matmul %3, %5, %cst_6 {dimension_numbers = #tpu.dot_dimension_numbers<[1], [0], [0], [1], [0, 0, 1, 1], [], []>} : vector<256x64xf32>, vector<64x64xf32>, vector<256x64xf32> -> vector<256x64xf32>
    %7 = arith.addf %0, %6 : vector<256x64xf32>
    %c0_7 = arith.constant 0 : index
    %c0_8 = arith.constant 0 : index
    %c1 = arith.constant 1 : index
    %c0_9 = arith.constant 0 : index
    %8 = vector.load %arg1[%c0_7, %c0_8, %c1, %c0_9] : memref<1x18x18x64xf32, #tpu.memory_space<vmem>>, vector<1x16x16x64xf32>
    %9 = vector.shape_cast %8 : vector<1x16x16x64xf32> to vector<16x16x64xf32>
    %10 = vector.shape_cast %9 : vector<16x16x64xf32> to vector<256x64xf32>
    %c1_10 = arith.constant 1 : index
    %c0_11 = arith.constant 0 : index
    %c0_12 = arith.constant 0 : index
    %11 = vector.load %arg2[%c1_10, %c0_11, %c0_12] : memref<9x64x64xf32, #tpu.memory_space<vmem>>, vector<1x64x64xf32>
    %12 = vector.shape_cast %11 : vector<1x64x64xf32> to vector<64x64xf32>
    %cst_13 = arith.constant dense<0.000000e+00> : vector<256x64xf32>
    %13 = tpu.matmul %10, %12, %cst_13 {dimension_numbers = #tpu.dot_dimension_numbers<[1], [0], [0], [1], [0, 0, 1, 1], [], []>} : vector<256x64xf32>, vector<64x64xf32>, vector<256x64xf32> -> vector<256x64xf32>
    %14 = arith.addf %7, %13 : vector<256x64xf32>
    %c0_14 = arith.constant 0 : index
    %c0_15 = arith.constant 0 : index
    %c2 = arith.constant 2 : index
    %c0_16 = arith.constant 0 : index
    %15 = vector.load %arg1[%c0_14, %c0_15, %c2, %c0_16] : memref<1x18x18x64xf32, #tpu.memory_space<vmem>>, vector<1x16x16x64xf32>
    %16 = vector.shape_cast %15 : vector<1x16x16x64xf32> to vector<16x16x64xf32>
    %17 = vector.shape_cast %16 : vector<16x16x64xf32> to vector<256x64xf32>
    %c2_17 = arith.constant 2 : index
    %c0_18 = arith.constant 0 : index
    %c0_19 = arith.constant 0 : index
    %18 = vector.load %arg2[%c2_17, %c0_18, %c0_19] : memref<9x64x64xf32, #tpu.memory_space<vmem>>, vector<1x64x64xf32>
    %19 = vector.shape_cast %18 : vector<1x64x64xf32> to vector<64x64xf32>
    %cst_20 = arith.constant dense<0.000000e+00> : vector<256x64xf32>
    %20 = tpu.matmul %17, %19, %cst_20 {dimension_numbers = #tpu.dot_dimension_numbers<[1], [0], [0], [1], [0, 0, 1, 1], [], []>} : vector<256x64xf32>, vector<64x64xf32>, vector<256x64xf32> -> vector<256x64xf32>
    %21 = arith.addf %14, %20 : vector<256x64xf32>
    %c0_21 = arith.constant 0 : index
    %c1_22 = arith.constant 1 : index
    %c0_23 = arith.constant 0 : index
    %c0_24 = arith.constant 0 : index
    %22 = vector.load %arg1[%c0_21, %c1_22, %c0_23, %c0_24] : memref<1x18x18x64xf32, #tpu.memory_space<vmem>>, vector<1x16x16x64xf32>
    %23 = vector.shape_cast %22 : vector<1x16x16x64xf32> to vector<16x16x64xf32>
    %24 = vector.shape_cast %23 : vector<16x16x64xf32> to vector<256x64xf32>
    %c3 = arith.constant 3 : index
    %c0_25 = arith.constant 0 : index
    %c0_26 = arith.constant 0 : index
    %25 = vector.load %arg2[%c3, %c0_25, %c0_26] : memref<9x64x64xf32, #tpu.memory_space<vmem>>, vector<1x64x64xf32>
    %26 = vector.shape_cast %25 : vector<1x64x64xf32> to vector<64x64xf32>
    %cst_27 = arith.constant dense<0.000000e+00> : vector<256x64xf32>
    %27 = tpu.matmul %24, %26, %cst_27 {dimension_numbers = #tpu.dot_dimension_numbers<[1], [0], [0], [1], [0, 0, 1, 1], [], []>} : vector<256x64xf32>, vector<64x64xf32>, vector<256x64xf32> -> vector<256x64xf32>
    %28 = arith.addf %21, %27 : vector<256x64xf32>
    %c0_28 = arith.constant 0 : index
    %c1_29 = arith.constant 1 : index
    %c1_30 = arith.constant 1 : index
    %c0_31 = arith.constant 0 : index
    %29 = vector.load %arg1[%c0_28, %c1_29, %c1_30, %c0_31] : memref<1x18x18x64xf32, #tpu.memory_space<vmem>>, vector<1x16x16x64xf32>
    %30 = vector.shape_cast %29 : vector<1x16x16x64xf32> to vector<16x16x64xf32>
    %31 = vector.shape_cast %30 : vector<16x16x64xf32> to vector<256x64xf32>
    %c4 = arith.constant 4 : index
    %c0_32 = arith.constant 0 : index
    %c0_33 = arith.constant 0 : index
    %32 = vector.load %arg2[%c4, %c0_32, %c0_33] : memref<9x64x64xf32, #tpu.memory_space<vmem>>, vector<1x64x64xf32>
    %33 = vector.shape_cast %32 : vector<1x64x64xf32> to vector<64x64xf32>
    %cst_34 = arith.constant dense<0.000000e+00> : vector<256x64xf32>
    %34 = tpu.matmul %31, %33, %cst_34 {dimension_numbers = #tpu.dot_dimension_numbers<[1], [0], [0], [1], [0, 0, 1, 1], [], []>} : vector<256x64xf32>, vector<64x64xf32>, vector<256x64xf32> -> vector<256x64xf32>
    %35 = arith.addf %28, %34 : vector<256x64xf32>
    %c0_35 = arith.constant 0 : index
    %c1_36 = arith.constant 1 : index
    %c2_37 = arith.constant 2 : index
    %c0_38 = arith.constant 0 : index
    %36 = vector.load %arg1[%c0_35, %c1_36, %c2_37, %c0_38] : memref<1x18x18x64xf32, #tpu.memory_space<vmem>>, vector<1x16x16x64xf32>
    %37 = vector.shape_cast %36 : vector<1x16x16x64xf32> to vector<16x16x64xf32>
    %38 = vector.shape_cast %37 : vector<16x16x64xf32> to vector<256x64xf32>
    %c5 = arith.constant 5 : index
    %c0_39 = arith.constant 0 : index
    %c0_40 = arith.constant 0 : index
    %39 = vector.load %arg2[%c5, %c0_39, %c0_40] : memref<9x64x64xf32, #tpu.memory_space<vmem>>, vector<1x64x64xf32>
    %40 = vector.shape_cast %39 : vector<1x64x64xf32> to vector<64x64xf32>
    %cst_41 = arith.constant dense<0.000000e+00> : vector<256x64xf32>
    %41 = tpu.matmul %38, %40, %cst_41 {dimension_numbers = #tpu.dot_dimension_numbers<[1], [0], [0], [1], [0, 0, 1, 1], [], []>} : vector<256x64xf32>, vector<64x64xf32>, vector<256x64xf32> -> vector<256x64xf32>
    %42 = arith.addf %35, %41 : vector<256x64xf32>
    %c0_42 = arith.constant 0 : index
    %c2_43 = arith.constant 2 : index
    %c0_44 = arith.constant 0 : index
    %c0_45 = arith.constant 0 : index
    %43 = vector.load %arg1[%c0_42, %c2_43, %c0_44, %c0_45] : memref<1x18x18x64xf32, #tpu.memory_space<vmem>>, vector<1x16x16x64xf32>
    %44 = vector.shape_cast %43 : vector<1x16x16x64xf32> to vector<16x16x64xf32>
    %45 = vector.shape_cast %44 : vector<16x16x64xf32> to vector<256x64xf32>
    %c6 = arith.constant 6 : index
    %c0_46 = arith.constant 0 : index
    %c0_47 = arith.constant 0 : index
    %46 = vector.load %arg2[%c6, %c0_46, %c0_47] : memref<9x64x64xf32, #tpu.memory_space<vmem>>, vector<1x64x64xf32>
    %47 = vector.shape_cast %46 : vector<1x64x64xf32> to vector<64x64xf32>
    %cst_48 = arith.constant dense<0.000000e+00> : vector<256x64xf32>
    %48 = tpu.matmul %45, %47, %cst_48 {dimension_numbers = #tpu.dot_dimension_numbers<[1], [0], [0], [1], [0, 0, 1, 1], [], []>} : vector<256x64xf32>, vector<64x64xf32>, vector<256x64xf32> -> vector<256x64xf32>
    %49 = arith.addf %42, %48 : vector<256x64xf32>
    %c0_49 = arith.constant 0 : index
    %c2_50 = arith.constant 2 : index
    %c1_51 = arith.constant 1 : index
    %c0_52 = arith.constant 0 : index
    %50 = vector.load %arg1[%c0_49, %c2_50, %c1_51, %c0_52] : memref<1x18x18x64xf32, #tpu.memory_space<vmem>>, vector<1x16x16x64xf32>
    %51 = vector.shape_cast %50 : vector<1x16x16x64xf32> to vector<16x16x64xf32>
    %52 = vector.shape_cast %51 : vector<16x16x64xf32> to vector<256x64xf32>
    %c7 = arith.constant 7 : index
    %c0_53 = arith.constant 0 : index
    %c0_54 = arith.constant 0 : index
    %53 = vector.load %arg2[%c7, %c0_53, %c0_54] : memref<9x64x64xf32, #tpu.memory_space<vmem>>, vector<1x64x64xf32>
    %54 = vector.shape_cast %53 : vector<1x64x64xf32> to vector<64x64xf32>
    %cst_55 = arith.constant dense<0.000000e+00> : vector<256x64xf32>
    %55 = tpu.matmul %52, %54, %cst_55 {dimension_numbers = #tpu.dot_dimension_numbers<[1], [0], [0], [1], [0, 0, 1, 1], [], []>} : vector<256x64xf32>, vector<64x64xf32>, vector<256x64xf32> -> vector<256x64xf32>
    %56 = arith.addf %49, %55 : vector<256x64xf32>
    %c0_56 = arith.constant 0 : index
    %c2_57 = arith.constant 2 : index
    %c2_58 = arith.constant 2 : index
    %c0_59 = arith.constant 0 : index
    %57 = vector.load %arg1[%c0_56, %c2_57, %c2_58, %c0_59] : memref<1x18x18x64xf32, #tpu.memory_space<vmem>>, vector<1x16x16x64xf32>
    %58 = vector.shape_cast %57 : vector<1x16x16x64xf32> to vector<16x16x64xf32>
    %59 = vector.shape_cast %58 : vector<16x16x64xf32> to vector<256x64xf32>
    %c8 = arith.constant 8 : index
    %c0_60 = arith.constant 0 : index
    %c0_61 = arith.constant 0 : index
    %60 = vector.load %arg2[%c8, %c0_60, %c0_61] : memref<9x64x64xf32, #tpu.memory_space<vmem>>, vector<1x64x64xf32>
    %61 = vector.shape_cast %60 : vector<1x64x64xf32> to vector<64x64xf32>
    %cst_62 = arith.constant dense<0.000000e+00> : vector<256x64xf32>
    %62 = tpu.matmul %59, %61, %cst_62 {dimension_numbers = #tpu.dot_dimension_numbers<[1], [0], [0], [1], [0, 0, 1, 1], [], []>} : vector<256x64xf32>, vector<64x64xf32>, vector<256x64xf32> -> vector<256x64xf32>
    %63 = arith.addf %56, %62 : vector<256x64xf32>
    %c0_63 = arith.constant 0 : index
    %c0_64 = arith.constant 0 : index
    %64 = vector.load %arg3[%c0_63, %c0_64] : memref<1x64xf32, #tpu.memory_space<vmem>>, vector<1x64xf32>
    %65 = vector.broadcast %64 : vector<1x64xf32> to vector<256x64xf32>
    %66 = arith.addf %63, %65 : vector<256x64xf32>
    %cst_65 = arith.constant 0.000000e+00 : f32
    %67 = vector.broadcast %cst_65 : f32 to vector<256x64xf32>
    %68 = arith.maximumf %66, %67 : vector<256x64xf32>
    %69 = vector.shape_cast %68 : vector<256x64xf32> to vector<1x16x16x64xf32>
    %c0_66 = arith.constant 0 : index
    %c0_67 = arith.constant 0 : index
    %c0_68 = arith.constant 0 : index
    %c0_69 = arith.constant 0 : index
    %70 = vector.load %arg4[%c0_66, %c0_67, %c0_68, %c0_69] : memref<1x16x16x64xf32, #tpu.memory_space<vmem>>, vector<1x16x16x64xf32>
    tpu.vector_store %arg4[%c0_66, %c0_67, %c0_68, %c0_69], %69 {strides = array<i32>} : memref<1x16x16x64xf32, #tpu.memory_space<vmem>>, vector<1x16x16x64xf32>,
    return
  }
  func.func @transform_0(%arg0: i32) -> (i32, i32, i32, i32) {
    %c0_i32 = arith.constant 0 : i32
    %c0_i32_0 = arith.constant 0 : i32
    %c0_i32_1 = arith.constant 0 : i32
    %c0_i32_2 = arith.constant 0 : i32
    return %arg0, %c0_i32, %c0_i32_0, %c0_i32_1 : i32, i32, i32, i32
  }
  func.func @transform_1(%arg0: i32) -> (i32, i32, i32) {
    %c0_i32 = arith.constant 0 : i32
    %c0_i32_0 = arith.constant 0 : i32
    %c0_i32_1 = arith.constant 0 : i32
    %c0_i32_2 = arith.constant 0 : i32
    return %c0_i32, %c0_i32_0, %c0_i32_1 : i32, i32, i32
  }
  func.func @transform_2(%arg0: i32) -> (i32, i32) {
    %c0_i32 = arith.constant 0 : i32
    %c0_i32_0 = arith.constant 0 : i32
    %c0_i32_1 = arith.constant 0 : i32
    return %c0_i32, %c0_i32_0 : i32, i32
  }
  func.func @transform_3(%arg0: i32) -> (i32, i32, i32, i32) {
    %c0_i32 = arith.constant 0 : i32
    %c0_i32_0 = arith.constant 0 : i32
    %c0_i32_1 = arith.constant 0 : i32
    %c0_i32_2 = arith.constant 0 : i32
    return %arg0, %c0_i32, %c0_i32_0, %c0_i32_1 : i32, i32, i32, i32
  }
}

module attributes {stable_mosaic.version = 11 : i64} {
  func.func @_maxpool2x2_kernel(%arg0: i32, %arg1: i32, %arg2: memref<1x2x8x128xf32, #tpu.memory_space<vmem>>, %arg3: memref<1x1x8x64xf32, #tpu.memory_space<vmem>>) attributes {dimension_semantics = [#tpu.dimension_semantics<parallel>, #tpu.dimension_semantics<parallel>], iteration_bounds = array<i64: 2, 8>, scalar_prefetch = 0 : i64, scratch_operands = 0 : i64, tpu.core_type = #tpu.core_type<tc>, window_params = [{transform_indices = @transform_0, window_bounds = array<i64: 1, 2, 8, 128>}, {transform_indices = @transform_1, window_bounds = array<i64: 1, 1, 8, 64>}]} {
    %c0 = arith.constant 0 : index
    %c0_0 = arith.constant 0 : index
    %c0_1 = arith.constant 0 : index
    %c0_2 = arith.constant 0 : index
    %0 = vector.load %arg2[%c0, %c0_0, %c0_1, %c0_2] : memref<1x2x8x128xf32, #tpu.memory_space<vmem>>, vector<1x1x8x128xf32>
    %1 = vector.shape_cast %0 : vector<1x1x8x128xf32> to vector<8x128xf32>
    %c0_3 = arith.constant 0 : index
    %c1 = arith.constant 1 : index
    %c0_4 = arith.constant 0 : index
    %c0_5 = arith.constant 0 : index
    %2 = vector.load %arg2[%c0_3, %c1, %c0_4, %c0_5] : memref<1x2x8x128xf32, #tpu.memory_space<vmem>>, vector<1x1x8x128xf32>
    %3 = vector.shape_cast %2 : vector<1x1x8x128xf32> to vector<8x128xf32>
    %4 = arith.maximumf %1, %3 : vector<8x128xf32>
    %5 = vector.extract_strided_slice %4 {offsets = [0, 0], sizes = [8, 64], strides = [1, 1]} : vector<8x128xf32> to vector<8x64xf32>
    %6 = vector.extract_strided_slice %4 {offsets = [0, 64], sizes = [8, 64], strides = [1, 1]} : vector<8x128xf32> to vector<8x64xf32>
    %7 = arith.maximumf %5, %6 : vector<8x64xf32>
    %c0_6 = arith.constant 0 : index
    %c0_7 = arith.constant 0 : index
    %c0_8 = arith.constant 0 : index
    %c0_9 = arith.constant 0 : index
    %8 = vector.load %arg3[%c0_6, %c0_7, %c0_8, %c0_9] : memref<1x1x8x64xf32, #tpu.memory_space<vmem>>, vector<1x1x8x64xf32>
    %9 = vector.shape_cast %8 : vector<1x1x8x64xf32> to vector<8x64xf32>
    %10 = vector.shape_cast %7 : vector<8x64xf32> to vector<1x1x8x64xf32>
    tpu.vector_store %arg3[%c0_6, %c0_7, %c0_8, %c0_9], %10 {strides = array<i32>} : memref<1x1x8x64xf32, #tpu.memory_space<vmem>>, vector<1x1x8x64xf32>,
    return
  }
  func.func @transform_0(%arg0: i32, %arg1: i32) -> (i32, i32, i32, i32) {
    %c0_i32 = arith.constant 0 : i32
    %c0_i32_0 = arith.constant 0 : i32
    %c0_i32_1 = arith.constant 0 : i32
    return %arg0, %arg1, %c0_i32, %c0_i32_0 : i32, i32, i32, i32
  }
  func.func @transform_1(%arg0: i32, %arg1: i32) -> (i32, i32, i32, i32) {
    %c0_i32 = arith.constant 0 : i32
    %c0_i32_0 = arith.constant 0 : i32
    %c0_i32_1 = arith.constant 0 : i32
    return %arg0, %arg1, %c0_i32, %c0_i32_0 : i32, i32, i32, i32
  }
}

module attributes {stable_mosaic.version = 11 : i64} {
  func.func @_conv3x3_kernel(%arg0: i32, %arg1: memref<1x10x10x64xf32, #tpu.memory_space<vmem>>, %arg2: memref<9x64x128xf32, #tpu.memory_space<vmem>>, %arg3: memref<1x128xf32, #tpu.memory_space<vmem>>, %arg4: memref<1x8x8x128xf32, #tpu.memory_space<vmem>>) attributes {dimension_semantics = [#tpu.dimension_semantics<parallel>], iteration_bounds = array<i64: 2>, scalar_prefetch = 0 : i64, scratch_operands = 0 : i64, tpu.core_type = #tpu.core_type<tc>, window_params = [{transform_indices = @transform_0, window_bounds = array<i64: 1, 10, 10, 64>}, {pipeline_mode = #tpu.pipeline_mode<synchronous>, transform_indices = @transform_1, window_bounds = array<i64: 9, 64, 128>}, {pipeline_mode = #tpu.pipeline_mode<synchronous>, transform_indices = @transform_2, window_bounds = array<i64: 1, 128>}, {transform_indices = @transform_3, window_bounds = array<i64: 1, 8, 8, 128>}]} {
    %cst = arith.constant 0.000000e+00 : f32
    %0 = vector.broadcast %cst : f32 to vector<64x128xf32>
    %c0 = arith.constant 0 : index
    %c0_0 = arith.constant 0 : index
    %c0_1 = arith.constant 0 : index
    %c0_2 = arith.constant 0 : index
    %1 = vector.load %arg1[%c0, %c0_0, %c0_1, %c0_2] : memref<1x10x10x64xf32, #tpu.memory_space<vmem>>, vector<1x8x8x64xf32>
    %2 = vector.shape_cast %1 : vector<1x8x8x64xf32> to vector<8x8x64xf32>
    %3 = vector.shape_cast %2 : vector<8x8x64xf32> to vector<64x64xf32>
    %c0_3 = arith.constant 0 : index
    %c0_4 = arith.constant 0 : index
    %c0_5 = arith.constant 0 : index
    %4 = vector.load %arg2[%c0_3, %c0_4, %c0_5] : memref<9x64x128xf32, #tpu.memory_space<vmem>>, vector<1x64x128xf32>
    %5 = vector.shape_cast %4 : vector<1x64x128xf32> to vector<64x128xf32>
    %cst_6 = arith.constant dense<0.000000e+00> : vector<64x128xf32>
    %6 = tpu.matmul %3, %5, %cst_6 {dimension_numbers = #tpu.dot_dimension_numbers<[1], [0], [0], [1], [0, 0, 1, 1], [], []>} : vector<64x64xf32>, vector<64x128xf32>, vector<64x128xf32> -> vector<64x128xf32>
    %7 = arith.addf %0, %6 : vector<64x128xf32>
    %c0_7 = arith.constant 0 : index
    %c0_8 = arith.constant 0 : index
    %c1 = arith.constant 1 : index
    %c0_9 = arith.constant 0 : index
    %8 = vector.load %arg1[%c0_7, %c0_8, %c1, %c0_9] : memref<1x10x10x64xf32, #tpu.memory_space<vmem>>, vector<1x8x8x64xf32>
    %9 = vector.shape_cast %8 : vector<1x8x8x64xf32> to vector<8x8x64xf32>
    %10 = vector.shape_cast %9 : vector<8x8x64xf32> to vector<64x64xf32>
    %c1_10 = arith.constant 1 : index
    %c0_11 = arith.constant 0 : index
    %c0_12 = arith.constant 0 : index
    %11 = vector.load %arg2[%c1_10, %c0_11, %c0_12] : memref<9x64x128xf32, #tpu.memory_space<vmem>>, vector<1x64x128xf32>
    %12 = vector.shape_cast %11 : vector<1x64x128xf32> to vector<64x128xf32>
    %cst_13 = arith.constant dense<0.000000e+00> : vector<64x128xf32>
    %13 = tpu.matmul %10, %12, %cst_13 {dimension_numbers = #tpu.dot_dimension_numbers<[1], [0], [0], [1], [0, 0, 1, 1], [], []>} : vector<64x64xf32>, vector<64x128xf32>, vector<64x128xf32> -> vector<64x128xf32>
    %14 = arith.addf %7, %13 : vector<64x128xf32>
    %c0_14 = arith.constant 0 : index
    %c0_15 = arith.constant 0 : index
    %c2 = arith.constant 2 : index
    %c0_16 = arith.constant 0 : index
    %15 = vector.load %arg1[%c0_14, %c0_15, %c2, %c0_16] : memref<1x10x10x64xf32, #tpu.memory_space<vmem>>, vector<1x8x8x64xf32>
    %16 = vector.shape_cast %15 : vector<1x8x8x64xf32> to vector<8x8x64xf32>
    %17 = vector.shape_cast %16 : vector<8x8x64xf32> to vector<64x64xf32>
    %c2_17 = arith.constant 2 : index
    %c0_18 = arith.constant 0 : index
    %c0_19 = arith.constant 0 : index
    %18 = vector.load %arg2[%c2_17, %c0_18, %c0_19] : memref<9x64x128xf32, #tpu.memory_space<vmem>>, vector<1x64x128xf32>
    %19 = vector.shape_cast %18 : vector<1x64x128xf32> to vector<64x128xf32>
    %cst_20 = arith.constant dense<0.000000e+00> : vector<64x128xf32>
    %20 = tpu.matmul %17, %19, %cst_20 {dimension_numbers = #tpu.dot_dimension_numbers<[1], [0], [0], [1], [0, 0, 1, 1], [], []>} : vector<64x64xf32>, vector<64x128xf32>, vector<64x128xf32> -> vector<64x128xf32>
    %21 = arith.addf %14, %20 : vector<64x128xf32>
    %c0_21 = arith.constant 0 : index
    %c1_22 = arith.constant 1 : index
    %c0_23 = arith.constant 0 : index
    %c0_24 = arith.constant 0 : index
    %22 = vector.load %arg1[%c0_21, %c1_22, %c0_23, %c0_24] : memref<1x10x10x64xf32, #tpu.memory_space<vmem>>, vector<1x8x8x64xf32>
    %23 = vector.shape_cast %22 : vector<1x8x8x64xf32> to vector<8x8x64xf32>
    %24 = vector.shape_cast %23 : vector<8x8x64xf32> to vector<64x64xf32>
    %c3 = arith.constant 3 : index
    %c0_25 = arith.constant 0 : index
    %c0_26 = arith.constant 0 : index
    %25 = vector.load %arg2[%c3, %c0_25, %c0_26] : memref<9x64x128xf32, #tpu.memory_space<vmem>>, vector<1x64x128xf32>
    %26 = vector.shape_cast %25 : vector<1x64x128xf32> to vector<64x128xf32>
    %cst_27 = arith.constant dense<0.000000e+00> : vector<64x128xf32>
    %27 = tpu.matmul %24, %26, %cst_27 {dimension_numbers = #tpu.dot_dimension_numbers<[1], [0], [0], [1], [0, 0, 1, 1], [], []>} : vector<64x64xf32>, vector<64x128xf32>, vector<64x128xf32> -> vector<64x128xf32>
    %28 = arith.addf %21, %27 : vector<64x128xf32>
    %c0_28 = arith.constant 0 : index
    %c1_29 = arith.constant 1 : index
    %c1_30 = arith.constant 1 : index
    %c0_31 = arith.constant 0 : index
    %29 = vector.load %arg1[%c0_28, %c1_29, %c1_30, %c0_31] : memref<1x10x10x64xf32, #tpu.memory_space<vmem>>, vector<1x8x8x64xf32>
    %30 = vector.shape_cast %29 : vector<1x8x8x64xf32> to vector<8x8x64xf32>
    %31 = vector.shape_cast %30 : vector<8x8x64xf32> to vector<64x64xf32>
    %c4 = arith.constant 4 : index
    %c0_32 = arith.constant 0 : index
    %c0_33 = arith.constant 0 : index
    %32 = vector.load %arg2[%c4, %c0_32, %c0_33] : memref<9x64x128xf32, #tpu.memory_space<vmem>>, vector<1x64x128xf32>
    %33 = vector.shape_cast %32 : vector<1x64x128xf32> to vector<64x128xf32>
    %cst_34 = arith.constant dense<0.000000e+00> : vector<64x128xf32>
    %34 = tpu.matmul %31, %33, %cst_34 {dimension_numbers = #tpu.dot_dimension_numbers<[1], [0], [0], [1], [0, 0, 1, 1], [], []>} : vector<64x64xf32>, vector<64x128xf32>, vector<64x128xf32> -> vector<64x128xf32>
    %35 = arith.addf %28, %34 : vector<64x128xf32>
    %c0_35 = arith.constant 0 : index
    %c1_36 = arith.constant 1 : index
    %c2_37 = arith.constant 2 : index
    %c0_38 = arith.constant 0 : index
    %36 = vector.load %arg1[%c0_35, %c1_36, %c2_37, %c0_38] : memref<1x10x10x64xf32, #tpu.memory_space<vmem>>, vector<1x8x8x64xf32>
    %37 = vector.shape_cast %36 : vector<1x8x8x64xf32> to vector<8x8x64xf32>
    %38 = vector.shape_cast %37 : vector<8x8x64xf32> to vector<64x64xf32>
    %c5 = arith.constant 5 : index
    %c0_39 = arith.constant 0 : index
    %c0_40 = arith.constant 0 : index
    %39 = vector.load %arg2[%c5, %c0_39, %c0_40] : memref<9x64x128xf32, #tpu.memory_space<vmem>>, vector<1x64x128xf32>
    %40 = vector.shape_cast %39 : vector<1x64x128xf32> to vector<64x128xf32>
    %cst_41 = arith.constant dense<0.000000e+00> : vector<64x128xf32>
    %41 = tpu.matmul %38, %40, %cst_41 {dimension_numbers = #tpu.dot_dimension_numbers<[1], [0], [0], [1], [0, 0, 1, 1], [], []>} : vector<64x64xf32>, vector<64x128xf32>, vector<64x128xf32> -> vector<64x128xf32>
    %42 = arith.addf %35, %41 : vector<64x128xf32>
    %c0_42 = arith.constant 0 : index
    %c2_43 = arith.constant 2 : index
    %c0_44 = arith.constant 0 : index
    %c0_45 = arith.constant 0 : index
    %43 = vector.load %arg1[%c0_42, %c2_43, %c0_44, %c0_45] : memref<1x10x10x64xf32, #tpu.memory_space<vmem>>, vector<1x8x8x64xf32>
    %44 = vector.shape_cast %43 : vector<1x8x8x64xf32> to vector<8x8x64xf32>
    %45 = vector.shape_cast %44 : vector<8x8x64xf32> to vector<64x64xf32>
    %c6 = arith.constant 6 : index
    %c0_46 = arith.constant 0 : index
    %c0_47 = arith.constant 0 : index
    %46 = vector.load %arg2[%c6, %c0_46, %c0_47] : memref<9x64x128xf32, #tpu.memory_space<vmem>>, vector<1x64x128xf32>
    %47 = vector.shape_cast %46 : vector<1x64x128xf32> to vector<64x128xf32>
    %cst_48 = arith.constant dense<0.000000e+00> : vector<64x128xf32>
    %48 = tpu.matmul %45, %47, %cst_48 {dimension_numbers = #tpu.dot_dimension_numbers<[1], [0], [0], [1], [0, 0, 1, 1], [], []>} : vector<64x64xf32>, vector<64x128xf32>, vector<64x128xf32> -> vector<64x128xf32>
    %49 = arith.addf %42, %48 : vector<64x128xf32>
    %c0_49 = arith.constant 0 : index
    %c2_50 = arith.constant 2 : index
    %c1_51 = arith.constant 1 : index
    %c0_52 = arith.constant 0 : index
    %50 = vector.load %arg1[%c0_49, %c2_50, %c1_51, %c0_52] : memref<1x10x10x64xf32, #tpu.memory_space<vmem>>, vector<1x8x8x64xf32>
    %51 = vector.shape_cast %50 : vector<1x8x8x64xf32> to vector<8x8x64xf32>
    %52 = vector.shape_cast %51 : vector<8x8x64xf32> to vector<64x64xf32>
    %c7 = arith.constant 7 : index
    %c0_53 = arith.constant 0 : index
    %c0_54 = arith.constant 0 : index
    %53 = vector.load %arg2[%c7, %c0_53, %c0_54] : memref<9x64x128xf32, #tpu.memory_space<vmem>>, vector<1x64x128xf32>
    %54 = vector.shape_cast %53 : vector<1x64x128xf32> to vector<64x128xf32>
    %cst_55 = arith.constant dense<0.000000e+00> : vector<64x128xf32>
    %55 = tpu.matmul %52, %54, %cst_55 {dimension_numbers = #tpu.dot_dimension_numbers<[1], [0], [0], [1], [0, 0, 1, 1], [], []>} : vector<64x64xf32>, vector<64x128xf32>, vector<64x128xf32> -> vector<64x128xf32>
    %56 = arith.addf %49, %55 : vector<64x128xf32>
    %c0_56 = arith.constant 0 : index
    %c2_57 = arith.constant 2 : index
    %c2_58 = arith.constant 2 : index
    %c0_59 = arith.constant 0 : index
    %57 = vector.load %arg1[%c0_56, %c2_57, %c2_58, %c0_59] : memref<1x10x10x64xf32, #tpu.memory_space<vmem>>, vector<1x8x8x64xf32>
    %58 = vector.shape_cast %57 : vector<1x8x8x64xf32> to vector<8x8x64xf32>
    %59 = vector.shape_cast %58 : vector<8x8x64xf32> to vector<64x64xf32>
    %c8 = arith.constant 8 : index
    %c0_60 = arith.constant 0 : index
    %c0_61 = arith.constant 0 : index
    %60 = vector.load %arg2[%c8, %c0_60, %c0_61] : memref<9x64x128xf32, #tpu.memory_space<vmem>>, vector<1x64x128xf32>
    %61 = vector.shape_cast %60 : vector<1x64x128xf32> to vector<64x128xf32>
    %cst_62 = arith.constant dense<0.000000e+00> : vector<64x128xf32>
    %62 = tpu.matmul %59, %61, %cst_62 {dimension_numbers = #tpu.dot_dimension_numbers<[1], [0], [0], [1], [0, 0, 1, 1], [], []>} : vector<64x64xf32>, vector<64x128xf32>, vector<64x128xf32> -> vector<64x128xf32>
    %63 = arith.addf %56, %62 : vector<64x128xf32>
    %c0_63 = arith.constant 0 : index
    %c0_64 = arith.constant 0 : index
    %64 = vector.load %arg3[%c0_63, %c0_64] : memref<1x128xf32, #tpu.memory_space<vmem>>, vector<1x128xf32>
    %65 = vector.broadcast %64 : vector<1x128xf32> to vector<64x128xf32>
    %66 = arith.addf %63, %65 : vector<64x128xf32>
    %cst_65 = arith.constant 0.000000e+00 : f32
    %67 = vector.broadcast %cst_65 : f32 to vector<64x128xf32>
    %68 = arith.maximumf %66, %67 : vector<64x128xf32>
    %69 = vector.shape_cast %68 : vector<64x128xf32> to vector<1x8x8x128xf32>
    %c0_66 = arith.constant 0 : index
    %c0_67 = arith.constant 0 : index
    %c0_68 = arith.constant 0 : index
    %c0_69 = arith.constant 0 : index
    %70 = vector.load %arg4[%c0_66, %c0_67, %c0_68, %c0_69] : memref<1x8x8x128xf32, #tpu.memory_space<vmem>>, vector<1x8x8x128xf32>
    tpu.vector_store %arg4[%c0_66, %c0_67, %c0_68, %c0_69], %69 {strides = array<i32>} : memref<1x8x8x128xf32, #tpu.memory_space<vmem>>, vector<1x8x8x128xf32>,
    return
  }
  func.func @transform_0(%arg0: i32) -> (i32, i32, i32, i32) {
    %c0_i32 = arith.constant 0 : i32
    %c0_i32_0 = arith.constant 0 : i32
    %c0_i32_1 = arith.constant 0 : i32
    %c0_i32_2 = arith.constant 0 : i32
    return %arg0, %c0_i32, %c0_i32_0, %c0_i32_1 : i32, i32, i32, i32
  }
  func.func @transform_1(%arg0: i32) -> (i32, i32, i32) {
    %c0_i32 = arith.constant 0 : i32
    %c0_i32_0 = arith.constant 0 : i32
    %c0_i32_1 = arith.constant 0 : i32
    %c0_i32_2 = arith.constant 0 : i32
    return %c0_i32, %c0_i32_0, %c0_i32_1 : i32, i32, i32
  }
  func.func @transform_2(%arg0: i32) -> (i32, i32) {
    %c0_i32 = arith.constant 0 : i32
    %c0_i32_0 = arith.constant 0 : i32
    %c0_i32_1 = arith.constant 0 : i32
    return %c0_i32, %c0_i32_0 : i32, i32
  }
  func.func @transform_3(%arg0: i32) -> (i32, i32, i32, i32) {
    %c0_i32 = arith.constant 0 : i32
    %c0_i32_0 = arith.constant 0 : i32
    %c0_i32_1 = arith.constant 0 : i32
    %c0_i32_2 = arith.constant 0 : i32
    return %arg0, %c0_i32, %c0_i32_0, %c0_i32_1 : i32, i32, i32, i32
  }
}

module attributes {stable_mosaic.version = 11 : i64} {
  func.func @_conv3x3_kernel(%arg0: i32, %arg1: memref<1x10x10x128xf32, #tpu.memory_space<vmem>>, %arg2: memref<9x128x128xf32, #tpu.memory_space<vmem>>, %arg3: memref<1x128xf32, #tpu.memory_space<vmem>>, %arg4: memref<1x8x8x128xf32, #tpu.memory_space<vmem>>) attributes {dimension_semantics = [#tpu.dimension_semantics<parallel>], iteration_bounds = array<i64: 2>, scalar_prefetch = 0 : i64, scratch_operands = 0 : i64, tpu.core_type = #tpu.core_type<tc>, window_params = [{transform_indices = @transform_0, window_bounds = array<i64: 1, 10, 10, 128>}, {pipeline_mode = #tpu.pipeline_mode<synchronous>, transform_indices = @transform_1, window_bounds = array<i64: 9, 128, 128>}, {pipeline_mode = #tpu.pipeline_mode<synchronous>, transform_indices = @transform_2, window_bounds = array<i64: 1, 128>}, {transform_indices = @transform_3, window_bounds = array<i64: 1, 8, 8, 128>}]} {
    %cst = arith.constant 0.000000e+00 : f32
    %0 = vector.broadcast %cst : f32 to vector<64x128xf32>
    %c0 = arith.constant 0 : index
    %c0_0 = arith.constant 0 : index
    %c0_1 = arith.constant 0 : index
    %c0_2 = arith.constant 0 : index
    %1 = vector.load %arg1[%c0, %c0_0, %c0_1, %c0_2] : memref<1x10x10x128xf32, #tpu.memory_space<vmem>>, vector<1x8x8x128xf32>
    %2 = vector.shape_cast %1 : vector<1x8x8x128xf32> to vector<8x8x128xf32>
    %3 = vector.shape_cast %2 : vector<8x8x128xf32> to vector<64x128xf32>
    %c0_3 = arith.constant 0 : index
    %c0_4 = arith.constant 0 : index
    %c0_5 = arith.constant 0 : index
    %4 = vector.load %arg2[%c0_3, %c0_4, %c0_5] : memref<9x128x128xf32, #tpu.memory_space<vmem>>, vector<1x128x128xf32>
    %5 = vector.shape_cast %4 : vector<1x128x128xf32> to vector<128x128xf32>
    %cst_6 = arith.constant dense<0.000000e+00> : vector<64x128xf32>
    %6 = tpu.matmul %3, %5, %cst_6 {dimension_numbers = #tpu.dot_dimension_numbers<[1], [0], [0], [1], [0, 0, 1, 1], [], []>} : vector<64x128xf32>, vector<128x128xf32>, vector<64x128xf32> -> vector<64x128xf32>
    %7 = arith.addf %0, %6 : vector<64x128xf32>
    %c0_7 = arith.constant 0 : index
    %c0_8 = arith.constant 0 : index
    %c1 = arith.constant 1 : index
    %c0_9 = arith.constant 0 : index
    %8 = vector.load %arg1[%c0_7, %c0_8, %c1, %c0_9] : memref<1x10x10x128xf32, #tpu.memory_space<vmem>>, vector<1x8x8x128xf32>
    %9 = vector.shape_cast %8 : vector<1x8x8x128xf32> to vector<8x8x128xf32>
    %10 = vector.shape_cast %9 : vector<8x8x128xf32> to vector<64x128xf32>
    %c1_10 = arith.constant 1 : index
    %c0_11 = arith.constant 0 : index
    %c0_12 = arith.constant 0 : index
    %11 = vector.load %arg2[%c1_10, %c0_11, %c0_12] : memref<9x128x128xf32, #tpu.memory_space<vmem>>, vector<1x128x128xf32>
    %12 = vector.shape_cast %11 : vector<1x128x128xf32> to vector<128x128xf32>
    %cst_13 = arith.constant dense<0.000000e+00> : vector<64x128xf32>
    %13 = tpu.matmul %10, %12, %cst_13 {dimension_numbers = #tpu.dot_dimension_numbers<[1], [0], [0], [1], [0, 0, 1, 1], [], []>} : vector<64x128xf32>, vector<128x128xf32>, vector<64x128xf32> -> vector<64x128xf32>
    %14 = arith.addf %7, %13 : vector<64x128xf32>
    %c0_14 = arith.constant 0 : index
    %c0_15 = arith.constant 0 : index
    %c2 = arith.constant 2 : index
    %c0_16 = arith.constant 0 : index
    %15 = vector.load %arg1[%c0_14, %c0_15, %c2, %c0_16] : memref<1x10x10x128xf32, #tpu.memory_space<vmem>>, vector<1x8x8x128xf32>
    %16 = vector.shape_cast %15 : vector<1x8x8x128xf32> to vector<8x8x128xf32>
    %17 = vector.shape_cast %16 : vector<8x8x128xf32> to vector<64x128xf32>
    %c2_17 = arith.constant 2 : index
    %c0_18 = arith.constant 0 : index
    %c0_19 = arith.constant 0 : index
    %18 = vector.load %arg2[%c2_17, %c0_18, %c0_19] : memref<9x128x128xf32, #tpu.memory_space<vmem>>, vector<1x128x128xf32>
    %19 = vector.shape_cast %18 : vector<1x128x128xf32> to vector<128x128xf32>
    %cst_20 = arith.constant dense<0.000000e+00> : vector<64x128xf32>
    %20 = tpu.matmul %17, %19, %cst_20 {dimension_numbers = #tpu.dot_dimension_numbers<[1], [0], [0], [1], [0, 0, 1, 1], [], []>} : vector<64x128xf32>, vector<128x128xf32>, vector<64x128xf32> -> vector<64x128xf32>
    %21 = arith.addf %14, %20 : vector<64x128xf32>
    %c0_21 = arith.constant 0 : index
    %c1_22 = arith.constant 1 : index
    %c0_23 = arith.constant 0 : index
    %c0_24 = arith.constant 0 : index
    %22 = vector.load %arg1[%c0_21, %c1_22, %c0_23, %c0_24] : memref<1x10x10x128xf32, #tpu.memory_space<vmem>>, vector<1x8x8x128xf32>
    %23 = vector.shape_cast %22 : vector<1x8x8x128xf32> to vector<8x8x128xf32>
    %24 = vector.shape_cast %23 : vector<8x8x128xf32> to vector<64x128xf32>
    %c3 = arith.constant 3 : index
    %c0_25 = arith.constant 0 : index
    %c0_26 = arith.constant 0 : index
    %25 = vector.load %arg2[%c3, %c0_25, %c0_26] : memref<9x128x128xf32, #tpu.memory_space<vmem>>, vector<1x128x128xf32>
    %26 = vector.shape_cast %25 : vector<1x128x128xf32> to vector<128x128xf32>
    %cst_27 = arith.constant dense<0.000000e+00> : vector<64x128xf32>
    %27 = tpu.matmul %24, %26, %cst_27 {dimension_numbers = #tpu.dot_dimension_numbers<[1], [0], [0], [1], [0, 0, 1, 1], [], []>} : vector<64x128xf32>, vector<128x128xf32>, vector<64x128xf32> -> vector<64x128xf32>
    %28 = arith.addf %21, %27 : vector<64x128xf32>
    %c0_28 = arith.constant 0 : index
    %c1_29 = arith.constant 1 : index
    %c1_30 = arith.constant 1 : index
    %c0_31 = arith.constant 0 : index
    %29 = vector.load %arg1[%c0_28, %c1_29, %c1_30, %c0_31] : memref<1x10x10x128xf32, #tpu.memory_space<vmem>>, vector<1x8x8x128xf32>
    %30 = vector.shape_cast %29 : vector<1x8x8x128xf32> to vector<8x8x128xf32>
    %31 = vector.shape_cast %30 : vector<8x8x128xf32> to vector<64x128xf32>
    %c4 = arith.constant 4 : index
    %c0_32 = arith.constant 0 : index
    %c0_33 = arith.constant 0 : index
    %32 = vector.load %arg2[%c4, %c0_32, %c0_33] : memref<9x128x128xf32, #tpu.memory_space<vmem>>, vector<1x128x128xf32>
    %33 = vector.shape_cast %32 : vector<1x128x128xf32> to vector<128x128xf32>
    %cst_34 = arith.constant dense<0.000000e+00> : vector<64x128xf32>
    %34 = tpu.matmul %31, %33, %cst_34 {dimension_numbers = #tpu.dot_dimension_numbers<[1], [0], [0], [1], [0, 0, 1, 1], [], []>} : vector<64x128xf32>, vector<128x128xf32>, vector<64x128xf32> -> vector<64x128xf32>
    %35 = arith.addf %28, %34 : vector<64x128xf32>
    %c0_35 = arith.constant 0 : index
    %c1_36 = arith.constant 1 : index
    %c2_37 = arith.constant 2 : index
    %c0_38 = arith.constant 0 : index
    %36 = vector.load %arg1[%c0_35, %c1_36, %c2_37, %c0_38] : memref<1x10x10x128xf32, #tpu.memory_space<vmem>>, vector<1x8x8x128xf32>
    %37 = vector.shape_cast %36 : vector<1x8x8x128xf32> to vector<8x8x128xf32>
    %38 = vector.shape_cast %37 : vector<8x8x128xf32> to vector<64x128xf32>
    %c5 = arith.constant 5 : index
    %c0_39 = arith.constant 0 : index
    %c0_40 = arith.constant 0 : index
    %39 = vector.load %arg2[%c5, %c0_39, %c0_40] : memref<9x128x128xf32, #tpu.memory_space<vmem>>, vector<1x128x128xf32>
    %40 = vector.shape_cast %39 : vector<1x128x128xf32> to vector<128x128xf32>
    %cst_41 = arith.constant dense<0.000000e+00> : vector<64x128xf32>
    %41 = tpu.matmul %38, %40, %cst_41 {dimension_numbers = #tpu.dot_dimension_numbers<[1], [0], [0], [1], [0, 0, 1, 1], [], []>} : vector<64x128xf32>, vector<128x128xf32>, vector<64x128xf32> -> vector<64x128xf32>
    %42 = arith.addf %35, %41 : vector<64x128xf32>
    %c0_42 = arith.constant 0 : index
    %c2_43 = arith.constant 2 : index
    %c0_44 = arith.constant 0 : index
    %c0_45 = arith.constant 0 : index
    %43 = vector.load %arg1[%c0_42, %c2_43, %c0_44, %c0_45] : memref<1x10x10x128xf32, #tpu.memory_space<vmem>>, vector<1x8x8x128xf32>
    %44 = vector.shape_cast %43 : vector<1x8x8x128xf32> to vector<8x8x128xf32>
    %45 = vector.shape_cast %44 : vector<8x8x128xf32> to vector<64x128xf32>
    %c6 = arith.constant 6 : index
    %c0_46 = arith.constant 0 : index
    %c0_47 = arith.constant 0 : index
    %46 = vector.load %arg2[%c6, %c0_46, %c0_47] : memref<9x128x128xf32, #tpu.memory_space<vmem>>, vector<1x128x128xf32>
    %47 = vector.shape_cast %46 : vector<1x128x128xf32> to vector<128x128xf32>
    %cst_48 = arith.constant dense<0.000000e+00> : vector<64x128xf32>
    %48 = tpu.matmul %45, %47, %cst_48 {dimension_numbers = #tpu.dot_dimension_numbers<[1], [0], [0], [1], [0, 0, 1, 1], [], []>} : vector<64x128xf32>, vector<128x128xf32>, vector<64x128xf32> -> vector<64x128xf32>
    %49 = arith.addf %42, %48 : vector<64x128xf32>
    %c0_49 = arith.constant 0 : index
    %c2_50 = arith.constant 2 : index
    %c1_51 = arith.constant 1 : index
    %c0_52 = arith.constant 0 : index
    %50 = vector.load %arg1[%c0_49, %c2_50, %c1_51, %c0_52] : memref<1x10x10x128xf32, #tpu.memory_space<vmem>>, vector<1x8x8x128xf32>
    %51 = vector.shape_cast %50 : vector<1x8x8x128xf32> to vector<8x8x128xf32>
    %52 = vector.shape_cast %51 : vector<8x8x128xf32> to vector<64x128xf32>
    %c7 = arith.constant 7 : index
    %c0_53 = arith.constant 0 : index
    %c0_54 = arith.constant 0 : index
    %53 = vector.load %arg2[%c7, %c0_53, %c0_54] : memref<9x128x128xf32, #tpu.memory_space<vmem>>, vector<1x128x128xf32>
    %54 = vector.shape_cast %53 : vector<1x128x128xf32> to vector<128x128xf32>
    %cst_55 = arith.constant dense<0.000000e+00> : vector<64x128xf32>
    %55 = tpu.matmul %52, %54, %cst_55 {dimension_numbers = #tpu.dot_dimension_numbers<[1], [0], [0], [1], [0, 0, 1, 1], [], []>} : vector<64x128xf32>, vector<128x128xf32>, vector<64x128xf32> -> vector<64x128xf32>
    %56 = arith.addf %49, %55 : vector<64x128xf32>
    %c0_56 = arith.constant 0 : index
    %c2_57 = arith.constant 2 : index
    %c2_58 = arith.constant 2 : index
    %c0_59 = arith.constant 0 : index
    %57 = vector.load %arg1[%c0_56, %c2_57, %c2_58, %c0_59] : memref<1x10x10x128xf32, #tpu.memory_space<vmem>>, vector<1x8x8x128xf32>
    %58 = vector.shape_cast %57 : vector<1x8x8x128xf32> to vector<8x8x128xf32>
    %59 = vector.shape_cast %58 : vector<8x8x128xf32> to vector<64x128xf32>
    %c8 = arith.constant 8 : index
    %c0_60 = arith.constant 0 : index
    %c0_61 = arith.constant 0 : index
    %60 = vector.load %arg2[%c8, %c0_60, %c0_61] : memref<9x128x128xf32, #tpu.memory_space<vmem>>, vector<1x128x128xf32>
    %61 = vector.shape_cast %60 : vector<1x128x128xf32> to vector<128x128xf32>
    %cst_62 = arith.constant dense<0.000000e+00> : vector<64x128xf32>
    %62 = tpu.matmul %59, %61, %cst_62 {dimension_numbers = #tpu.dot_dimension_numbers<[1], [0], [0], [1], [0, 0, 1, 1], [], []>} : vector<64x128xf32>, vector<128x128xf32>, vector<64x128xf32> -> vector<64x128xf32>
    %63 = arith.addf %56, %62 : vector<64x128xf32>
    %c0_63 = arith.constant 0 : index
    %c0_64 = arith.constant 0 : index
    %64 = vector.load %arg3[%c0_63, %c0_64] : memref<1x128xf32, #tpu.memory_space<vmem>>, vector<1x128xf32>
    %65 = vector.broadcast %64 : vector<1x128xf32> to vector<64x128xf32>
    %66 = arith.addf %63, %65 : vector<64x128xf32>
    %67 = vector.shape_cast %66 : vector<64x128xf32> to vector<1x8x8x128xf32>
    %c0_65 = arith.constant 0 : index
    %c0_66 = arith.constant 0 : index
    %c0_67 = arith.constant 0 : index
    %c0_68 = arith.constant 0 : index
    %68 = vector.load %arg4[%c0_65, %c0_66, %c0_67, %c0_68] : memref<1x8x8x128xf32, #tpu.memory_space<vmem>>, vector<1x8x8x128xf32>
    tpu.vector_store %arg4[%c0_65, %c0_66, %c0_67, %c0_68], %67 {strides = array<i32>} : memref<1x8x8x128xf32, #tpu.memory_space<vmem>>, vector<1x8x8x128xf32>,
    return
  }
  func.func @transform_0(%arg0: i32) -> (i32, i32, i32, i32) {
    %c0_i32 = arith.constant 0 : i32
    %c0_i32_0 = arith.constant 0 : i32
    %c0_i32_1 = arith.constant 0 : i32
    %c0_i32_2 = arith.constant 0 : i32
    return %arg0, %c0_i32, %c0_i32_0, %c0_i32_1 : i32, i32, i32, i32
  }
  func.func @transform_1(%arg0: i32) -> (i32, i32, i32) {
    %c0_i32 = arith.constant 0 : i32
    %c0_i32_0 = arith.constant 0 : i32
    %c0_i32_1 = arith.constant 0 : i32
    %c0_i32_2 = arith.constant 0 : i32
    return %c0_i32, %c0_i32_0, %c0_i32_1 : i32, i32, i32
  }
  func.func @transform_2(%arg0: i32) -> (i32, i32) {
    %c0_i32 = arith.constant 0 : i32
    %c0_i32_0 = arith.constant 0 : i32
    %c0_i32_1 = arith.constant 0 : i32
    return %c0_i32, %c0_i32_0 : i32, i32
  }
  func.func @transform_3(%arg0: i32) -> (i32, i32, i32, i32) {
    %c0_i32 = arith.constant 0 : i32
    %c0_i32_0 = arith.constant 0 : i32
    %c0_i32_1 = arith.constant 0 : i32
    %c0_i32_2 = arith.constant 0 : i32
    return %arg0, %c0_i32, %c0_i32_0, %c0_i32_1 : i32, i32, i32, i32
  }
}

module attributes {stable_mosaic.version = 11 : i64} {
  func.func @_mse_kernel(%arg0: i32, %arg1: memref<1x8x8x128xf32, #tpu.memory_space<vmem>>, %arg2: memref<1x8x8x128xf32, #tpu.memory_space<vmem>>, %arg3: memref<1x1xf32, #tpu.memory_space<smem>>) attributes {dimension_semantics = [#tpu.dimension_semantics<arbitrary>], iteration_bounds = array<i64: 2>, scalar_prefetch = 0 : i64, scratch_operands = 0 : i64, tpu.core_type = #tpu.core_type<tc>, window_params = [{transform_indices = @transform_0, window_bounds = array<i64: 1, 8, 8, 128>}, {transform_indices = @transform_1, window_bounds = array<i64: 1, 8, 8, 128>}, {transform_indices = @transform_2, window_bounds = array<i64: 1, 1>}]} {
    %c0_i32 = arith.constant 0 : i32
    %0 = arith.cmpi eq, %arg0, %c0_i32 : i32
    %1 = arith.extui %0 : i1 to i32
    %c0_i32_0 = arith.constant 0 : i32
    %2 = arith.cmpi ne, %1, %c0_i32_0 : i32
    scf.if %2 {
      %cst_13 = arith.constant 0.000000e+00 : f32
      %c0_14 = arith.constant 0 : index
      %c0_15 = arith.constant 0 : index
      %17 = memref.load %arg3[%c0_14, %c0_15] : memref<1x1xf32, #tpu.memory_space<smem>>
      memref.store %cst_13, %arg3[%c0_14, %c0_15] : memref<1x1xf32, #tpu.memory_space<smem>>
    } else {
    }
    %c0 = arith.constant 0 : index
    %c0_1 = arith.constant 0 : index
    %c0_2 = arith.constant 0 : index
    %c0_3 = arith.constant 0 : index
    %3 = vector.load %arg1[%c0, %c0_1, %c0_2, %c0_3] : memref<1x8x8x128xf32, #tpu.memory_space<vmem>>, vector<1x8x8x128xf32>
    %c0_4 = arith.constant 0 : index
    %c0_5 = arith.constant 0 : index
    %c0_6 = arith.constant 0 : index
    %c0_7 = arith.constant 0 : index
    %4 = vector.load %arg2[%c0_4, %c0_5, %c0_6, %c0_7] : memref<1x8x8x128xf32, #tpu.memory_space<vmem>>, vector<1x8x8x128xf32>
    %5 = arith.subf %3, %4 : vector<1x8x8x128xf32>
    %c0_8 = arith.constant 0 : index
    %c0_9 = arith.constant 0 : index
    %6 = memref.load %arg3[%c0_8, %c0_9] : memref<1x1xf32, #tpu.memory_space<smem>>
    %7 = arith.mulf %5, %5 : vector<1x8x8x128xf32>
    %8 = vector.shape_cast %7 : vector<1x8x8x128xf32> to vector<1x1x8x8x128xf32>
    %cst = arith.constant dense<0.000000e+00> : vector<1xf32>
    %9 = vector.multi_reduction <add>, %8, %cst [1, 2, 3, 4] : vector<1x1x8x8x128xf32> to vector<1xf32>
    %10 = vector.shape_cast %9 : vector<1xf32> to vector<1x1x1x1x1xf32>
    %11 = vector.extract %10[0, 0, 0, 0, 0] : f32 from vector<1x1x1x1x1xf32>
    %12 = arith.addf %6, %11 : f32
    %c0_10 = arith.constant 0 : index
    %c0_11 = arith.constant 0 : index
    %13 = memref.load %arg3[%c0_10, %c0_11] : memref<1x1xf32, #tpu.memory_space<smem>>
    memref.store %12, %arg3[%c0_10, %c0_11] : memref<1x1xf32, #tpu.memory_space<smem>>
    %c1_i32 = arith.constant 1 : i32
    %14 = arith.cmpi eq, %arg0, %c1_i32 : i32
    %15 = arith.extui %14 : i1 to i32
    %c0_i32_12 = arith.constant 0 : i32
    %16 = arith.cmpi ne, %15, %c0_i32_12 : i32
    scf.if %16 {
      %c0_13 = arith.constant 0 : index
      %c0_14 = arith.constant 0 : index
      %17 = memref.load %arg3[%c0_13, %c0_14] : memref<1x1xf32, #tpu.memory_space<smem>>
      %cst_15 = arith.constant 6.10351563E-5 : f32
      %18 = arith.mulf %17, %cst_15 : f32
      %c0_16 = arith.constant 0 : index
      %c0_17 = arith.constant 0 : index
      %19 = memref.load %arg3[%c0_16, %c0_17] : memref<1x1xf32, #tpu.memory_space<smem>>
      memref.store %18, %arg3[%c0_16, %c0_17] : memref<1x1xf32, #tpu.memory_space<smem>>
    } else {
    }
    return
  }
  func.func @transform_0(%arg0: i32) -> (i32, i32, i32, i32) {
    %c0_i32 = arith.constant 0 : i32
    %c0_i32_0 = arith.constant 0 : i32
    %c0_i32_1 = arith.constant 0 : i32
    %c0_i32_2 = arith.constant 0 : i32
    return %arg0, %c0_i32, %c0_i32_0, %c0_i32_1 : i32, i32, i32, i32
  }
  func.func @transform_1(%arg0: i32) -> (i32, i32, i32, i32) {
    %c0_i32 = arith.constant 0 : i32
    %c0_i32_0 = arith.constant 0 : i32
    %c0_i32_1 = arith.constant 0 : i32
    %c0_i32_2 = arith.constant 0 : i32
    return %arg0, %c0_i32, %c0_i32_0, %c0_i32_1 : i32, i32, i32, i32
  }
  func.func @transform_2(%arg0: i32) -> (i32, i32) {
    %c0_i32 = arith.constant 0 : i32
    %c0_i32_0 = arith.constant 0 : i32
    %c0_i32_1 = arith.constant 0 : i32
    return %c0_i32, %c0_i32_0 : i32, i32
  }
}

</mosaic_0001>

<llo_original>
// kernel: feature_reconstruction_loss.13
$region0: #{feature_reconstruction_loss.13}
  #allocation0 [shape = 'u32[]', space=smem, size = 0x4, offset = 0x4, fixed_abs, tag = 'smem constant byte address 0x4 - core index']
  #allocation1 [shape = 'u32[144,128]{1,0:T(1,128)}', space=vmem, size = 0x12000, scoped, tag = 'internal scratch']
  %s0 = inlined_call_operand.vmem [shape: f32[2,16,8,128], index: 0, kind: input, shape index: {}]
  %s1 = inlined_call_operand.vmem [shape: f32[2,8,8,64], index: 1, kind: output, shape index: {}]
  %s2 = sld [smem:[#allocation0]]
  $region37: #{feature_reconstruction_loss.13} parent=0
    _
  %s4 = ssub.s32 1, %s2
  %s5 = scalar_select 0, %s4, %s2
  loop: start=0, step=1, limit=18
  $region2: #{feature_reconstruction_loss.13} parent=0 // loop_pre_header
    _
  $region3: #{feature_reconstruction_loss.13} parent=0 // loop_header
    %s7 = sphi 0, %s11
    %p8 = scmp.ge.s32.totalorder %s7, 18
    %s14 = sphi 0, %s26
    %s15 = sphi 0, %s22
    %s16 = sphi 0, %s14
    %s17 = sphi 0, %s15
    %s18 = sphi 0, %s16
    %s19 = sphi 0, %s17
    %s31 = sphi 0, %s33
    %s34 = sphi 0, %s31
    %s35 = sphi 0, %s34
    %s51 = sphi 0, %s35
    %s59 = sphi 0, %s61
    %s62 = sphi 0, %s59
    %s63 = sphi 0, %s62
    %s79 = sphi 0, %s63
  $region4: #{feature_reconstruction_loss.13} parent=0 // loop_header_branch
    %10 = sbr.rel (%p8) target = $region8
  $region5: #{feature_reconstruction_loss.13} parent=0 // loop_body
    %s12 = ssub.s32 %s7, 1
    %s13 = ssub.s32 %s7, 2
    %s20 = sadd.s32 1, %s15
    %p21 = scmp.ge.s32.totalorder %s20, 8
    %s22 = scalar_select %p21, 0, %s20
    %s23 = sadd.s32 1, %s14
    %s24 = scalar_select %p21, %s23, %s14
    %p25 = scmp.ge.s32.totalorder %s24, 2
    %s26 = scalar_select %p25, 0, %s24
    %s27 = ssub.s32 %s14, %s26
    %s28 = ssub.s32 %s15, %s22
    %s29 = sor.u32 %s27, %s28
    %p30 = scmp.eq.s32.totalorder %s29, 0
    %s32 = sadd.s32 %s31, 1
    %s33 = scalar_select %p30, %s31, %s32
    %p36 = pneg %p30
    %p37 = scmp.eq.s32.totalorder %s7, 15
    %p38 = por %p36, %p37
    %p39 = scmp.ne.s32.totalorder %s31, %s34
    %p40 = scmp.eq.s32.totalorder %s7, 0
    %p41 = por %p39, %p40
    %p42 = scmp.ne.s32.totalorder %s31, %s34
    %p43 = scmp.eq.s32.totalorder %s12, 15
    %p44 = por %p42, %p43
    %p45 = scmp.ne.s32.totalorder %s34, %s35
    %p46 = scmp.eq.s32.totalorder %s12, 0
    %p47 = por %p45, %p46
    %p48 = scmp.ne.s32.totalorder %s34, %s35
    %p49 = scmp.eq.s32.totalorder %s13, 15
    %p50 = por %p48, %p49
    %p52 = scmp.ne.s32.totalorder %s35, %s51
    %p53 = scmp.eq.s32.totalorder %s13, 0
    %p54 = por %p52, %p53
    %s55 = ssub.s32 %s14, %s26
    %s56 = ssub.s32 %s15, %s22
    %s57 = sor.u32 %s55, %s56
    %p58 = scmp.eq.s32.totalorder %s57, 0
    %s60 = sadd.s32 %s59, 1
    %s61 = scalar_select %p58, %s59, %s60
    %p64 = pneg %p58
    %p65 = scmp.eq.s32.totalorder %s7, 15
    %p66 = por %p64, %p65
    %p67 = scmp.ne.s32.totalorder %s59, %s62
    %p68 = scmp.eq.s32.totalorder %s7, 0
    %p69 = por %p67, %p68
    %p70 = scmp.ne.s32.totalorder %s59, %s62
    %p71 = scmp.eq.s32.totalorder %s12, 15
    %p72 = por %p70, %p71
    %p73 = scmp.ne.s32.totalorder %s62, %s63
    %p74 = scmp.eq.s32.totalorder %s12, 0
    %p75 = por %p73, %p74
    %p76 = scmp.ne.s32.totalorder %s62, %s63
    %p77 = scmp.eq.s32.totalorder %s13, 15
    %p78 = por %p76, %p77
    %p80 = scmp.ne.s32.totalorder %s63, %s79
    %p81 = scmp.eq.s32.totalorder %s13, 0
    %p82 = por %p80, %p81
    %p83 = scmp.le.s32.totalorder 1, %s7
    %p84 = scmp.lt.s32.totalorder %s7, 17
    %p85 = pnand %p83, %p84
    %p86 = pneg %p85
    // Predicated region
    $region9: #{feature_reconstruction_loss.13} parent=5 // pred_check
      _
    $region10: #{feature_reconstruction_loss.13} parent=5 // pred_check_branch
      %88 = sbr.rel (%p85) target = $region12
    $region11: #{feature_reconstruction_loss.13} parent=5 // pred_region
      %s89 = ssub.s32 %s7, 1
    $region12: #{feature_reconstruction_loss.13} parent=5 // pred_fallthru
      _
    %p90 = scmp.lt.s32.totalorder %s7, 16
    // Predicated region
    $region13: #{feature_reconstruction_loss.13} parent=5 // pred_check
      %p91 = pneg %p90
    $region14: #{feature_reconstruction_loss.13} parent=5 // pred_check_branch
      %93 = sbr.rel (%p91) target = $region16
    $region15: #{feature_reconstruction_loss.13} parent=5 // pred_region
      // Predicated region
      $region17: #{feature_reconstruction_loss.13} parent=15 // pred_check
        %p94 = pneg %p41
      $region18: #{feature_reconstruction_loss.13} parent=15 // pred_check_branch
        %96 = sbr.rel (%p94) target = $region20
      $region19: #{feature_reconstruction_loss.13} parent=15 // pred_region
        %s97 = smul.u32 2, %s15
        %p98 = scmp.lt.s32.totalorder %s14, 1
        %s99 = scalar_select %p98, %s14, 1
        %p100 = scmp.lt.s32.totalorder %s97, 15
        %s101 = scalar_select %p100, %s97, 15
        %s102 = smul.addr %s99, 16
        %s103 = sadd.s32 %s101, %s102
        %s104 = smul.addr %s103, 8
        %s105 = scalar_lea.vmem %s0, %s104
        %s106 = smul.u32 2, %s15
      $region20: #{feature_reconstruction_loss.13} parent=15 // pred_fallthru
        _
    $region16: #{feature_reconstruction_loss.13} parent=5 // pred_fallthru
      _
    %p107 = scmp.le.s32.totalorder 1, %s7
    %p108 = scmp.lt.s32.totalorder %s7, 17
    %p109 = pnand %p107, %p108
    %p110 = pneg %p109
    // Predicated region
    $region21: #{feature_reconstruction_loss.13} parent=5 // pred_check
      _
    $region22: #{feature_reconstruction_loss.13} parent=5 // pred_check_branch
      %112 = sbr.rel (%p109) target = $region24
    $region23: #{feature_reconstruction_loss.13} parent=5 // pred_region
      %s113 = ssub.s32 %s7, 1
      %s114 = smul.u32 2, %s17
      %p115 = scmp.lt.s32.totalorder %s16, 1
      %s116 = scalar_select %p115, %s16, 1
      %p117 = scmp.lt.s32.totalorder %s114, 15
      %s118 = scalar_select %p117, %s114, 15
      %s119 = smul.addr %s116, 16
      %s120 = sadd.s32 %s118, %s119
      %s121 = smul.addr %s120, 8
      %s122 = scalar_lea.vmem %s0, %s121
      %p123 = pneg %p47
      %p124 = pneg %p44
      %p125 = pneg %p75
      %p126 = pneg %p72
      %p127 = scmp.lt.s32.totalorder %s16, 1
      %s128 = scalar_select %p127, %s16, 1
      %p129 = scmp.lt.s32.totalorder %s17, 7
      %s130 = scalar_select %p129, %s17, 7
      %s131 = smul.addr %s128, 8
      %s132 = sadd.s32 %s130, %s131
      %s133 = smul.addr %s132, 8
      %s134 = scalar_lea.vmem %s1, %s133
      %s135 = smul.u32 2, %s17
      %p136 = scmp.lt.s32.totalorder %s16, 1
      %s137 = scalar_select %p136, %s16, 1
      %p138 = scmp.lt.s32.totalorder %s135, 15
      %s139 = scalar_select %p138, %s135, 15
      %s140 = smul.addr %s137, 16
      %s141 = sadd.s32 %s139, %s140
      %s142 = smul.addr %s141, 8
      %s143 = scalar_lea.vmem %s0, %s142
      %s144 = smul.u32 2, %s17
      %p145 = scmp.lt.s32.totalorder %s16, 1
      %s146 = scalar_select %p145, %s16, 1
      %p147 = scmp.lt.s32.totalorder %s17, 7
      %s148 = scalar_select %p147, %s17, 7
      %s149 = smul.addr %s146, 8
      %s150 = sadd.s32 %s148, %s149
      %s151 = smul.addr %s150, 8
      %s152 = scalar_lea.vmem %s1, %s151
      %v153 = vld [vmem:[%s143] sm:$0xff]
      %s154 = scalar_lea.vmem %s143, 8
      %v155 = vld [vmem:[%s154] sm:$0xff]
      %v156 = vmax.f32 %v153, %v155
      %158 = vrot.lane.b32.xlu0 %v156, 64
      %v159 = vpop.permute.xlu0 %158
      %v161 = vmax.f32 %v156, %v159
      %vm162 = vcmask 523264
      %163 = vst.msk [vmem:[%s152] sm:$0xff] %vm162, %v161
      %p164 = scmp.lt.s32.totalorder %s16, 1
      %s165 = scalar_select %p164, %s16, 1
      %p166 = scmp.lt.s32.totalorder %s17, 7
      %s167 = scalar_select %p166, %s17, 7
      %s168 = smul.addr %s165, 8
      %s169 = sadd.s32 %s167, %s168
      %s170 = smul.addr %s169, 8
      %s171 = scalar_lea.vmem %s1, %s170
      // Predicated region
      $region25: #{feature_reconstruction_loss.13} parent=23 // pred_check
        %p172 = pneg %p72
      $region26: #{feature_reconstruction_loss.13} parent=23 // pred_check_branch
        %174 = sbr.rel (%p172) target = $region28
      $region27: #{feature_reconstruction_loss.13} parent=23 // pred_region
        _
      $region28: #{feature_reconstruction_loss.13} parent=23 // pred_fallthru
        _
    $region24: #{feature_reconstruction_loss.13} parent=5 // pred_fallthru
      _
    %p175 = scmp.le.s32.totalorder 2, %s7
    // Predicated region
    $region29: #{feature_reconstruction_loss.13} parent=5 // pred_check
      %p176 = pneg %p175
    $region30: #{feature_reconstruction_loss.13} parent=5 // pred_check_branch
      %178 = sbr.rel (%p176) target = $region32
    $region31: #{feature_reconstruction_loss.13} parent=5 // pred_region
      %s179 = ssub.s32 %s7, 2
      // Predicated region
      $region33: #{feature_reconstruction_loss.13} parent=31 // pred_check
        %p180 = pneg %p78
      $region34: #{feature_reconstruction_loss.13} parent=31 // pred_check_branch
        %182 = sbr.rel (%p180) target = $region36
      $region35: #{feature_reconstruction_loss.13} parent=31 // pred_region
        %p183 = scmp.lt.s32.totalorder %s18, 1
        %s184 = scalar_select %p183, %s18, 1
        %p185 = scmp.lt.s32.totalorder %s19, 7
        %s186 = scalar_select %p185, %s19, 7
        %s187 = smul.addr %s184, 8
        %s188 = sadd.s32 %s186, %s187
        %s189 = smul.addr %s188, 8
        %s190 = scalar_lea.vmem %s1, %s189
      $region36: #{feature_reconstruction_loss.13} parent=31 // pred_fallthru
        _
    $region32: #{feature_reconstruction_loss.13} parent=5 // pred_fallthru
      _
  $region6: #{feature_reconstruction_loss.13} parent=0 // loop_footer
    %s11 = sadd.s32 1, %s7
  $region7: #{feature_reconstruction_loss.13} parent=0 // loop_footer_branch
    %6 = sbr.rel target = $region3
  $region8: #{feature_reconstruction_loss.13} parent=0 // loop_exit
    _

// kernel: feature_reconstruction_loss.11
$region0: #{feature_reconstruction_loss.11}
  #allocation0 [shape = 'u32[]', space=smem, size = 0x4, offset = 0x4, fixed_abs, tag = 'smem constant byte address 0x4 - core index']
  #allocation1 [shape = 'u32[144,128]{1,0:T(1,128)}', space=vmem, size = 0x12000, scoped, tag = 'internal scratch']
  %s0 = inlined_call_operand.vmem [shape: f32[2,18,18,3], index: 0, kind: input, shape index: {}]
  %s1 = inlined_call_operand.vmem [shape: f32[9,3,64], index: 1, kind: input, shape index: {}]
  %s2 = inlined_call_operand.vmem [shape: f32[1,64], index: 2, kind: input, shape index: {}]
  %s3 = inlined_call_operand.vmem [shape: f32[2,16,16,64], index: 3, kind: output, shape index: {}]
  %s4 = sld [smem:[#allocation0]]
  $region45: #{feature_reconstruction_loss.11} parent=0
    _
  %s6 = ssub.s32 1, %s4
  %s7 = scalar_select 0, %s6, %s4
  loop: start=0, step=1, limit=4
  $region2: #{feature_reconstruction_loss.11} parent=0 // loop_pre_header
    _
  $region3: #{feature_reconstruction_loss.11} parent=0 // loop_header
    %s9 = sphi 0, %s13
    %p10 = scmp.ge.s32.totalorder %s9, 4
    %s19 = sphi 0, %s21
    %s22 = sphi 0, %s19
    %s23 = sphi 0, %s22
    %s39 = sphi 0, %s23
    %s43 = sphi 0, %s43
    %s45 = sphi 0, %s43
    %s46 = sphi 0, %s45
    %s60 = sphi 0, %s46
    %s64 = sphi 0, %s64
    %s66 = sphi 0, %s64
    %s67 = sphi 0, %s66
    %s81 = sphi 0, %s67
    %s87 = sphi 0, %s89
    %s90 = sphi 0, %s87
    %s91 = sphi 0, %s90
    %s107 = sphi 0, %s91
  $region4: #{feature_reconstruction_loss.11} parent=0 // loop_header_branch
    %12 = sbr.rel (%p10) target = $region8
  $region5: #{feature_reconstruction_loss.11} parent=0 // loop_body
    %s14 = ssub.s32 %s9, 1
    %s15 = ssub.s32 %s9, 2
    %s16 = sadd.s32 %s9, 1
    %s17 = ssub.s32 %s9, %s16
    %p18 = scmp.eq.s32.totalorder %s17, 0
    %s20 = sadd.s32 %s19, 1
    %s21 = scalar_select %p18, %s19, %s20
    %p24 = pneg %p18
    %p25 = scmp.eq.s32.totalorder %s9, 1
    %p26 = por %p24, %p25
    %p27 = scmp.ne.s32.totalorder %s19, %s22
    %p28 = scmp.eq.s32.totalorder %s9, 0
    %p29 = por %p27, %p28
    %p30 = scmp.ne.s32.totalorder %s19, %s22
    %p31 = scmp.eq.s32.totalorder %s14, 1
    %p32 = por %p30, %p31
    %p33 = scmp.ne.s32.totalorder %s22, %s23
    %p34 = scmp.eq.s32.totalorder %s14, 0
    %p35 = por %p33, %p34
    %p36 = scmp.ne.s32.totalorder %s22, %s23
    %p37 = scmp.eq.s32.totalorder %s15, 1
    %p38 = por %p36, %p37
    %p40 = scmp.ne.s32.totalorder %s23, %s39
    %p41 = scmp.eq.s32.totalorder %s15, 0
    %p42 = por %p40, %p41
    %s44 = sadd.s32 %s43, 1
    %p47 = scmp.eq.s32.totalorder %s9, 1
    %p48 = scmp.ne.s32.totalorder %s43, %s45
    %p49 = scmp.eq.s32.totalorder %s9, 0
    %p50 = por %p48, %p49
    %p51 = scmp.ne.s32.totalorder %s43, %s45
    %p52 = scmp.eq.s32.totalorder %s14, 1
    %p53 = por %p51, %p52
    %p54 = scmp.ne.s32.totalorder %s45, %s46
    %p55 = scmp.eq.s32.totalorder %s14, 0
    %p56 = por %p54, %p55
    %p57 = scmp.ne.s32.totalorder %s45, %s46
    %p58 = scmp.eq.s32.totalorder %s15, 1
    %p59 = por %p57, %p58
    %p61 = scmp.ne.s32.totalorder %s46, %s60
    %p62 = scmp.eq.s32.totalorder %s15, 0
    %p63 = por %p61, %p62
    %s65 = sadd.s32 %s64, 1
    %p68 = scmp.eq.s32.totalorder %s9, 1
    %p69 = scmp.ne.s32.totalorder %s64, %s66
    %p70 = scmp.eq.s32.totalorder %s9, 0
    %p71 = por %p69, %p70
    %p72 = scmp.ne.s32.totalorder %s64, %s66
    %p73 = scmp.eq.s32.totalorder %s14, 1
    %p74 = por %p72, %p73
    %p75 = scmp.ne.s32.totalorder %s66, %s67
    %p76 = scmp.eq.s32.totalorder %s14, 0
    %p77 = por %p75, %p76
    %p78 = scmp.ne.s32.totalorder %s66, %s67
    %p79 = scmp.eq.s32.totalorder %s15, 1
    %p80 = por %p78, %p79
    %p82 = scmp.ne.s32.totalorder %s67, %s81
    %p83 = scmp.eq.s32.totalorder %s15, 0
    %p84 = por %p82, %p83
    %s85 = ssub.s32 %s9, %s16
    %p86 = scmp.eq.s32.totalorder %s85, 0
    %s88 = sadd.s32 %s87, 1
    %s89 = scalar_select %p86, %s87, %s88
    %p92 = pneg %p86
    %p93 = scmp.eq.s32.totalorder %s9, 1
    %p94 = por %p92, %p93
    %p95 = scmp.ne.s32.totalorder %s87, %s90
    %p96 = scmp.eq.s32.totalorder %s9, 0
    %p97 = por %p95, %p96
    %p98 = scmp.ne.s32.totalorder %s87, %s90
    %p99 = scmp.eq.s32.totalorder %s14, 1
    %p100 = por %p98, %p99
    %p101 = scmp.ne.s32.totalorder %s90, %s91
    %p102 = scmp.eq.s32.totalorder %s14, 0
    %p103 = por %p101, %p102
    %p104 = scmp.ne.s32.totalorder %s90, %s91
    %p105 = scmp.eq.s32.totalorder %s15, 1
    %p106 = por %p104, %p105
    %p108 = scmp.ne.s32.totalorder %s91, %s107
    %p109 = scmp.eq.s32.totalorder %s15, 0
    %p110 = por %p108, %p109
    %p111 = scmp.le.s32.totalorder 1, %s9
    %p112 = scmp.lt.s32.totalorder %s9, 3
    %p113 = pnand %p111, %p112
    %p114 = pneg %p113
    // Predicated region
    $region9: #{feature_reconstruction_loss.11} parent=5 // pred_check
      _
    $region10: #{feature_reconstruction_loss.11} parent=5 // pred_check_branch
      %116 = sbr.rel (%p113) target = $region12
    $region11: #{feature_reconstruction_loss.11} parent=5 // pred_region
      %s117 = ssub.s32 %s9, 1
      // Predicated region
      $region13: #{feature_reconstruction_loss.11} parent=11 // pred_check
        %p118 = pneg %p56
      $region14: #{feature_reconstruction_loss.11} parent=11 // pred_check_branch
        %120 = sbr.rel (%p118) target = $region16
      $region15: #{feature_reconstruction_loss.11} parent=11 // pred_region
        _
      $region16: #{feature_reconstruction_loss.11} parent=11 // pred_fallthru
        _
      // Predicated region
      $region17: #{feature_reconstruction_loss.11} parent=11 // pred_check
        %p121 = pneg %p77
      $region18: #{feature_reconstruction_loss.11} parent=11 // pred_check_branch
        %123 = sbr.rel (%p121) target = $region20
      $region19: #{feature_reconstruction_loss.11} parent=11 // pred_region
        _
      $region20: #{feature_reconstruction_loss.11} parent=11 // pred_fallthru
        _
    $region12: #{feature_reconstruction_loss.11} parent=5 // pred_fallthru
      _
    %p124 = scmp.lt.s32.totalorder %s9, 2
    // Predicated region
    $region21: #{feature_reconstruction_loss.11} parent=5 // pred_check
      %p125 = pneg %p124
    $region22: #{feature_reconstruction_loss.11} parent=5 // pred_check_branch
      %127 = sbr.rel (%p125) target = $region24
    $region23: #{feature_reconstruction_loss.11} parent=5 // pred_region
      // Predicated region
      $region25: #{feature_reconstruction_loss.11} parent=23 // pred_check
        %p128 = pneg %p29
      $region26: #{feature_reconstruction_loss.11} parent=23 // pred_check_branch
        %130 = sbr.rel (%p128) target = $region28
      $region27: #{feature_reconstruction_loss.11} parent=23 // pred_region
        %p131 = scmp.lt.s32.totalorder %s9, 1
        %s132 = scalar_select %p131, %s9, 1
        %s133 = smul.addr %s132, 54
        %s134 = smul.addr %s133, 8
        %s135 = scalar_lea.vmem %s0, %s134
      $region28: #{feature_reconstruction_loss.11} parent=23 // pred_fallthru
        _
    $region24: #{feature_reconstruction_loss.11} parent=5 // pred_fallthru
      _
    %p136 = scmp.le.s32.totalorder 1, %s9
    %p137 = scmp.lt.s32.totalorder %s9, 3
    %p138 = pnand %p136, %p137
    %p139 = pneg %p138
    // Predicated region
    $region29: #{feature_reconstruction_loss.11} parent=5 // pred_check
      _
    $region30: #{feature_reconstruction_loss.11} parent=5 // pred_check_branch
      %141 = sbr.rel (%p138) target = $region32
    $region31: #{feature_reconstruction_loss.11} parent=5 // pred_region
      %s142 = ssub.s32 %s9, 1
      %p143 = scmp.lt.s32.totalorder %s14, 1
      %s144 = scalar_select %p143, %s14, 1
      %s145 = smul.addr %s144, 54
      %s146 = smul.addr %s145, 8
      %s147 = scalar_lea.vmem %s0, %s146
      %p148 = pneg %p35
      %p149 = pneg %p32
      %p150 = pneg %p56
      %p151 = pneg %p53
      %p152 = pneg %p77
      %p153 = pneg %p74
      %p154 = pneg %p103
      %p155 = pneg %p100
      %p156 = scmp.lt.s32.totalorder %s14, 1
      %s157 = scalar_select %p156, %s14, 1
      %s158 = smul.addr %s157, 32
      %s159 = smul.addr %s158, 8
      %s160 = scalar_lea.vmem %s3, %s159
      %p161 = scmp.lt.s32.totalorder %s14, 1
      %s162 = scalar_select %p161, %s14, 1
      %s163 = smul.addr %s162, 54
      %s164 = smul.addr %s163, 8
      %s165 = scalar_lea.vmem %s0, %s164
      %p166 = scmp.lt.s32.totalorder %s14, 1
      %s167 = scalar_select %p166, %s14, 1
      %s168 = smul.addr %s167, 32
      %s169 = smul.addr %s168, 8
      %s170 = scalar_lea.vmem %s3, %s169
      %v171 = vld [vmem:[%s165] sm:$0xff]
      %v172 = vld [vmem:[%s165 + $0x8] sm:$0xff]
      %v173 = vld [vmem:[%s165 + $0x18] sm:$0xff]
      %v174 = vld [vmem:[%s165 + $0x20] sm:$0xff]
      %v175 = vld [vmem:[%s165 + $0x30] sm:$0xff]
      %v176 = vld [vmem:[%s165 + $0x38] sm:$0xff]
      %v177 = vld [vmem:[%s165 + $0x48] sm:$0xff]
      %v178 = vld [vmem:[%s165 + $0x50] sm:$0xff]
      %v179 = vld [vmem:[%s165 + $0x60] sm:$0xff]
      %v180 = vld [vmem:[%s165 + $0x68] sm:$0xff]
      %v181 = vld [vmem:[%s165 + $0x78] sm:$0xff]
      %v182 = vld [vmem:[%s165 + $0x80] sm:$0xff]
      %v183 = vld [vmem:[%s165 + $0x90] sm:$0xff]
      %v184 = vld [vmem:[%s165 + $0x98] sm:$0xff]
      %v185 = vld [vmem:[%s165 + $0xa8] sm:$0xff]
      %v186 = vld [vmem:[%s165 + $0xb0] sm:$0xff]
      %v187 = vld [vmem:[%s165 + $0xc0] sm:$0xff]
      %v188 = vld [vmem:[%s165 + $0xc8] sm:$0xff]
      %v189 = vld [vmem:[%s165 + $0xd8] sm:$0xff]
      %v190 = vld [vmem:[%s165 + $0xe0] sm:$0xff]
      %v191 = vld [vmem:[%s165 + $0xf0] sm:$0xff]
      %v192 = vld [vmem:[%s165 + $0xf8] sm:$0xff]
      %v193 = vld [vmem:[%s165 + $0x108] sm:$0xff]
      %v194 = vld [vmem:[%s165 + $0x110] sm:$0xff]
      %v195 = vld [vmem:[%s165 + $0x120] sm:$0xff]
      %v196 = vld [vmem:[%s165 + $0x128] sm:$0xff]
      %v197 = vld [vmem:[%s165 + $0x138] sm:$0xff]
      %v198 = vld [vmem:[%s165 + $0x140] sm:$0xff]
      %v199 = vld [vmem:[%s165 + $0x150] sm:$0xff]
      %v200 = vld [vmem:[%s165 + $0x158] sm:$0xff]
      %v201 = vld [vmem:[%s165 + $0x168] sm:$0xff]
      %v202 = vld [vmem:[%s165 + $0x170] sm:$0xff]
      %v203 = vld [vmem:[%s1] sm:$0x7]
      %v204 = vld [vmem:[%s165 + $0x1] sm:$0xff]
      %v205 = vld [vmem:[%s165 + $0x9] sm:$0xff]
      %v206 = vld [vmem:[%s165 + $0x19] sm:$0xff]
      %v207 = vld [vmem:[%s165 + $0x21] sm:$0xff]
      %v208 = vld [vmem:[%s165 + $0x31] sm:$0xff]
      %v209 = vld [vmem:[%s165 + $0x39] sm:$0xff]
      %v210 = vld [vmem:[%s165 + $0x49] sm:$0xff]
      %v211 = vld [vmem:[%s165 + $0x51] sm:$0xff]
      %v212 = vld [vmem:[%s165 + $0x61] sm:$0xff]
      %v213 = vld [vmem:[%s165 + $0x69] sm:$0xff]
      %v214 = vld [vmem:[%s165 + $0x79] sm:$0xff]
      %v215 = vld [vmem:[%s165 + $0x81] sm:$0xff]
      %v216 = vld [vmem:[%s165 + $0x91] sm:$0xff]
      %v217 = vld [vmem:[%s165 + $0x99] sm:$0xff]
      %v218 = vld [vmem:[%s165 + $0xa9] sm:$0xff]
      %v219 = vld [vmem:[%s165 + $0xb1] sm:$0xff]
      %v220 = vld [vmem:[%s165 + $0xc1] sm:$0xff]
      %v221 = vld [vmem:[%s165 + $0xc9] sm:$0xff]
      %v222 = vld [vmem:[%s165 + $0xd9] sm:$0xff]
      %v223 = vld [vmem:[%s165 + $0xe1] sm:$0xff]
      %v224 = vld [vmem:[%s165 + $0xf1] sm:$0xff]
      %v225 = vld [vmem:[%s165 + $0xf9] sm:$0xff]
      %v226 = vld [vmem:[%s165 + $0x109] sm:$0xff]
      %v227 = vld [vmem:[%s165 + $0x111] sm:$0xff]
      %v228 = vld [vmem:[%s165 + $0x121] sm:$0xff]
      %v229 = vld [vmem:[%s165 + $0x129] sm:$0xff]
      %v230 = vld [vmem:[%s165 + $0x139] sm:$0xff]
      %v231 = vld [vmem:[%s165 + $0x141] sm:$0xff]
      %v232 = vld [vmem:[%s165 + $0x151] sm:$0xff]
      %v233 = vld [vmem:[%s165 + $0x159] sm:$0xff]
      %v234 = vld [vmem:[%s165 + $0x169] sm:$0xff]
      %v235 = vld [vmem:[%s165 + $0x171] sm:$0xff]
      %s236 = scalar_lea.vmem %s1, 4
      %v237 = vld [vmem:[%s236] sm:$0x7]
      %vm238 = vcmask 23552
      %v240 = vsel %vm238, %v204, 0
      %v243 = vsel %vm238, %v205, 0
      %v246 = vsel %vm238, %v206, 0
      %v249 = vsel %vm238, %v207, 0
      %v252 = vsel %vm238, %v208, 0
      %v255 = vsel %vm238, %v209, 0
      %v258 = vsel %vm238, %v210, 0
      %v261 = vsel %vm238, %v211, 0
      %v264 = vsel %vm238, %v212, 0
      %v267 = vsel %vm238, %v213, 0
      %v270 = vsel %vm238, %v214, 0
      %v273 = vsel %vm238, %v215, 0
      %v276 = vsel %vm238, %v216, 0
      %v279 = vsel %vm238, %v217, 0
      %v282 = vsel %vm238, %v218, 0
      %v285 = vsel %vm238, %v219, 0
      %v288 = vsel %vm238, %v220, 0
      %v291 = vsel %vm238, %v221, 0
      %v294 = vsel %vm238, %v222, 0
      %v297 = vsel %vm238, %v223, 0
      %v300 = vsel %vm238, %v224, 0
      %v303 = vsel %vm238, %v225, 0
      %v306 = vsel %vm238, %v226, 0
      %v309 = vsel %vm238, %v227, 0
      %v312 = vsel %vm238, %v228, 0
      %v315 = vsel %vm238, %v229, 0
      %v318 = vsel %vm238, %v230, 0
      %v321 = vsel %vm238, %v231, 0
      %v324 = vsel %vm238, %v232, 0
      %v327 = vsel %vm238, %v233, 0
      %v330 = vsel %vm238, %v234, 0
      %v333 = vsel %vm238, %v235, 0
      %vm335 = vcmask 1042432
      %v337 = vsel %vm335, %v237, 0
      %339 = vmatprep.subr.mxu0 0.0
      %340 = vmatpush1.msra.mxu0 0.0
      %341 = vmatprep.subr.mxu0 0.0
      %342 = vmatpush1.msra.mxu0 0.0
      %343 = vmatprep.subr.mxu0 0.0
      %344 = vmatpush1.msra.mxu0 0.0
      %345 = vmatprep.subr.mxu0 0.0
      %346 = vmatpush1.msra.mxu0 0.0
      %347 = vmatprep.subr.mxu0 0.0
      %348 = vmatpush1.msra.mxu0 0.0
      %349 = vmatprep.subr.mxu0 0.0
      %350 = vmatpush1.msra.mxu0 0.0
      %351 = vmatprep.subr.mxu0 0.0
      %352 = vmatpush1.msra.mxu0 0.0
      %353 = vmatprep.subr.mxu0 0.0
      %354 = vmatpush1.msra.mxu0 0.0
      %355 = vmatprep.subr.mxu0 0.0
      %356 = vmatpush1.msra.mxu0 0.0
      %357 = vmatprep.subr.mxu0 0.0
      %358 = vmatpush1.msra.mxu0 0.0
      %359 = vmatprep.subr.mxu0 0.0
      %360 = vmatpush1.msra.mxu0 0.0
      %361 = vmatprep.subr.mxu0 0.0
      %362 = vmatpush1.msra.mxu0 0.0
      %363 = vmatprep.subr.mxu0 0.0
      %364 = vmatpush1.msra.mxu0 0.0
      %365 = vmatprep.subr.mxu0 0.0
      %366 = vmatpush1.msra.mxu0 0.0
      %367 = vmatprep.subr.mxu0 0.0
      %368 = vmatpush1.msra.mxu0 0.0
      %369 = vmatprep.subr.mxu0 0.0
      %370 = vmatpush1.msra.mxu0 %v337
      %371 = vmatprep.subr.mxu0 0.0
      %372 = vmatpush2.msra.mxu0 0.0
      %373 = vmatprep.subr.mxu0 0.0
      %374 = vmatpush2.msra.mxu0 0.0
      %375 = vmatprep.subr.mxu0 0.0
      %376 = vmatpush2.msra.mxu0 0.0
      %377 = vmatprep.subr.mxu0 0.0
      %378 = vmatpush2.msra.mxu0 0.0
      %379 = vmatprep.subr.mxu0 0.0
      %380 = vmatpush2.msra.mxu0 0.0
      %381 = vmatprep.subr.mxu0 0.0
      %382 = vmatpush2.msra.mxu0 0.0
      %383 = vmatprep.subr.mxu0 0.0
      %384 = vmatpush2.msra.mxu0 0.0
      %385 = vmatprep.subr.mxu0 0.0
      %386 = vmatpush2.msra.mxu0 0.0
      %387 = vmatprep.subr.mxu0 0.0
      %388 = vmatpush2.msra.mxu0 0.0
      %389 = vmatprep.subr.mxu0 0.0
      %390 = vmatpush2.msra.mxu0 0.0
      %391 = vmatprep.subr.mxu0 0.0
      %392 = vmatpush2.msra.mxu0 0.0
      %393 = vmatprep.subr.mxu0 0.0
      %394 = vmatpush2.msra.mxu0 0.0
      %395 = vmatprep.subr.mxu0 0.0
      %396 = vmatpush2.msra.mxu0 0.0
      %397 = vmatprep.subr.mxu0 0.0
      %398 = vmatpush2.msra.mxu0 0.0
      %399 = vmatprep.subr.mxu0 0.0
      %400 = vmatpush2.msra.mxu0 0.0
      %401 = vmatprep.subr.mxu0 0.0
      %402 = vmatpush2.msra.mxu0 0.0
      %403 = vmatprep.mubr.f32.mxu0 0.0
      %404 = vmatmul.mubr.f32.gmra.mxu0 %v240
      %v405 = vpop.f32.mrf.mxu0
      %v406 = vadd.f32 0.0, %v405
      %v407 = vpop.f32.mrf.mxu0
      %408 = vmatprep.mubr.f32.mxu0 0.0
      %409 = vmatmul.mubr.f32.gmra.mxu0 %v243
      %v410 = vpop.f32.mrf.mxu0
      %v411 = vadd.f32 0.0, %v410
      %v412 = vpop.f32.mrf.mxu0
      %413 = vmatprep.mubr.f32.mxu0 0.0
      %414 = vmatmul.mubr.f32.gmra.mxu0 %v246
      %v415 = vpop.f32.mrf.mxu0
      %v416 = vadd.f32 0.0, %v415
      %v417 = vpop.f32.mrf.mxu0
      %418 = vmatprep.mubr.f32.mxu0 0.0
      %419 = vmatmul.mubr.f32.gmra.mxu0 %v249
      %v420 = vpop.f32.mrf.mxu0
      %v421 = vadd.f32 0.0, %v420
      %v422 = vpop.f32.mrf.mxu0
      %423 = vmatprep.mubr.f32.mxu0 0.0
      %424 = vmatmul.mubr.f32.gmra.mxu0 %v252
      %v425 = vpop.f32.mrf.mxu0
      %v426 = vadd.f32 0.0, %v425
      %v427 = vpop.f32.mrf.mxu0
      %428 = vmatprep.mubr.f32.mxu0 0.0
      %429 = vmatmul.mubr.f32.gmra.mxu0 %v255
      %v430 = vpop.f32.mrf.mxu0
      %v431 = vadd.f32 0.0, %v430
      %v432 = vpop.f32.mrf.mxu0
      %433 = vmatprep.mubr.f32.mxu0 0.0
      %434 = vmatmul.mubr.f32.gmra.mxu0 %v258
      %v435 = vpop.f32.mrf.mxu0
      %v436 = vadd.f32 0.0, %v435
      %v437 = vpop.f32.mrf.mxu0
      %438 = vmatprep.mubr.f32.mxu0 0.0
      %439 = vmatmul.mubr.f32.gmra.mxu0 %v261
      %v440 = vpop.f32.mrf.mxu0
      %v441 = vadd.f32 0.0, %v440
      %v442 = vpop.f32.mrf.mxu0
      %443 = vmatprep.mubr.f32.mxu0 0.0
      %444 = vmatmul.mubr.f32.gmra.mxu0 %v264
      %v445 = vpop.f32.mrf.mxu0
      %v446 = vadd.f32 0.0, %v445
      %v447 = vpop.f32.mrf.mxu0
      %448 = vmatprep.mubr.f32.mxu0 0.0
      %449 = vmatmul.mubr.f32.gmra.mxu0 %v267
      %v450 = vpop.f32.mrf.mxu0
      %v451 = vadd.f32 0.0, %v450
      %v452 = vpop.f32.mrf.mxu0
      %453 = vmatprep.mubr.f32.mxu0 0.0
      %454 = vmatmul.mubr.f32.gmra.mxu0 %v270
      %v455 = vpop.f32.mrf.mxu0
      %v456 = vadd.f32 0.0, %v455
      %v457 = vpop.f32.mrf.mxu0
      %458 = vmatprep.mubr.f32.mxu0 0.0
      %459 = vmatmul.mubr.f32.gmra.mxu0 %v273
      %v460 = vpop.f32.mrf.mxu0
      %v461 = vadd.f32 0.0, %v460
      %v462 = vpop.f32.mrf.mxu0
      %463 = vmatprep.mubr.f32.mxu0 0.0
      %464 = vmatmul.mubr.f32.gmra.mxu0 %v276
      %v465 = vpop.f32.mrf.mxu0
      %v466 = vadd.f32 0.0, %v465
      %v467 = vpop.f32.mrf.mxu0
      %468 = vmatprep.mubr.f32.mxu0 0.0
      %469 = vmatmul.mubr.f32.gmra.mxu0 %v279
      %v470 = vpop.f32.mrf.mxu0
      %v471 = vadd.f32 0.0, %v470
      %v472 = vpop.f32.mrf.mxu0
      %473 = vmatprep.mubr.f32.mxu0 0.0
      %474 = vmatmul.mubr.f32.gmra.mxu0 %v282
      %v475 = vpop.f32.mrf.mxu0
      %v476 = vadd.f32 0.0, %v475
      %v477 = vpop.f32.mrf.mxu0
      %478 = vmatprep.mubr.f32.mxu0 0.0
      %479 = vmatmul.mubr.f32.gmra.mxu0 %v285
      %v480 = vpop.f32.mrf.mxu0
      %v481 = vadd.f32 0.0, %v480
      %v482 = vpop.f32.mrf.mxu0
      %483 = vmatprep.mubr.f32.mxu0 0.0
      %484 = vmatmul.mubr.f32.gmra.mxu0 %v288
      %v485 = vpop.f32.mrf.mxu0
      %v486 = vadd.f32 0.0, %v485
      %v487 = vpop.f32.mrf.mxu0
      %488 = vmatprep.mubr.f32.mxu0 0.0
      %489 = vmatmul.mubr.f32.gmra.mxu0 %v291
      %v490 = vpop.f32.mrf.mxu0
      %v491 = vadd.f32 0.0, %v490
      %v492 = vpop.f32.mrf.mxu0
      %493 = vmatprep.mubr.f32.mxu0 0.0
      %494 = vmatmul.mubr.f32.gmra.mxu0 %v294
      %v495 = vpop.f32.mrf.mxu0
      %v496 = vadd.f32 0.0, %v495
      %v497 = vpop.f32.mrf.mxu0
      %498 = vmatprep.mubr.f32.mxu0 0.0
      %499 = vmatmul.mubr.f32.gmra.mxu0 %v297
      %v500 = vpop.f32.mrf.mxu0
      %v501 = vadd.f32 0.0, %v500
      %v502 = vpop.f32.mrf.mxu0
      %503 = vmatprep.mubr.f32.mxu0 0.0
      %504 = vmatmul.mubr.f32.gmra.mxu0 %v300
      %v505 = vpop.f32.mrf.mxu0
      %v506 = vadd.f32 0.0, %v505
      %v507 = vpop.f32.mrf.mxu0
      %508 = vmatprep.mubr.f32.mxu0 0.0
      %509 = vmatmul.mubr.f32.gmra.mxu0 %v303
      %v510 = vpop.f32.mrf.mxu0
      %v511 = vadd.f32 0.0, %v510
      %v512 = vpop.f32.mrf.mxu0
      %513 = vmatprep.mubr.f32.mxu0 0.0
      %514 = vmatmul.mubr.f32.gmra.mxu0 %v306
      %v515 = vpop.f32.mrf.mxu0
      %v516 = vadd.f32 0.0, %v515
      %v517 = vpop.f32.mrf.mxu0
      %518 = vmatprep.mubr.f32.mxu0 0.0
      %519 = vmatmul.mubr.f32.gmra.mxu0 %v309
      %v520 = vpop.f32.mrf.mxu0
      %v521 = vadd.f32 0.0, %v520
      %v522 = vpop.f32.mrf.mxu0
      %523 = vmatprep.mubr.f32.mxu0 0.0
      %524 = vmatmul.mubr.f32.gmra.mxu0 %v312
      %v525 = vpop.f32.mrf.mxu0
      %v526 = vadd.f32 0.0, %v525
      %v527 = vpop.f32.mrf.mxu0
      %528 = vmatprep.mubr.f32.mxu0 0.0
      %529 = vmatmul.mubr.f32.gmra.mxu0 %v315
      %v530 = vpop.f32.mrf.mxu0
      %v531 = vadd.f32 0.0, %v530
      %v532 = vpop.f32.mrf.mxu0
      %533 = vmatprep.mubr.f32.mxu0 0.0
      %534 = vmatmul.mubr.f32.gmra.mxu0 %v318
      %v535 = vpop.f32.mrf.mxu0
      %v536 = vadd.f32 0.0, %v535
      %v537 = vpop.f32.mrf.mxu0
      %538 = vmatprep.mubr.f32.mxu0 0.0
      %539 = vmatmul.mubr.f32.gmra.mxu0 %v321
      %v540 = vpop.f32.mrf.mxu0
      %v541 = vadd.f32 0.0, %v540
      %v542 = vpop.f32.mrf.mxu0
      %543 = vmatprep.mubr.f32.mxu0 0.0
      %544 = vmatmul.mubr.f32.gmra.mxu0 %v324
      %v545 = vpop.f32.mrf.mxu0
      %v546 = vadd.f32 0.0, %v545
      %v547 = vpop.f32.mrf.mxu0
      %548 = vmatprep.mubr.f32.mxu0 0.0
      %549 = vmatmul.mubr.f32.gmra.mxu0 %v327
      %v550 = vpop.f32.mrf.mxu0
      %v551 = vadd.f32 0.0, %v550
      %v552 = vpop.f32.mrf.mxu0
      %553 = vmatprep.mubr.f32.mxu0 0.0
      %554 = vmatmul.mubr.f32.gmra.mxu0 %v330
      %v555 = vpop.f32.mrf.mxu0
      %v556 = vadd.f32 0.0, %v555
      %v557 = vpop.f32.mrf.mxu0
      %558 = vmatprep.mubr.f32.mxu0 0.0
      %559 = vmatmul.mubr.f32.gmra.mxu0 %v333
      %v560 = vpop.f32.mrf.mxu0
      %v561 = vadd.f32 0.0, %v560
      %v562 = vpop.f32.mrf.mxu0
      %563 = vdwg.mxu0
      %v565 = vsel %vm238, %v171, 0
      %v568 = vsel %vm238, %v172, 0
      %v571 = vsel %vm238, %v173, 0
      %v574 = vsel %vm238, %v174, 0
      %v577 = vsel %vm238, %v175, 0
      %v580 = vsel %vm238, %v176, 0
      %v583 = vsel %vm238, %v177, 0
      %v586 = vsel %vm238, %v178, 0
      %v589 = vsel %vm238, %v179, 0
      %v592 = vsel %vm238, %v180, 0
      %v595 = vsel %vm238, %v181, 0
      %v598 = vsel %vm238, %v182, 0
      %v601 = vsel %vm238, %v183, 0
      %v604 = vsel %vm238, %v184, 0
      %v607 = vsel %vm238, %v185, 0
      %v610 = vsel %vm238, %v186, 0
      %v613 = vsel %vm238, %v187, 0
      %v616 = vsel %vm238, %v188, 0
      %v619 = vsel %vm238, %v189, 0
      %v622 = vsel %vm238, %v190, 0
      %v625 = vsel %vm238, %v191, 0
      %v628 = vsel %vm238, %v192, 0
      %v631 = vsel %vm238, %v193, 0
      %v634 = vsel %vm238, %v194, 0
      %v637 = vsel %vm238, %v195, 0
      %v640 = vsel %vm238, %v196, 0
      %v643 = vsel %vm238, %v197, 0
      %v646 = vsel %vm238, %v198, 0
      %v649 = vsel %vm238, %v199, 0
      %v652 = vsel %vm238, %v200, 0
      %v655 = vsel %vm238, %v201, 0
      %v658 = vsel %vm238, %v202, 0
      %v661 = vsel %vm335, %v203, 0
      %663 = vmatprep.subr.mxu0 0.0
      %664 = vmatpush1.msra.mxu0 0.0
      %665 = vmatprep.subr.mxu0 0.0
      %666 = vmatpush1.msra.mxu0 0.0
      %667 = vmatprep.subr.mxu0 0.0
      %668 = vmatpush1.msra.mxu0 0.0
      %669 = vmatprep.subr.mxu0 0.0
      %670 = vmatpush1.msra.mxu0 0.0
      %671 = vmatprep.subr.mxu0 0.0
      %672 = vmatpush1.msra.mxu0 0.0
      %673 = vmatprep.subr.mxu0 0.0
      %674 = vmatpush1.msra.mxu0 0.0
      %675 = vmatprep.subr.mxu0 0.0
      %676 = vmatpush1.msra.mxu0 0.0
      %677 = vmatprep.subr.mxu0 0.0
      %678 = vmatpush1.msra.mxu0 0.0
      %679 = vmatprep.subr.mxu0 0.0
      %680 = vmatpush1.msra.mxu0 0.0
      %681 = vmatprep.subr.mxu0 0.0
      %682 = vmatpush1.msra.mxu0 0.0
      %683 = vmatprep.subr.mxu0 0.0
      %684 = vmatpush1.msra.mxu0 0.0
      %685 = vmatprep.subr.mxu0 0.0
      %686 = vmatpush1.msra.mxu0 0.0
      %687 = vmatprep.subr.mxu0 0.0
      %688 = vmatpush1.msra.mxu0 0.0
      %689 = vmatprep.subr.mxu0 0.0
      %690 = vmatpush1.msra.mxu0 0.0
      %691 = vmatprep.subr.mxu0 0.0
      %692 = vmatpush1.msra.mxu0 0.0
      %693 = vmatprep.subr.mxu0 0.0
      %694 = vmatpush1.msra.mxu0 %v661
      %695 = vmatprep.subr.mxu0 0.0
      %696 = vmatpush2.msra.mxu0 0.0
      %697 = vmatprep.subr.mxu0 0.0
      %698 = vmatpush2.msra.mxu0 0.0
      %699 = vmatprep.subr.mxu0 0.0
      %700 = vmatpush2.msra.mxu0 0.0
      %701 = vmatprep.subr.mxu0 0.0
      %702 = vmatpush2.msra.mxu0 0.0
      %703 = vmatprep.subr.mxu0 0.0
      %704 = vmatpush2.msra.mxu0 0.0
      %705 = vmatprep.subr.mxu0 0.0
      %706 = vmatpush2.msra.mxu0 0.0
      %707 = vmatprep.subr.mxu0 0.0
      %708 = vmatpush2.msra.mxu0 0.0
      %709 = vmatprep.subr.mxu0 0.0
      %710 = vmatpush2.msra.mxu0 0.0
      %711 = vmatprep.subr.mxu0 0.0
      %712 = vmatpush2.msra.mxu0 0.0
      %713 = vmatprep.subr.mxu0 0.0
      %714 = vmatpush2.msra.mxu0 0.0
      %715 = vmatprep.subr.mxu0 0.0
      %716 = vmatpush2.msra.mxu0 0.0
      %717 = vmatprep.subr.mxu0 0.0
      %718 = vmatpush2.msra.mxu0 0.0
      %719 = vmatprep.subr.mxu0 0.0
      %720 = vmatpush2.msra.mxu0 0.0
      %721 = vmatprep.subr.mxu0 0.0
      %722 = vmatpush2.msra.mxu0 0.0
      %723 = vmatprep.subr.mxu0 0.0
      %724 = vmatpush2.msra.mxu0 0.0
      %725 = vmatprep.subr.mxu0 0.0
      %726 = vmatpush2.msra.mxu0 0.0
      %727 = vmatprep.mubr.f32.mxu0 0.0
      %728 = vmatmul.mubr.f32.gmra.mxu0 %v565
      %v729 = vpop.f32.mrf.mxu0
      %v730 = vadd.f32 %v406, %v729
      %v731 = vpop.f32.mrf.mxu0
      %732 = vmatprep.mubr.f32.mxu0 0.0
      %733 = vmatmul.mubr.f32.gmra.mxu0 %v568
      %v734 = vpop.f32.mrf.mxu0
      %v735 = vadd.f32 %v411, %v734
      %v736 = vpop.f32.mrf.mxu0
      %737 = vmatprep.mubr.f32.mxu0 0.0
      %738 = vmatmul.mubr.f32.gmra.mxu0 %v571
      %v739 = vpop.f32.mrf.mxu0
      %v740 = vadd.f32 %v416, %v739
      %v741 = vpop.f32.mrf.mxu0
      %742 = vmatprep.mubr.f32.mxu0 0.0
      %743 = vmatmul.mubr.f32.gmra.mxu0 %v574
      %v744 = vpop.f32.mrf.mxu0
      %v745 = vadd.f32 %v421, %v744
      %v746 = vpop.f32.mrf.mxu0
      %747 = vmatprep.mubr.f32.mxu0 0.0
      %748 = vmatmul.mubr.f32.gmra.mxu0 %v577
      %v749 = vpop.f32.mrf.mxu0
      %v750 = vadd.f32 %v426, %v749
      %v751 = vpop.f32.mrf.mxu0
      %752 = vmatprep.mubr.f32.mxu0 0.0
      %753 = vmatmul.mubr.f32.gmra.mxu0 %v580
      %v754 = vpop.f32.mrf.mxu0
      %v755 = vadd.f32 %v431, %v754
      %v756 = vpop.f32.mrf.mxu0
      %757 = vmatprep.mubr.f32.mxu0 0.0
      %758 = vmatmul.mubr.f32.gmra.mxu0 %v583
      %v759 = vpop.f32.mrf.mxu0
      %v760 = vadd.f32 %v436, %v759
      %v761 = vpop.f32.mrf.mxu0
      %762 = vmatprep.mubr.f32.mxu0 0.0
      %763 = vmatmul.mubr.f32.gmra.mxu0 %v586
      %v764 = vpop.f32.mrf.mxu0
      %v765 = vadd.f32 %v441, %v764
      %v766 = vpop.f32.mrf.mxu0
      %767 = vmatprep.mubr.f32.mxu0 0.0
      %768 = vmatmul.mubr.f32.gmra.mxu0 %v589
      %v769 = vpop.f32.mrf.mxu0
      %v770 = vadd.f32 %v446, %v769
      %v771 = vpop.f32.mrf.mxu0
      %772 = vmatprep.mubr.f32.mxu0 0.0
      %773 = vmatmul.mubr.f32.gmra.mxu0 %v592
      %v774 = vpop.f32.mrf.mxu0
      %v775 = vadd.f32 %v451, %v774
      %v776 = vpop.f32.mrf.mxu0
      %777 = vmatprep.mubr.f32.mxu0 0.0
      %778 = vmatmul.mubr.f32.gmra.mxu0 %v595
      %v779 = vpop.f32.mrf.mxu0
      %v780 = vadd.f32 %v456, %v779
      %v781 = vpop.f32.mrf.mxu0
      %782 = vmatprep.mubr.f32.mxu0 0.0
      %783 = vmatmul.mubr.f32.gmra.mxu0 %v598
      %v784 = vpop.f32.mrf.mxu0
      %v785 = vadd.f32 %v461, %v784
      %v786 = vpop.f32.mrf.mxu0
      %787 = vmatprep.mubr.f32.mxu0 0.0
      %788 = vmatmul.mubr.f32.gmra.mxu0 %v601
      %v789 = vpop.f32.mrf.mxu0
      %v790 = vadd.f32 %v466, %v789
      %v791 = vpop.f32.mrf.mxu0
      %792 = vmatprep.mubr.f32.mxu0 0.0
      %793 = vmatmul.mubr.f32.gmra.mxu0 %v604
      %v794 = vpop.f32.mrf.mxu0
      %v795 = vadd.f32 %v471, %v794
      %v796 = vpop.f32.mrf.mxu0
      %797 = vmatprep.mubr.f32.mxu0 0.0
      %798 = vmatmul.mubr.f32.gmra.mxu0 %v607
      %v799 = vpop.f32.mrf.mxu0
      %v800 = vadd.f32 %v476, %v799
      %v801 = vpop.f32.mrf.mxu0
      %802 = vmatprep.mubr.f32.mxu0 0.0
      %803 = vmatmul.mubr.f32.gmra.mxu0 %v610
      %v804 = vpop.f32.mrf.mxu0
      %v805 = vadd.f32 %v481, %v804
      %v806 = vpop.f32.mrf.mxu0
      %807 = vmatprep.mubr.f32.mxu0 0.0
      %808 = vmatmul.mubr.f32.gmra.mxu0 %v613
      %v809 = vpop.f32.mrf.mxu0
      %v810 = vadd.f32 %v486, %v809
      %v811 = vpop.f32.mrf.mxu0
      %812 = vmatprep.mubr.f32.mxu0 0.0
      %813 = vmatmul.mubr.f32.gmra.mxu0 %v616
      %v814 = vpop.f32.mrf.mxu0
      %v815 = vadd.f32 %v491, %v814
      %v816 = vpop.f32.mrf.mxu0
      %817 = vmatprep.mubr.f32.mxu0 0.0
      %818 = vmatmul.mubr.f32.gmra.mxu0 %v619
      %v819 = vpop.f32.mrf.mxu0
      %v820 = vadd.f32 %v496, %v819
      %v821 = vpop.f32.mrf.mxu0
      %822 = vmatprep.mubr.f32.mxu0 0.0
      %823 = vmatmul.mubr.f32.gmra.mxu0 %v622
      %v824 = vpop.f32.mrf.mxu0
      %v825 = vadd.f32 %v501, %v824
      %v826 = vpop.f32.mrf.mxu0
      %827 = vmatprep.mubr.f32.mxu0 0.0
      %828 = vmatmul.mubr.f32.gmra.mxu0 %v625
      %v829 = vpop.f32.mrf.mxu0
      %v830 = vadd.f32 %v506, %v829
      %v831 = vpop.f32.mrf.mxu0
      %832 = vmatprep.mubr.f32.mxu0 0.0
      %833 = vmatmul.mubr.f32.gmra.mxu0 %v628
      %v834 = vpop.f32.mrf.mxu0
      %v835 = vadd.f32 %v511, %v834
      %v836 = vpop.f32.mrf.mxu0
      %837 = vmatprep.mubr.f32.mxu0 0.0
      %838 = vmatmul.mubr.f32.gmra.mxu0 %v631
      %v839 = vpop.f32.mrf.mxu0
      %v840 = vadd.f32 %v516, %v839
      %v841 = vpop.f32.mrf.mxu0
      %842 = vmatprep.mubr.f32.mxu0 0.0
      %843 = vmatmul.mubr.f32.gmra.mxu0 %v634
      %v844 = vpop.f32.mrf.mxu0
      %v845 = vadd.f32 %v521, %v844
      %v846 = vpop.f32.mrf.mxu0
      %847 = vmatprep.mubr.f32.mxu0 0.0
      %848 = vmatmul.mubr.f32.gmra.mxu0 %v637
      %v849 = vpop.f32.mrf.mxu0
      %v850 = vadd.f32 %v526, %v849
      %v851 = vpop.f32.mrf.mxu0
      %852 = vmatprep.mubr.f32.mxu0 0.0
      %853 = vmatmul.mubr.f32.gmra.mxu0 %v640
      %v854 = vpop.f32.mrf.mxu0
      %v855 = vadd.f32 %v531, %v854
      %v856 = vpop.f32.mrf.mxu0
      %857 = vmatprep.mubr.f32.mxu0 0.0
      %858 = vmatmul.mubr.f32.gmra.mxu0 %v643
      %v859 = vpop.f32.mrf.mxu0
      %v860 = vadd.f32 %v536, %v859
      %v861 = vpop.f32.mrf.mxu0
      %862 = vmatprep.mubr.f32.mxu0 0.0
      %863 = vmatmul.mubr.f32.gmra.mxu0 %v646
      %v864 = vpop.f32.mrf.mxu0
      %v865 = vadd.f32 %v541, %v864
      %v866 = vpop.f32.mrf.mxu0
      %867 = vmatprep.mubr.f32.mxu0 0.0
      %868 = vmatmul.mubr.f32.gmra.mxu0 %v649
      %v869 = vpop.f32.mrf.mxu0
      %v870 = vadd.f32 %v546, %v869
      %v871 = vpop.f32.mrf.mxu0
      %872 = vmatprep.mubr.f32.mxu0 0.0
      %873 = vmatmul.mubr.f32.gmra.mxu0 %v652
      %v874 = vpop.f32.mrf.mxu0
      %v875 = vadd.f32 %v551, %v874
      %v876 = vpop.f32.mrf.mxu0
      %877 = vmatprep.mubr.f32.mxu0 0.0
      %878 = vmatmul.mubr.f32.gmra.mxu0 %v655
      %v879 = vpop.f32.mrf.mxu0
      %v880 = vadd.f32 %v556, %v879
      %v881 = vpop.f32.mrf.mxu0
      %882 = vmatprep.mubr.f32.mxu0 0.0
      %883 = vmatmul.mubr.f32.gmra.mxu0 %v658
      %v884 = vpop.f32.mrf.mxu0
      %v885 = vadd.f32 %v561, %v884
      %v886 = vpop.f32.mrf.mxu0
      %887 = vdwg.mxu0
      %v888 = vld [vmem:[%s165 + $0x2] sm:$0xff]
      %v889 = vld [vmem:[%s165 + $0xa] sm:$0xff]
      %v890 = vld [vmem:[%s165 + $0x1a] sm:$0xff]
      %v891 = vld [vmem:[%s165 + $0x22] sm:$0xff]
      %v892 = vld [vmem:[%s165 + $0x32] sm:$0xff]
      %v893 = vld [vmem:[%s165 + $0x3a] sm:$0xff]
      %v894 = vld [vmem:[%s165 + $0x4a] sm:$0xff]
      %v895 = vld [vmem:[%s165 + $0x52] sm:$0xff]
      %v896 = vld [vmem:[%s165 + $0x62] sm:$0xff]
      %v897 = vld [vmem:[%s165 + $0x6a] sm:$0xff]
      %v898 = vld [vmem:[%s165 + $0x7a] sm:$0xff]
      %v899 = vld [vmem:[%s165 + $0x82] sm:$0xff]
      %v900 = vld [vmem:[%s165 + $0x92] sm:$0xff]
      %v901 = vld [vmem:[%s165 + $0x9a] sm:$0xff]
      %v902 = vld [vmem:[%s165 + $0xaa] sm:$0xff]
      %v903 = vld [vmem:[%s165 + $0xb2] sm:$0xff]
      %v904 = vld [vmem:[%s165 + $0xc2] sm:$0xff]
      %v905 = vld [vmem:[%s165 + $0xca] sm:$0xff]
      %v906 = vld [vmem:[%s165 + $0xda] sm:$0xff]
      %v907 = vld [vmem:[%s165 + $0xe2] sm:$0xff]
      %v908 = vld [vmem:[%s165 + $0xf2] sm:$0xff]
      %v909 = vld [vmem:[%s165 + $0xfa] sm:$0xff]
      %v910 = vld [vmem:[%s165 + $0x10a] sm:$0xff]
      %v911 = vld [vmem:[%s165 + $0x112] sm:$0xff]
      %v912 = vld [vmem:[%s165 + $0x122] sm:$0xff]
      %v913 = vld [vmem:[%s165 + $0x12a] sm:$0xff]
      %v914 = vld [vmem:[%s165 + $0x13a] sm:$0xff]
      %v915 = vld [vmem:[%s165 + $0x142] sm:$0xff]
      %v916 = vld [vmem:[%s165 + $0x152] sm:$0xff]
      %v917 = vld [vmem:[%s165 + $0x15a] sm:$0xff]
      %v918 = vld [vmem:[%s165 + $0x16a] sm:$0xff]
      %v919 = vld [vmem:[%s165 + $0x172] sm:$0xff]
      %s920 = scalar_lea.vmem %s1, 8
      %v921 = vld [vmem:[%s920] sm:$0x7]
      %v923 = vsel %vm238, %v888, 0
      %v926 = vsel %vm238, %v889, 0
      %v929 = vsel %vm238, %v890, 0
      %v932 = vsel %vm238, %v891, 0
      %v935 = vsel %vm238, %v892, 0
      %v938 = vsel %vm238, %v893, 0
      %v941 = vsel %vm238, %v894, 0
      %v944 = vsel %vm238, %v895, 0
      %v947 = vsel %vm238, %v896, 0
      %v950 = vsel %vm238, %v897, 0
      %v953 = vsel %vm238, %v898, 0
      %v956 = vsel %vm238, %v899, 0
      %v959 = vsel %vm238, %v900, 0
      %v962 = vsel %vm238, %v901, 0
      %v965 = vsel %vm238, %v902, 0
      %v968 = vsel %vm238, %v903, 0
      %v971 = vsel %vm238, %v904, 0
      %v974 = vsel %vm238, %v905, 0
      %v977 = vsel %vm238, %v906, 0
      %v980 = vsel %vm238, %v907, 0
      %v983 = vsel %vm238, %v908, 0
      %v986 = vsel %vm238, %v909, 0
      %v989 = vsel %vm238, %v910, 0
      %v992 = vsel %vm238, %v911, 0
      %v995 = vsel %vm238, %v912, 0
      %v998 = vsel %vm238, %v913, 0
      %v1001 = vsel %vm238, %v914, 0
      %v1004 = vsel %vm238, %v915, 0
      %v1007 = vsel %vm238, %v916, 0
      %v1010 = vsel %vm238, %v917, 0
      %v1013 = vsel %vm238, %v918, 0
      %v1016 = vsel %vm238, %v919, 0
      %v1019 = vsel %vm335, %v921, 0
      %1021 = vmatprep.subr.mxu0 0.0
      %1022 = vmatpush1.msra.mxu0 0.0
      %1023 = vmatprep.subr.mxu0 0.0
      %1024 = vmatpush1.msra.mxu0 0.0
      %1025 = vmatprep.subr.mxu0 0.0
      %1026 = vmatpush1.msra.mxu0 0.0
      %1027 = vmatprep.subr.mxu0 0.0
      %1028 = vmatpush1.msra.mxu0 0.0
      %1029 = vmatprep.subr.mxu0 0.0
      %1030 = vmatpush1.msra.mxu0 0.0
      %1031 = vmatprep.subr.mxu0 0.0
      %1032 = vmatpush1.msra.mxu0 0.0
      %1033 = vmatprep.subr.mxu0 0.0
      %1034 = vmatpush1.msra.mxu0 0.0
      %1035 = vmatprep.subr.mxu0 0.0
      %1036 = vmatpush1.msra.mxu0 0.0
      %1037 = vmatprep.subr.mxu0 0.0
      %1038 = vmatpush1.msra.mxu0 0.0
      %1039 = vmatprep.subr.mxu0 0.0
      %1040 = vmatpush1.msra.mxu0 0.0
      %1041 = vmatprep.subr.mxu0 0.0
      %1042 = vmatpush1.msra.mxu0 0.0
      %1043 = vmatprep.subr.mxu0 0.0
      %1044 = vmatpush1.msra.mxu0 0.0
      %1045 = vmatprep.subr.mxu0 0.0
      %1046 = vmatpush1.msra.mxu0 0.0
      %1047 = vmatprep.subr.mxu0 0.0
      %1048 = vmatpush1.msra.mxu0 0.0
      %1049 = vmatprep.subr.mxu0 0.0
      %1050 = vmatpush1.msra.mxu0 0.0
      %1051 = vmatprep.subr.mxu0 0.0
      %1052 = vmatpush1.msra.mxu0 %v1019
      %1053 = vmatprep.subr.mxu0 0.0
      %1054 = vmatpush2.msra.mxu0 0.0
      %1055 = vmatprep.subr.mxu0 0.0
      %1056 = vmatpush2.msra.mxu0 0.0
      %1057 = vmatprep.subr.mxu0 0.0
      %1058 = vmatpush2.msra.mxu0 0.0
      %1059 = vmatprep.subr.mxu0 0.0
      %1060 = vmatpush2.msra.mxu0 0.0
      %1061 = vmatprep.subr.mxu0 0.0
      %1062 = vmatpush2.msra.mxu0 0.0
      %1063 = vmatprep.subr.mxu0 0.0
      %1064 = vmatpush2.msra.mxu0 0.0
      %1065 = vmatprep.subr.mxu0 0.0
      %1066 = vmatpush2.msra.mxu0 0.0
      %1067 = vmatprep.subr.mxu0 0.0
      %1068 = vmatpush2.msra.mxu0 0.0
      %1069 = vmatprep.subr.mxu0 0.0
      %1070 = vmatpush2.msra.mxu0 0.0
      %1071 = vmatprep.subr.mxu0 0.0
      %1072 = vmatpush2.msra.mxu0 0.0
      %1073 = vmatprep.subr.mxu0 0.0
      %1074 = vmatpush2.msra.mxu0 0.0
      %1075 = vmatprep.subr.mxu0 0.0
      %1076 = vmatpush2.msra.mxu0 0.0
      %1077 = vmatprep.subr.mxu0 0.0
      %1078 = vmatpush2.msra.mxu0 0.0
      %1079 = vmatprep.subr.mxu0 0.0
      %1080 = vmatpush2.msra.mxu0 0.0
      %1081 = vmatprep.subr.mxu0 0.0
      %1082 = vmatpush2.msra.mxu0 0.0
      %1083 = vmatprep.subr.mxu0 0.0
      %1084 = vmatpush2.msra.mxu0 0.0
      %1085 = vmatprep.mubr.f32.mxu0 0.0
      %1086 = vmatmul.mubr.f32.gmra.mxu0 %v923
      %v1087 = vpop.f32.mrf.mxu0
      %v1088 = vadd.f32 0.0, %v1087
      %v1089 = vpop.f32.mrf.mxu0
      %1090 = vmatprep.mubr.f32.mxu0 0.0
      %1091 = vmatmul.mubr.f32.gmra.mxu0 %v926
      %v1092 = vpop.f32.mrf.mxu0
      %v1093 = vadd.f32 0.0, %v1092
      %v1094 = vpop.f32.mrf.mxu0
      %1095 = vmatprep.mubr.f32.mxu0 0.0
      %1096 = vmatmul.mubr.f32.gmra.mxu0 %v929
      %v1097 = vpop.f32.mrf.mxu0
      %v1098 = vadd.f32 0.0, %v1097
      %v1099 = vpop.f32.mrf.mxu0
      %1100 = vmatprep.mubr.f32.mxu0 0.0
      %1101 = vmatmul.mubr.f32.gmra.mxu0 %v932
      %v1102 = vpop.f32.mrf.mxu0
      %v1103 = vadd.f32 0.0, %v1102
      %v1104 = vpop.f32.mrf.mxu0
      %1105 = vmatprep.mubr.f32.mxu0 0.0
      %1106 = vmatmul.mubr.f32.gmra.mxu0 %v935
      %v1107 = vpop.f32.mrf.mxu0
      %v1108 = vadd.f32 0.0, %v1107
      %v1109 = vpop.f32.mrf.mxu0
      %1110 = vmatprep.mubr.f32.mxu0 0.0
      %1111 = vmatmul.mubr.f32.gmra.mxu0 %v938
      %v1112 = vpop.f32.mrf.mxu0
      %v1113 = vadd.f32 0.0, %v1112
      %v1114 = vpop.f32.mrf.mxu0
      %1115 = vmatprep.mubr.f32.mxu0 0.0
      %1116 = vmatmul.mubr.f32.gmra.mxu0 %v941
      %v1117 = vpop.f32.mrf.mxu0
      %v1118 = vadd.f32 0.0, %v1117
      %v1119 = vpop.f32.mrf.mxu0
      %1120 = vmatprep.mubr.f32.mxu0 0.0
      %1121 = vmatmul.mubr.f32.gmra.mxu0 %v944
      %v1122 = vpop.f32.mrf.mxu0
      %v1123 = vadd.f32 0.0, %v1122
      %v1124 = vpop.f32.mrf.mxu0
      %1125 = vmatprep.mubr.f32.mxu0 0.0
      %1126 = vmatmul.mubr.f32.gmra.mxu0 %v947
      %v1127 = vpop.f32.mrf.mxu0
      %v1128 = vadd.f32 0.0, %v1127
      %v1129 = vpop.f32.mrf.mxu0
      %1130 = vmatprep.mubr.f32.mxu0 0.0
      %1131 = vmatmul.mubr.f32.gmra.mxu0 %v950
      %v1132 = vpop.f32.mrf.mxu0
      %v1133 = vadd.f32 0.0, %v1132
      %v1134 = vpop.f32.mrf.mxu0
      %1135 = vmatprep.mubr.f32.mxu0 0.0
      %1136 = vmatmul.mubr.f32.gmra.mxu0 %v953
      %v1137 = vpop.f32.mrf.mxu0
      %v1138 = vadd.f32 0.0, %v1137
      %v1139 = vpop.f32.mrf.mxu0
      %1140 = vmatprep.mubr.f32.mxu0 0.0
      %1141 = vmatmul.mubr.f32.gmra.mxu0 %v956
      %v1142 = vpop.f32.mrf.mxu0
      %v1143 = vadd.f32 0.0, %v1142
      %v1144 = vpop.f32.mrf.mxu0
      %1145 = vmatprep.mubr.f32.mxu0 0.0
      %1146 = vmatmul.mubr.f32.gmra.mxu0 %v959
      %v1147 = vpop.f32.mrf.mxu0
      %v1148 = vadd.f32 0.0, %v1147
      %v1149 = vpop.f32.mrf.mxu0
      %1150 = vmatprep.mubr.f32.mxu0 0.0
      %1151 = vmatmul.mubr.f32.gmra.mxu0 %v962
      %v1152 = vpop.f32.mrf.mxu0
      %v1153 = vadd.f32 0.0, %v1152
      %v1154 = vpop.f32.mrf.mxu0
      %1155 = vmatprep.mubr.f32.mxu0 0.0
      %1156 = vmatmul.mubr.f32.gmra.mxu0 %v965
      %v1157 = vpop.f32.mrf.mxu0
      %v1158 = vadd.f32 0.0, %v1157
      %v1159 = vpop.f32.mrf.mxu0
      %1160 = vmatprep.mubr.f32.mxu0 0.0
      %1161 = vmatmul.mubr.f32.gmra.mxu0 %v968
      %v1162 = vpop.f32.mrf.mxu0
      %v1163 = vadd.f32 0.0, %v1162
      %v1164 = vpop.f32.mrf.mxu0
      %1165 = vmatprep.mubr.f32.mxu0 0.0
      %1166 = vmatmul.mubr.f32.gmra.mxu0 %v971
      %v1167 = vpop.f32.mrf.mxu0
      %v1168 = vadd.f32 0.0, %v1167
      %v1169 = vpop.f32.mrf.mxu0
      %1170 = vmatprep.mubr.f32.mxu0 0.0
      %1171 = vmatmul.mubr.f32.gmra.mxu0 %v974
      %v1172 = vpop.f32.mrf.mxu0
      %v1173 = vadd.f32 0.0, %v1172
      %v1174 = vpop.f32.mrf.mxu0
      %1175 = vmatprep.mubr.f32.mxu0 0.0
      %1176 = vmatmul.mubr.f32.gmra.mxu0 %v977
      %v1177 = vpop.f32.mrf.mxu0
      %v1178 = vadd.f32 0.0, %v1177
      %v1179 = vpop.f32.mrf.mxu0
      %1180 = vmatprep.mubr.f32.mxu0 0.0
      %1181 = vmatmul.mubr.f32.gmra.mxu0 %v980
      %v1182 = vpop.f32.mrf.mxu0
      %v1183 = vadd.f32 0.0, %v1182
      %v1184 = vpop.f32.mrf.mxu0
      %1185 = vmatprep.mubr.f32.mxu0 0.0
      %1186 = vmatmul.mubr.f32.gmra.mxu0 %v983
      %v1187 = vpop.f32.mrf.mxu0
      %v1188 = vadd.f32 0.0, %v1187
      %v1189 = vpop.f32.mrf.mxu0
      %1190 = vmatprep.mubr.f32.mxu0 0.0
      %1191 = vmatmul.mubr.f32.gmra.mxu0 %v986
      %v1192 = vpop.f32.mrf.mxu0
      %v1193 = vadd.f32 0.0, %v1192
      %v1194 = vpop.f32.mrf.mxu0
      %1195 = vmatprep.mubr.f32.mxu0 0.0
      %1196 = vmatmul.mubr.f32.gmra.mxu0 %v989
      %v1197 = vpop.f32.mrf.mxu0
      %v1198 = vadd.f32 0.0, %v1197
      %v1199 = vpop.f32.mrf.mxu0
      %1200 = vmatprep.mubr.f32.mxu0 0.0
      %1201 = vmatmul.mubr.f32.gmra.mxu0 %v992
      %v1202 = vpop.f32.mrf.mxu0
      %v1203 = vadd.f32 0.0, %v1202
      %v1204 = vpop.f32.mrf.mxu0
      %1205 = vmatprep.mubr.f32.mxu0 0.0
      %1206 = vmatmul.mubr.f32.gmra.mxu0 %v995
      %v1207 = vpop.f32.mrf.mxu0
      %v1208 = vadd.f32 0.0, %v1207
      %v1209 = vpop.f32.mrf.mxu0
      %1210 = vmatprep.mubr.f32.mxu0 0.0
      %1211 = vmatmul.mubr.f32.gmra.mxu0 %v998
      %v1212 = vpop.f32.mrf.mxu0
      %v1213 = vadd.f32 0.0, %v1212
      %v1214 = vpop.f32.mrf.mxu0
      %1215 = vmatprep.mubr.f32.mxu0 0.0
      %1216 = vmatmul.mubr.f32.gmra.mxu0 %v1001
      %v1217 = vpop.f32.mrf.mxu0
      %v1218 = vadd.f32 0.0, %v1217
      %v1219 = vpop.f32.mrf.mxu0
      %1220 = vmatprep.mubr.f32.mxu0 0.0
      %1221 = vmatmul.mubr.f32.gmra.mxu0 %v1004
      %v1222 = vpop.f32.mrf.mxu0
      %v1223 = vadd.f32 0.0, %v1222
      %v1224 = vpop.f32.mrf.mxu0
      %1225 = vmatprep.mubr.f32.mxu0 0.0
      %1226 = vmatmul.mubr.f32.gmra.mxu0 %v1007
      %v1227 = vpop.f32.mrf.mxu0
      %v1228 = vadd.f32 0.0, %v1227
      %v1229 = vpop.f32.mrf.mxu0
      %1230 = vmatprep.mubr.f32.mxu0 0.0
      %1231 = vmatmul.mubr.f32.gmra.mxu0 %v1010
      %v1232 = vpop.f32.mrf.mxu0
      %v1233 = vadd.f32 0.0, %v1232
      %v1234 = vpop.f32.mrf.mxu0
      %1235 = vmatprep.mubr.f32.mxu0 0.0
      %1236 = vmatmul.mubr.f32.gmra.mxu0 %v1013
      %v1237 = vpop.f32.mrf.mxu0
      %v1238 = vadd.f32 0.0, %v1237
      %v1239 = vpop.f32.mrf.mxu0
      %1240 = vmatprep.mubr.f32.mxu0 0.0
      %1241 = vmatmul.mubr.f32.gmra.mxu0 %v1016
      %v1242 = vpop.f32.mrf.mxu0
      %v1243 = vadd.f32 0.0, %v1242
      %v1244 = vpop.f32.mrf.mxu0
      %1245 = vdwg.mxu0
      %v1246 = vadd.f32 %v730, %v1088
      %v1247 = vadd.f32 %v735, %v1093
      %v1248 = vadd.f32 %v740, %v1098
      %v1249 = vadd.f32 %v745, %v1103
      %v1250 = vadd.f32 %v750, %v1108
      %v1251 = vadd.f32 %v755, %v1113
      %v1252 = vadd.f32 %v760, %v1118
      %v1253 = vadd.f32 %v765, %v1123
      %v1254 = vadd.f32 %v770, %v1128
      %v1255 = vadd.f32 %v775, %v1133
      %v1256 = vadd.f32 %v780, %v1138
      %v1257 = vadd.f32 %v785, %v1143
      %v1258 = vadd.f32 %v790, %v1148
      %v1259 = vadd.f32 %v795, %v1153
      %v1260 = vadd.f32 %v800, %v1158
      %v1261 = vadd.f32 %v805, %v1163
      %v1262 = vadd.f32 %v810, %v1168
      %v1263 = vadd.f32 %v815, %v1173
      %v1264 = vadd.f32 %v820, %v1178
      %v1265 = vadd.f32 %v825, %v1183
      %v1266 = vadd.f32 %v830, %v1188
      %v1267 = vadd.f32 %v835, %v1193
      %v1268 = vadd.f32 %v840, %v1198
      %v1269 = vadd.f32 %v845, %v1203
      %v1270 = vadd.f32 %v850, %v1208
      %v1271 = vadd.f32 %v855, %v1213
      %v1272 = vadd.f32 %v860, %v1218
      %v1273 = vadd.f32 %v865, %v1223
      %v1274 = vadd.f32 %v870, %v1228
      %v1275 = vadd.f32 %v875, %v1233
      %v1276 = vadd.f32 %v880, %v1238
      %v1277 = vadd.f32 %v885, %v1243
      %s1278 = scalar_lea.vmem %s165, 24
      %v1279 = vld [vmem:[%s1278] sm:$0xff]
      %v1280 = vld [vmem:[%s1278 + $0x8] sm:$0xff]
      %v1281 = vld [vmem:[%s1278 + $0x18] sm:$0xff]
      %v1282 = vld [vmem:[%s1278 + $0x20] sm:$0xff]
      %v1283 = vld [vmem:[%s1278 + $0x30] sm:$0xff]
      %v1284 = vld [vmem:[%s1278 + $0x38] sm:$0xff]
      %v1285 = vld [vmem:[%s1278 + $0x48] sm:$0xff]
      %v1286 = vld [vmem:[%s1278 + $0x50] sm:$0xff]
      %v1287 = vld [vmem:[%s1278 + $0x60] sm:$0xff]
      %v1288 = vld [vmem:[%s1278 + $0x68] sm:$0xff]
      %v1289 = vld [vmem:[%s1278 + $0x78] sm:$0xff]
      %v1290 = vld [vmem:[%s1278 + $0x80] sm:$0xff]
      %v1291 = vld [vmem:[%s1278 + $0x90] sm:$0xff]
      %v1292 = vld [vmem:[%s1278 + $0x98] sm:$0xff]
      %v1293 = vld [vmem:[%s1278 + $0xa8] sm:$0xff]
      %v1294 = vld [vmem:[%s1278 + $0xb0] sm:$0xff]
      %v1295 = vld [vmem:[%s1278 + $0xc0] sm:$0xff]
      %v1296 = vld [vmem:[%s1278 + $0xc8] sm:$0xff]
      %v1297 = vld [vmem:[%s1278 + $0xd8] sm:$0xff]
      %v1298 = vld [vmem:[%s1278 + $0xe0] sm:$0xff]
      %v1299 = vld [vmem:[%s1278 + $0xf0] sm:$0xff]
      %v1300 = vld [vmem:[%s1278 + $0xf8] sm:$0xff]
      %v1301 = vld [vmem:[%s1278 + $0x108] sm:$0xff]
      %v1302 = vld [vmem:[%s1278 + $0x110] sm:$0xff]
      %v1303 = vld [vmem:[%s1278 + $0x120] sm:$0xff]
      %v1304 = vld [vmem:[%s1278 + $0x128] sm:$0xff]
      %v1305 = vld [vmem:[%s1278 + $0x138] sm:$0xff]
      %v1306 = vld [vmem:[%s1278 + $0x140] sm:$0xff]
      %v1307 = vld [vmem:[%s1278 + $0x150] sm:$0xff]
      %v1308 = vld [vmem:[%s1278 + $0x158] sm:$0xff]
      %v1309 = vld [vmem:[%s1278 + $0x168] sm:$0xff]
      %v1310 = vld [vmem:[%s1278 + $0x170] sm:$0xff]
      %s1311 = scalar_lea.vmem %s1, 12
      %v1312 = vld [vmem:[%s1311] sm:$0x7]
      %v1314 = vsel %vm238, %v1279, 0
      %v1317 = vsel %vm238, %v1280, 0
      %v1320 = vsel %vm238, %v1281, 0
      %v1323 = vsel %vm238, %v1282, 0
      %v1326 = vsel %vm238, %v1283, 0
      %v1329 = vsel %vm238, %v1284, 0
      %v1332 = vsel %vm238, %v1285, 0
      %v1335 = vsel %vm238, %v1286, 0
      %v1338 = vsel %vm238, %v1287, 0
      %v1341 = vsel %vm238, %v1288, 0
      %v1344 = vsel %vm238, %v1289, 0
      %v1347 = vsel %vm238, %v1290, 0
      %v1350 = vsel %vm238, %v1291, 0
      %v1353 = vsel %vm238, %v1292, 0
      %v1356 = vsel %vm238, %v1293, 0
      %v1359 = vsel %vm238, %v1294, 0
      %v1362 = vsel %vm238, %v1295, 0
      %v1365 = vsel %vm238, %v1296, 0
      %v1368 = vsel %vm238, %v1297, 0
      %v1371 = vsel %vm238, %v1298, 0
      %v1374 = vsel %vm238, %v1299, 0
      %v1377 = vsel %vm238, %v1300, 0
      %v1380 = vsel %vm238, %v1301, 0
      %v1383 = vsel %vm238, %v1302, 0
      %v1386 = vsel %vm238, %v1303, 0
      %v1389 = vsel %vm238, %v1304, 0
      %v1392 = vsel %vm238, %v1305, 0
      %v1395 = vsel %vm238, %v1306, 0
      %v1398 = vsel %vm238, %v1307, 0
      %v1401 = vsel %vm238, %v1308, 0
      %v1404 = vsel %vm238, %v1309, 0
      %v1407 = vsel %vm238, %v1310, 0
      %v1410 = vsel %vm335, %v1312, 0
      %1412 = vmatprep.subr.mxu0 0.0
      %1413 = vmatpush1.msra.mxu0 0.0
      %1414 = vmatprep.subr.mxu0 0.0
      %1415 = vmatpush1.msra.mxu0 0.0
      %1416 = vmatprep.subr.mxu0 0.0
      %1417 = vmatpush1.msra.mxu0 0.0
      %1418 = vmatprep.subr.mxu0 0.0
      %1419 = vmatpush1.msra.mxu0 0.0
      %1420 = vmatprep.subr.mxu0 0.0
      %1421 = vmatpush1.msra.mxu0 0.0
      %1422 = vmatprep.subr.mxu0 0.0
      %1423 = vmatpush1.msra.mxu0 0.0
      %1424 = vmatprep.subr.mxu0 0.0
      %1425 = vmatpush1.msra.mxu0 0.0
      %1426 = vmatprep.subr.mxu0 0.0
      %1427 = vmatpush1.msra.mxu0 0.0
      %1428 = vmatprep.subr.mxu0 0.0
      %1429 = vmatpush1.msra.mxu0 0.0
      %1430 = vmatprep.subr.mxu0 0.0
      %1431 = vmatpush1.msra.mxu0 0.0
      %1432 = vmatprep.subr.mxu0 0.0
      %1433 = vmatpush1.msra.mxu0 0.0
      %1434 = vmatprep.subr.mxu0 0.0
      %1435 = vmatpush1.msra.mxu0 0.0
      %1436 = vmatprep.subr.mxu0 0.0
      %1437 = vmatpush1.msra.mxu0 0.0
      %1438 = vmatprep.subr.mxu0 0.0
      %1439 = vmatpush1.msra.mxu0 0.0
      %1440 = vmatprep.subr.mxu0 0.0
      %1441 = vmatpush1.msra.mxu0 0.0
      %1442 = vmatprep.subr.mxu0 0.0
      %1443 = vmatpush1.msra.mxu0 %v1410
      %1444 = vmatprep.subr.mxu0 0.0
      %1445 = vmatpush2.msra.mxu0 0.0
      %1446 = vmatprep.subr.mxu0 0.0
      %1447 = vmatpush2.msra.mxu0 0.0
      %1448 = vmatprep.subr.mxu0 0.0
      %1449 = vmatpush2.msra.mxu0 0.0
      %1450 = vmatprep.subr.mxu0 0.0
      %1451 = vmatpush2.msra.mxu0 0.0
      %1452 = vmatprep.subr.mxu0 0.0
      %1453 = vmatpush2.msra.mxu0 0.0
      %1454 = vmatprep.subr.mxu0 0.0
      %1455 = vmatpush2.msra.mxu0 0.0
      %1456 = vmatprep.subr.mxu0 0.0
      %1457 = vmatpush2.msra.mxu0 0.0
      %1458 = vmatprep.subr.mxu0 0.0
      %1459 = vmatpush2.msra.mxu0 0.0
      %1460 = vmatprep.subr.mxu0 0.0
      %1461 = vmatpush2.msra.mxu0 0.0
      %1462 = vmatprep.subr.mxu0 0.0
      %1463 = vmatpush2.msra.mxu0 0.0
      %1464 = vmatprep.subr.mxu0 0.0
      %1465 = vmatpush2.msra.mxu0 0.0
      %1466 = vmatprep.subr.mxu0 0.0
      %1467 = vmatpush2.msra.mxu0 0.0
      %1468 = vmatprep.subr.mxu0 0.0
      %1469 = vmatpush2.msra.mxu0 0.0
      %1470 = vmatprep.subr.mxu0 0.0
      %1471 = vmatpush2.msra.mxu0 0.0
      %1472 = vmatprep.subr.mxu0 0.0
      %1473 = vmatpush2.msra.mxu0 0.0
      %1474 = vmatprep.subr.mxu0 0.0
      %1475 = vmatpush2.msra.mxu0 0.0
      %1476 = vmatprep.mubr.f32.mxu0 0.0
      %1477 = vmatmul.mubr.f32.gmra.mxu0 %v1314
      %v1478 = vpop.f32.mrf.mxu0
      %v1479 = vadd.f32 0.0, %v1478
      %v1480 = vpop.f32.mrf.mxu0
      %1481 = vmatprep.mubr.f32.mxu0 0.0
      %1482 = vmatmul.mubr.f32.gmra.mxu0 %v1317
      %v1483 = vpop.f32.mrf.mxu0
      %v1484 = vadd.f32 0.0, %v1483
      %v1485 = vpop.f32.mrf.mxu0
      %1486 = vmatprep.mubr.f32.mxu0 0.0
      %1487 = vmatmul.mubr.f32.gmra.mxu0 %v1320
      %v1488 = vpop.f32.mrf.mxu0
      %v1489 = vadd.f32 0.0, %v1488
      %v1490 = vpop.f32.mrf.mxu0
      %1491 = vmatprep.mubr.f32.mxu0 0.0
      %1492 = vmatmul.mubr.f32.gmra.mxu0 %v1323
      %v1493 = vpop.f32.mrf.mxu0
      %v1494 = vadd.f32 0.0, %v1493
      %v1495 = vpop.f32.mrf.mxu0
      %1496 = vmatprep.mubr.f32.mxu0 0.0
      %1497 = vmatmul.mubr.f32.gmra.mxu0 %v1326
      %v1498 = vpop.f32.mrf.mxu0
      %v1499 = vadd.f32 0.0, %v1498
      %v1500 = vpop.f32.mrf.mxu0
      %1501 = vmatprep.mubr.f32.mxu0 0.0
      %1502 = vmatmul.mubr.f32.gmra.mxu0 %v1329
      %v1503 = vpop.f32.mrf.mxu0
      %v1504 = vadd.f32 0.0, %v1503
      %v1505 = vpop.f32.mrf.mxu0
      %1506 = vmatprep.mubr.f32.mxu0 0.0
      %1507 = vmatmul.mubr.f32.gmra.mxu0 %v1332
      %v1508 = vpop.f32.mrf.mxu0
      %v1509 = vadd.f32 0.0, %v1508
      %v1510 = vpop.f32.mrf.mxu0
      %1511 = vmatprep.mubr.f32.mxu0 0.0
      %1512 = vmatmul.mubr.f32.gmra.mxu0 %v1335
      %v1513 = vpop.f32.mrf.mxu0
      %v1514 = vadd.f32 0.0, %v1513
      %v1515 = vpop.f32.mrf.mxu0
      %1516 = vmatprep.mubr.f32.mxu0 0.0
      %1517 = vmatmul.mubr.f32.gmra.mxu0 %v1338
      %v1518 = vpop.f32.mrf.mxu0
      %v1519 = vadd.f32 0.0, %v1518
      %v1520 = vpop.f32.mrf.mxu0
      %1521 = vmatprep.mubr.f32.mxu0 0.0
      %1522 = vmatmul.mubr.f32.gmra.mxu0 %v1341
      %v1523 = vpop.f32.mrf.mxu0
      %v1524 = vadd.f32 0.0, %v1523
      %v1525 = vpop.f32.mrf.mxu0
      %1526 = vmatprep.mubr.f32.mxu0 0.0
      %1527 = vmatmul.mubr.f32.gmra.mxu0 %v1344
      %v1528 = vpop.f32.mrf.mxu0
      %v1529 = vadd.f32 0.0, %v1528
      %v1530 = vpop.f32.mrf.mxu0
      %1531 = vmatprep.mubr.f32.mxu0 0.0
      %1532 = vmatmul.mubr.f32.gmra.mxu0 %v1347
      %v1533 = vpop.f32.mrf.mxu0
      %v1534 = vadd.f32 0.0, %v1533
      %v1535 = vpop.f32.mrf.mxu0
      %1536 = vmatprep.mubr.f32.mxu0 0.0
      %1537 = vmatmul.mubr.f32.gmra.mxu0 %v1350
      %v1538 = vpop.f32.mrf.mxu0
      %v1539 = vadd.f32 0.0, %v1538
      %v1540 = vpop.f32.mrf.mxu0
      %1541 = vmatprep.mubr.f32.mxu0 0.0
      %1542 = vmatmul.mubr.f32.gmra.mxu0 %v1353
      %v1543 = vpop.f32.mrf.mxu0
      %v1544 = vadd.f32 0.0, %v1543
      %v1545 = vpop.f32.mrf.mxu0
      %1546 = vmatprep.mubr.f32.mxu0 0.0
      %1547 = vmatmul.mubr.f32.gmra.mxu0 %v1356
      %v1548 = vpop.f32.mrf.mxu0
      %v1549 = vadd.f32 0.0, %v1548
      %v1550 = vpop.f32.mrf.mxu0
      %1551 = vmatprep.mubr.f32.mxu0 0.0
      %1552 = vmatmul.mubr.f32.gmra.mxu0 %v1359
      %v1553 = vpop.f32.mrf.mxu0
      %v1554 = vadd.f32 0.0, %v1553
      %v1555 = vpop.f32.mrf.mxu0
      %1556 = vmatprep.mubr.f32.mxu0 0.0
      %1557 = vmatmul.mubr.f32.gmra.mxu0 %v1362
      %v1558 = vpop.f32.mrf.mxu0
      %v1559 = vadd.f32 0.0, %v1558
      %v1560 = vpop.f32.mrf.mxu0
      %1561 = vmatprep.mubr.f32.mxu0 0.0
      %1562 = vmatmul.mubr.f32.gmra.mxu0 %v1365
      %v1563 = vpop.f32.mrf.mxu0
      %v1564 = vadd.f32 0.0, %v1563
      %v1565 = vpop.f32.mrf.mxu0
      %1566 = vmatprep.mubr.f32.mxu0 0.0
      %1567 = vmatmul.mubr.f32.gmra.mxu0 %v1368
      %v1568 = vpop.f32.mrf.mxu0
      %v1569 = vadd.f32 0.0, %v1568
      %v1570 = vpop.f32.mrf.mxu0
      %1571 = vmatprep.mubr.f32.mxu0 0.0
      %1572 = vmatmul.mubr.f32.gmra.mxu0 %v1371
      %v1573 = vpop.f32.mrf.mxu0
      %v1574 = vadd.f32 0.0, %v1573
      %v1575 = vpop.f32.mrf.mxu0
      %1576 = vmatprep.mubr.f32.mxu0 0.0
      %1577 = vmatmul.mubr.f32.gmra.mxu0 %v1374
      %v1578 = vpop.f32.mrf.mxu0
      %v1579 = vadd.f32 0.0, %v1578
      %v1580 = vpop.f32.mrf.mxu0
      %1581 = vmatprep.mubr.f32.mxu0 0.0
      %1582 = vmatmul.mubr.f32.gmra.mxu0 %v1377
      %v1583 = vpop.f32.mrf.mxu0
      %v1584 = vadd.f32 0.0, %v1583
      %v1585 = vpop.f32.mrf.mxu0
      %1586 = vmatprep.mubr.f32.mxu0 0.0
      %1587 = vmatmul.mubr.f32.gmra.mxu0 %v1380
      %v1588 = vpop.f32.mrf.mxu0
      %v1589 = vadd.f32 0.0, %v1588
      %v1590 = vpop.f32.mrf.mxu0
      %1591 = vmatprep.mubr.f32.mxu0 0.0
      %1592 = vmatmul.mubr.f32.gmra.mxu0 %v1383
      %v1593 = vpop.f32.mrf.mxu0
      %v1594 = vadd.f32 0.0, %v1593
      %v1595 = vpop.f32.mrf.mxu0
      %1596 = vmatprep.mubr.f32.mxu0 0.0
      %1597 = vmatmul.mubr.f32.gmra.mxu0 %v1386
      %v1598 = vpop.f32.mrf.mxu0
      %v1599 = vadd.f32 0.0, %v1598
      %v1600 = vpop.f32.mrf.mxu0
      %1601 = vmatprep.mubr.f32.mxu0 0.0
      %1602 = vmatmul.mubr.f32.gmra.mxu0 %v1389
      %v1603 = vpop.f32.mrf.mxu0
      %v1604 = vadd.f32 0.0, %v1603
      %v1605 = vpop.f32.mrf.mxu0
      %1606 = vmatprep.mubr.f32.mxu0 0.0
      %1607 = vmatmul.mubr.f32.gmra.mxu0 %v1392
      %v1608 = vpop.f32.mrf.mxu0
      %v1609 = vadd.f32 0.0, %v1608
      %v1610 = vpop.f32.mrf.mxu0
      %1611 = vmatprep.mubr.f32.mxu0 0.0
      %1612 = vmatmul.mubr.f32.gmra.mxu0 %v1395
      %v1613 = vpop.f32.mrf.mxu0
      %v1614 = vadd.f32 0.0, %v1613
      %v1615 = vpop.f32.mrf.mxu0
      %1616 = vmatprep.mubr.f32.mxu0 0.0
      %1617 = vmatmul.mubr.f32.gmra.mxu0 %v1398
      %v1618 = vpop.f32.mrf.mxu0
      %v1619 = vadd.f32 0.0, %v1618
      %v1620 = vpop.f32.mrf.mxu0
      %1621 = vmatprep.mubr.f32.mxu0 0.0
      %1622 = vmatmul.mubr.f32.gmra.mxu0 %v1401
      %v1623 = vpop.f32.mrf.mxu0
      %v1624 = vadd.f32 0.0, %v1623
      %v1625 = vpop.f32.mrf.mxu0
      %1626 = vmatprep.mubr.f32.mxu0 0.0
      %1627 = vmatmul.mubr.f32.gmra.mxu0 %v1404
      %v1628 = vpop.f32.mrf.mxu0
      %v1629 = vadd.f32 0.0, %v1628
      %v1630 = vpop.f32.mrf.mxu0
      %1631 = vmatprep.mubr.f32.mxu0 0.0
      %1632 = vmatmul.mubr.f32.gmra.mxu0 %v1407
      %v1633 = vpop.f32.mrf.mxu0
      %v1634 = vadd.f32 0.0, %v1633
      %v1635 = vpop.f32.mrf.mxu0
      %1636 = vdwg.mxu0
      %v1637 = vadd.f32 %v1246, %v1479
      %v1638 = vadd.f32 %v1247, %v1484
      %v1639 = vadd.f32 %v1248, %v1489
      %v1640 = vadd.f32 %v1249, %v1494
      %v1641 = vadd.f32 %v1250, %v1499
      %v1642 = vadd.f32 %v1251, %v1504
      %v1643 = vadd.f32 %v1252, %v1509
      %v1644 = vadd.f32 %v1253, %v1514
      %v1645 = vadd.f32 %v1254, %v1519
      %v1646 = vadd.f32 %v1255, %v1524
      %v1647 = vadd.f32 %v1256, %v1529
      %v1648 = vadd.f32 %v1257, %v1534
      %v1649 = vadd.f32 %v1258, %v1539
      %v1650 = vadd.f32 %v1259, %v1544
      %v1651 = vadd.f32 %v1260, %v1549
      %v1652 = vadd.f32 %v1261, %v1554
      %v1653 = vadd.f32 %v1262, %v1559
      %v1654 = vadd.f32 %v1263, %v1564
      %v1655 = vadd.f32 %v1264, %v1569
      %v1656 = vadd.f32 %v1265, %v1574
      %v1657 = vadd.f32 %v1266, %v1579
      %v1658 = vadd.f32 %v1267, %v1584
      %v1659 = vadd.f32 %v1268, %v1589
      %v1660 = vadd.f32 %v1269, %v1594
      %v1661 = vadd.f32 %v1270, %v1599
      %v1662 = vadd.f32 %v1271, %v1604
      %v1663 = vadd.f32 %v1272, %v1609
      %v1664 = vadd.f32 %v1273, %v1614
      %v1665 = vadd.f32 %v1274, %v1619
      %v1666 = vadd.f32 %v1275, %v1624
      %v1667 = vadd.f32 %v1276, %v1629
      %v1668 = vadd.f32 %v1277, %v1634
      %v1669 = vld [vmem:[%s1278 + $0x1] sm:$0xff]
      %v1670 = vld [vmem:[%s1278 + $0x9] sm:$0xff]
      %v1671 = vld [vmem:[%s1278 + $0x19] sm:$0xff]
      %v1672 = vld [vmem:[%s1278 + $0x21] sm:$0xff]
      %v1673 = vld [vmem:[%s1278 + $0x31] sm:$0xff]
      %v1674 = vld [vmem:[%s1278 + $0x39] sm:$0xff]
      %v1675 = vld [vmem:[%s1278 + $0x49] sm:$0xff]
      %v1676 = vld [vmem:[%s1278 + $0x51] sm:$0xff]
      %v1677 = vld [vmem:[%s1278 + $0x61] sm:$0xff]
      %v1678 = vld [vmem:[%s1278 + $0x69] sm:$0xff]
      %v1679 = vld [vmem:[%s1278 + $0x79] sm:$0xff]
      %v1680 = vld [vmem:[%s1278 + $0x81] sm:$0xff]
      %v1681 = vld [vmem:[%s1278 + $0x91] sm:$0xff]
      %v1682 = vld [vmem:[%s1278 + $0x99] sm:$0xff]
      %v1683 = vld [vmem:[%s1278 + $0xa9] sm:$0xff]
      %v1684 = vld [vmem:[%s1278 + $0xb1] sm:$0xff]
      %v1685 = vld [vmem:[%s1278 + $0xc1] sm:$0xff]
      %v1686 = vld [vmem:[%s1278 + $0xc9] sm:$0xff]
      %v1687 = vld [vmem:[%s1278 + $0xd9] sm:$0xff]
      %v1688 = vld [vmem:[%s1278 + $0xe1] sm:$0xff]
      %v1689 = vld [vmem:[%s1278 + $0xf1] sm:$0xff]
      %v1690 = vld [vmem:[%s1278 + $0xf9] sm:$0xff]
      %v1691 = vld [vmem:[%s1278 + $0x109] sm:$0xff]
      %v1692 = vld [vmem:[%s1278 + $0x111] sm:$0xff]
      %v1693 = vld [vmem:[%s1278 + $0x121] sm:$0xff]
      %v1694 = vld [vmem:[%s1278 + $0x129] sm:$0xff]
      %v1695 = vld [vmem:[%s1278 + $0x139] sm:$0xff]
      %v1696 = vld [vmem:[%s1278 + $0x141] sm:$0xff]
      %v1697 = vld [vmem:[%s1278 + $0x151] sm:$0xff]
      %v1698 = vld [vmem:[%s1278 + $0x159] sm:$0xff]
      %v1699 = vld [vmem:[%s1278 + $0x169] sm:$0xff]
      %v1700 = vld [vmem:[%s1278 + $0x171] sm:$0xff]
      %s1701 = scalar_lea.vmem %s1, 16
      %v1702 = vld [vmem:[%s1701] sm:$0x7]
      %v1704 = vsel %vm238, %v1669, 0
      %v1707 = vsel %vm238, %v1670, 0
      %v1710 = vsel %vm238, %v1671, 0
      %v1713 = vsel %vm238, %v1672, 0
      %v1716 = vsel %vm238, %v1673, 0
      %v1719 = vsel %vm238, %v1674, 0
      %v1722 = vsel %vm238, %v1675, 0
      %v1725 = vsel %vm238, %v1676, 0
      %v1728 = vsel %vm238, %v1677, 0
      %v1731 = vsel %vm238, %v1678, 0
      %v1734 = vsel %vm238, %v1679, 0
      %v1737 = vsel %vm238, %v1680, 0
      %v1740 = vsel %vm238, %v1681, 0
      %v1743 = vsel %vm238, %v1682, 0
      %v1746 = vsel %vm238, %v1683, 0
      %v1749 = vsel %vm238, %v1684, 0
      %v1752 = vsel %vm238, %v1685, 0
      %v1755 = vsel %vm238, %v1686, 0
      %v1758 = vsel %vm238, %v1687, 0
      %v1761 = vsel %vm238, %v1688, 0
      %v1764 = vsel %vm238, %v1689, 0
      %v1767 = vsel %vm238, %v1690, 0
      %v1770 = vsel %vm238, %v1691, 0
      %v1773 = vsel %vm238, %v1692, 0
      %v1776 = vsel %vm238, %v1693, 0
      %v1779 = vsel %vm238, %v1694, 0
      %v1782 = vsel %vm238, %v1695, 0
      %v1785 = vsel %vm238, %v1696, 0
      %v1788 = vsel %vm238, %v1697, 0
      %v1791 = vsel %vm238, %v1698, 0
      %v1794 = vsel %vm238, %v1699, 0
      %v1797 = vsel %vm238, %v1700, 0
      %v1800 = vsel %vm335, %v1702, 0
      %1802 = vmatprep.subr.mxu0 0.0
      %1803 = vmatpush1.msra.mxu0 0.0
      %1804 = vmatprep.subr.mxu0 0.0
      %1805 = vmatpush1.msra.mxu0 0.0
      %1806 = vmatprep.subr.mxu0 0.0
      %1807 = vmatpush1.msra.mxu0 0.0
      %1808 = vmatprep.subr.mxu0 0.0
      %1809 = vmatpush1.msra.mxu0 0.0
      %1810 = vmatprep.subr.mxu0 0.0
      %1811 = vmatpush1.msra.mxu0 0.0
      %1812 = vmatprep.subr.mxu0 0.0
      %1813 = vmatpush1.msra.mxu0 0.0
      %1814 = vmatprep.subr.mxu0 0.0
      %1815 = vmatpush1.msra.mxu0 0.0
      %1816 = vmatprep.subr.mxu0 0.0
      %1817 = vmatpush1.msra.mxu0 0.0
      %1818 = vmatprep.subr.mxu0 0.0
      %1819 = vmatpush1.msra.mxu0 0.0
      %1820 = vmatprep.subr.mxu0 0.0
      %1821 = vmatpush1.msra.mxu0 0.0
      %1822 = vmatprep.subr.mxu0 0.0
      %1823 = vmatpush1.msra.mxu0 0.0
      %1824 = vmatprep.subr.mxu0 0.0
      %1825 = vmatpush1.msra.mxu0 0.0
      %1826 = vmatprep.subr.mxu0 0.0
      %1827 = vmatpush1.msra.mxu0 0.0
      %1828 = vmatprep.subr.mxu0 0.0
      %1829 = vmatpush1.msra.mxu0 0.0
      %1830 = vmatprep.subr.mxu0 0.0
      %1831 = vmatpush1.msra.mxu0 0.0
      %1832 = vmatprep.subr.mxu0 0.0
      %1833 = vmatpush1.msra.mxu0 %v1800
      %1834 = vmatprep.subr.mxu0 0.0
      %1835 = vmatpush2.msra.mxu0 0.0
      %1836 = vmatprep.subr.mxu0 0.0
      %1837 = vmatpush2.msra.mxu0 0.0
      %1838 = vmatprep.subr.mxu0 0.0
      %1839 = vmatpush2.msra.mxu0 0.0
      %1840 = vmatprep.subr.mxu0 0.0
      %1841 = vmatpush2.msra.mxu0 0.0
      %1842 = vmatprep.subr.mxu0 0.0
      %1843 = vmatpush2.msra.mxu0 0.0
      %1844 = vmatprep.subr.mxu0 0.0
      %1845 = vmatpush2.msra.mxu0 0.0
      %1846 = vmatprep.subr.mxu0 0.0
      %1847 = vmatpush2.msra.mxu0 0.0
      %1848 = vmatprep.subr.mxu0 0.0
      %1849 = vmatpush2.msra.mxu0 0.0
      %1850 = vmatprep.subr.mxu0 0.0
      %1851 = vmatpush2.msra.mxu0 0.0
      %1852 = vmatprep.subr.mxu0 0.0
      %1853 = vmatpush2.msra.mxu0 0.0
      %1854 = vmatprep.subr.mxu0 0.0
      %1855 = vmatpush2.msra.mxu0 0.0
      %1856 = vmatprep.subr.mxu0 0.0
      %1857 = vmatpush2.msra.mxu0 0.0
      %1858 = vmatprep.subr.mxu0 0.0
      %1859 = vmatpush2.msra.mxu0 0.0
      %1860 = vmatprep.subr.mxu0 0.0
      %1861 = vmatpush2.msra.mxu0 0.0
      %1862 = vmatprep.subr.mxu0 0.0
      %1863 = vmatpush2.msra.mxu0 0.0
      %1864 = vmatprep.subr.mxu0 0.0
      %1865 = vmatpush2.msra.mxu0 0.0
      %1866 = vmatprep.mubr.f32.mxu0 0.0
      %1867 = vmatmul.mubr.f32.gmra.mxu0 %v1704
      %v1868 = vpop.f32.mrf.mxu0
      %v1869 = vadd.f32 0.0, %v1868
      %v1870 = vpop.f32.mrf.mxu0
      %1871 = vmatprep.mubr.f32.mxu0 0.0
      %1872 = vmatmul.mubr.f32.gmra.mxu0 %v1707
      %v1873 = vpop.f32.mrf.mxu0
      %v1874 = vadd.f32 0.0, %v1873
      %v1875 = vpop.f32.mrf.mxu0
      %1876 = vmatprep.mubr.f32.mxu0 0.0
      %1877 = vmatmul.mubr.f32.gmra.mxu0 %v1710
      %v1878 = vpop.f32.mrf.mxu0
      %v1879 = vadd.f32 0.0, %v1878
      %v1880 = vpop.f32.mrf.mxu0
      %1881 = vmatprep.mubr.f32.mxu0 0.0
      %1882 = vmatmul.mubr.f32.gmra.mxu0 %v1713
      %v1883 = vpop.f32.mrf.mxu0
      %v1884 = vadd.f32 0.0, %v1883
      %v1885 = vpop.f32.mrf.mxu0
      %1886 = vmatprep.mubr.f32.mxu0 0.0
      %1887 = vmatmul.mubr.f32.gmra.mxu0 %v1716
      %v1888 = vpop.f32.mrf.mxu0
      %v1889 = vadd.f32 0.0, %v1888
      %v1890 = vpop.f32.mrf.mxu0
      %1891 = vmatprep.mubr.f32.mxu0 0.0
      %1892 = vmatmul.mubr.f32.gmra.mxu0 %v1719
      %v1893 = vpop.f32.mrf.mxu0
      %v1894 = vadd.f32 0.0, %v1893
      %v1895 = vpop.f32.mrf.mxu0
      %1896 = vmatprep.mubr.f32.mxu0 0.0
      %1897 = vmatmul.mubr.f32.gmra.mxu0 %v1722
      %v1898 = vpop.f32.mrf.mxu0
      %v1899 = vadd.f32 0.0, %v1898
      %v1900 = vpop.f32.mrf.mxu0
      %1901 = vmatprep.mubr.f32.mxu0 0.0
      %1902 = vmatmul.mubr.f32.gmra.mxu0 %v1725
      %v1903 = vpop.f32.mrf.mxu0
      %v1904 = vadd.f32 0.0, %v1903
      %v1905 = vpop.f32.mrf.mxu0
      %1906 = vmatprep.mubr.f32.mxu0 0.0
      %1907 = vmatmul.mubr.f32.gmra.mxu0 %v1728
      %v1908 = vpop.f32.mrf.mxu0
      %v1909 = vadd.f32 0.0, %v1908
      %v1910 = vpop.f32.mrf.mxu0
      %1911 = vmatprep.mubr.f32.mxu0 0.0
      %1912 = vmatmul.mubr.f32.gmra.mxu0 %v1731
      %v1913 = vpop.f32.mrf.mxu0
      %v1914 = vadd.f32 0.0, %v1913
      %v1915 = vpop.f32.mrf.mxu0
      %1916 = vmatprep.mubr.f32.mxu0 0.0
      %1917 = vmatmul.mubr.f32.gmra.mxu0 %v1734
      %v1918 = vpop.f32.mrf.mxu0
      %v1919 = vadd.f32 0.0, %v1918
      %v1920 = vpop.f32.mrf.mxu0
      %1921 = vmatprep.mubr.f32.mxu0 0.0
      %1922 = vmatmul.mubr.f32.gmra.mxu0 %v1737
      %v1923 = vpop.f32.mrf.mxu0
      %v1924 = vadd.f32 0.0, %v1923
      %v1925 = vpop.f32.mrf.mxu0
      %1926 = vmatprep.mubr.f32.mxu0 0.0
      %1927 = vmatmul.mubr.f32.gmra.mxu0 %v1740
      %v1928 = vpop.f32.mrf.mxu0
      %v1929 = vadd.f32 0.0, %v1928
      %v1930 = vpop.f32.mrf.mxu0
      %1931 = vmatprep.mubr.f32.mxu0 0.0
      %1932 = vmatmul.mubr.f32.gmra.mxu0 %v1743
      %v1933 = vpop.f32.mrf.mxu0
      %v1934 = vadd.f32 0.0, %v1933
      %v1935 = vpop.f32.mrf.mxu0
      %1936 = vmatprep.mubr.f32.mxu0 0.0
      %1937 = vmatmul.mubr.f32.gmra.mxu0 %v1746
      %v1938 = vpop.f32.mrf.mxu0
      %v1939 = vadd.f32 0.0, %v1938
      %v1940 = vpop.f32.mrf.mxu0
      %1941 = vmatprep.mubr.f32.mxu0 0.0
      %1942 = vmatmul.mubr.f32.gmra.mxu0 %v1749
      %v1943 = vpop.f32.mrf.mxu0
      %v1944 = vadd.f32 0.0, %v1943
      %v1945 = vpop.f32.mrf.mxu0
      %1946 = vmatprep.mubr.f32.mxu0 0.0
      %1947 = vmatmul.mubr.f32.gmra.mxu0 %v1752
      %v1948 = vpop.f32.mrf.mxu0
      %v1949 = vadd.f32 0.0, %v1948
      %v1950 = vpop.f32.mrf.mxu0
      %1951 = vmatprep.mubr.f32.mxu0 0.0
      %1952 = vmatmul.mubr.f32.gmra.mxu0 %v1755
      %v1953 = vpop.f32.mrf.mxu0
      %v1954 = vadd.f32 0.0, %v1953
      %v1955 = vpop.f32.mrf.mxu0
      %1956 = vmatprep.mubr.f32.mxu0 0.0
      %1957 = vmatmul.mubr.f32.gmra.mxu0 %v1758
      %v1958 = vpop.f32.mrf.mxu0
      %v1959 = vadd.f32 0.0, %v1958
      %v1960 = vpop.f32.mrf.mxu0
      %1961 = vmatprep.mubr.f32.mxu0 0.0
      %1962 = vmatmul.mubr.f32.gmra.mxu0 %v1761
      %v1963 = vpop.f32.mrf.mxu0
      %v1964 = vadd.f32 0.0, %v1963
      %v1965 = vpop.f32.mrf.mxu0
      %1966 = vmatprep.mubr.f32.mxu0 0.0
      %1967 = vmatmul.mubr.f32.gmra.mxu0 %v1764
      %v1968 = vpop.f32.mrf.mxu0
      %v1969 = vadd.f32 0.0, %v1968
      %v1970 = vpop.f32.mrf.mxu0
      %1971 = vmatprep.mubr.f32.mxu0 0.0
      %1972 = vmatmul.mubr.f32.gmra.mxu0 %v1767
      %v1973 = vpop.f32.mrf.mxu0
      %v1974 = vadd.f32 0.0, %v1973
      %v1975 = vpop.f32.mrf.mxu0
      %1976 = vmatprep.mubr.f32.mxu0 0.0
      %1977 = vmatmul.mubr.f32.gmra.mxu0 %v1770
      %v1978 = vpop.f32.mrf.mxu0
      %v1979 = vadd.f32 0.0, %v1978
      %v1980 = vpop.f32.mrf.mxu0
      %1981 = vmatprep.mubr.f32.mxu0 0.0
      %1982 = vmatmul.mubr.f32.gmra.mxu0 %v1773
      %v1983 = vpop.f32.mrf.mxu0
      %v1984 = vadd.f32 0.0, %v1983
      %v1985 = vpop.f32.mrf.mxu0
      %1986 = vmatprep.mubr.f32.mxu0 0.0
      %1987 = vmatmul.mubr.f32.gmra.mxu0 %v1776
      %v1988 = vpop.f32.mrf.mxu0
      %v1989 = vadd.f32 0.0, %v1988
      %v1990 = vpop.f32.mrf.mxu0
      %1991 = vmatprep.mubr.f32.mxu0 0.0
      %1992 = vmatmul.mubr.f32.gmra.mxu0 %v1779
      %v1993 = vpop.f32.mrf.mxu0
      %v1994 = vadd.f32 0.0, %v1993
      %v1995 = vpop.f32.mrf.mxu0
      %1996 = vmatprep.mubr.f32.mxu0 0.0
      %1997 = vmatmul.mubr.f32.gmra.mxu0 %v1782
      %v1998 = vpop.f32.mrf.mxu0
      %v1999 = vadd.f32 0.0, %v1998
      %v2000 = vpop.f32.mrf.mxu0
      %2001 = vmatprep.mubr.f32.mxu0 0.0
      %2002 = vmatmul.mubr.f32.gmra.mxu0 %v1785
      %v2003 = vpop.f32.mrf.mxu0
      %v2004 = vadd.f32 0.0, %v2003
      %v2005 = vpop.f32.mrf.mxu0
      %2006 = vmatprep.mubr.f32.mxu0 0.0
      %2007 = vmatmul.mubr.f32.gmra.mxu0 %v1788
      %v2008 = vpop.f32.mrf.mxu0
      %v2009 = vadd.f32 0.0, %v2008
      %v2010 = vpop.f32.mrf.mxu0
      %2011 = vmatprep.mubr.f32.mxu0 0.0
      %2012 = vmatmul.mubr.f32.gmra.mxu0 %v1791
      %v2013 = vpop.f32.mrf.mxu0
      %v2014 = vadd.f32 0.0, %v2013
      %v2015 = vpop.f32.mrf.mxu0
      %2016 = vmatprep.mubr.f32.mxu0 0.0
      %2017 = vmatmul.mubr.f32.gmra.mxu0 %v1794
      %v2018 = vpop.f32.mrf.mxu0
      %v2019 = vadd.f32 0.0, %v2018
      %v2020 = vpop.f32.mrf.mxu0
      %2021 = vmatprep.mubr.f32.mxu0 0.0
      %2022 = vmatmul.mubr.f32.gmra.mxu0 %v1797
      %v2023 = vpop.f32.mrf.mxu0
      %v2024 = vadd.f32 0.0, %v2023
      %v2025 = vpop.f32.mrf.mxu0
      %2026 = vdwg.mxu0
      %v2027 = vadd.f32 %v1637, %v1869
      %v2028 = vadd.f32 %v1638, %v1874
      %v2029 = vadd.f32 %v1639, %v1879
      %v2030 = vadd.f32 %v1640, %v1884
      %v2031 = vadd.f32 %v1641, %v1889
      %v2032 = vadd.f32 %v1642, %v1894
      %v2033 = vadd.f32 %v1643, %v1899
      %v2034 = vadd.f32 %v1644, %v1904
      %v2035 = vadd.f32 %v1645, %v1909
      %v2036 = vadd.f32 %v1646, %v1914
      %v2037 = vadd.f32 %v1647, %v1919
      %v2038 = vadd.f32 %v1648, %v1924
      %v2039 = vadd.f32 %v1649, %v1929
      %v2040 = vadd.f32 %v1650, %v1934
      %v2041 = vadd.f32 %v1651, %v1939
      %v2042 = vadd.f32 %v1652, %v1944
      %v2043 = vadd.f32 %v1653, %v1949
      %v2044 = vadd.f32 %v1654, %v1954
      %v2045 = vadd.f32 %v1655, %v1959
      %v2046 = vadd.f32 %v1656, %v1964
      %v2047 = vadd.f32 %v1657, %v1969
      %v2048 = vadd.f32 %v1658, %v1974
      %v2049 = vadd.f32 %v1659, %v1979
      %v2050 = vadd.f32 %v1660, %v1984
      %v2051 = vadd.f32 %v1661, %v1989
      %v2052 = vadd.f32 %v1662, %v1994
      %v2053 = vadd.f32 %v1663, %v1999
      %v2054 = vadd.f32 %v1664, %v2004
      %v2055 = vadd.f32 %v1665, %v2009
      %v2056 = vadd.f32 %v1666, %v2014
      %v2057 = vadd.f32 %v1667, %v2019
      %v2058 = vadd.f32 %v1668, %v2024
      %v2059 = vld [vmem:[%s1278 + $0x2] sm:$0xff]
      %v2060 = vld [vmem:[%s1278 + $0xa] sm:$0xff]
      %v2061 = vld [vmem:[%s1278 + $0x1a] sm:$0xff]
      %v2062 = vld [vmem:[%s1278 + $0x22] sm:$0xff]
      %v2063 = vld [vmem:[%s1278 + $0x32] sm:$0xff]
      %v2064 = vld [vmem:[%s1278 + $0x3a] sm:$0xff]
      %v2065 = vld [vmem:[%s1278 + $0x4a] sm:$0xff]
      %v2066 = vld [vmem:[%s1278 + $0x52] sm:$0xff]
      %v2067 = vld [vmem:[%s1278 + $0x62] sm:$0xff]
      %v2068 = vld [vmem:[%s1278 + $0x6a] sm:$0xff]
      %v2069 = vld [vmem:[%s1278 + $0x7a] sm:$0xff]
      %v2070 = vld [vmem:[%s1278 + $0x82] sm:$0xff]
      %v2071 = vld [vmem:[%s1278 + $0x92] sm:$0xff]
      %v2072 = vld [vmem:[%s1278 + $0x9a] sm:$0xff]
      %v2073 = vld [vmem:[%s1278 + $0xaa] sm:$0xff]
      %v2074 = vld [vmem:[%s1278 + $0xb2] sm:$0xff]
      %v2075 = vld [vmem:[%s1278 + $0xc2] sm:$0xff]
      %v2076 = vld [vmem:[%s1278 + $0xca] sm:$0xff]
      %v2077 = vld [vmem:[%s1278 + $0xda] sm:$0xff]
      %v2078 = vld [vmem:[%s1278 + $0xe2] sm:$0xff]
      %v2079 = vld [vmem:[%s1278 + $0xf2] sm:$0xff]
      %v2080 = vld [vmem:[%s1278 + $0xfa] sm:$0xff]
      %v2081 = vld [vmem:[%s1278 + $0x10a] sm:$0xff]
      %v2082 = vld [vmem:[%s1278 + $0x112] sm:$0xff]
      %v2083 = vld [vmem:[%s1278 + $0x122] sm:$0xff]
      %v2084 = vld [vmem:[%s1278 + $0x12a] sm:$0xff]
      %v2085 = vld [vmem:[%s1278 + $0x13a] sm:$0xff]
      %v2086 = vld [vmem:[%s1278 + $0x142] sm:$0xff]
      %v2087 = vld [vmem:[%s1278 + $0x152] sm:$0xff]
      %v2088 = vld [vmem:[%s1278 + $0x15a] sm:$0xff]
      %v2089 = vld [vmem:[%s1278 + $0x16a] sm:$0xff]
      %v2090 = vld [vmem:[%s1278 + $0x172] sm:$0xff]
      %s2091 = scalar_lea.vmem %s1, 20
      %v2092 = vld [vmem:[%s2091] sm:$0x7]
      %v2094 = vsel %vm238, %v2059, 0
      %v2097 = vsel %vm238, %v2060, 0
      %v2100 = vsel %vm238, %v2061, 0
      %v2103 = vsel %vm238, %v2062, 0
      %v2106 = vsel %vm238, %v2063, 0
      %v2109 = vsel %vm238, %v2064, 0
      %v2112 = vsel %vm238, %v2065, 0
      %v2115 = vsel %vm238, %v2066, 0
      %v2118 = vsel %vm238, %v2067, 0
      %v2121 = vsel %vm238, %v2068, 0
      %v2124 = vsel %vm238, %v2069, 0
      %v2127 = vsel %vm238, %v2070, 0
      %v2130 = vsel %vm238, %v2071, 0
      %v2133 = vsel %vm238, %v2072, 0
      %v2136 = vsel %vm238, %v2073, 0
      %v2139 = vsel %vm238, %v2074, 0
      %v2142 = vsel %vm238, %v2075, 0
      %v2145 = vsel %vm238, %v2076, 0
      %v2148 = vsel %vm238, %v2077, 0
      %v2151 = vsel %vm238, %v2078, 0
      %v2154 = vsel %vm238, %v2079, 0
      %v2157 = vsel %vm238, %v2080, 0
      %v2160 = vsel %vm238, %v2081, 0
      %v2163 = vsel %vm238, %v2082, 0
      %v2166 = vsel %vm238, %v2083, 0
      %v2169 = vsel %vm238, %v2084, 0
      %v2172 = vsel %vm238, %v2085, 0
      %v2175 = vsel %vm238, %v2086, 0
      %v2178 = vsel %vm238, %v2087, 0
      %v2181 = vsel %vm238, %v2088, 0
      %v2184 = vsel %vm238, %v2089, 0
      %v2187 = vsel %vm238, %v2090, 0
      %v2190 = vsel %vm335, %v2092, 0
      %2192 = vmatprep.subr.mxu0 0.0
      %2193 = vmatpush1.msra.mxu0 0.0
      %2194 = vmatprep.subr.mxu0 0.0
      %2195 = vmatpush1.msra.mxu0 0.0
      %2196 = vmatprep.subr.mxu0 0.0
      %2197 = vmatpush1.msra.mxu0 0.0
      %2198 = vmatprep.subr.mxu0 0.0
      %2199 = vmatpush1.msra.mxu0 0.0
      %2200 = vmatprep.subr.mxu0 0.0
      %2201 = vmatpush1.msra.mxu0 0.0
      %2202 = vmatprep.subr.mxu0 0.0
      %2203 = vmatpush1.msra.mxu0 0.0
      %2204 = vmatprep.subr.mxu0 0.0
      %2205 = vmatpush1.msra.mxu0 0.0
      %2206 = vmatprep.subr.mxu0 0.0
      %2207 = vmatpush1.msra.mxu0 0.0
      %2208 = vmatprep.subr.mxu0 0.0
      %2209 = vmatpush1.msra.mxu0 0.0
      %2210 = vmatprep.subr.mxu0 0.0
      %2211 = vmatpush1.msra.mxu0 0.0
      %2212 = vmatprep.subr.mxu0 0.0
      %2213 = vmatpush1.msra.mxu0 0.0
      %2214 = vmatprep.subr.mxu0 0.0
      %2215 = vmatpush1.msra.mxu0 0.0
      %2216 = vmatprep.subr.mxu0 0.0
      %2217 = vmatpush1.msra.mxu0 0.0
      %2218 = vmatprep.subr.mxu0 0.0
      %2219 = vmatpush1.msra.mxu0 0.0
      %2220 = vmatprep.subr.mxu0 0.0
      %2221 = vmatpush1.msra.mxu0 0.0
      %2222 = vmatprep.subr.mxu0 0.0
      %2223 = vmatpush1.msra.mxu0 %v2190
      %2224 = vmatprep.subr.mxu0 0.0
      %2225 = vmatpush2.msra.mxu0 0.0
      %2226 = vmatprep.subr.mxu0 0.0
      %2227 = vmatpush2.msra.mxu0 0.0
      %2228 = vmatprep.subr.mxu0 0.0
      %2229 = vmatpush2.msra.mxu0 0.0
      %2230 = vmatprep.subr.mxu0 0.0
      %2231 = vmatpush2.msra.mxu0 0.0
      %2232 = vmatprep.subr.mxu0 0.0
      %2233 = vmatpush2.msra.mxu0 0.0
      %2234 = vmatprep.subr.mxu0 0.0
      %2235 = vmatpush2.msra.mxu0 0.0
      %2236 = vmatprep.subr.mxu0 0.0
      %2237 = vmatpush2.msra.mxu0 0.0
      %2238 = vmatprep.subr.mxu0 0.0
      %2239 = vmatpush2.msra.mxu0 0.0
      %2240 = vmatprep.subr.mxu0 0.0
      %2241 = vmatpush2.msra.mxu0 0.0
      %2242 = vmatprep.subr.mxu0 0.0
      %2243 = vmatpush2.msra.mxu0 0.0
      %2244 = vmatprep.subr.mxu0 0.0
      %2245 = vmatpush2.msra.mxu0 0.0
      %2246 = vmatprep.subr.mxu0 0.0
      %2247 = vmatpush2.msra.mxu0 0.0
      %2248 = vmatprep.subr.mxu0 0.0
      %2249 = vmatpush2.msra.mxu0 0.0
      %2250 = vmatprep.subr.mxu0 0.0
      %2251 = vmatpush2.msra.mxu0 0.0
      %2252 = vmatprep.subr.mxu0 0.0
      %2253 = vmatpush2.msra.mxu0 0.0
      %2254 = vmatprep.subr.mxu0 0.0
      %2255 = vmatpush2.msra.mxu0 0.0
      %2256 = vmatprep.mubr.f32.mxu0 0.0
      %2257 = vmatmul.mubr.f32.gmra.mxu0 %v2094
      %v2258 = vpop.f32.mrf.mxu0
      %v2259 = vadd.f32 0.0, %v2258
      %v2260 = vpop.f32.mrf.mxu0
      %2261 = vmatprep.mubr.f32.mxu0 0.0
      %2262 = vmatmul.mubr.f32.gmra.mxu0 %v2097
      %v2263 = vpop.f32.mrf.mxu0
      %v2264 = vadd.f32 0.0, %v2263
      %v2265 = vpop.f32.mrf.mxu0
      %2266 = vmatprep.mubr.f32.mxu0 0.0
      %2267 = vmatmul.mubr.f32.gmra.mxu0 %v2100
      %v2268 = vpop.f32.mrf.mxu0
      %v2269 = vadd.f32 0.0, %v2268
      %v2270 = vpop.f32.mrf.mxu0
      %2271 = vmatprep.mubr.f32.mxu0 0.0
      %2272 = vmatmul.mubr.f32.gmra.mxu0 %v2103
      %v2273 = vpop.f32.mrf.mxu0
      %v2274 = vadd.f32 0.0, %v2273
      %v2275 = vpop.f32.mrf.mxu0
      %2276 = vmatprep.mubr.f32.mxu0 0.0
      %2277 = vmatmul.mubr.f32.gmra.mxu0 %v2106
      %v2278 = vpop.f32.mrf.mxu0
      %v2279 = vadd.f32 0.0, %v2278
      %v2280 = vpop.f32.mrf.mxu0
      %2281 = vmatprep.mubr.f32.mxu0 0.0
      %2282 = vmatmul.mubr.f32.gmra.mxu0 %v2109
      %v2283 = vpop.f32.mrf.mxu0
      %v2284 = vadd.f32 0.0, %v2283
      %v2285 = vpop.f32.mrf.mxu0
      %2286 = vmatprep.mubr.f32.mxu0 0.0
      %2287 = vmatmul.mubr.f32.gmra.mxu0 %v2112
      %v2288 = vpop.f32.mrf.mxu0
      %v2289 = vadd.f32 0.0, %v2288
      %v2290 = vpop.f32.mrf.mxu0
      %2291 = vmatprep.mubr.f32.mxu0 0.0
      %2292 = vmatmul.mubr.f32.gmra.mxu0 %v2115
      %v2293 = vpop.f32.mrf.mxu0
      %v2294 = vadd.f32 0.0, %v2293
      %v2295 = vpop.f32.mrf.mxu0
      %2296 = vmatprep.mubr.f32.mxu0 0.0
      %2297 = vmatmul.mubr.f32.gmra.mxu0 %v2118
      %v2298 = vpop.f32.mrf.mxu0
      %v2299 = vadd.f32 0.0, %v2298
      %v2300 = vpop.f32.mrf.mxu0
      %2301 = vmatprep.mubr.f32.mxu0 0.0
      %2302 = vmatmul.mubr.f32.gmra.mxu0 %v2121
      %v2303 = vpop.f32.mrf.mxu0
      %v2304 = vadd.f32 0.0, %v2303
      %v2305 = vpop.f32.mrf.mxu0
      %2306 = vmatprep.mubr.f32.mxu0 0.0
      %2307 = vmatmul.mubr.f32.gmra.mxu0 %v2124
      %v2308 = vpop.f32.mrf.mxu0
      %v2309 = vadd.f32 0.0, %v2308
      %v2310 = vpop.f32.mrf.mxu0
      %2311 = vmatprep.mubr.f32.mxu0 0.0
      %2312 = vmatmul.mubr.f32.gmra.mxu0 %v2127
      %v2313 = vpop.f32.mrf.mxu0
      %v2314 = vadd.f32 0.0, %v2313
      %v2315 = vpop.f32.mrf.mxu0
      %2316 = vmatprep.mubr.f32.mxu0 0.0
      %2317 = vmatmul.mubr.f32.gmra.mxu0 %v2130
      %v2318 = vpop.f32.mrf.mxu0
      %v2319 = vadd.f32 0.0, %v2318
      %v2320 = vpop.f32.mrf.mxu0
      %2321 = vmatprep.mubr.f32.mxu0 0.0
      %2322 = vmatmul.mubr.f32.gmra.mxu0 %v2133
      %v2323 = vpop.f32.mrf.mxu0
      %v2324 = vadd.f32 0.0, %v2323
      %v2325 = vpop.f32.mrf.mxu0
      %2326 = vmatprep.mubr.f32.mxu0 0.0
      %2327 = vmatmul.mubr.f32.gmra.mxu0 %v2136
      %v2328 = vpop.f32.mrf.mxu0
      %v2329 = vadd.f32 0.0, %v2328
      %v2330 = vpop.f32.mrf.mxu0
      %2331 = vmatprep.mubr.f32.mxu0 0.0
      %2332 = vmatmul.mubr.f32.gmra.mxu0 %v2139
      %v2333 = vpop.f32.mrf.mxu0
      %v2334 = vadd.f32 0.0, %v2333
      %v2335 = vpop.f32.mrf.mxu0
      %2336 = vmatprep.mubr.f32.mxu0 0.0
      %2337 = vmatmul.mubr.f32.gmra.mxu0 %v2142
      %v2338 = vpop.f32.mrf.mxu0
      %v2339 = vadd.f32 0.0, %v2338
      %v2340 = vpop.f32.mrf.mxu0
      %2341 = vmatprep.mubr.f32.mxu0 0.0
      %2342 = vmatmul.mubr.f32.gmra.mxu0 %v2145
      %v2343 = vpop.f32.mrf.mxu0
      %v2344 = vadd.f32 0.0, %v2343
      %v2345 = vpop.f32.mrf.mxu0
      %2346 = vmatprep.mubr.f32.mxu0 0.0
      %2347 = vmatmul.mubr.f32.gmra.mxu0 %v2148
      %v2348 = vpop.f32.mrf.mxu0
      %v2349 = vadd.f32 0.0, %v2348
      %v2350 = vpop.f32.mrf.mxu0
      %2351 = vmatprep.mubr.f32.mxu0 0.0
      %2352 = vmatmul.mubr.f32.gmra.mxu0 %v2151
      %v2353 = vpop.f32.mrf.mxu0
      %v2354 = vadd.f32 0.0, %v2353
      %v2355 = vpop.f32.mrf.mxu0
      %2356 = vmatprep.mubr.f32.mxu0 0.0
      %2357 = vmatmul.mubr.f32.gmra.mxu0 %v2154
      %v2358 = vpop.f32.mrf.mxu0
      %v2359 = vadd.f32 0.0, %v2358
      %v2360 = vpop.f32.mrf.mxu0
      %2361 = vmatprep.mubr.f32.mxu0 0.0
      %2362 = vmatmul.mubr.f32.gmra.mxu0 %v2157
      %v2363 = vpop.f32.mrf.mxu0
      %v2364 = vadd.f32 0.0, %v2363
      %v2365 = vpop.f32.mrf.mxu0
      %2366 = vmatprep.mubr.f32.mxu0 0.0
      %2367 = vmatmul.mubr.f32.gmra.mxu0 %v2160
      %v2368 = vpop.f32.mrf.mxu0
      %v2369 = vadd.f32 0.0, %v2368
      %v2370 = vpop.f32.mrf.mxu0
      %2371 = vmatprep.mubr.f32.mxu0 0.0
      %2372 = vmatmul.mubr.f32.gmra.mxu0 %v2163
      %v2373 = vpop.f32.mrf.mxu0
      %v2374 = vadd.f32 0.0, %v2373
      %v2375 = vpop.f32.mrf.mxu0
      %2376 = vmatprep.mubr.f32.mxu0 0.0
      %2377 = vmatmul.mubr.f32.gmra.mxu0 %v2166
      %v2378 = vpop.f32.mrf.mxu0
      %v2379 = vadd.f32 0.0, %v2378
      %v2380 = vpop.f32.mrf.mxu0
      %2381 = vmatprep.mubr.f32.mxu0 0.0
      %2382 = vmatmul.mubr.f32.gmra.mxu0 %v2169
      %v2383 = vpop.f32.mrf.mxu0
      %v2384 = vadd.f32 0.0, %v2383
      %v2385 = vpop.f32.mrf.mxu0
      %2386 = vmatprep.mubr.f32.mxu0 0.0
      %2387 = vmatmul.mubr.f32.gmra.mxu0 %v2172
      %v2388 = vpop.f32.mrf.mxu0
      %v2389 = vadd.f32 0.0, %v2388
      %v2390 = vpop.f32.mrf.mxu0
      %2391 = vmatprep.mubr.f32.mxu0 0.0
      %2392 = vmatmul.mubr.f32.gmra.mxu0 %v2175
      %v2393 = vpop.f32.mrf.mxu0
      %v2394 = vadd.f32 0.0, %v2393
      %v2395 = vpop.f32.mrf.mxu0
      %2396 = vmatprep.mubr.f32.mxu0 0.0
      %2397 = vmatmul.mubr.f32.gmra.mxu0 %v2178
      %v2398 = vpop.f32.mrf.mxu0
      %v2399 = vadd.f32 0.0, %v2398
      %v2400 = vpop.f32.mrf.mxu0
      %2401 = vmatprep.mubr.f32.mxu0 0.0
      %2402 = vmatmul.mubr.f32.gmra.mxu0 %v2181
      %v2403 = vpop.f32.mrf.mxu0
      %v2404 = vadd.f32 0.0, %v2403
      %v2405 = vpop.f32.mrf.mxu0
      %2406 = vmatprep.mubr.f32.mxu0 0.0
      %2407 = vmatmul.mubr.f32.gmra.mxu0 %v2184
      %v2408 = vpop.f32.mrf.mxu0
      %v2409 = vadd.f32 0.0, %v2408
      %v2410 = vpop.f32.mrf.mxu0
      %2411 = vmatprep.mubr.f32.mxu0 0.0
      %2412 = vmatmul.mubr.f32.gmra.mxu0 %v2187
      %v2413 = vpop.f32.mrf.mxu0
      %v2414 = vadd.f32 0.0, %v2413
      %v2415 = vpop.f32.mrf.mxu0
      %2416 = vdwg.mxu0
      %v2417 = vadd.f32 %v2027, %v2259
      %v2418 = vadd.f32 %v2028, %v2264
      %v2419 = vadd.f32 %v2029, %v2269
      %v2420 = vadd.f32 %v2030, %v2274
      %v2421 = vadd.f32 %v2031, %v2279
      %v2422 = vadd.f32 %v2032, %v2284
      %v2423 = vadd.f32 %v2033, %v2289
      %v2424 = vadd.f32 %v2034, %v2294
      %v2425 = vadd.f32 %v2035, %v2299
      %v2426 = vadd.f32 %v2036, %v2304
      %v2427 = vadd.f32 %v2037, %v2309
      %v2428 = vadd.f32 %v2038, %v2314
      %v2429 = vadd.f32 %v2039, %v2319
      %v2430 = vadd.f32 %v2040, %v2324
      %v2431 = vadd.f32 %v2041, %v2329
      %v2432 = vadd.f32 %v2042, %v2334
      %v2433 = vadd.f32 %v2043, %v2339
      %v2434 = vadd.f32 %v2044, %v2344
      %v2435 = vadd.f32 %v2045, %v2349
      %v2436 = vadd.f32 %v2046, %v2354
      %v2437 = vadd.f32 %v2047, %v2359
      %v2438 = vadd.f32 %v2048, %v2364
      %v2439 = vadd.f32 %v2049, %v2369
      %v2440 = vadd.f32 %v2050, %v2374
      %v2441 = vadd.f32 %v2051, %v2379
      %v2442 = vadd.f32 %v2052, %v2384
      %v2443 = vadd.f32 %v2053, %v2389
      %v2444 = vadd.f32 %v2054, %v2394
      %v2445 = vadd.f32 %v2055, %v2399
      %v2446 = vadd.f32 %v2056, %v2404
      %v2447 = vadd.f32 %v2057, %v2409
      %v2448 = vadd.f32 %v2058, %v2414
      %s2449 = scalar_lea.vmem %s165, 48
      %v2450 = vld [vmem:[%s2449] sm:$0xff]
      %v2451 = vld [vmem:[%s2449 + $0x8] sm:$0xff]
      %v2452 = vld [vmem:[%s2449 + $0x18] sm:$0xff]
      %v2453 = vld [vmem:[%s2449 + $0x20] sm:$0xff]
      %v2454 = vld [vmem:[%s2449 + $0x30] sm:$0xff]
      %v2455 = vld [vmem:[%s2449 + $0x38] sm:$0xff]
      %v2456 = vld [vmem:[%s2449 + $0x48] sm:$0xff]
      %v2457 = vld [vmem:[%s2449 + $0x50] sm:$0xff]
      %v2458 = vld [vmem:[%s2449 + $0x60] sm:$0xff]
      %v2459 = vld [vmem:[%s2449 + $0x68] sm:$0xff]
      %v2460 = vld [vmem:[%s2449 + $0x78] sm:$0xff]
      %v2461 = vld [vmem:[%s2449 + $0x80] sm:$0xff]
      %v2462 = vld [vmem:[%s2449 + $0x90] sm:$0xff]
      %v2463 = vld [vmem:[%s2449 + $0x98] sm:$0xff]
      %v2464 = vld [vmem:[%s2449 + $0xa8] sm:$0xff]
      %v2465 = vld [vmem:[%s2449 + $0xb0] sm:$0xff]
      %v2466 = vld [vmem:[%s2449 + $0xc0] sm:$0xff]
      %v2467 = vld [vmem:[%s2449 + $0xc8] sm:$0xff]
      %v2468 = vld [vmem:[%s2449 + $0xd8] sm:$0xff]
      %v2469 = vld [vmem:[%s2449 + $0xe0] sm:$0xff]
      %v2470 = vld [vmem:[%s2449 + $0xf0] sm:$0xff]
      %v2471 = vld [vmem:[%s2449 + $0xf8] sm:$0xff]
      %v2472 = vld [vmem:[%s2449 + $0x108] sm:$0xff]
      %v2473 = vld [vmem:[%s2449 + $0x110] sm:$0xff]
      %v2474 = vld [vmem:[%s2449 + $0x120] sm:$0xff]
      %v2475 = vld [vmem:[%s2449 + $0x128] sm:$0xff]
      %v2476 = vld [vmem:[%s2449 + $0x138] sm:$0xff]
      %v2477 = vld [vmem:[%s2449 + $0x140] sm:$0xff]
      %v2478 = vld [vmem:[%s2449 + $0x150] sm:$0xff]
      %v2479 = vld [vmem:[%s2449 + $0x158] sm:$0xff]
      %v2480 = vld [vmem:[%s2449 + $0x168] sm:$0xff]
      %v2481 = vld [vmem:[%s2449 + $0x170] sm:$0xff]
      %s2482 = scalar_lea.vmem %s1, 24
      %v2483 = vld [vmem:[%s2482] sm:$0x7]
      %v2485 = vsel %vm238, %v2450, 0
      %v2488 = vsel %vm238, %v2451, 0
      %v2491 = vsel %vm238, %v2452, 0
      %v2494 = vsel %vm238, %v2453, 0
      %v2497 = vsel %vm238, %v2454, 0
      %v2500 = vsel %vm238, %v2455, 0
      %v2503 = vsel %vm238, %v2456, 0
      %v2506 = vsel %vm238, %v2457, 0
      %v2509 = vsel %vm238, %v2458, 0
      %v2512 = vsel %vm238, %v2459, 0
      %v2515 = vsel %vm238, %v2460, 0
      %v2518 = vsel %vm238, %v2461, 0
      %v2521 = vsel %vm238, %v2462, 0
      %v2524 = vsel %vm238, %v2463, 0
      %v2527 = vsel %vm238, %v2464, 0
      %v2530 = vsel %vm238, %v2465, 0
      %v2533 = vsel %vm238, %v2466, 0
      %v2536 = vsel %vm238, %v2467, 0
      %v2539 = vsel %vm238, %v2468, 0
      %v2542 = vsel %vm238, %v2469, 0
      %v2545 = vsel %vm238, %v2470, 0
      %v2548 = vsel %vm238, %v2471, 0
      %v2551 = vsel %vm238, %v2472, 0
      %v2554 = vsel %vm238, %v2473, 0
      %v2557 = vsel %vm238, %v2474, 0
      %v2560 = vsel %vm238, %v2475, 0
      %v2563 = vsel %vm238, %v2476, 0
      %v2566 = vsel %vm238, %v2477, 0
      %v2569 = vsel %vm238, %v2478, 0
      %v2572 = vsel %vm238, %v2479, 0
      %v2575 = vsel %vm238, %v2480, 0
      %v2578 = vsel %vm238, %v2481, 0
      %v2581 = vsel %vm335, %v2483, 0
      %2583 = vmatprep.subr.mxu0 0.0
      %2584 = vmatpush1.msra.mxu0 0.0
      %2585 = vmatprep.subr.mxu0 0.0
      %2586 = vmatpush1.msra.mxu0 0.0
      %2587 = vmatprep.subr.mxu0 0.0
      %2588 = vmatpush1.msra.mxu0 0.0
      %2589 = vmatprep.subr.mxu0 0.0
      %2590 = vmatpush1.msra.mxu0 0.0
      %2591 = vmatprep.subr.mxu0 0.0
      %2592 = vmatpush1.msra.mxu0 0.0
      %2593 = vmatprep.subr.mxu0 0.0
      %2594 = vmatpush1.msra.mxu0 0.0
      %2595 = vmatprep.subr.mxu0 0.0
      %2596 = vmatpush1.msra.mxu0 0.0
      %2597 = vmatprep.subr.mxu0 0.0
      %2598 = vmatpush1.msra.mxu0 0.0
      %2599 = vmatprep.subr.mxu0 0.0
      %2600 = vmatpush1.msra.mxu0 0.0
      %2601 = vmatprep.subr.mxu0 0.0
      %2602 = vmatpush1.msra.mxu0 0.0
      %2603 = vmatprep.subr.mxu0 0.0
      %2604 = vmatpush1.msra.mxu0 0.0
      %2605 = vmatprep.subr.mxu0 0.0
      %2606 = vmatpush1.msra.mxu0 0.0
      %2607 = vmatprep.subr.mxu0 0.0
      %2608 = vmatpush1.msra.mxu0 0.0
      %2609 = vmatprep.subr.mxu0 0.0
      %2610 = vmatpush1.msra.mxu0 0.0
      %2611 = vmatprep.subr.mxu0 0.0
      %2612 = vmatpush1.msra.mxu0 0.0
      %2613 = vmatprep.subr.mxu0 0.0
      %2614 = vmatpush1.msra.mxu0 %v2581
      %2615 = vmatprep.subr.mxu0 0.0
      %2616 = vmatpush2.msra.mxu0 0.0
      %2617 = vmatprep.subr.mxu0 0.0
      %2618 = vmatpush2.msra.mxu0 0.0
      %2619 = vmatprep.subr.mxu0 0.0
      %2620 = vmatpush2.msra.mxu0 0.0
      %2621 = vmatprep.subr.mxu0 0.0
      %2622 = vmatpush2.msra.mxu0 0.0
      %2623 = vmatprep.subr.mxu0 0.0
      %2624 = vmatpush2.msra.mxu0 0.0
      %2625 = vmatprep.subr.mxu0 0.0
      %2626 = vmatpush2.msra.mxu0 0.0
      %2627 = vmatprep.subr.mxu0 0.0
      %2628 = vmatpush2.msra.mxu0 0.0
      %2629 = vmatprep.subr.mxu0 0.0
      %2630 = vmatpush2.msra.mxu0 0.0
      %2631 = vmatprep.subr.mxu0 0.0
      %2632 = vmatpush2.msra.mxu0 0.0
      %2633 = vmatprep.subr.mxu0 0.0
      %2634 = vmatpush2.msra.mxu0 0.0
      %2635 = vmatprep.subr.mxu0 0.0
      %2636 = vmatpush2.msra.mxu0 0.0
      %2637 = vmatprep.subr.mxu0 0.0
      %2638 = vmatpush2.msra.mxu0 0.0
      %2639 = vmatprep.subr.mxu0 0.0
      %2640 = vmatpush2.msra.mxu0 0.0
      %2641 = vmatprep.subr.mxu0 0.0
      %2642 = vmatpush2.msra.mxu0 0.0
      %2643 = vmatprep.subr.mxu0 0.0
      %2644 = vmatpush2.msra.mxu0 0.0
      %2645 = vmatprep.subr.mxu0 0.0
      %2646 = vmatpush2.msra.mxu0 0.0
      %2647 = vmatprep.mubr.f32.mxu0 0.0
      %2648 = vmatmul.mubr.f32.gmra.mxu0 %v2485
      %v2649 = vpop.f32.mrf.mxu0
      %v2650 = vadd.f32 0.0, %v2649
      %v2651 = vpop.f32.mrf.mxu0
      %2652 = vmatprep.mubr.f32.mxu0 0.0
      %2653 = vmatmul.mubr.f32.gmra.mxu0 %v2488
      %v2654 = vpop.f32.mrf.mxu0
      %v2655 = vadd.f32 0.0, %v2654
      %v2656 = vpop.f32.mrf.mxu0
      %2657 = vmatprep.mubr.f32.mxu0 0.0
      %2658 = vmatmul.mubr.f32.gmra.mxu0 %v2491
      %v2659 = vpop.f32.mrf.mxu0
      %v2660 = vadd.f32 0.0, %v2659
      %v2661 = vpop.f32.mrf.mxu0
      %2662 = vmatprep.mubr.f32.mxu0 0.0
      %2663 = vmatmul.mubr.f32.gmra.mxu0 %v2494
      %v2664 = vpop.f32.mrf.mxu0
      %v2665 = vadd.f32 0.0, %v2664
      %v2666 = vpop.f32.mrf.mxu0
      %2667 = vmatprep.mubr.f32.mxu0 0.0
      %2668 = vmatmul.mubr.f32.gmra.mxu0 %v2497
      %v2669 = vpop.f32.mrf.mxu0
      %v2670 = vadd.f32 0.0, %v2669
      %v2671 = vpop.f32.mrf.mxu0
      %2672 = vmatprep.mubr.f32.mxu0 0.0
      %2673 = vmatmul.mubr.f32.gmra.mxu0 %v2500
      %v2674 = vpop.f32.mrf.mxu0
      %v2675 = vadd.f32 0.0, %v2674
      %v2676 = vpop.f32.mrf.mxu0
      %2677 = vmatprep.mubr.f32.mxu0 0.0
      %2678 = vmatmul.mubr.f32.gmra.mxu0 %v2503
      %v2679 = vpop.f32.mrf.mxu0
      %v2680 = vadd.f32 0.0, %v2679
      %v2681 = vpop.f32.mrf.mxu0
      %2682 = vmatprep.mubr.f32.mxu0 0.0
      %2683 = vmatmul.mubr.f32.gmra.mxu0 %v2506
      %v2684 = vpop.f32.mrf.mxu0
      %v2685 = vadd.f32 0.0, %v2684
      %v2686 = vpop.f32.mrf.mxu0
      %2687 = vmatprep.mubr.f32.mxu0 0.0
      %2688 = vmatmul.mubr.f32.gmra.mxu0 %v2509
      %v2689 = vpop.f32.mrf.mxu0
      %v2690 = vadd.f32 0.0, %v2689
      %v2691 = vpop.f32.mrf.mxu0
      %2692 = vmatprep.mubr.f32.mxu0 0.0
      %2693 = vmatmul.mubr.f32.gmra.mxu0 %v2512
      %v2694 = vpop.f32.mrf.mxu0
      %v2695 = vadd.f32 0.0, %v2694
      %v2696 = vpop.f32.mrf.mxu0
      %2697 = vmatprep.mubr.f32.mxu0 0.0
      %2698 = vmatmul.mubr.f32.gmra.mxu0 %v2515
      %v2699 = vpop.f32.mrf.mxu0
      %v2700 = vadd.f32 0.0, %v2699
      %v2701 = vpop.f32.mrf.mxu0
      %2702 = vmatprep.mubr.f32.mxu0 0.0
      %2703 = vmatmul.mubr.f32.gmra.mxu0 %v2518
      %v2704 = vpop.f32.mrf.mxu0
      %v2705 = vadd.f32 0.0, %v2704
      %v2706 = vpop.f32.mrf.mxu0
      %2707 = vmatprep.mubr.f32.mxu0 0.0
      %2708 = vmatmul.mubr.f32.gmra.mxu0 %v2521
      %v2709 = vpop.f32.mrf.mxu0
      %v2710 = vadd.f32 0.0, %v2709
      %v2711 = vpop.f32.mrf.mxu0
      %2712 = vmatprep.mubr.f32.mxu0 0.0
      %2713 = vmatmul.mubr.f32.gmra.mxu0 %v2524
      %v2714 = vpop.f32.mrf.mxu0
      %v2715 = vadd.f32 0.0, %v2714
      %v2716 = vpop.f32.mrf.mxu0
      %2717 = vmatprep.mubr.f32.mxu0 0.0
      %2718 = vmatmul.mubr.f32.gmra.mxu0 %v2527
      %v2719 = vpop.f32.mrf.mxu0
      %v2720 = vadd.f32 0.0, %v2719
      %v2721 = vpop.f32.mrf.mxu0
      %2722 = vmatprep.mubr.f32.mxu0 0.0
      %2723 = vmatmul.mubr.f32.gmra.mxu0 %v2530
      %v2724 = vpop.f32.mrf.mxu0
      %v2725 = vadd.f32 0.0, %v2724
      %v2726 = vpop.f32.mrf.mxu0
      %2727 = vmatprep.mubr.f32.mxu0 0.0
      %2728 = vmatmul.mubr.f32.gmra.mxu0 %v2533
      %v2729 = vpop.f32.mrf.mxu0
      %v2730 = vadd.f32 0.0, %v2729
      %v2731 = vpop.f32.mrf.mxu0
      %2732 = vmatprep.mubr.f32.mxu0 0.0
      %2733 = vmatmul.mubr.f32.gmra.mxu0 %v2536
      %v2734 = vpop.f32.mrf.mxu0
      %v2735 = vadd.f32 0.0, %v2734
      %v2736 = vpop.f32.mrf.mxu0
      %2737 = vmatprep.mubr.f32.mxu0 0.0
      %2738 = vmatmul.mubr.f32.gmra.mxu0 %v2539
      %v2739 = vpop.f32.mrf.mxu0
      %v2740 = vadd.f32 0.0, %v2739
      %v2741 = vpop.f32.mrf.mxu0
      %2742 = vmatprep.mubr.f32.mxu0 0.0
      %2743 = vmatmul.mubr.f32.gmra.mxu0 %v2542
      %v2744 = vpop.f32.mrf.mxu0
      %v2745 = vadd.f32 0.0, %v2744
      %v2746 = vpop.f32.mrf.mxu0
      %2747 = vmatprep.mubr.f32.mxu0 0.0
      %2748 = vmatmul.mubr.f32.gmra.mxu0 %v2545
      %v2749 = vpop.f32.mrf.mxu0
      %v2750 = vadd.f32 0.0, %v2749
      %v2751 = vpop.f32.mrf.mxu0
      %2752 = vmatprep.mubr.f32.mxu0 0.0
      %2753 = vmatmul.mubr.f32.gmra.mxu0 %v2548
      %v2754 = vpop.f32.mrf.mxu0
      %v2755 = vadd.f32 0.0, %v2754
      %v2756 = vpop.f32.mrf.mxu0
      %2757 = vmatprep.mubr.f32.mxu0 0.0
      %2758 = vmatmul.mubr.f32.gmra.mxu0 %v2551
      %v2759 = vpop.f32.mrf.mxu0
      %v2760 = vadd.f32 0.0, %v2759
      %v2761 = vpop.f32.mrf.mxu0
      %2762 = vmatprep.mubr.f32.mxu0 0.0
      %2763 = vmatmul.mubr.f32.gmra.mxu0 %v2554
      %v2764 = vpop.f32.mrf.mxu0
      %v2765 = vadd.f32 0.0, %v2764
      %v2766 = vpop.f32.mrf.mxu0
      %2767 = vmatprep.mubr.f32.mxu0 0.0
      %2768 = vmatmul.mubr.f32.gmra.mxu0 %v2557
      %v2769 = vpop.f32.mrf.mxu0
      %v2770 = vadd.f32 0.0, %v2769
      %v2771 = vpop.f32.mrf.mxu0
      %2772 = vmatprep.mubr.f32.mxu0 0.0
      %2773 = vmatmul.mubr.f32.gmra.mxu0 %v2560
      %v2774 = vpop.f32.mrf.mxu0
      %v2775 = vadd.f32 0.0, %v2774
      %v2776 = vpop.f32.mrf.mxu0
      %2777 = vmatprep.mubr.f32.mxu0 0.0
      %2778 = vmatmul.mubr.f32.gmra.mxu0 %v2563
      %v2779 = vpop.f32.mrf.mxu0
      %v2780 = vadd.f32 0.0, %v2779
      %v2781 = vpop.f32.mrf.mxu0
      %2782 = vmatprep.mubr.f32.mxu0 0.0
      %2783 = vmatmul.mubr.f32.gmra.mxu0 %v2566
      %v2784 = vpop.f32.mrf.mxu0
      %v2785 = vadd.f32 0.0, %v2784
      %v2786 = vpop.f32.mrf.mxu0
      %2787 = vmatprep.mubr.f32.mxu0 0.0
      %2788 = vmatmul.mubr.f32.gmra.mxu0 %v2569
      %v2789 = vpop.f32.mrf.mxu0
      %v2790 = vadd.f32 0.0, %v2789
      %v2791 = vpop.f32.mrf.mxu0
      %2792 = vmatprep.mubr.f32.mxu0 0.0
      %2793 = vmatmul.mubr.f32.gmra.mxu0 %v2572
      %v2794 = vpop.f32.mrf.mxu0
      %v2795 = vadd.f32 0.0, %v2794
      %v2796 = vpop.f32.mrf.mxu0
      %2797 = vmatprep.mubr.f32.mxu0 0.0
      %2798 = vmatmul.mubr.f32.gmra.mxu0 %v2575
      %v2799 = vpop.f32.mrf.mxu0
      %v2800 = vadd.f32 0.0, %v2799
      %v2801 = vpop.f32.mrf.mxu0
      %2802 = vmatprep.mubr.f32.mxu0 0.0
      %2803 = vmatmul.mubr.f32.gmra.mxu0 %v2578
      %v2804 = vpop.f32.mrf.mxu0
      %v2805 = vadd.f32 0.0, %v2804
      %v2806 = vpop.f32.mrf.mxu0
      %2807 = vdwg.mxu0
      %v2808 = vadd.f32 %v2417, %v2650
      %v2809 = vadd.f32 %v2418, %v2655
      %v2810 = vadd.f32 %v2419, %v2660
      %v2811 = vadd.f32 %v2420, %v2665
      %v2812 = vadd.f32 %v2421, %v2670
      %v2813 = vadd.f32 %v2422, %v2675
      %v2814 = vadd.f32 %v2423, %v2680
      %v2815 = vadd.f32 %v2424, %v2685
      %v2816 = vadd.f32 %v2425, %v2690
      %v2817 = vadd.f32 %v2426, %v2695
      %v2818 = vadd.f32 %v2427, %v2700
      %v2819 = vadd.f32 %v2428, %v2705
      %v2820 = vadd.f32 %v2429, %v2710
      %v2821 = vadd.f32 %v2430, %v2715
      %v2822 = vadd.f32 %v2431, %v2720
      %v2823 = vadd.f32 %v2432, %v2725
      %v2824 = vadd.f32 %v2433, %v2730
      %v2825 = vadd.f32 %v2434, %v2735
      %v2826 = vadd.f32 %v2435, %v2740
      %v2827 = vadd.f32 %v2436, %v2745
      %v2828 = vadd.f32 %v2437, %v2750
      %v2829 = vadd.f32 %v2438, %v2755
      %v2830 = vadd.f32 %v2439, %v2760
      %v2831 = vadd.f32 %v2440, %v2765
      %v2832 = vadd.f32 %v2441, %v2770
      %v2833 = vadd.f32 %v2442, %v2775
      %v2834 = vadd.f32 %v2443, %v2780
      %v2835 = vadd.f32 %v2444, %v2785
      %v2836 = vadd.f32 %v2445, %v2790
      %v2837 = vadd.f32 %v2446, %v2795
      %v2838 = vadd.f32 %v2447, %v2800
      %v2839 = vadd.f32 %v2448, %v2805
      %v2840 = vld [vmem:[%s2449 + $0x1] sm:$0xff]
      %v2841 = vld [vmem:[%s2449 + $0x9] sm:$0xff]
      %v2842 = vld [vmem:[%s2449 + $0x19] sm:$0xff]
      %v2843 = vld [vmem:[%s2449 + $0x21] sm:$0xff]
      %v2844 = vld [vmem:[%s2449 + $0x31] sm:$0xff]
      %v2845 = vld [vmem:[%s2449 + $0x39] sm:$0xff]
      %v2846 = vld [vmem:[%s2449 + $0x49] sm:$0xff]
      %v2847 = vld [vmem:[%s2449 + $0x51] sm:$0xff]
      %v2848 = vld [vmem:[%s2449 + $0x61] sm:$0xff]
      %v2849 = vld [vmem:[%s2449 + $0x69] sm:$0xff]
      %v2850 = vld [vmem:[%s2449 + $0x79] sm:$0xff]
      %v2851 = vld [vmem:[%s2449 + $0x81] sm:$0xff]
      %v2852 = vld [vmem:[%s2449 + $0x91] sm:$0xff]
      %v2853 = vld [vmem:[%s2449 + $0x99] sm:$0xff]
      %v2854 = vld [vmem:[%s2449 + $0xa9] sm:$0xff]
      %v2855 = vld [vmem:[%s2449 + $0xb1] sm:$0xff]
      %v2856 = vld [vmem:[%s2449 + $0xc1] sm:$0xff]
      %v2857 = vld [vmem:[%s2449 + $0xc9] sm:$0xff]
      %v2858 = vld [vmem:[%s2449 + $0xd9] sm:$0xff]
      %v2859 = vld [vmem:[%s2449 + $0xe1] sm:$0xff]
      %v2860 = vld [vmem:[%s2449 + $0xf1] sm:$0xff]
      %v2861 = vld [vmem:[%s2449 + $0xf9] sm:$0xff]
      %v2862 = vld [vmem:[%s2449 + $0x109] sm:$0xff]
      %v2863 = vld [vmem:[%s2449 + $0x111] sm:$0xff]
      %v2864 = vld [vmem:[%s2449 + $0x121] sm:$0xff]
      %v2865 = vld [vmem:[%s2449 + $0x129] sm:$0xff]
      %v2866 = vld [vmem:[%s2449 + $0x139] sm:$0xff]
      %v2867 = vld [vmem:[%s2449 + $0x141] sm:$0xff]
      %v2868 = vld [vmem:[%s2449 + $0x151] sm:$0xff]
      %v2869 = vld [vmem:[%s2449 + $0x159] sm:$0xff]
      %v2870 = vld [vmem:[%s2449 + $0x169] sm:$0xff]
      %v2871 = vld [vmem:[%s2449 + $0x171] sm:$0xff]
      %s2872 = scalar_lea.vmem %s1, 28
      %v2873 = vld [vmem:[%s2872] sm:$0x7]
      %v2875 = vsel %vm238, %v2840, 0
      %v2878 = vsel %vm238, %v2841, 0
      %v2881 = vsel %vm238, %v2842, 0
      %v2884 = vsel %vm238, %v2843, 0
      %v2887 = vsel %vm238, %v2844, 0
      %v2890 = vsel %vm238, %v2845, 0
      %v2893 = vsel %vm238, %v2846, 0
      %v2896 = vsel %vm238, %v2847, 0
      %v2899 = vsel %vm238, %v2848, 0
      %v2902 = vsel %vm238, %v2849, 0
      %v2905 = vsel %vm238, %v2850, 0
      %v2908 = vsel %vm238, %v2851, 0
      %v2911 = vsel %vm238, %v2852, 0
      %v2914 = vsel %vm238, %v2853, 0
      %v2917 = vsel %vm238, %v2854, 0
      %v2920 = vsel %vm238, %v2855, 0
      %v2923 = vsel %vm238, %v2856, 0
      %v2926 = vsel %vm238, %v2857, 0
      %v2929 = vsel %vm238, %v2858, 0
      %v2932 = vsel %vm238, %v2859, 0
      %v2935 = vsel %vm238, %v2860, 0
      %v2938 = vsel %vm238, %v2861, 0
      %v2941 = vsel %vm238, %v2862, 0
      %v2944 = vsel %vm238, %v2863, 0
      %v2947 = vsel %vm238, %v2864, 0
      %v2950 = vsel %vm238, %v2865, 0
      %v2953 = vsel %vm238, %v2866, 0
      %v2956 = vsel %vm238, %v2867, 0
      %v2959 = vsel %vm238, %v2868, 0
      %v2962 = vsel %vm238, %v2869, 0
      %v2965 = vsel %vm238, %v2870, 0
      %v2968 = vsel %vm238, %v2871, 0
      %v2971 = vsel %vm335, %v2873, 0
      %2973 = vmatprep.subr.mxu0 0.0
      %2974 = vmatpush1.msra.mxu0 0.0
      %2975 = vmatprep.subr.mxu0 0.0
      %2976 = vmatpush1.msra.mxu0 0.0
      %2977 = vmatprep.subr.mxu0 0.0
      %2978 = vmatpush1.msra.mxu0 0.0
      %2979 = vmatprep.subr.mxu0 0.0
      %2980 = vmatpush1.msra.mxu0 0.0
      %2981 = vmatprep.subr.mxu0 0.0
      %2982 = vmatpush1.msra.mxu0 0.0
      %2983 = vmatprep.subr.mxu0 0.0
      %2984 = vmatpush1.msra.mxu0 0.0
      %2985 = vmatprep.subr.mxu0 0.0
      %2986 = vmatpush1.msra.mxu0 0.0
      %2987 = vmatprep.subr.mxu0 0.0
      %2988 = vmatpush1.msra.mxu0 0.0
      %2989 = vmatprep.subr.mxu0 0.0
      %2990 = vmatpush1.msra.mxu0 0.0
      %2991 = vmatprep.subr.mxu0 0.0
      %2992 = vmatpush1.msra.mxu0 0.0
      %2993 = vmatprep.subr.mxu0 0.0
      %2994 = vmatpush1.msra.mxu0 0.0
      %2995 = vmatprep.subr.mxu0 0.0
      %2996 = vmatpush1.msra.mxu0 0.0
      %2997 = vmatprep.subr.mxu0 0.0
      %2998 = vmatpush1.msra.mxu0 0.0
      %2999 = vmatprep.subr.mxu0 0.0
      %3000 = vmatpush1.msra.mxu0 0.0
      %3001 = vmatprep.subr.mxu0 0.0
      %3002 = vmatpush1.msra.mxu0 0.0
      %3003 = vmatprep.subr.mxu0 0.0
      %3004 = vmatpush1.msra.mxu0 %v2971
      %3005 = vmatprep.subr.mxu0 0.0
      %3006 = vmatpush2.msra.mxu0 0.0
      %3007 = vmatprep.subr.mxu0 0.0
      %3008 = vmatpush2.msra.mxu0 0.0
      %3009 = vmatprep.subr.mxu0 0.0
      %3010 = vmatpush2.msra.mxu0 0.0
      %3011 = vmatprep.subr.mxu0 0.0
      %3012 = vmatpush2.msra.mxu0 0.0
      %3013 = vmatprep.subr.mxu0 0.0
      %3014 = vmatpush2.msra.mxu0 0.0
      %3015 = vmatprep.subr.mxu0 0.0
      %3016 = vmatpush2.msra.mxu0 0.0
      %3017 = vmatprep.subr.mxu0 0.0
      %3018 = vmatpush2.msra.mxu0 0.0
      %3019 = vmatprep.subr.mxu0 0.0
      %3020 = vmatpush2.msra.mxu0 0.0
      %3021 = vmatprep.subr.mxu0 0.0
      %3022 = vmatpush2.msra.mxu0 0.0
      %3023 = vmatprep.subr.mxu0 0.0
      %3024 = vmatpush2.msra.mxu0 0.0
      %3025 = vmatprep.subr.mxu0 0.0
      %3026 = vmatpush2.msra.mxu0 0.0
      %3027 = vmatprep.subr.mxu0 0.0
      %3028 = vmatpush2.msra.mxu0 0.0
      %3029 = vmatprep.subr.mxu0 0.0
      %3030 = vmatpush2.msra.mxu0 0.0
      %3031 = vmatprep.subr.mxu0 0.0
      %3032 = vmatpush2.msra.mxu0 0.0
      %3033 = vmatprep.subr.mxu0 0.0
      %3034 = vmatpush2.msra.mxu0 0.0
      %3035 = vmatprep.subr.mxu0 0.0
      %3036 = vmatpush2.msra.mxu0 0.0
      %3037 = vmatprep.mubr.f32.mxu0 0.0
      %3038 = vmatmul.mubr.f32.gmra.mxu0 %v2875
      %v3039 = vpop.f32.mrf.mxu0
      %v3040 = vadd.f32 0.0, %v3039
      %v3041 = vpop.f32.mrf.mxu0
      %3042 = vmatprep.mubr.f32.mxu0 0.0
      %3043 = vmatmul.mubr.f32.gmra.mxu0 %v2878
      %v3044 = vpop.f32.mrf.mxu0
      %v3045 = vadd.f32 0.0, %v3044
      %v3046 = vpop.f32.mrf.mxu0
      %3047 = vmatprep.mubr.f32.mxu0 0.0
      %3048 = vmatmul.mubr.f32.gmra.mxu0 %v2881
      %v3049 = vpop.f32.mrf.mxu0
      %v3050 = vadd.f32 0.0, %v3049
      %v3051 = vpop.f32.mrf.mxu0
      %3052 = vmatprep.mubr.f32.mxu0 0.0
      %3053 = vmatmul.mubr.f32.gmra.mxu0 %v2884
      %v3054 = vpop.f32.mrf.mxu0
      %v3055 = vadd.f32 0.0, %v3054
      %v3056 = vpop.f32.mrf.mxu0
      %3057 = vmatprep.mubr.f32.mxu0 0.0
      %3058 = vmatmul.mubr.f32.gmra.mxu0 %v2887
      %v3059 = vpop.f32.mrf.mxu0
      %v3060 = vadd.f32 0.0, %v3059
      %v3061 = vpop.f32.mrf.mxu0
      %3062 = vmatprep.mubr.f32.mxu0 0.0
      %3063 = vmatmul.mubr.f32.gmra.mxu0 %v2890
      %v3064 = vpop.f32.mrf.mxu0
      %v3065 = vadd.f32 0.0, %v3064
      %v3066 = vpop.f32.mrf.mxu0
      %3067 = vmatprep.mubr.f32.mxu0 0.0
      %3068 = vmatmul.mubr.f32.gmra.mxu0 %v2893
      %v3069 = vpop.f32.mrf.mxu0
      %v3070 = vadd.f32 0.0, %v3069
      %v3071 = vpop.f32.mrf.mxu0
      %3072 = vmatprep.mubr.f32.mxu0 0.0
      %3073 = vmatmul.mubr.f32.gmra.mxu0 %v2896
      %v3074 = vpop.f32.mrf.mxu0
      %v3075 = vadd.f32 0.0, %v3074
      %v3076 = vpop.f32.mrf.mxu0
      %3077 = vmatprep.mubr.f32.mxu0 0.0
      %3078 = vmatmul.mubr.f32.gmra.mxu0 %v2899
      %v3079 = vpop.f32.mrf.mxu0
      %v3080 = vadd.f32 0.0, %v3079
      %v3081 = vpop.f32.mrf.mxu0
      %3082 = vmatprep.mubr.f32.mxu0 0.0
      %3083 = vmatmul.mubr.f32.gmra.mxu0 %v2902
      %v3084 = vpop.f32.mrf.mxu0
      %v3085 = vadd.f32 0.0, %v3084
      %v3086 = vpop.f32.mrf.mxu0
      %3087 = vmatprep.mubr.f32.mxu0 0.0
      %3088 = vmatmul.mubr.f32.gmra.mxu0 %v2905
      %v3089 = vpop.f32.mrf.mxu0
      %v3090 = vadd.f32 0.0, %v3089
      %v3091 = vpop.f32.mrf.mxu0
      %3092 = vmatprep.mubr.f32.mxu0 0.0
      %3093 = vmatmul.mubr.f32.gmra.mxu0 %v2908
      %v3094 = vpop.f32.mrf.mxu0
      %v3095 = vadd.f32 0.0, %v3094
      %v3096 = vpop.f32.mrf.mxu0
      %3097 = vmatprep.mubr.f32.mxu0 0.0
      %3098 = vmatmul.mubr.f32.gmra.mxu0 %v2911
      %v3099 = vpop.f32.mrf.mxu0
      %v3100 = vadd.f32 0.0, %v3099
      %v3101 = vpop.f32.mrf.mxu0
      %3102 = vmatprep.mubr.f32.mxu0 0.0
      %3103 = vmatmul.mubr.f32.gmra.mxu0 %v2914
      %v3104 = vpop.f32.mrf.mxu0
      %v3105 = vadd.f32 0.0, %v3104
      %v3106 = vpop.f32.mrf.mxu0
      %3107 = vmatprep.mubr.f32.mxu0 0.0
      %3108 = vmatmul.mubr.f32.gmra.mxu0 %v2917
      %v3109 = vpop.f32.mrf.mxu0
      %v3110 = vadd.f32 0.0, %v3109
      %v3111 = vpop.f32.mrf.mxu0
      %3112 = vmatprep.mubr.f32.mxu0 0.0
      %3113 = vmatmul.mubr.f32.gmra.mxu0 %v2920
      %v3114 = vpop.f32.mrf.mxu0
      %v3115 = vadd.f32 0.0, %v3114
      %v3116 = vpop.f32.mrf.mxu0
      %3117 = vmatprep.mubr.f32.mxu0 0.0
      %3118 = vmatmul.mubr.f32.gmra.mxu0 %v2923
      %v3119 = vpop.f32.mrf.mxu0
      %v3120 = vadd.f32 0.0, %v3119
      %v3121 = vpop.f32.mrf.mxu0
      %3122 = vmatprep.mubr.f32.mxu0 0.0
      %3123 = vmatmul.mubr.f32.gmra.mxu0 %v2926
      %v3124 = vpop.f32.mrf.mxu0
      %v3125 = vadd.f32 0.0, %v3124
      %v3126 = vpop.f32.mrf.mxu0
      %3127 = vmatprep.mubr.f32.mxu0 0.0
      %3128 = vmatmul.mubr.f32.gmra.mxu0 %v2929
      %v3129 = vpop.f32.mrf.mxu0
      %v3130 = vadd.f32 0.0, %v3129
      %v3131 = vpop.f32.mrf.mxu0
      %3132 = vmatprep.mubr.f32.mxu0 0.0
      %3133 = vmatmul.mubr.f32.gmra.mxu0 %v2932
      %v3134 = vpop.f32.mrf.mxu0
      %v3135 = vadd.f32 0.0, %v3134
      %v3136 = vpop.f32.mrf.mxu0
      %3137 = vmatprep.mubr.f32.mxu0 0.0
      %3138 = vmatmul.mubr.f32.gmra.mxu0 %v2935
      %v3139 = vpop.f32.mrf.mxu0
      %v3140 = vadd.f32 0.0, %v3139
      %v3141 = vpop.f32.mrf.mxu0
      %3142 = vmatprep.mubr.f32.mxu0 0.0
      %3143 = vmatmul.mubr.f32.gmra.mxu0 %v2938
      %v3144 = vpop.f32.mrf.mxu0
      %v3145 = vadd.f32 0.0, %v3144
      %v3146 = vpop.f32.mrf.mxu0
      %3147 = vmatprep.mubr.f32.mxu0 0.0
      %3148 = vmatmul.mubr.f32.gmra.mxu0 %v2941
      %v3149 = vpop.f32.mrf.mxu0
      %v3150 = vadd.f32 0.0, %v3149
      %v3151 = vpop.f32.mrf.mxu0
      %3152 = vmatprep.mubr.f32.mxu0 0.0
      %3153 = vmatmul.mubr.f32.gmra.mxu0 %v2944
      %v3154 = vpop.f32.mrf.mxu0
      %v3155 = vadd.f32 0.0, %v3154
      %v3156 = vpop.f32.mrf.mxu0
      %3157 = vmatprep.mubr.f32.mxu0 0.0
      %3158 = vmatmul.mubr.f32.gmra.mxu0 %v2947
      %v3159 = vpop.f32.mrf.mxu0
      %v3160 = vadd.f32 0.0, %v3159
      %v3161 = vpop.f32.mrf.mxu0
      %3162 = vmatprep.mubr.f32.mxu0 0.0
      %3163 = vmatmul.mubr.f32.gmra.mxu0 %v2950
      %v3164 = vpop.f32.mrf.mxu0
      %v3165 = vadd.f32 0.0, %v3164
      %v3166 = vpop.f32.mrf.mxu0
      %3167 = vmatprep.mubr.f32.mxu0 0.0
      %3168 = vmatmul.mubr.f32.gmra.mxu0 %v2953
      %v3169 = vpop.f32.mrf.mxu0
      %v3170 = vadd.f32 0.0, %v3169
      %v3171 = vpop.f32.mrf.mxu0
      %3172 = vmatprep.mubr.f32.mxu0 0.0
      %3173 = vmatmul.mubr.f32.gmra.mxu0 %v2956
      %v3174 = vpop.f32.mrf.mxu0
      %v3175 = vadd.f32 0.0, %v3174
      %v3176 = vpop.f32.mrf.mxu0
      %3177 = vmatprep.mubr.f32.mxu0 0.0
      %3178 = vmatmul.mubr.f32.gmra.mxu0 %v2959
      %v3179 = vpop.f32.mrf.mxu0
      %v3180 = vadd.f32 0.0, %v3179
      %v3181 = vpop.f32.mrf.mxu0
      %3182 = vmatprep.mubr.f32.mxu0 0.0
      %3183 = vmatmul.mubr.f32.gmra.mxu0 %v2962
      %v3184 = vpop.f32.mrf.mxu0
      %v3185 = vadd.f32 0.0, %v3184
      %v3186 = vpop.f32.mrf.mxu0
      %3187 = vmatprep.mubr.f32.mxu0 0.0
      %3188 = vmatmul.mubr.f32.gmra.mxu0 %v2965
      %v3189 = vpop.f32.mrf.mxu0
      %v3190 = vadd.f32 0.0, %v3189
      %v3191 = vpop.f32.mrf.mxu0
      %3192 = vmatprep.mubr.f32.mxu0 0.0
      %3193 = vmatmul.mubr.f32.gmra.mxu0 %v2968
      %v3194 = vpop.f32.mrf.mxu0
      %v3195 = vadd.f32 0.0, %v3194
      %v3196 = vpop.f32.mrf.mxu0
      %3197 = vdwg.mxu0
      %v3198 = vadd.f32 %v2808, %v3040
      %v3199 = vadd.f32 %v2809, %v3045
      %v3200 = vadd.f32 %v2810, %v3050
      %v3201 = vadd.f32 %v2811, %v3055
      %v3202 = vadd.f32 %v2812, %v3060
      %v3203 = vadd.f32 %v2813, %v3065
      %v3204 = vadd.f32 %v2814, %v3070
      %v3205 = vadd.f32 %v2815, %v3075
      %v3206 = vadd.f32 %v2816, %v3080
      %v3207 = vadd.f32 %v2817, %v3085
      %v3208 = vadd.f32 %v2818, %v3090
      %v3209 = vadd.f32 %v2819, %v3095
      %v3210 = vadd.f32 %v2820, %v3100
      %v3211 = vadd.f32 %v2821, %v3105
      %v3212 = vadd.f32 %v2822, %v3110
      %v3213 = vadd.f32 %v2823, %v3115
      %v3214 = vadd.f32 %v2824, %v3120
      %v3215 = vadd.f32 %v2825, %v3125
      %v3216 = vadd.f32 %v2826, %v3130
      %v3217 = vadd.f32 %v2827, %v3135
      %v3218 = vadd.f32 %v2828, %v3140
      %v3219 = vadd.f32 %v2829, %v3145
      %v3220 = vadd.f32 %v2830, %v3150
      %v3221 = vadd.f32 %v2831, %v3155
      %v3222 = vadd.f32 %v2832, %v3160
      %v3223 = vadd.f32 %v2833, %v3165
      %v3224 = vadd.f32 %v2834, %v3170
      %v3225 = vadd.f32 %v2835, %v3175
      %v3226 = vadd.f32 %v2836, %v3180
      %v3227 = vadd.f32 %v2837, %v3185
      %v3228 = vadd.f32 %v2838, %v3190
      %v3229 = vadd.f32 %v2839, %v3195
      %v3230 = vld [vmem:[%s2449 + $0x2] sm:$0xff]
      %v3231 = vld [vmem:[%s2449 + $0xa] sm:$0xff]
      %v3232 = vld [vmem:[%s2449 + $0x1a] sm:$0xff]
      %v3233 = vld [vmem:[%s2449 + $0x22] sm:$0xff]
      %v3234 = vld [vmem:[%s2449 + $0x32] sm:$0xff]
      %v3235 = vld [vmem:[%s2449 + $0x3a] sm:$0xff]
      %v3236 = vld [vmem:[%s2449 + $0x4a] sm:$0xff]
      %v3237 = vld [vmem:[%s2449 + $0x52] sm:$0xff]
      %v3238 = vld [vmem:[%s2449 + $0x62] sm:$0xff]
      %v3239 = vld [vmem:[%s2449 + $0x6a] sm:$0xff]
      %v3240 = vld [vmem:[%s2449 + $0x7a] sm:$0xff]
      %v3241 = vld [vmem:[%s2449 + $0x82] sm:$0xff]
      %v3242 = vld [vmem:[%s2449 + $0x92] sm:$0xff]
      %v3243 = vld [vmem:[%s2449 + $0x9a] sm:$0xff]
      %v3244 = vld [vmem:[%s2449 + $0xaa] sm:$0xff]
      %v3245 = vld [vmem:[%s2449 + $0xb2] sm:$0xff]
      %v3246 = vld [vmem:[%s2449 + $0xc2] sm:$0xff]
      %v3247 = vld [vmem:[%s2449 + $0xca] sm:$0xff]
      %v3248 = vld [vmem:[%s2449 + $0xda] sm:$0xff]
      %v3249 = vld [vmem:[%s2449 + $0xe2] sm:$0xff]
      %v3250 = vld [vmem:[%s2449 + $0xf2] sm:$0xff]
      %v3251 = vld [vmem:[%s2449 + $0xfa] sm:$0xff]
      %v3252 = vld [vmem:[%s2449 + $0x10a] sm:$0xff]
      %v3253 = vld [vmem:[%s2449 + $0x112] sm:$0xff]
      %v3254 = vld [vmem:[%s2449 + $0x122] sm:$0xff]
      %v3255 = vld [vmem:[%s2449 + $0x12a] sm:$0xff]
      %v3256 = vld [vmem:[%s2449 + $0x13a] sm:$0xff]
      %v3257 = vld [vmem:[%s2449 + $0x142] sm:$0xff]
      %v3258 = vld [vmem:[%s2449 + $0x152] sm:$0xff]
      %v3259 = vld [vmem:[%s2449 + $0x15a] sm:$0xff]
      %v3260 = vld [vmem:[%s2449 + $0x16a] sm:$0xff]
      %v3261 = vld [vmem:[%s2449 + $0x172] sm:$0xff]
      %s3262 = scalar_lea.vmem %s1, 32
      %v3263 = vld [vmem:[%s3262] sm:$0x7]
      %v3265 = vsel %vm238, %v3230, 0
      %v3268 = vsel %vm238, %v3231, 0
      %v3271 = vsel %vm238, %v3232, 0
      %v3274 = vsel %vm238, %v3233, 0
      %v3277 = vsel %vm238, %v3234, 0
      %v3280 = vsel %vm238, %v3235, 0
      %v3283 = vsel %vm238, %v3236, 0
      %v3286 = vsel %vm238, %v3237, 0
      %v3289 = vsel %vm238, %v3238, 0
      %v3292 = vsel %vm238, %v3239, 0
      %v3295 = vsel %vm238, %v3240, 0
      %v3298 = vsel %vm238, %v3241, 0
      %v3301 = vsel %vm238, %v3242, 0
      %v3304 = vsel %vm238, %v3243, 0
      %v3307 = vsel %vm238, %v3244, 0
      %v3310 = vsel %vm238, %v3245, 0
      %v3313 = vsel %vm238, %v3246, 0
      %v3316 = vsel %vm238, %v3247, 0
      %v3319 = vsel %vm238, %v3248, 0
      %v3322 = vsel %vm238, %v3249, 0
      %v3325 = vsel %vm238, %v3250, 0
      %v3328 = vsel %vm238, %v3251, 0
      %v3331 = vsel %vm238, %v3252, 0
      %v3334 = vsel %vm238, %v3253, 0
      %v3337 = vsel %vm238, %v3254, 0
      %v3340 = vsel %vm238, %v3255, 0
      %v3343 = vsel %vm238, %v3256, 0
      %v3346 = vsel %vm238, %v3257, 0
      %v3349 = vsel %vm238, %v3258, 0
      %v3352 = vsel %vm238, %v3259, 0
      %v3355 = vsel %vm238, %v3260, 0
      %v3358 = vsel %vm238, %v3261, 0
      %v3361 = vsel %vm335, %v3263, 0
      %3363 = vmatprep.subr.mxu0 0.0
      %3364 = vmatpush1.msra.mxu0 0.0
      %3365 = vmatprep.subr.mxu0 0.0
      %3366 = vmatpush1.msra.mxu0 0.0
      %3367 = vmatprep.subr.mxu0 0.0
      %3368 = vmatpush1.msra.mxu0 0.0
      %3369 = vmatprep.subr.mxu0 0.0
      %3370 = vmatpush1.msra.mxu0 0.0
      %3371 = vmatprep.subr.mxu0 0.0
      %3372 = vmatpush1.msra.mxu0 0.0
      %3373 = vmatprep.subr.mxu0 0.0
      %3374 = vmatpush1.msra.mxu0 0.0
      %3375 = vmatprep.subr.mxu0 0.0
      %3376 = vmatpush1.msra.mxu0 0.0
      %3377 = vmatprep.subr.mxu0 0.0
      %3378 = vmatpush1.msra.mxu0 0.0
      %3379 = vmatprep.subr.mxu0 0.0
      %3380 = vmatpush1.msra.mxu0 0.0
      %3381 = vmatprep.subr.mxu0 0.0
      %3382 = vmatpush1.msra.mxu0 0.0
      %3383 = vmatprep.subr.mxu0 0.0
      %3384 = vmatpush1.msra.mxu0 0.0
      %3385 = vmatprep.subr.mxu0 0.0
      %3386 = vmatpush1.msra.mxu0 0.0
      %3387 = vmatprep.subr.mxu0 0.0
      %3388 = vmatpush1.msra.mxu0 0.0
      %3389 = vmatprep.subr.mxu0 0.0
      %3390 = vmatpush1.msra.mxu0 0.0
      %3391 = vmatprep.subr.mxu0 0.0
      %3392 = vmatpush1.msra.mxu0 0.0
      %3393 = vmatprep.subr.mxu0 0.0
      %3394 = vmatpush1.msra.mxu0 %v3361
      %3395 = vmatprep.subr.mxu0 0.0
      %3396 = vmatpush2.msra.mxu0 0.0
      %3397 = vmatprep.subr.mxu0 0.0
      %3398 = vmatpush2.msra.mxu0 0.0
      %3399 = vmatprep.subr.mxu0 0.0
      %3400 = vmatpush2.msra.mxu0 0.0
      %3401 = vmatprep.subr.mxu0 0.0
      %3402 = vmatpush2.msra.mxu0 0.0
      %3403 = vmatprep.subr.mxu0 0.0
      %3404 = vmatpush2.msra.mxu0 0.0
      %3405 = vmatprep.subr.mxu0 0.0
      %3406 = vmatpush2.msra.mxu0 0.0
      %3407 = vmatprep.subr.mxu0 0.0
      %3408 = vmatpush2.msra.mxu0 0.0
      %3409 = vmatprep.subr.mxu0 0.0
      %3410 = vmatpush2.msra.mxu0 0.0
      %3411 = vmatprep.subr.mxu0 0.0
      %3412 = vmatpush2.msra.mxu0 0.0
      %3413 = vmatprep.subr.mxu0 0.0
      %3414 = vmatpush2.msra.mxu0 0.0
      %3415 = vmatprep.subr.mxu0 0.0
      %3416 = vmatpush2.msra.mxu0 0.0
      %3417 = vmatprep.subr.mxu0 0.0
      %3418 = vmatpush2.msra.mxu0 0.0
      %3419 = vmatprep.subr.mxu0 0.0
      %3420 = vmatpush2.msra.mxu0 0.0
      %3421 = vmatprep.subr.mxu0 0.0
      %3422 = vmatpush2.msra.mxu0 0.0
      %3423 = vmatprep.subr.mxu0 0.0
      %3424 = vmatpush2.msra.mxu0 0.0
      %3425 = vmatprep.subr.mxu0 0.0
      %3426 = vmatpush2.msra.mxu0 0.0
      %3427 = vmatprep.mubr.f32.mxu0 0.0
      %3428 = vmatmul.mubr.f32.gmra.mxu0 %v3265
      %v3429 = vpop.f32.mrf.mxu0
      %v3430 = vadd.f32 0.0, %v3429
      %v3431 = vpop.f32.mrf.mxu0
      %3432 = vmatprep.mubr.f32.mxu0 0.0
      %3433 = vmatmul.mubr.f32.gmra.mxu0 %v3268
      %v3434 = vpop.f32.mrf.mxu0
      %v3435 = vadd.f32 0.0, %v3434
      %v3436 = vpop.f32.mrf.mxu0
      %3437 = vmatprep.mubr.f32.mxu0 0.0
      %3438 = vmatmul.mubr.f32.gmra.mxu0 %v3271
      %v3439 = vpop.f32.mrf.mxu0
      %v3440 = vadd.f32 0.0, %v3439
      %v3441 = vpop.f32.mrf.mxu0
      %3442 = vmatprep.mubr.f32.mxu0 0.0
      %3443 = vmatmul.mubr.f32.gmra.mxu0 %v3274
      %v3444 = vpop.f32.mrf.mxu0
      %v3445 = vadd.f32 0.0, %v3444
      %v3446 = vpop.f32.mrf.mxu0
      %3447 = vmatprep.mubr.f32.mxu0 0.0
      %3448 = vmatmul.mubr.f32.gmra.mxu0 %v3277
      %v3449 = vpop.f32.mrf.mxu0
      %v3450 = vadd.f32 0.0, %v3449
      %v3451 = vpop.f32.mrf.mxu0
      %3452 = vmatprep.mubr.f32.mxu0 0.0
      %3453 = vmatmul.mubr.f32.gmra.mxu0 %v3280
      %v3454 = vpop.f32.mrf.mxu0
      %v3455 = vadd.f32 0.0, %v3454
      %v3456 = vpop.f32.mrf.mxu0
      %3457 = vmatprep.mubr.f32.mxu0 0.0
      %3458 = vmatmul.mubr.f32.gmra.mxu0 %v3283
      %v3459 = vpop.f32.mrf.mxu0
      %v3460 = vadd.f32 0.0, %v3459
      %v3461 = vpop.f32.mrf.mxu0
      %3462 = vmatprep.mubr.f32.mxu0 0.0
      %3463 = vmatmul.mubr.f32.gmra.mxu0 %v3286
      %v3464 = vpop.f32.mrf.mxu0
      %v3465 = vadd.f32 0.0, %v3464
      %v3466 = vpop.f32.mrf.mxu0
      %3467 = vmatprep.mubr.f32.mxu0 0.0
      %3468 = vmatmul.mubr.f32.gmra.mxu0 %v3289
      %v3469 = vpop.f32.mrf.mxu0
      %v3470 = vadd.f32 0.0, %v3469
      %v3471 = vpop.f32.mrf.mxu0
      %3472 = vmatprep.mubr.f32.mxu0 0.0
      %3473 = vmatmul.mubr.f32.gmra.mxu0 %v3292
      %v3474 = vpop.f32.mrf.mxu0
      %v3475 = vadd.f32 0.0, %v3474
      %v3476 = vpop.f32.mrf.mxu0
      %3477 = vmatprep.mubr.f32.mxu0 0.0
      %3478 = vmatmul.mubr.f32.gmra.mxu0 %v3295
      %v3479 = vpop.f32.mrf.mxu0
      %v3480 = vadd.f32 0.0, %v3479
      %v3481 = vpop.f32.mrf.mxu0
      %3482 = vmatprep.mubr.f32.mxu0 0.0
      %3483 = vmatmul.mubr.f32.gmra.mxu0 %v3298
      %v3484 = vpop.f32.mrf.mxu0
      %v3485 = vadd.f32 0.0, %v3484
      %v3486 = vpop.f32.mrf.mxu0
      %3487 = vmatprep.mubr.f32.mxu0 0.0
      %3488 = vmatmul.mubr.f32.gmra.mxu0 %v3301
      %v3489 = vpop.f32.mrf.mxu0
      %v3490 = vadd.f32 0.0, %v3489
      %v3491 = vpop.f32.mrf.mxu0
      %3492 = vmatprep.mubr.f32.mxu0 0.0
      %3493 = vmatmul.mubr.f32.gmra.mxu0 %v3304
      %v3494 = vpop.f32.mrf.mxu0
      %v3495 = vadd.f32 0.0, %v3494
      %v3496 = vpop.f32.mrf.mxu0
      %3497 = vmatprep.mubr.f32.mxu0 0.0
      %3498 = vmatmul.mubr.f32.gmra.mxu0 %v3307
      %v3499 = vpop.f32.mrf.mxu0
      %v3500 = vadd.f32 0.0, %v3499
      %v3501 = vpop.f32.mrf.mxu0
      %3502 = vmatprep.mubr.f32.mxu0 0.0
      %3503 = vmatmul.mubr.f32.gmra.mxu0 %v3310
      %v3504 = vpop.f32.mrf.mxu0
      %v3505 = vadd.f32 0.0, %v3504
      %v3506 = vpop.f32.mrf.mxu0
      %3507 = vmatprep.mubr.f32.mxu0 0.0
      %3508 = vmatmul.mubr.f32.gmra.mxu0 %v3313
      %v3509 = vpop.f32.mrf.mxu0
      %v3510 = vadd.f32 0.0, %v3509
      %v3511 = vpop.f32.mrf.mxu0
      %3512 = vmatprep.mubr.f32.mxu0 0.0
      %3513 = vmatmul.mubr.f32.gmra.mxu0 %v3316
      %v3514 = vpop.f32.mrf.mxu0
      %v3515 = vadd.f32 0.0, %v3514
      %v3516 = vpop.f32.mrf.mxu0
      %3517 = vmatprep.mubr.f32.mxu0 0.0
      %3518 = vmatmul.mubr.f32.gmra.mxu0 %v3319
      %v3519 = vpop.f32.mrf.mxu0
      %v3520 = vadd.f32 0.0, %v3519
      %v3521 = vpop.f32.mrf.mxu0
      %3522 = vmatprep.mubr.f32.mxu0 0.0
      %3523 = vmatmul.mubr.f32.gmra.mxu0 %v3322
      %v3524 = vpop.f32.mrf.mxu0
      %v3525 = vadd.f32 0.0, %v3524
      %v3526 = vpop.f32.mrf.mxu0
      %3527 = vmatprep.mubr.f32.mxu0 0.0
      %3528 = vmatmul.mubr.f32.gmra.mxu0 %v3325
      %v3529 = vpop.f32.mrf.mxu0
      %v3530 = vadd.f32 0.0, %v3529
      %v3531 = vpop.f32.mrf.mxu0
      %3532 = vmatprep.mubr.f32.mxu0 0.0
      %3533 = vmatmul.mubr.f32.gmra.mxu0 %v3328
      %v3534 = vpop.f32.mrf.mxu0
      %v3535 = vadd.f32 0.0, %v3534
      %v3536 = vpop.f32.mrf.mxu0
      %3537 = vmatprep.mubr.f32.mxu0 0.0
      %3538 = vmatmul.mubr.f32.gmra.mxu0 %v3331
      %v3539 = vpop.f32.mrf.mxu0
      %v3540 = vadd.f32 0.0, %v3539
      %v3541 = vpop.f32.mrf.mxu0
      %3542 = vmatprep.mubr.f32.mxu0 0.0
      %3543 = vmatmul.mubr.f32.gmra.mxu0 %v3334
      %v3544 = vpop.f32.mrf.mxu0
      %v3545 = vadd.f32 0.0, %v3544
      %v3546 = vpop.f32.mrf.mxu0
      %3547 = vmatprep.mubr.f32.mxu0 0.0
      %3548 = vmatmul.mubr.f32.gmra.mxu0 %v3337
      %v3549 = vpop.f32.mrf.mxu0
      %v3550 = vadd.f32 0.0, %v3549
      %v3551 = vpop.f32.mrf.mxu0
      %3552 = vmatprep.mubr.f32.mxu0 0.0
      %3553 = vmatmul.mubr.f32.gmra.mxu0 %v3340
      %v3554 = vpop.f32.mrf.mxu0
      %v3555 = vadd.f32 0.0, %v3554
      %v3556 = vpop.f32.mrf.mxu0
      %3557 = vmatprep.mubr.f32.mxu0 0.0
      %3558 = vmatmul.mubr.f32.gmra.mxu0 %v3343
      %v3559 = vpop.f32.mrf.mxu0
      %v3560 = vadd.f32 0.0, %v3559
      %v3561 = vpop.f32.mrf.mxu0
      %3562 = vmatprep.mubr.f32.mxu0 0.0
      %3563 = vmatmul.mubr.f32.gmra.mxu0 %v3346
      %v3564 = vpop.f32.mrf.mxu0
      %v3565 = vadd.f32 0.0, %v3564
      %v3566 = vpop.f32.mrf.mxu0
      %3567 = vmatprep.mubr.f32.mxu0 0.0
      %3568 = vmatmul.mubr.f32.gmra.mxu0 %v3349
      %v3569 = vpop.f32.mrf.mxu0
      %v3570 = vadd.f32 0.0, %v3569
      %v3571 = vpop.f32.mrf.mxu0
      %3572 = vmatprep.mubr.f32.mxu0 0.0
      %3573 = vmatmul.mubr.f32.gmra.mxu0 %v3352
      %v3574 = vpop.f32.mrf.mxu0
      %v3575 = vadd.f32 0.0, %v3574
      %v3576 = vpop.f32.mrf.mxu0
      %3577 = vmatprep.mubr.f32.mxu0 0.0
      %3578 = vmatmul.mubr.f32.gmra.mxu0 %v3355
      %v3579 = vpop.f32.mrf.mxu0
      %v3580 = vadd.f32 0.0, %v3579
      %v3581 = vpop.f32.mrf.mxu0
      %3582 = vmatprep.mubr.f32.mxu0 0.0
      %3583 = vmatmul.mubr.f32.gmra.mxu0 %v3358
      %v3584 = vpop.f32.mrf.mxu0
      %v3585 = vadd.f32 0.0, %v3584
      %v3586 = vpop.f32.mrf.mxu0
      %3587 = vdwg.mxu0
      %v3588 = vadd.f32 %v3198, %v3430
      %v3589 = vadd.f32 %v3199, %v3435
      %v3590 = vadd.f32 %v3200, %v3440
      %v3591 = vadd.f32 %v3201, %v3445
      %v3592 = vadd.f32 %v3202, %v3450
      %v3593 = vadd.f32 %v3203, %v3455
      %v3594 = vadd.f32 %v3204, %v3460
      %v3595 = vadd.f32 %v3205, %v3465
      %v3596 = vadd.f32 %v3206, %v3470
      %v3597 = vadd.f32 %v3207, %v3475
      %v3598 = vadd.f32 %v3208, %v3480
      %v3599 = vadd.f32 %v3209, %v3485
      %v3600 = vadd.f32 %v3210, %v3490
      %v3601 = vadd.f32 %v3211, %v3495
      %v3602 = vadd.f32 %v3212, %v3500
      %v3603 = vadd.f32 %v3213, %v3505
      %v3604 = vadd.f32 %v3214, %v3510
      %v3605 = vadd.f32 %v3215, %v3515
      %v3606 = vadd.f32 %v3216, %v3520
      %v3607 = vadd.f32 %v3217, %v3525
      %v3608 = vadd.f32 %v3218, %v3530
      %v3609 = vadd.f32 %v3219, %v3535
      %v3610 = vadd.f32 %v3220, %v3540
      %v3611 = vadd.f32 %v3221, %v3545
      %v3612 = vadd.f32 %v3222, %v3550
      %v3613 = vadd.f32 %v3223, %v3555
      %v3614 = vadd.f32 %v3224, %v3560
      %v3615 = vadd.f32 %v3225, %v3565
      %v3616 = vadd.f32 %v3226, %v3570
      %v3617 = vadd.f32 %v3227, %v3575
      %v3618 = vadd.f32 %v3228, %v3580
      %v3619 = vadd.f32 %v3229, %v3585
      %v3620 = vld [vmem:[%s2] sm:$0x1]
      %v3622 = vlaneseq
      %v3623 = vshrl.u32 %v3622, 7
      %v3624 = vsub.s32 0, %v3623
      %v3625 = vrot.slane %v3620, %v3624
      %v3627 = vadd.f32 %v3588, %v3625
      %v3628 = vadd.f32 %v3589, %v3625
      %v3629 = vadd.f32 %v3590, %v3625
      %v3630 = vadd.f32 %v3591, %v3625
      %v3631 = vadd.f32 %v3592, %v3625
      %v3632 = vadd.f32 %v3593, %v3625
      %v3633 = vadd.f32 %v3594, %v3625
      %v3634 = vadd.f32 %v3595, %v3625
      %v3635 = vadd.f32 %v3596, %v3625
      %v3636 = vadd.f32 %v3597, %v3625
      %v3637 = vadd.f32 %v3598, %v3625
      %v3638 = vadd.f32 %v3599, %v3625
      %v3639 = vadd.f32 %v3600, %v3625
      %v3640 = vadd.f32 %v3601, %v3625
      %v3641 = vadd.f32 %v3602, %v3625
      %v3642 = vadd.f32 %v3603, %v3625
      %v3643 = vadd.f32 %v3604, %v3625
      %v3644 = vadd.f32 %v3605, %v3625
      %v3645 = vadd.f32 %v3606, %v3625
      %v3646 = vadd.f32 %v3607, %v3625
      %v3647 = vadd.f32 %v3608, %v3625
      %v3648 = vadd.f32 %v3609, %v3625
      %v3649 = vadd.f32 %v3610, %v3625
      %v3650 = vadd.f32 %v3611, %v3625
      %v3651 = vadd.f32 %v3612, %v3625
      %v3652 = vadd.f32 %v3613, %v3625
      %v3653 = vadd.f32 %v3614, %v3625
      %v3654 = vadd.f32 %v3615, %v3625
      %v3655 = vadd.f32 %v3616, %v3625
      %v3656 = vadd.f32 %v3617, %v3625
      %v3657 = vadd.f32 %v3618, %v3625
      %v3658 = vadd.f32 %v3619, %v3625
      %v3659 = vmax.f32 %v3627, 0.0
      %v3660 = vmax.f32 %v3628, 0.0
      %v3661 = vmax.f32 %v3629, 0.0
      %v3662 = vmax.f32 %v3630, 0.0
      %v3663 = vmax.f32 %v3631, 0.0
      %v3664 = vmax.f32 %v3632, 0.0
      %v3665 = vmax.f32 %v3633, 0.0
      %v3666 = vmax.f32 %v3634, 0.0
      %v3667 = vmax.f32 %v3635, 0.0
      %v3668 = vmax.f32 %v3636, 0.0
      %v3669 = vmax.f32 %v3637, 0.0
      %v3670 = vmax.f32 %v3638, 0.0
      %v3671 = vmax.f32 %v3639, 0.0
      %v3672 = vmax.f32 %v3640, 0.0
      %v3673 = vmax.f32 %v3641, 0.0
      %v3674 = vmax.f32 %v3642, 0.0
      %v3675 = vmax.f32 %v3643, 0.0
      %v3676 = vmax.f32 %v3644, 0.0
      %v3677 = vmax.f32 %v3645, 0.0
      %v3678 = vmax.f32 %v3646, 0.0
      %v3679 = vmax.f32 %v3647, 0.0
      %v3680 = vmax.f32 %v3648, 0.0
      %v3681 = vmax.f32 %v3649, 0.0
      %v3682 = vmax.f32 %v3650, 0.0
      %v3683 = vmax.f32 %v3651, 0.0
      %v3684 = vmax.f32 %v3652, 0.0
      %v3685 = vmax.f32 %v3653, 0.0
      %v3686 = vmax.f32 %v3654, 0.0
      %v3687 = vmax.f32 %v3655, 0.0
      %v3688 = vmax.f32 %v3656, 0.0
      %v3689 = vmax.f32 %v3657, 0.0
      %v3690 = vmax.f32 %v3658, 0.0
      %vm3691 = vcmask 523264
      %3692 = vst.msk [vmem:[%s170] sm:$0xff] %vm3691, %v3659
      %3693 = vst.msk [vmem:[%s170 + $0x8] sm:$0xff] %vm3691, %v3660
      %3694 = vst.msk [vmem:[%s170 + $0x10] sm:$0xff] %vm3691, %v3661
      %3695 = vst.msk [vmem:[%s170 + $0x18] sm:$0xff] %vm3691, %v3662
      %3696 = vst.msk [vmem:[%s170 + $0x20] sm:$0xff] %vm3691, %v3663
      %3697 = vst.msk [vmem:[%s170 + $0x28] sm:$0xff] %vm3691, %v3664
      %3698 = vst.msk [vmem:[%s170 + $0x30] sm:$0xff] %vm3691, %v3665
      %3699 = vst.msk [vmem:[%s170 + $0x38] sm:$0xff] %vm3691, %v3666
      %3700 = vst.msk [vmem:[%s170 + $0x40] sm:$0xff] %vm3691, %v3667
      %3701 = vst.msk [vmem:[%s170 + $0x48] sm:$0xff] %vm3691, %v3668
      %3702 = vst.msk [vmem:[%s170 + $0x50] sm:$0xff] %vm3691, %v3669
      %3703 = vst.msk [vmem:[%s170 + $0x58] sm:$0xff] %vm3691, %v3670
      %3704 = vst.msk [vmem:[%s170 + $0x60] sm:$0xff] %vm3691, %v3671
      %3705 = vst.msk [vmem:[%s170 + $0x68] sm:$0xff] %vm3691, %v3672
      %3706 = vst.msk [vmem:[%s170 + $0x70] sm:$0xff] %vm3691, %v3673
      %3707 = vst.msk [vmem:[%s170 + $0x78] sm:$0xff] %vm3691, %v3674
      %3708 = vst.msk [vmem:[%s170 + $0x80] sm:$0xff] %vm3691, %v3675
      %3709 = vst.msk [vmem:[%s170 + $0x88] sm:$0xff] %vm3691, %v3676
      %3710 = vst.msk [vmem:[%s170 + $0x90] sm:$0xff] %vm3691, %v3677
      %3711 = vst.msk [vmem:[%s170 + $0x98] sm:$0xff] %vm3691, %v3678
      %3712 = vst.msk [vmem:[%s170 + $0xa0] sm:$0xff] %vm3691, %v3679
      %3713 = vst.msk [vmem:[%s170 + $0xa8] sm:$0xff] %vm3691, %v3680
      %3714 = vst.msk [vmem:[%s170 + $0xb0] sm:$0xff] %vm3691, %v3681
      %3715 = vst.msk [vmem:[%s170 + $0xb8] sm:$0xff] %vm3691, %v3682
      %3716 = vst.msk [vmem:[%s170 + $0xc0] sm:$0xff] %vm3691, %v3683
      %3717 = vst.msk [vmem:[%s170 + $0xc8] sm:$0xff] %vm3691, %v3684
      %3718 = vst.msk [vmem:[%s170 + $0xd0] sm:$0xff] %vm3691, %v3685
      %3719 = vst.msk [vmem:[%s170 + $0xd8] sm:$0xff] %vm3691, %v3686
      %3720 = vst.msk [vmem:[%s170 + $0xe0] sm:$0xff] %vm3691, %v3687
      %3721 = vst.msk [vmem:[%s170 + $0xe8] sm:$0xff] %vm3691, %v3688
      %3722 = vst.msk [vmem:[%s170 + $0xf0] sm:$0xff] %vm3691, %v3689
      %3723 = vst.msk [vmem:[%s170 + $0xf8] sm:$0xff] %vm3691, %v3690
      %p3724 = scmp.lt.s32.totalorder %s14, 1
      %s3725 = scalar_select %p3724, %s14, 1
      %s3726 = smul.addr %s3725, 32
      %s3727 = smul.addr %s3726, 8
      %s3728 = scalar_lea.vmem %s3, %s3727
      // Predicated region
      $region33: #{feature_reconstruction_loss.11} parent=31 // pred_check
        %p3729 = pneg %p100
      $region34: #{feature_reconstruction_loss.11} parent=31 // pred_check_branch
        %3731 = sbr.rel (%p3729) target = $region36
      $region35: #{feature_reconstruction_loss.11} parent=31 // pred_region
        _
      $region36: #{feature_reconstruction_loss.11} parent=31 // pred_fallthru
        _
    $region32: #{feature_reconstruction_loss.11} parent=5 // pred_fallthru
      _
    %p3732 = scmp.le.s32.totalorder 2, %s9
    // Predicated region
    $region37: #{feature_reconstruction_loss.11} parent=5 // pred_check
      %p3733 = pneg %p3732
    $region38: #{feature_reconstruction_loss.11} parent=5 // pred_check_branch
      %3735 = sbr.rel (%p3733) target = $region40
    $region39: #{feature_reconstruction_loss.11} parent=5 // pred_region
      %s3736 = ssub.s32 %s9, 2
      // Predicated region
      $region41: #{feature_reconstruction_loss.11} parent=39 // pred_check
        %p3737 = pneg %p106
      $region42: #{feature_reconstruction_loss.11} parent=39 // pred_check_branch
        %3739 = sbr.rel (%p3737) target = $region44
      $region43: #{feature_reconstruction_loss.11} parent=39 // pred_region
        %p3740 = scmp.lt.s32.totalorder %s15, 1
        %s3741 = scalar_select %p3740, %s15, 1
        %s3742 = smul.addr %s3741, 32
        %s3743 = smul.addr %s3742, 8
        %s3744 = scalar_lea.vmem %s3, %s3743
      $region44: #{feature_reconstruction_loss.11} parent=39 // pred_fallthru
        _
    $region40: #{feature_reconstruction_loss.11} parent=5 // pred_fallthru
      _
  $region6: #{feature_reconstruction_loss.11} parent=0 // loop_footer
    %s13 = sadd.s32 1, %s9
  $region7: #{feature_reconstruction_loss.11} parent=0 // loop_footer_branch
    %8 = sbr.rel target = $region3
  $region8: #{feature_reconstruction_loss.11} parent=0 // loop_exit
    _

// kernel: feature_reconstruction_loss.14
$region0: #{feature_reconstruction_loss.14}
  #allocation0 [shape = 'u32[]', space=smem, size = 0x4, offset = 0x4, fixed_abs, tag = 'smem constant byte address 0x4 - core index']
  #allocation1 [shape = 'u32[144,128]{1,0:T(1,128)}', space=vmem, size = 0x12000, scoped, tag = 'internal scratch']
  %s0 = inlined_call_operand.vmem [shape: f32[2,10,10,64], index: 0, kind: input, shape index: {}]
  %s1 = inlined_call_operand.vmem [shape: f32[9,64,128], index: 1, kind: input, shape index: {}]
  %s2 = inlined_call_operand.vmem [shape: f32[1,128], index: 2, kind: input, shape index: {}]
  %s3 = inlined_call_operand.vmem [shape: f32[2,8,8,128], index: 3, kind: output, shape index: {}]
  %s4 = sld [smem:[#allocation0]]
  $region45: #{feature_reconstruction_loss.14} parent=0
    _
  %s6 = ssub.s32 1, %s4
  %s7 = scalar_select 0, %s6, %s4
  loop: start=0, step=1, limit=4
  $region2: #{feature_reconstruction_loss.14} parent=0 // loop_pre_header
    _
  $region3: #{feature_reconstruction_loss.14} parent=0 // loop_header
    %s9 = sphi 0, %s13
    %p10 = scmp.ge.s32.totalorder %s9, 4
    %s19 = sphi 0, %s21
    %s22 = sphi 0, %s19
    %s23 = sphi 0, %s22
    %s39 = sphi 0, %s23
    %s43 = sphi 0, %s43
    %s45 = sphi 0, %s43
    %s46 = sphi 0, %s45
    %s60 = sphi 0, %s46
    %s64 = sphi 0, %s64
    %s66 = sphi 0, %s64
    %s67 = sphi 0, %s66
    %s81 = sphi 0, %s67
    %s87 = sphi 0, %s89
    %s90 = sphi 0, %s87
    %s91 = sphi 0, %s90
    %s107 = sphi 0, %s91
  $region4: #{feature_reconstruction_loss.14} parent=0 // loop_header_branch
    %12 = sbr.rel (%p10) target = $region8
  $region5: #{feature_reconstruction_loss.14} parent=0 // loop_body
    %s14 = ssub.s32 %s9, 1
    %s15 = ssub.s32 %s9, 2
    %s16 = sadd.s32 %s9, 1
    %s17 = ssub.s32 %s9, %s16
    %p18 = scmp.eq.s32.totalorder %s17, 0
    %s20 = sadd.s32 %s19, 1
    %s21 = scalar_select %p18, %s19, %s20
    %p24 = pneg %p18
    %p25 = scmp.eq.s32.totalorder %s9, 1
    %p26 = por %p24, %p25
    %p27 = scmp.ne.s32.totalorder %s19, %s22
    %p28 = scmp.eq.s32.totalorder %s9, 0
    %p29 = por %p27, %p28
    %p30 = scmp.ne.s32.totalorder %s19, %s22
    %p31 = scmp.eq.s32.totalorder %s14, 1
    %p32 = por %p30, %p31
    %p33 = scmp.ne.s32.totalorder %s22, %s23
    %p34 = scmp.eq.s32.totalorder %s14, 0
    %p35 = por %p33, %p34
    %p36 = scmp.ne.s32.totalorder %s22, %s23
    %p37 = scmp.eq.s32.totalorder %s15, 1
    %p38 = por %p36, %p37
    %p40 = scmp.ne.s32.totalorder %s23, %s39
    %p41 = scmp.eq.s32.totalorder %s15, 0
    %p42 = por %p40, %p41
    %s44 = sadd.s32 %s43, 1
    %p47 = scmp.eq.s32.totalorder %s9, 1
    %p48 = scmp.ne.s32.totalorder %s43, %s45
    %p49 = scmp.eq.s32.totalorder %s9, 0
    %p50 = por %p48, %p49
    %p51 = scmp.ne.s32.totalorder %s43, %s45
    %p52 = scmp.eq.s32.totalorder %s14, 1
    %p53 = por %p51, %p52
    %p54 = scmp.ne.s32.totalorder %s45, %s46
    %p55 = scmp.eq.s32.totalorder %s14, 0
    %p56 = por %p54, %p55
    %p57 = scmp.ne.s32.totalorder %s45, %s46
    %p58 = scmp.eq.s32.totalorder %s15, 1
    %p59 = por %p57, %p58
    %p61 = scmp.ne.s32.totalorder %s46, %s60
    %p62 = scmp.eq.s32.totalorder %s15, 0
    %p63 = por %p61, %p62
    %s65 = sadd.s32 %s64, 1
    %p68 = scmp.eq.s32.totalorder %s9, 1
    %p69 = scmp.ne.s32.totalorder %s64, %s66
    %p70 = scmp.eq.s32.totalorder %s9, 0
    %p71 = por %p69, %p70
    %p72 = scmp.ne.s32.totalorder %s64, %s66
    %p73 = scmp.eq.s32.totalorder %s14, 1
    %p74 = por %p72, %p73
    %p75 = scmp.ne.s32.totalorder %s66, %s67
    %p76 = scmp.eq.s32.totalorder %s14, 0
    %p77 = por %p75, %p76
    %p78 = scmp.ne.s32.totalorder %s66, %s67
    %p79 = scmp.eq.s32.totalorder %s15, 1
    %p80 = por %p78, %p79
    %p82 = scmp.ne.s32.totalorder %s67, %s81
    %p83 = scmp.eq.s32.totalorder %s15, 0
    %p84 = por %p82, %p83
    %s85 = ssub.s32 %s9, %s16
    %p86 = scmp.eq.s32.totalorder %s85, 0
    %s88 = sadd.s32 %s87, 1
    %s89 = scalar_select %p86, %s87, %s88
    %p92 = pneg %p86
    %p93 = scmp.eq.s32.totalorder %s9, 1
    %p94 = por %p92, %p93
    %p95 = scmp.ne.s32.totalorder %s87, %s90
    %p96 = scmp.eq.s32.totalorder %s9, 0
    %p97 = por %p95, %p96
    %p98 = scmp.ne.s32.totalorder %s87, %s90
    %p99 = scmp.eq.s32.totalorder %s14, 1
    %p100 = por %p98, %p99
    %p101 = scmp.ne.s32.totalorder %s90, %s91
    %p102 = scmp.eq.s32.totalorder %s14, 0
    %p103 = por %p101, %p102
    %p104 = scmp.ne.s32.totalorder %s90, %s91
    %p105 = scmp.eq.s32.totalorder %s15, 1
    %p106 = por %p104, %p105
    %p108 = scmp.ne.s32.totalorder %s91, %s107
    %p109 = scmp.eq.s32.totalorder %s15, 0
    %p110 = por %p108, %p109
    %p111 = scmp.le.s32.totalorder 1, %s9
    %p112 = scmp.lt.s32.totalorder %s9, 3
    %p113 = pnand %p111, %p112
    %p114 = pneg %p113
    // Predicated region
    $region9: #{feature_reconstruction_loss.14} parent=5 // pred_check
      _
    $region10: #{feature_reconstruction_loss.14} parent=5 // pred_check_branch
      %116 = sbr.rel (%p113) target = $region12
    $region11: #{feature_reconstruction_loss.14} parent=5 // pred_region
      %s117 = ssub.s32 %s9, 1
      // Predicated region
      $region13: #{feature_reconstruction_loss.14} parent=11 // pred_check
        %p118 = pneg %p56
      $region14: #{feature_reconstruction_loss.14} parent=11 // pred_check_branch
        %120 = sbr.rel (%p118) target = $region16
      $region15: #{feature_reconstruction_loss.14} parent=11 // pred_region
        _
      $region16: #{feature_reconstruction_loss.14} parent=11 // pred_fallthru
        _
      // Predicated region
      $region17: #{feature_reconstruction_loss.14} parent=11 // pred_check
        %p121 = pneg %p77
      $region18: #{feature_reconstruction_loss.14} parent=11 // pred_check_branch
        %123 = sbr.rel (%p121) target = $region20
      $region19: #{feature_reconstruction_loss.14} parent=11 // pred_region
        _
      $region20: #{feature_reconstruction_loss.14} parent=11 // pred_fallthru
        _
    $region12: #{feature_reconstruction_loss.14} parent=5 // pred_fallthru
      _
    %p124 = scmp.lt.s32.totalorder %s9, 2
    // Predicated region
    $region21: #{feature_reconstruction_loss.14} parent=5 // pred_check
      %p125 = pneg %p124
    $region22: #{feature_reconstruction_loss.14} parent=5 // pred_check_branch
      %127 = sbr.rel (%p125) target = $region24
    $region23: #{feature_reconstruction_loss.14} parent=5 // pred_region
      // Predicated region
      $region25: #{feature_reconstruction_loss.14} parent=23 // pred_check
        %p128 = pneg %p29
      $region26: #{feature_reconstruction_loss.14} parent=23 // pred_check_branch
        %130 = sbr.rel (%p128) target = $region28
      $region27: #{feature_reconstruction_loss.14} parent=23 // pred_region
        %p131 = scmp.lt.s32.totalorder %s9, 1
        %s132 = scalar_select %p131, %s9, 1
        %s133 = smul.addr %s132, 20
        %s134 = smul.addr %s133, 8
        %s135 = scalar_lea.vmem %s0, %s134
      $region28: #{feature_reconstruction_loss.14} parent=23 // pred_fallthru
        _
    $region24: #{feature_reconstruction_loss.14} parent=5 // pred_fallthru
      _
    %p136 = scmp.le.s32.totalorder 1, %s9
    %p137 = scmp.lt.s32.totalorder %s9, 3
    %p138 = pnand %p136, %p137
    %p139 = pneg %p138
    // Predicated region
    $region29: #{feature_reconstruction_loss.14} parent=5 // pred_check
      _
    $region30: #{feature_reconstruction_loss.14} parent=5 // pred_check_branch
      %141 = sbr.rel (%p138) target = $region32
    $region31: #{feature_reconstruction_loss.14} parent=5 // pred_region
      %s142 = ssub.s32 %s9, 1
      %p143 = scmp.lt.s32.totalorder %s14, 1
      %s144 = scalar_select %p143, %s14, 1
      %s145 = smul.addr %s144, 20
      %s146 = smul.addr %s145, 8
      %s147 = scalar_lea.vmem %s0, %s146
      %p148 = pneg %p35
      %p149 = pneg %p32
      %p150 = pneg %p56
      %p151 = pneg %p53
      %p152 = pneg %p77
      %p153 = pneg %p74
      %p154 = pneg %p103
      %p155 = pneg %p100
      %p156 = scmp.lt.s32.totalorder %s14, 1
      %s157 = scalar_select %p156, %s14, 1
      %s158 = smul.addr %s157, 8
      %s159 = smul.addr %s158, 8
      %s160 = scalar_lea.vmem %s3, %s159
      %p161 = scmp.lt.s32.totalorder %s14, 1
      %s162 = scalar_select %p161, %s14, 1
      %s163 = smul.addr %s162, 20
      %s164 = smul.addr %s163, 8
      %s165 = scalar_lea.vmem %s0, %s164
      %p166 = scmp.lt.s32.totalorder %s14, 1
      %s167 = scalar_select %p166, %s14, 1
      %s168 = smul.addr %s167, 8
      %s169 = smul.addr %s168, 8
      %s170 = scalar_lea.vmem %s3, %s169
      %v171 = vld [vmem:[%s165] sm:$0xff]
      %v172 = vld [vmem:[%s165 + $0x10] sm:$0xff]
      %v173 = vld [vmem:[%s165 + $0x20] sm:$0xff]
      %v174 = vld [vmem:[%s165 + $0x30] sm:$0xff]
      %v175 = vld [vmem:[%s165 + $0x40] sm:$0xff]
      %v176 = vld [vmem:[%s165 + $0x50] sm:$0xff]
      %v177 = vld [vmem:[%s165 + $0x60] sm:$0xff]
      %v178 = vld [vmem:[%s165 + $0x70] sm:$0xff]
      %v179 = vld [vmem:[%s1] sm:$0xff]
      %v180 = vld [vmem:[%s1 + $0x8] sm:$0xff]
      %v181 = vld [vmem:[%s1 + $0x10] sm:$0xff]
      %v182 = vld [vmem:[%s1 + $0x18] sm:$0xff]
      %v183 = vld [vmem:[%s1 + $0x20] sm:$0xff]
      %v184 = vld [vmem:[%s1 + $0x28] sm:$0xff]
      %v185 = vld [vmem:[%s1 + $0x30] sm:$0xff]
      %v186 = vld [vmem:[%s1 + $0x38] sm:$0xff]
      %v187 = vld [vmem:[%s165 + $0x1] sm:$0xff]
      %v188 = vld [vmem:[%s165 + $0x11] sm:$0xff]
      %v189 = vld [vmem:[%s165 + $0x21] sm:$0xff]
      %v190 = vld [vmem:[%s165 + $0x31] sm:$0xff]
      %v191 = vld [vmem:[%s165 + $0x41] sm:$0xff]
      %v192 = vld [vmem:[%s165 + $0x51] sm:$0xff]
      %v193 = vld [vmem:[%s165 + $0x61] sm:$0xff]
      %v194 = vld [vmem:[%s165 + $0x71] sm:$0xff]
      %s195 = scalar_lea.vmem %s1, 64
      %v196 = vld [vmem:[%s195] sm:$0xff]
      %v197 = vld [vmem:[%s195 + $0x8] sm:$0xff]
      %v198 = vld [vmem:[%s195 + $0x10] sm:$0xff]
      %v199 = vld [vmem:[%s195 + $0x18] sm:$0xff]
      %v200 = vld [vmem:[%s195 + $0x20] sm:$0xff]
      %v201 = vld [vmem:[%s195 + $0x28] sm:$0xff]
      %v202 = vld [vmem:[%s195 + $0x30] sm:$0xff]
      %v203 = vld [vmem:[%s195 + $0x38] sm:$0xff]
      %vm204 = vcmask 523264
      %v206 = vsel %vm204, %v187, 0
      %v209 = vsel %vm204, %v188, 0
      %v212 = vsel %vm204, %v189, 0
      %v215 = vsel %vm204, %v190, 0
      %v218 = vsel %vm204, %v191, 0
      %v221 = vsel %vm204, %v192, 0
      %v224 = vsel %vm204, %v193, 0
      %v227 = vsel %vm204, %v194, 0
      %229 = vmatprep.subr.mxu0 0.0
      %230 = vmatpush1.msra.mxu0 0.0
      %231 = vmatprep.subr.mxu0 0.0
      %232 = vmatpush1.msra.mxu0 0.0
      %233 = vmatprep.subr.mxu0 0.0
      %234 = vmatpush1.msra.mxu0 0.0
      %235 = vmatprep.subr.mxu0 0.0
      %236 = vmatpush1.msra.mxu0 0.0
      %237 = vmatprep.subr.mxu0 0.0
      %238 = vmatpush1.msra.mxu0 0.0
      %239 = vmatprep.subr.mxu0 0.0
      %240 = vmatpush1.msra.mxu0 0.0
      %241 = vmatprep.subr.mxu0 0.0
      %242 = vmatpush1.msra.mxu0 0.0
      %243 = vmatprep.subr.mxu0 0.0
      %244 = vmatpush1.msra.mxu0 0.0
      %245 = vmatprep.subr.mxu0 0.0
      %246 = vmatpush1.msra.mxu0 %v203
      %247 = vmatprep.subr.mxu0 0.0
      %248 = vmatpush1.msra.mxu0 %v202
      %249 = vmatprep.subr.mxu0 0.0
      %250 = vmatpush1.msra.mxu0 %v201
      %251 = vmatprep.subr.mxu0 0.0
      %252 = vmatpush1.msra.mxu0 %v200
      %253 = vmatprep.subr.mxu0 0.0
      %254 = vmatpush1.msra.mxu0 %v199
      %255 = vmatprep.subr.mxu0 0.0
      %256 = vmatpush1.msra.mxu0 %v198
      %257 = vmatprep.subr.mxu0 0.0
      %258 = vmatpush1.msra.mxu0 %v197
      %259 = vmatprep.subr.mxu0 0.0
      %260 = vmatpush1.msra.mxu0 %v196
      %261 = vmatprep.subr.mxu0 0.0
      %262 = vmatpush2.msra.mxu0 0.0
      %263 = vmatprep.subr.mxu0 0.0
      %264 = vmatpush2.msra.mxu0 0.0
      %265 = vmatprep.subr.mxu0 0.0
      %266 = vmatpush2.msra.mxu0 0.0
      %267 = vmatprep.subr.mxu0 0.0
      %268 = vmatpush2.msra.mxu0 0.0
      %269 = vmatprep.subr.mxu0 0.0
      %270 = vmatpush2.msra.mxu0 0.0
      %271 = vmatprep.subr.mxu0 0.0
      %272 = vmatpush2.msra.mxu0 0.0
      %273 = vmatprep.subr.mxu0 0.0
      %274 = vmatpush2.msra.mxu0 0.0
      %275 = vmatprep.subr.mxu0 0.0
      %276 = vmatpush2.msra.mxu0 0.0
      %277 = vmatprep.subr.mxu0 0.0
      %278 = vmatpush2.msra.mxu0 0.0
      %279 = vmatprep.subr.mxu0 0.0
      %280 = vmatpush2.msra.mxu0 0.0
      %281 = vmatprep.subr.mxu0 0.0
      %282 = vmatpush2.msra.mxu0 0.0
      %283 = vmatprep.subr.mxu0 0.0
      %284 = vmatpush2.msra.mxu0 0.0
      %285 = vmatprep.subr.mxu0 0.0
      %286 = vmatpush2.msra.mxu0 0.0
      %287 = vmatprep.subr.mxu0 0.0
      %288 = vmatpush2.msra.mxu0 0.0
      %289 = vmatprep.subr.mxu0 0.0
      %290 = vmatpush2.msra.mxu0 0.0
      %291 = vmatprep.subr.mxu0 0.0
      %292 = vmatpush2.msra.mxu0 0.0
      %293 = vmatprep.mubr.f32.mxu0 0.0
      %294 = vmatmul.mubr.f32.gmra.mxu0 %v206
      %v295 = vpop.f32.mrf.mxu0
      %v296 = vadd.f32 0.0, %v295
      %v297 = vpop.f32.mrf.mxu0
      %298 = vmatprep.mubr.f32.mxu0 0.0
      %299 = vmatmul.mubr.f32.gmra.mxu0 %v209
      %v300 = vpop.f32.mrf.mxu0
      %v301 = vadd.f32 0.0, %v300
      %v302 = vpop.f32.mrf.mxu0
      %303 = vmatprep.mubr.f32.mxu0 0.0
      %304 = vmatmul.mubr.f32.gmra.mxu0 %v212
      %v305 = vpop.f32.mrf.mxu0
      %v306 = vadd.f32 0.0, %v305
      %v307 = vpop.f32.mrf.mxu0
      %308 = vmatprep.mubr.f32.mxu0 0.0
      %309 = vmatmul.mubr.f32.gmra.mxu0 %v215
      %v310 = vpop.f32.mrf.mxu0
      %v311 = vadd.f32 0.0, %v310
      %v312 = vpop.f32.mrf.mxu0
      %313 = vmatprep.mubr.f32.mxu0 0.0
      %314 = vmatmul.mubr.f32.gmra.mxu0 %v218
      %v315 = vpop.f32.mrf.mxu0
      %v316 = vadd.f32 0.0, %v315
      %v317 = vpop.f32.mrf.mxu0
      %318 = vmatprep.mubr.f32.mxu0 0.0
      %319 = vmatmul.mubr.f32.gmra.mxu0 %v221
      %v320 = vpop.f32.mrf.mxu0
      %v321 = vadd.f32 0.0, %v320
      %v322 = vpop.f32.mrf.mxu0
      %323 = vmatprep.mubr.f32.mxu0 0.0
      %324 = vmatmul.mubr.f32.gmra.mxu0 %v224
      %v325 = vpop.f32.mrf.mxu0
      %v326 = vadd.f32 0.0, %v325
      %v327 = vpop.f32.mrf.mxu0
      %328 = vmatprep.mubr.f32.mxu0 0.0
      %329 = vmatmul.mubr.f32.gmra.mxu0 %v227
      %v330 = vpop.f32.mrf.mxu0
      %v331 = vadd.f32 0.0, %v330
      %v332 = vpop.f32.mrf.mxu0
      %333 = vdwg.mxu0
      %v335 = vsel %vm204, %v171, 0
      %v338 = vsel %vm204, %v172, 0
      %v341 = vsel %vm204, %v173, 0
      %v344 = vsel %vm204, %v174, 0
      %v347 = vsel %vm204, %v175, 0
      %v350 = vsel %vm204, %v176, 0
      %v353 = vsel %vm204, %v177, 0
      %v356 = vsel %vm204, %v178, 0
      %358 = vmatprep.subr.mxu0 0.0
      %359 = vmatpush1.msra.mxu0 0.0
      %360 = vmatprep.subr.mxu0 0.0
      %361 = vmatpush1.msra.mxu0 0.0
      %362 = vmatprep.subr.mxu0 0.0
      %363 = vmatpush1.msra.mxu0 0.0
      %364 = vmatprep.subr.mxu0 0.0
      %365 = vmatpush1.msra.mxu0 0.0
      %366 = vmatprep.subr.mxu0 0.0
      %367 = vmatpush1.msra.mxu0 0.0
      %368 = vmatprep.subr.mxu0 0.0
      %369 = vmatpush1.msra.mxu0 0.0
      %370 = vmatprep.subr.mxu0 0.0
      %371 = vmatpush1.msra.mxu0 0.0
      %372 = vmatprep.subr.mxu0 0.0
      %373 = vmatpush1.msra.mxu0 0.0
      %374 = vmatprep.subr.mxu0 0.0
      %375 = vmatpush1.msra.mxu0 %v186
      %376 = vmatprep.subr.mxu0 0.0
      %377 = vmatpush1.msra.mxu0 %v185
      %378 = vmatprep.subr.mxu0 0.0
      %379 = vmatpush1.msra.mxu0 %v184
      %380 = vmatprep.subr.mxu0 0.0
      %381 = vmatpush1.msra.mxu0 %v183
      %382 = vmatprep.subr.mxu0 0.0
      %383 = vmatpush1.msra.mxu0 %v182
      %384 = vmatprep.subr.mxu0 0.0
      %385 = vmatpush1.msra.mxu0 %v181
      %386 = vmatprep.subr.mxu0 0.0
      %387 = vmatpush1.msra.mxu0 %v180
      %388 = vmatprep.subr.mxu0 0.0
      %389 = vmatpush1.msra.mxu0 %v179
      %390 = vmatprep.subr.mxu0 0.0
      %391 = vmatpush2.msra.mxu0 0.0
      %392 = vmatprep.subr.mxu0 0.0
      %393 = vmatpush2.msra.mxu0 0.0
      %394 = vmatprep.subr.mxu0 0.0
      %395 = vmatpush2.msra.mxu0 0.0
      %396 = vmatprep.subr.mxu0 0.0
      %397 = vmatpush2.msra.mxu0 0.0
      %398 = vmatprep.subr.mxu0 0.0
      %399 = vmatpush2.msra.mxu0 0.0
      %400 = vmatprep.subr.mxu0 0.0
      %401 = vmatpush2.msra.mxu0 0.0
      %402 = vmatprep.subr.mxu0 0.0
      %403 = vmatpush2.msra.mxu0 0.0
      %404 = vmatprep.subr.mxu0 0.0
      %405 = vmatpush2.msra.mxu0 0.0
      %406 = vmatprep.subr.mxu0 0.0
      %407 = vmatpush2.msra.mxu0 0.0
      %408 = vmatprep.subr.mxu0 0.0
      %409 = vmatpush2.msra.mxu0 0.0
      %410 = vmatprep.subr.mxu0 0.0
      %411 = vmatpush2.msra.mxu0 0.0
      %412 = vmatprep.subr.mxu0 0.0
      %413 = vmatpush2.msra.mxu0 0.0
      %414 = vmatprep.subr.mxu0 0.0
      %415 = vmatpush2.msra.mxu0 0.0
      %416 = vmatprep.subr.mxu0 0.0
      %417 = vmatpush2.msra.mxu0 0.0
      %418 = vmatprep.subr.mxu0 0.0
      %419 = vmatpush2.msra.mxu0 0.0
      %420 = vmatprep.subr.mxu0 0.0
      %421 = vmatpush2.msra.mxu0 0.0
      %422 = vmatprep.mubr.f32.mxu0 0.0
      %423 = vmatmul.mubr.f32.gmra.mxu0 %v335
      %v424 = vpop.f32.mrf.mxu0
      %v425 = vadd.f32 %v296, %v424
      %v426 = vpop.f32.mrf.mxu0
      %427 = vmatprep.mubr.f32.mxu0 0.0
      %428 = vmatmul.mubr.f32.gmra.mxu0 %v338
      %v429 = vpop.f32.mrf.mxu0
      %v430 = vadd.f32 %v301, %v429
      %v431 = vpop.f32.mrf.mxu0
      %432 = vmatprep.mubr.f32.mxu0 0.0
      %433 = vmatmul.mubr.f32.gmra.mxu0 %v341
      %v434 = vpop.f32.mrf.mxu0
      %v435 = vadd.f32 %v306, %v434
      %v436 = vpop.f32.mrf.mxu0
      %437 = vmatprep.mubr.f32.mxu0 0.0
      %438 = vmatmul.mubr.f32.gmra.mxu0 %v344
      %v439 = vpop.f32.mrf.mxu0
      %v440 = vadd.f32 %v311, %v439
      %v441 = vpop.f32.mrf.mxu0
      %442 = vmatprep.mubr.f32.mxu0 0.0
      %443 = vmatmul.mubr.f32.gmra.mxu0 %v347
      %v444 = vpop.f32.mrf.mxu0
      %v445 = vadd.f32 %v316, %v444
      %v446 = vpop.f32.mrf.mxu0
      %447 = vmatprep.mubr.f32.mxu0 0.0
      %448 = vmatmul.mubr.f32.gmra.mxu0 %v350
      %v449 = vpop.f32.mrf.mxu0
      %v450 = vadd.f32 %v321, %v449
      %v451 = vpop.f32.mrf.mxu0
      %452 = vmatprep.mubr.f32.mxu0 0.0
      %453 = vmatmul.mubr.f32.gmra.mxu0 %v353
      %v454 = vpop.f32.mrf.mxu0
      %v455 = vadd.f32 %v326, %v454
      %v456 = vpop.f32.mrf.mxu0
      %457 = vmatprep.mubr.f32.mxu0 0.0
      %458 = vmatmul.mubr.f32.gmra.mxu0 %v356
      %v459 = vpop.f32.mrf.mxu0
      %v460 = vadd.f32 %v331, %v459
      %v461 = vpop.f32.mrf.mxu0
      %462 = vdwg.mxu0
      %v463 = vld [vmem:[%s165 + $0x2] sm:$0xff]
      %v464 = vld [vmem:[%s165 + $0x12] sm:$0xff]
      %v465 = vld [vmem:[%s165 + $0x22] sm:$0xff]
      %v466 = vld [vmem:[%s165 + $0x32] sm:$0xff]
      %v467 = vld [vmem:[%s165 + $0x42] sm:$0xff]
      %v468 = vld [vmem:[%s165 + $0x52] sm:$0xff]
      %v469 = vld [vmem:[%s165 + $0x62] sm:$0xff]
      %v470 = vld [vmem:[%s165 + $0x72] sm:$0xff]
      %s471 = scalar_lea.vmem %s1, 128
      %v472 = vld [vmem:[%s471] sm:$0xff]
      %v473 = vld [vmem:[%s471 + $0x8] sm:$0xff]
      %v474 = vld [vmem:[%s471 + $0x10] sm:$0xff]
      %v475 = vld [vmem:[%s471 + $0x18] sm:$0xff]
      %v476 = vld [vmem:[%s471 + $0x20] sm:$0xff]
      %v477 = vld [vmem:[%s471 + $0x28] sm:$0xff]
      %v478 = vld [vmem:[%s471 + $0x30] sm:$0xff]
      %v479 = vld [vmem:[%s471 + $0x38] sm:$0xff]
      %v481 = vsel %vm204, %v463, 0
      %v484 = vsel %vm204, %v464, 0
      %v487 = vsel %vm204, %v465, 0
      %v490 = vsel %vm204, %v466, 0
      %v493 = vsel %vm204, %v467, 0
      %v496 = vsel %vm204, %v468, 0
      %v499 = vsel %vm204, %v469, 0
      %v502 = vsel %vm204, %v470, 0
      %504 = vmatprep.subr.mxu0 0.0
      %505 = vmatpush1.msra.mxu0 0.0
      %506 = vmatprep.subr.mxu0 0.0
      %507 = vmatpush1.msra.mxu0 0.0
      %508 = vmatprep.subr.mxu0 0.0
      %509 = vmatpush1.msra.mxu0 0.0
      %510 = vmatprep.subr.mxu0 0.0
      %511 = vmatpush1.msra.mxu0 0.0
      %512 = vmatprep.subr.mxu0 0.0
      %513 = vmatpush1.msra.mxu0 0.0
      %514 = vmatprep.subr.mxu0 0.0
      %515 = vmatpush1.msra.mxu0 0.0
      %516 = vmatprep.subr.mxu0 0.0
      %517 = vmatpush1.msra.mxu0 0.0
      %518 = vmatprep.subr.mxu0 0.0
      %519 = vmatpush1.msra.mxu0 0.0
      %520 = vmatprep.subr.mxu0 0.0
      %521 = vmatpush1.msra.mxu0 %v479
      %522 = vmatprep.subr.mxu0 0.0
      %523 = vmatpush1.msra.mxu0 %v478
      %524 = vmatprep.subr.mxu0 0.0
      %525 = vmatpush1.msra.mxu0 %v477
      %526 = vmatprep.subr.mxu0 0.0
      %527 = vmatpush1.msra.mxu0 %v476
      %528 = vmatprep.subr.mxu0 0.0
      %529 = vmatpush1.msra.mxu0 %v475
      %530 = vmatprep.subr.mxu0 0.0
      %531 = vmatpush1.msra.mxu0 %v474
      %532 = vmatprep.subr.mxu0 0.0
      %533 = vmatpush1.msra.mxu0 %v473
      %534 = vmatprep.subr.mxu0 0.0
      %535 = vmatpush1.msra.mxu0 %v472
      %536 = vmatprep.subr.mxu0 0.0
      %537 = vmatpush2.msra.mxu0 0.0
      %538 = vmatprep.subr.mxu0 0.0
      %539 = vmatpush2.msra.mxu0 0.0
      %540 = vmatprep.subr.mxu0 0.0
      %541 = vmatpush2.msra.mxu0 0.0
      %542 = vmatprep.subr.mxu0 0.0
      %543 = vmatpush2.msra.mxu0 0.0
      %544 = vmatprep.subr.mxu0 0.0
      %545 = vmatpush2.msra.mxu0 0.0
      %546 = vmatprep.subr.mxu0 0.0
      %547 = vmatpush2.msra.mxu0 0.0
      %548 = vmatprep.subr.mxu0 0.0
      %549 = vmatpush2.msra.mxu0 0.0
      %550 = vmatprep.subr.mxu0 0.0
      %551 = vmatpush2.msra.mxu0 0.0
      %552 = vmatprep.subr.mxu0 0.0
      %553 = vmatpush2.msra.mxu0 0.0
      %554 = vmatprep.subr.mxu0 0.0
      %555 = vmatpush2.msra.mxu0 0.0
      %556 = vmatprep.subr.mxu0 0.0
      %557 = vmatpush2.msra.mxu0 0.0
      %558 = vmatprep.subr.mxu0 0.0
      %559 = vmatpush2.msra.mxu0 0.0
      %560 = vmatprep.subr.mxu0 0.0
      %561 = vmatpush2.msra.mxu0 0.0
      %562 = vmatprep.subr.mxu0 0.0
      %563 = vmatpush2.msra.mxu0 0.0
      %564 = vmatprep.subr.mxu0 0.0
      %565 = vmatpush2.msra.mxu0 0.0
      %566 = vmatprep.subr.mxu0 0.0
      %567 = vmatpush2.msra.mxu0 0.0
      %568 = vmatprep.mubr.f32.mxu0 0.0
      %569 = vmatmul.mubr.f32.gmra.mxu0 %v481
      %v570 = vpop.f32.mrf.mxu0
      %v571 = vadd.f32 0.0, %v570
      %v572 = vpop.f32.mrf.mxu0
      %573 = vmatprep.mubr.f32.mxu0 0.0
      %574 = vmatmul.mubr.f32.gmra.mxu0 %v484
      %v575 = vpop.f32.mrf.mxu0
      %v576 = vadd.f32 0.0, %v575
      %v577 = vpop.f32.mrf.mxu0
      %578 = vmatprep.mubr.f32.mxu0 0.0
      %579 = vmatmul.mubr.f32.gmra.mxu0 %v487
      %v580 = vpop.f32.mrf.mxu0
      %v581 = vadd.f32 0.0, %v580
      %v582 = vpop.f32.mrf.mxu0
      %583 = vmatprep.mubr.f32.mxu0 0.0
      %584 = vmatmul.mubr.f32.gmra.mxu0 %v490
      %v585 = vpop.f32.mrf.mxu0
      %v586 = vadd.f32 0.0, %v585
      %v587 = vpop.f32.mrf.mxu0
      %588 = vmatprep.mubr.f32.mxu0 0.0
      %589 = vmatmul.mubr.f32.gmra.mxu0 %v493
      %v590 = vpop.f32.mrf.mxu0
      %v591 = vadd.f32 0.0, %v590
      %v592 = vpop.f32.mrf.mxu0
      %593 = vmatprep.mubr.f32.mxu0 0.0
      %594 = vmatmul.mubr.f32.gmra.mxu0 %v496
      %v595 = vpop.f32.mrf.mxu0
      %v596 = vadd.f32 0.0, %v595
      %v597 = vpop.f32.mrf.mxu0
      %598 = vmatprep.mubr.f32.mxu0 0.0
      %599 = vmatmul.mubr.f32.gmra.mxu0 %v499
      %v600 = vpop.f32.mrf.mxu0
      %v601 = vadd.f32 0.0, %v600
      %v602 = vpop.f32.mrf.mxu0
      %603 = vmatprep.mubr.f32.mxu0 0.0
      %604 = vmatmul.mubr.f32.gmra.mxu0 %v502
      %v605 = vpop.f32.mrf.mxu0
      %v606 = vadd.f32 0.0, %v605
      %v607 = vpop.f32.mrf.mxu0
      %608 = vdwg.mxu0
      %v609 = vadd.f32 %v425, %v571
      %v610 = vadd.f32 %v430, %v576
      %v611 = vadd.f32 %v435, %v581
      %v612 = vadd.f32 %v440, %v586
      %v613 = vadd.f32 %v445, %v591
      %v614 = vadd.f32 %v450, %v596
      %v615 = vadd.f32 %v455, %v601
      %v616 = vadd.f32 %v460, %v606
      %s617 = scalar_lea.vmem %s165, 16
      %v618 = vld [vmem:[%s617] sm:$0xff]
      %v619 = vld [vmem:[%s617 + $0x10] sm:$0xff]
      %v620 = vld [vmem:[%s617 + $0x20] sm:$0xff]
      %v621 = vld [vmem:[%s617 + $0x30] sm:$0xff]
      %v622 = vld [vmem:[%s617 + $0x40] sm:$0xff]
      %v623 = vld [vmem:[%s617 + $0x50] sm:$0xff]
      %v624 = vld [vmem:[%s617 + $0x60] sm:$0xff]
      %v625 = vld [vmem:[%s617 + $0x70] sm:$0xff]
      %s626 = scalar_lea.vmem %s1, 192
      %v627 = vld [vmem:[%s626] sm:$0xff]
      %v628 = vld [vmem:[%s626 + $0x8] sm:$0xff]
      %v629 = vld [vmem:[%s626 + $0x10] sm:$0xff]
      %v630 = vld [vmem:[%s626 + $0x18] sm:$0xff]
      %v631 = vld [vmem:[%s626 + $0x20] sm:$0xff]
      %v632 = vld [vmem:[%s626 + $0x28] sm:$0xff]
      %v633 = vld [vmem:[%s626 + $0x30] sm:$0xff]
      %v634 = vld [vmem:[%s626 + $0x38] sm:$0xff]
      %v636 = vsel %vm204, %v618, 0
      %v639 = vsel %vm204, %v619, 0
      %v642 = vsel %vm204, %v620, 0
      %v645 = vsel %vm204, %v621, 0
      %v648 = vsel %vm204, %v622, 0
      %v651 = vsel %vm204, %v623, 0
      %v654 = vsel %vm204, %v624, 0
      %v657 = vsel %vm204, %v625, 0
      %659 = vmatprep.subr.mxu0 0.0
      %660 = vmatpush1.msra.mxu0 0.0
      %661 = vmatprep.subr.mxu0 0.0
      %662 = vmatpush1.msra.mxu0 0.0
      %663 = vmatprep.subr.mxu0 0.0
      %664 = vmatpush1.msra.mxu0 0.0
      %665 = vmatprep.subr.mxu0 0.0
      %666 = vmatpush1.msra.mxu0 0.0
      %667 = vmatprep.subr.mxu0 0.0
      %668 = vmatpush1.msra.mxu0 0.0
      %669 = vmatprep.subr.mxu0 0.0
      %670 = vmatpush1.msra.mxu0 0.0
      %671 = vmatprep.subr.mxu0 0.0
      %672 = vmatpush1.msra.mxu0 0.0
      %673 = vmatprep.subr.mxu0 0.0
      %674 = vmatpush1.msra.mxu0 0.0
      %675 = vmatprep.subr.mxu0 0.0
      %676 = vmatpush1.msra.mxu0 %v634
      %677 = vmatprep.subr.mxu0 0.0
      %678 = vmatpush1.msra.mxu0 %v633
      %679 = vmatprep.subr.mxu0 0.0
      %680 = vmatpush1.msra.mxu0 %v632
      %681 = vmatprep.subr.mxu0 0.0
      %682 = vmatpush1.msra.mxu0 %v631
      %683 = vmatprep.subr.mxu0 0.0
      %684 = vmatpush1.msra.mxu0 %v630
      %685 = vmatprep.subr.mxu0 0.0
      %686 = vmatpush1.msra.mxu0 %v629
      %687 = vmatprep.subr.mxu0 0.0
      %688 = vmatpush1.msra.mxu0 %v628
      %689 = vmatprep.subr.mxu0 0.0
      %690 = vmatpush1.msra.mxu0 %v627
      %691 = vmatprep.subr.mxu0 0.0
      %692 = vmatpush2.msra.mxu0 0.0
      %693 = vmatprep.subr.mxu0 0.0
      %694 = vmatpush2.msra.mxu0 0.0
      %695 = vmatprep.subr.mxu0 0.0
      %696 = vmatpush2.msra.mxu0 0.0
      %697 = vmatprep.subr.mxu0 0.0
      %698 = vmatpush2.msra.mxu0 0.0
      %699 = vmatprep.subr.mxu0 0.0
      %700 = vmatpush2.msra.mxu0 0.0
      %701 = vmatprep.subr.mxu0 0.0
      %702 = vmatpush2.msra.mxu0 0.0
      %703 = vmatprep.subr.mxu0 0.0
      %704 = vmatpush2.msra.mxu0 0.0
      %705 = vmatprep.subr.mxu0 0.0
      %706 = vmatpush2.msra.mxu0 0.0
      %707 = vmatprep.subr.mxu0 0.0
      %708 = vmatpush2.msra.mxu0 0.0
      %709 = vmatprep.subr.mxu0 0.0
      %710 = vmatpush2.msra.mxu0 0.0
      %711 = vmatprep.subr.mxu0 0.0
      %712 = vmatpush2.msra.mxu0 0.0
      %713 = vmatprep.subr.mxu0 0.0
      %714 = vmatpush2.msra.mxu0 0.0
      %715 = vmatprep.subr.mxu0 0.0
      %716 = vmatpush2.msra.mxu0 0.0
      %717 = vmatprep.subr.mxu0 0.0
      %718 = vmatpush2.msra.mxu0 0.0
      %719 = vmatprep.subr.mxu0 0.0
      %720 = vmatpush2.msra.mxu0 0.0
      %721 = vmatprep.subr.mxu0 0.0
      %722 = vmatpush2.msra.mxu0 0.0
      %723 = vmatprep.mubr.f32.mxu0 0.0
      %724 = vmatmul.mubr.f32.gmra.mxu0 %v636
      %v725 = vpop.f32.mrf.mxu0
      %v726 = vadd.f32 0.0, %v725
      %v727 = vpop.f32.mrf.mxu0
      %728 = vmatprep.mubr.f32.mxu0 0.0
      %729 = vmatmul.mubr.f32.gmra.mxu0 %v639
      %v730 = vpop.f32.mrf.mxu0
      %v731 = vadd.f32 0.0, %v730
      %v732 = vpop.f32.mrf.mxu0
      %733 = vmatprep.mubr.f32.mxu0 0.0
      %734 = vmatmul.mubr.f32.gmra.mxu0 %v642
      %v735 = vpop.f32.mrf.mxu0
      %v736 = vadd.f32 0.0, %v735
      %v737 = vpop.f32.mrf.mxu0
      %738 = vmatprep.mubr.f32.mxu0 0.0
      %739 = vmatmul.mubr.f32.gmra.mxu0 %v645
      %v740 = vpop.f32.mrf.mxu0
      %v741 = vadd.f32 0.0, %v740
      %v742 = vpop.f32.mrf.mxu0
      %743 = vmatprep.mubr.f32.mxu0 0.0
      %744 = vmatmul.mubr.f32.gmra.mxu0 %v648
      %v745 = vpop.f32.mrf.mxu0
      %v746 = vadd.f32 0.0, %v745
      %v747 = vpop.f32.mrf.mxu0
      %748 = vmatprep.mubr.f32.mxu0 0.0
      %749 = vmatmul.mubr.f32.gmra.mxu0 %v651
      %v750 = vpop.f32.mrf.mxu0
      %v751 = vadd.f32 0.0, %v750
      %v752 = vpop.f32.mrf.mxu0
      %753 = vmatprep.mubr.f32.mxu0 0.0
      %754 = vmatmul.mubr.f32.gmra.mxu0 %v654
      %v755 = vpop.f32.mrf.mxu0
      %v756 = vadd.f32 0.0, %v755
      %v757 = vpop.f32.mrf.mxu0
      %758 = vmatprep.mubr.f32.mxu0 0.0
      %759 = vmatmul.mubr.f32.gmra.mxu0 %v657
      %v760 = vpop.f32.mrf.mxu0
      %v761 = vadd.f32 0.0, %v760
      %v762 = vpop.f32.mrf.mxu0
      %763 = vdwg.mxu0
      %v764 = vadd.f32 %v609, %v726
      %v765 = vadd.f32 %v610, %v731
      %v766 = vadd.f32 %v611, %v736
      %v767 = vadd.f32 %v612, %v741
      %v768 = vadd.f32 %v613, %v746
      %v769 = vadd.f32 %v614, %v751
      %v770 = vadd.f32 %v615, %v756
      %v771 = vadd.f32 %v616, %v761
      %v772 = vld [vmem:[%s617 + $0x1] sm:$0xff]
      %v773 = vld [vmem:[%s617 + $0x11] sm:$0xff]
      %v774 = vld [vmem:[%s617 + $0x21] sm:$0xff]
      %v775 = vld [vmem:[%s617 + $0x31] sm:$0xff]
      %v776 = vld [vmem:[%s617 + $0x41] sm:$0xff]
      %v777 = vld [vmem:[%s617 + $0x51] sm:$0xff]
      %v778 = vld [vmem:[%s617 + $0x61] sm:$0xff]
      %v779 = vld [vmem:[%s617 + $0x71] sm:$0xff]
      %s780 = scalar_lea.vmem %s1, 256
      %v781 = vld [vmem:[%s780] sm:$0xff]
      %v782 = vld [vmem:[%s780 + $0x8] sm:$0xff]
      %v783 = vld [vmem:[%s780 + $0x10] sm:$0xff]
      %v784 = vld [vmem:[%s780 + $0x18] sm:$0xff]
      %v785 = vld [vmem:[%s780 + $0x20] sm:$0xff]
      %v786 = vld [vmem:[%s780 + $0x28] sm:$0xff]
      %v787 = vld [vmem:[%s780 + $0x30] sm:$0xff]
      %v788 = vld [vmem:[%s780 + $0x38] sm:$0xff]
      %v790 = vsel %vm204, %v772, 0
      %v793 = vsel %vm204, %v773, 0
      %v796 = vsel %vm204, %v774, 0
      %v799 = vsel %vm204, %v775, 0
      %v802 = vsel %vm204, %v776, 0
      %v805 = vsel %vm204, %v777, 0
      %v808 = vsel %vm204, %v778, 0
      %v811 = vsel %vm204, %v779, 0
      %813 = vmatprep.subr.mxu0 0.0
      %814 = vmatpush1.msra.mxu0 0.0
      %815 = vmatprep.subr.mxu0 0.0
      %816 = vmatpush1.msra.mxu0 0.0
      %817 = vmatprep.subr.mxu0 0.0
      %818 = vmatpush1.msra.mxu0 0.0
      %819 = vmatprep.subr.mxu0 0.0
      %820 = vmatpush1.msra.mxu0 0.0
      %821 = vmatprep.subr.mxu0 0.0
      %822 = vmatpush1.msra.mxu0 0.0
      %823 = vmatprep.subr.mxu0 0.0
      %824 = vmatpush1.msra.mxu0 0.0
      %825 = vmatprep.subr.mxu0 0.0
      %826 = vmatpush1.msra.mxu0 0.0
      %827 = vmatprep.subr.mxu0 0.0
      %828 = vmatpush1.msra.mxu0 0.0
      %829 = vmatprep.subr.mxu0 0.0
      %830 = vmatpush1.msra.mxu0 %v788
      %831 = vmatprep.subr.mxu0 0.0
      %832 = vmatpush1.msra.mxu0 %v787
      %833 = vmatprep.subr.mxu0 0.0
      %834 = vmatpush1.msra.mxu0 %v786
      %835 = vmatprep.subr.mxu0 0.0
      %836 = vmatpush1.msra.mxu0 %v785
      %837 = vmatprep.subr.mxu0 0.0
      %838 = vmatpush1.msra.mxu0 %v784
      %839 = vmatprep.subr.mxu0 0.0
      %840 = vmatpush1.msra.mxu0 %v783
      %841 = vmatprep.subr.mxu0 0.0
      %842 = vmatpush1.msra.mxu0 %v782
      %843 = vmatprep.subr.mxu0 0.0
      %844 = vmatpush1.msra.mxu0 %v781
      %845 = vmatprep.subr.mxu0 0.0
      %846 = vmatpush2.msra.mxu0 0.0
      %847 = vmatprep.subr.mxu0 0.0
      %848 = vmatpush2.msra.mxu0 0.0
      %849 = vmatprep.subr.mxu0 0.0
      %850 = vmatpush2.msra.mxu0 0.0
      %851 = vmatprep.subr.mxu0 0.0
      %852 = vmatpush2.msra.mxu0 0.0
      %853 = vmatprep.subr.mxu0 0.0
      %854 = vmatpush2.msra.mxu0 0.0
      %855 = vmatprep.subr.mxu0 0.0
      %856 = vmatpush2.msra.mxu0 0.0
      %857 = vmatprep.subr.mxu0 0.0
      %858 = vmatpush2.msra.mxu0 0.0
      %859 = vmatprep.subr.mxu0 0.0
      %860 = vmatpush2.msra.mxu0 0.0
      %861 = vmatprep.subr.mxu0 0.0
      %862 = vmatpush2.msra.mxu0 0.0
      %863 = vmatprep.subr.mxu0 0.0
      %864 = vmatpush2.msra.mxu0 0.0
      %865 = vmatprep.subr.mxu0 0.0
      %866 = vmatpush2.msra.mxu0 0.0
      %867 = vmatprep.subr.mxu0 0.0
      %868 = vmatpush2.msra.mxu0 0.0
      %869 = vmatprep.subr.mxu0 0.0
      %870 = vmatpush2.msra.mxu0 0.0
      %871 = vmatprep.subr.mxu0 0.0
      %872 = vmatpush2.msra.mxu0 0.0
      %873 = vmatprep.subr.mxu0 0.0
      %874 = vmatpush2.msra.mxu0 0.0
      %875 = vmatprep.subr.mxu0 0.0
      %876 = vmatpush2.msra.mxu0 0.0
      %877 = vmatprep.mubr.f32.mxu0 0.0
      %878 = vmatmul.mubr.f32.gmra.mxu0 %v790
      %v879 = vpop.f32.mrf.mxu0
      %v880 = vadd.f32 0.0, %v879
      %v881 = vpop.f32.mrf.mxu0
      %882 = vmatprep.mubr.f32.mxu0 0.0
      %883 = vmatmul.mubr.f32.gmra.mxu0 %v793
      %v884 = vpop.f32.mrf.mxu0
      %v885 = vadd.f32 0.0, %v884
      %v886 = vpop.f32.mrf.mxu0
      %887 = vmatprep.mubr.f32.mxu0 0.0
      %888 = vmatmul.mubr.f32.gmra.mxu0 %v796
      %v889 = vpop.f32.mrf.mxu0
      %v890 = vadd.f32 0.0, %v889
      %v891 = vpop.f32.mrf.mxu0
      %892 = vmatprep.mubr.f32.mxu0 0.0
      %893 = vmatmul.mubr.f32.gmra.mxu0 %v799
      %v894 = vpop.f32.mrf.mxu0
      %v895 = vadd.f32 0.0, %v894
      %v896 = vpop.f32.mrf.mxu0
      %897 = vmatprep.mubr.f32.mxu0 0.0
      %898 = vmatmul.mubr.f32.gmra.mxu0 %v802
      %v899 = vpop.f32.mrf.mxu0
      %v900 = vadd.f32 0.0, %v899
      %v901 = vpop.f32.mrf.mxu0
      %902 = vmatprep.mubr.f32.mxu0 0.0
      %903 = vmatmul.mubr.f32.gmra.mxu0 %v805
      %v904 = vpop.f32.mrf.mxu0
      %v905 = vadd.f32 0.0, %v904
      %v906 = vpop.f32.mrf.mxu0
      %907 = vmatprep.mubr.f32.mxu0 0.0
      %908 = vmatmul.mubr.f32.gmra.mxu0 %v808
      %v909 = vpop.f32.mrf.mxu0
      %v910 = vadd.f32 0.0, %v909
      %v911 = vpop.f32.mrf.mxu0
      %912 = vmatprep.mubr.f32.mxu0 0.0
      %913 = vmatmul.mubr.f32.gmra.mxu0 %v811
      %v914 = vpop.f32.mrf.mxu0
      %v915 = vadd.f32 0.0, %v914
      %v916 = vpop.f32.mrf.mxu0
      %917 = vdwg.mxu0
      %v918 = vadd.f32 %v764, %v880
      %v919 = vadd.f32 %v765, %v885
      %v920 = vadd.f32 %v766, %v890
      %v921 = vadd.f32 %v767, %v895
      %v922 = vadd.f32 %v768, %v900
      %v923 = vadd.f32 %v769, %v905
      %v924 = vadd.f32 %v770, %v910
      %v925 = vadd.f32 %v771, %v915
      %v926 = vld [vmem:[%s617 + $0x2] sm:$0xff]
      %v927 = vld [vmem:[%s617 + $0x12] sm:$0xff]
      %v928 = vld [vmem:[%s617 + $0x22] sm:$0xff]
      %v929 = vld [vmem:[%s617 + $0x32] sm:$0xff]
      %v930 = vld [vmem:[%s617 + $0x42] sm:$0xff]
      %v931 = vld [vmem:[%s617 + $0x52] sm:$0xff]
      %v932 = vld [vmem:[%s617 + $0x62] sm:$0xff]
      %v933 = vld [vmem:[%s617 + $0x72] sm:$0xff]
      %s934 = scalar_lea.vmem %s1, 320
      %v935 = vld [vmem:[%s934] sm:$0xff]
      %v936 = vld [vmem:[%s934 + $0x8] sm:$0xff]
      %v937 = vld [vmem:[%s934 + $0x10] sm:$0xff]
      %v938 = vld [vmem:[%s934 + $0x18] sm:$0xff]
      %v939 = vld [vmem:[%s934 + $0x20] sm:$0xff]
      %v940 = vld [vmem:[%s934 + $0x28] sm:$0xff]
      %v941 = vld [vmem:[%s934 + $0x30] sm:$0xff]
      %v942 = vld [vmem:[%s934 + $0x38] sm:$0xff]
      %v944 = vsel %vm204, %v926, 0
      %v947 = vsel %vm204, %v927, 0
      %v950 = vsel %vm204, %v928, 0
      %v953 = vsel %vm204, %v929, 0
      %v956 = vsel %vm204, %v930, 0
      %v959 = vsel %vm204, %v931, 0
      %v962 = vsel %vm204, %v932, 0
      %v965 = vsel %vm204, %v933, 0
      %967 = vmatprep.subr.mxu0 0.0
      %968 = vmatpush1.msra.mxu0 0.0
      %969 = vmatprep.subr.mxu0 0.0
      %970 = vmatpush1.msra.mxu0 0.0
      %971 = vmatprep.subr.mxu0 0.0
      %972 = vmatpush1.msra.mxu0 0.0
      %973 = vmatprep.subr.mxu0 0.0
      %974 = vmatpush1.msra.mxu0 0.0
      %975 = vmatprep.subr.mxu0 0.0
      %976 = vmatpush1.msra.mxu0 0.0
      %977 = vmatprep.subr.mxu0 0.0
      %978 = vmatpush1.msra.mxu0 0.0
      %979 = vmatprep.subr.mxu0 0.0
      %980 = vmatpush1.msra.mxu0 0.0
      %981 = vmatprep.subr.mxu0 0.0
      %982 = vmatpush1.msra.mxu0 0.0
      %983 = vmatprep.subr.mxu0 0.0
      %984 = vmatpush1.msra.mxu0 %v942
      %985 = vmatprep.subr.mxu0 0.0
      %986 = vmatpush1.msra.mxu0 %v941
      %987 = vmatprep.subr.mxu0 0.0
      %988 = vmatpush1.msra.mxu0 %v940
      %989 = vmatprep.subr.mxu0 0.0
      %990 = vmatpush1.msra.mxu0 %v939
      %991 = vmatprep.subr.mxu0 0.0
      %992 = vmatpush1.msra.mxu0 %v938
      %993 = vmatprep.subr.mxu0 0.0
      %994 = vmatpush1.msra.mxu0 %v937
      %995 = vmatprep.subr.mxu0 0.0
      %996 = vmatpush1.msra.mxu0 %v936
      %997 = vmatprep.subr.mxu0 0.0
      %998 = vmatpush1.msra.mxu0 %v935
      %999 = vmatprep.subr.mxu0 0.0
      %1000 = vmatpush2.msra.mxu0 0.0
      %1001 = vmatprep.subr.mxu0 0.0
      %1002 = vmatpush2.msra.mxu0 0.0
      %1003 = vmatprep.subr.mxu0 0.0
      %1004 = vmatpush2.msra.mxu0 0.0
      %1005 = vmatprep.subr.mxu0 0.0
      %1006 = vmatpush2.msra.mxu0 0.0
      %1007 = vmatprep.subr.mxu0 0.0
      %1008 = vmatpush2.msra.mxu0 0.0
      %1009 = vmatprep.subr.mxu0 0.0
      %1010 = vmatpush2.msra.mxu0 0.0
      %1011 = vmatprep.subr.mxu0 0.0
      %1012 = vmatpush2.msra.mxu0 0.0
      %1013 = vmatprep.subr.mxu0 0.0
      %1014 = vmatpush2.msra.mxu0 0.0
      %1015 = vmatprep.subr.mxu0 0.0
      %1016 = vmatpush2.msra.mxu0 0.0
      %1017 = vmatprep.subr.mxu0 0.0
      %1018 = vmatpush2.msra.mxu0 0.0
      %1019 = vmatprep.subr.mxu0 0.0
      %1020 = vmatpush2.msra.mxu0 0.0
      %1021 = vmatprep.subr.mxu0 0.0
      %1022 = vmatpush2.msra.mxu0 0.0
      %1023 = vmatprep.subr.mxu0 0.0
      %1024 = vmatpush2.msra.mxu0 0.0
      %1025 = vmatprep.subr.mxu0 0.0
      %1026 = vmatpush2.msra.mxu0 0.0
      %1027 = vmatprep.subr.mxu0 0.0
      %1028 = vmatpush2.msra.mxu0 0.0
      %1029 = vmatprep.subr.mxu0 0.0
      %1030 = vmatpush2.msra.mxu0 0.0
      %1031 = vmatprep.mubr.f32.mxu0 0.0
      %1032 = vmatmul.mubr.f32.gmra.mxu0 %v944
      %v1033 = vpop.f32.mrf.mxu0
      %v1034 = vadd.f32 0.0, %v1033
      %v1035 = vpop.f32.mrf.mxu0
      %1036 = vmatprep.mubr.f32.mxu0 0.0
      %1037 = vmatmul.mubr.f32.gmra.mxu0 %v947
      %v1038 = vpop.f32.mrf.mxu0
      %v1039 = vadd.f32 0.0, %v1038
      %v1040 = vpop.f32.mrf.mxu0
      %1041 = vmatprep.mubr.f32.mxu0 0.0
      %1042 = vmatmul.mubr.f32.gmra.mxu0 %v950
      %v1043 = vpop.f32.mrf.mxu0
      %v1044 = vadd.f32 0.0, %v1043
      %v1045 = vpop.f32.mrf.mxu0
      %1046 = vmatprep.mubr.f32.mxu0 0.0
      %1047 = vmatmul.mubr.f32.gmra.mxu0 %v953
      %v1048 = vpop.f32.mrf.mxu0
      %v1049 = vadd.f32 0.0, %v1048
      %v1050 = vpop.f32.mrf.mxu0
      %1051 = vmatprep.mubr.f32.mxu0 0.0
      %1052 = vmatmul.mubr.f32.gmra.mxu0 %v956
      %v1053 = vpop.f32.mrf.mxu0
      %v1054 = vadd.f32 0.0, %v1053
      %v1055 = vpop.f32.mrf.mxu0
      %1056 = vmatprep.mubr.f32.mxu0 0.0
      %1057 = vmatmul.mubr.f32.gmra.mxu0 %v959
      %v1058 = vpop.f32.mrf.mxu0
      %v1059 = vadd.f32 0.0, %v1058
      %v1060 = vpop.f32.mrf.mxu0
      %1061 = vmatprep.mubr.f32.mxu0 0.0
      %1062 = vmatmul.mubr.f32.gmra.mxu0 %v962
      %v1063 = vpop.f32.mrf.mxu0
      %v1064 = vadd.f32 0.0, %v1063
      %v1065 = vpop.f32.mrf.mxu0
      %1066 = vmatprep.mubr.f32.mxu0 0.0
      %1067 = vmatmul.mubr.f32.gmra.mxu0 %v965
      %v1068 = vpop.f32.mrf.mxu0
      %v1069 = vadd.f32 0.0, %v1068
      %v1070 = vpop.f32.mrf.mxu0
      %1071 = vdwg.mxu0
      %v1072 = vadd.f32 %v918, %v1034
      %v1073 = vadd.f32 %v919, %v1039
      %v1074 = vadd.f32 %v920, %v1044
      %v1075 = vadd.f32 %v921, %v1049
      %v1076 = vadd.f32 %v922, %v1054
      %v1077 = vadd.f32 %v923, %v1059
      %v1078 = vadd.f32 %v924, %v1064
      %v1079 = vadd.f32 %v925, %v1069
      %s1080 = scalar_lea.vmem %s165, 32
      %v1081 = vld [vmem:[%s1080] sm:$0xff]
      %v1082 = vld [vmem:[%s1080 + $0x10] sm:$0xff]
      %v1083 = vld [vmem:[%s1080 + $0x20] sm:$0xff]
      %v1084 = vld [vmem:[%s1080 + $0x30] sm:$0xff]
      %v1085 = vld [vmem:[%s1080 + $0x40] sm:$0xff]
      %v1086 = vld [vmem:[%s1080 + $0x50] sm:$0xff]
      %v1087 = vld [vmem:[%s1080 + $0x60] sm:$0xff]
      %v1088 = vld [vmem:[%s1080 + $0x70] sm:$0xff]
      %s1089 = scalar_lea.vmem %s1, 384
      %v1090 = vld [vmem:[%s1089] sm:$0xff]
      %v1091 = vld [vmem:[%s1089 + $0x8] sm:$0xff]
      %v1092 = vld [vmem:[%s1089 + $0x10] sm:$0xff]
      %v1093 = vld [vmem:[%s1089 + $0x18] sm:$0xff]
      %v1094 = vld [vmem:[%s1089 + $0x20] sm:$0xff]
      %v1095 = vld [vmem:[%s1089 + $0x28] sm:$0xff]
      %v1096 = vld [vmem:[%s1089 + $0x30] sm:$0xff]
      %v1097 = vld [vmem:[%s1089 + $0x38] sm:$0xff]
      %v1099 = vsel %vm204, %v1081, 0
      %v1102 = vsel %vm204, %v1082, 0
      %v1105 = vsel %vm204, %v1083, 0
      %v1108 = vsel %vm204, %v1084, 0
      %v1111 = vsel %vm204, %v1085, 0
      %v1114 = vsel %vm204, %v1086, 0
      %v1117 = vsel %vm204, %v1087, 0
      %v1120 = vsel %vm204, %v1088, 0
      %1122 = vmatprep.subr.mxu0 0.0
      %1123 = vmatpush1.msra.mxu0 0.0
      %1124 = vmatprep.subr.mxu0 0.0
      %1125 = vmatpush1.msra.mxu0 0.0
      %1126 = vmatprep.subr.mxu0 0.0
      %1127 = vmatpush1.msra.mxu0 0.0
      %1128 = vmatprep.subr.mxu0 0.0
      %1129 = vmatpush1.msra.mxu0 0.0
      %1130 = vmatprep.subr.mxu0 0.0
      %1131 = vmatpush1.msra.mxu0 0.0
      %1132 = vmatprep.subr.mxu0 0.0
      %1133 = vmatpush1.msra.mxu0 0.0
      %1134 = vmatprep.subr.mxu0 0.0
      %1135 = vmatpush1.msra.mxu0 0.0
      %1136 = vmatprep.subr.mxu0 0.0
      %1137 = vmatpush1.msra.mxu0 0.0
      %1138 = vmatprep.subr.mxu0 0.0
      %1139 = vmatpush1.msra.mxu0 %v1097
      %1140 = vmatprep.subr.mxu0 0.0
      %1141 = vmatpush1.msra.mxu0 %v1096
      %1142 = vmatprep.subr.mxu0 0.0
      %1143 = vmatpush1.msra.mxu0 %v1095
      %1144 = vmatprep.subr.mxu0 0.0
      %1145 = vmatpush1.msra.mxu0 %v1094
      %1146 = vmatprep.subr.mxu0 0.0
      %1147 = vmatpush1.msra.mxu0 %v1093
      %1148 = vmatprep.subr.mxu0 0.0
      %1149 = vmatpush1.msra.mxu0 %v1092
      %1150 = vmatprep.subr.mxu0 0.0
      %1151 = vmatpush1.msra.mxu0 %v1091
      %1152 = vmatprep.subr.mxu0 0.0
      %1153 = vmatpush1.msra.mxu0 %v1090
      %1154 = vmatprep.subr.mxu0 0.0
      %1155 = vmatpush2.msra.mxu0 0.0
      %1156 = vmatprep.subr.mxu0 0.0
      %1157 = vmatpush2.msra.mxu0 0.0
      %1158 = vmatprep.subr.mxu0 0.0
      %1159 = vmatpush2.msra.mxu0 0.0
      %1160 = vmatprep.subr.mxu0 0.0
      %1161 = vmatpush2.msra.mxu0 0.0
      %1162 = vmatprep.subr.mxu0 0.0
      %1163 = vmatpush2.msra.mxu0 0.0
      %1164 = vmatprep.subr.mxu0 0.0
      %1165 = vmatpush2.msra.mxu0 0.0
      %1166 = vmatprep.subr.mxu0 0.0
      %1167 = vmatpush2.msra.mxu0 0.0
      %1168 = vmatprep.subr.mxu0 0.0
      %1169 = vmatpush2.msra.mxu0 0.0
      %1170 = vmatprep.subr.mxu0 0.0
      %1171 = vmatpush2.msra.mxu0 0.0
      %1172 = vmatprep.subr.mxu0 0.0
      %1173 = vmatpush2.msra.mxu0 0.0
      %1174 = vmatprep.subr.mxu0 0.0
      %1175 = vmatpush2.msra.mxu0 0.0
      %1176 = vmatprep.subr.mxu0 0.0
      %1177 = vmatpush2.msra.mxu0 0.0
      %1178 = vmatprep.subr.mxu0 0.0
      %1179 = vmatpush2.msra.mxu0 0.0
      %1180 = vmatprep.subr.mxu0 0.0
      %1181 = vmatpush2.msra.mxu0 0.0
      %1182 = vmatprep.subr.mxu0 0.0
      %1183 = vmatpush2.msra.mxu0 0.0
      %1184 = vmatprep.subr.mxu0 0.0
      %1185 = vmatpush2.msra.mxu0 0.0
      %1186 = vmatprep.mubr.f32.mxu0 0.0
      %1187 = vmatmul.mubr.f32.gmra.mxu0 %v1099
      %v1188 = vpop.f32.mrf.mxu0
      %v1189 = vadd.f32 0.0, %v1188
      %v1190 = vpop.f32.mrf.mxu0
      %1191 = vmatprep.mubr.f32.mxu0 0.0
      %1192 = vmatmul.mubr.f32.gmra.mxu0 %v1102
      %v1193 = vpop.f32.mrf.mxu0
      %v1194 = vadd.f32 0.0, %v1193
      %v1195 = vpop.f32.mrf.mxu0
      %1196 = vmatprep.mubr.f32.mxu0 0.0
      %1197 = vmatmul.mubr.f32.gmra.mxu0 %v1105
      %v1198 = vpop.f32.mrf.mxu0
      %v1199 = vadd.f32 0.0, %v1198
      %v1200 = vpop.f32.mrf.mxu0
      %1201 = vmatprep.mubr.f32.mxu0 0.0
      %1202 = vmatmul.mubr.f32.gmra.mxu0 %v1108
      %v1203 = vpop.f32.mrf.mxu0
      %v1204 = vadd.f32 0.0, %v1203
      %v1205 = vpop.f32.mrf.mxu0
      %1206 = vmatprep.mubr.f32.mxu0 0.0
      %1207 = vmatmul.mubr.f32.gmra.mxu0 %v1111
      %v1208 = vpop.f32.mrf.mxu0
      %v1209 = vadd.f32 0.0, %v1208
      %v1210 = vpop.f32.mrf.mxu0
      %1211 = vmatprep.mubr.f32.mxu0 0.0
      %1212 = vmatmul.mubr.f32.gmra.mxu0 %v1114
      %v1213 = vpop.f32.mrf.mxu0
      %v1214 = vadd.f32 0.0, %v1213
      %v1215 = vpop.f32.mrf.mxu0
      %1216 = vmatprep.mubr.f32.mxu0 0.0
      %1217 = vmatmul.mubr.f32.gmra.mxu0 %v1117
      %v1218 = vpop.f32.mrf.mxu0
      %v1219 = vadd.f32 0.0, %v1218
      %v1220 = vpop.f32.mrf.mxu0
      %1221 = vmatprep.mubr.f32.mxu0 0.0
      %1222 = vmatmul.mubr.f32.gmra.mxu0 %v1120
      %v1223 = vpop.f32.mrf.mxu0
      %v1224 = vadd.f32 0.0, %v1223
      %v1225 = vpop.f32.mrf.mxu0
      %1226 = vdwg.mxu0
      %v1227 = vadd.f32 %v1072, %v1189
      %v1228 = vadd.f32 %v1073, %v1194
      %v1229 = vadd.f32 %v1074, %v1199
      %v1230 = vadd.f32 %v1075, %v1204
      %v1231 = vadd.f32 %v1076, %v1209
      %v1232 = vadd.f32 %v1077, %v1214
      %v1233 = vadd.f32 %v1078, %v1219
      %v1234 = vadd.f32 %v1079, %v1224
      %v1235 = vld [vmem:[%s1080 + $0x1] sm:$0xff]
      %v1236 = vld [vmem:[%s1080 + $0x11] sm:$0xff]
      %v1237 = vld [vmem:[%s1080 + $0x21] sm:$0xff]
      %v1238 = vld [vmem:[%s1080 + $0x31] sm:$0xff]
      %v1239 = vld [vmem:[%s1080 + $0x41] sm:$0xff]
      %v1240 = vld [vmem:[%s1080 + $0x51] sm:$0xff]
      %v1241 = vld [vmem:[%s1080 + $0x61] sm:$0xff]
      %v1242 = vld [vmem:[%s1080 + $0x71] sm:$0xff]
      %s1243 = scalar_lea.vmem %s1, 448
      %v1244 = vld [vmem:[%s1243] sm:$0xff]
      %v1245 = vld [vmem:[%s1243 + $0x8] sm:$0xff]
      %v1246 = vld [vmem:[%s1243 + $0x10] sm:$0xff]
      %v1247 = vld [vmem:[%s1243 + $0x18] sm:$0xff]
      %v1248 = vld [vmem:[%s1243 + $0x20] sm:$0xff]
      %v1249 = vld [vmem:[%s1243 + $0x28] sm:$0xff]
      %v1250 = vld [vmem:[%s1243 + $0x30] sm:$0xff]
      %v1251 = vld [vmem:[%s1243 + $0x38] sm:$0xff]
      %v1253 = vsel %vm204, %v1235, 0
      %v1256 = vsel %vm204, %v1236, 0
      %v1259 = vsel %vm204, %v1237, 0
      %v1262 = vsel %vm204, %v1238, 0
      %v1265 = vsel %vm204, %v1239, 0
      %v1268 = vsel %vm204, %v1240, 0
      %v1271 = vsel %vm204, %v1241, 0
      %v1274 = vsel %vm204, %v1242, 0
      %1276 = vmatprep.subr.mxu0 0.0
      %1277 = vmatpush1.msra.mxu0 0.0
      %1278 = vmatprep.subr.mxu0 0.0
      %1279 = vmatpush1.msra.mxu0 0.0
      %1280 = vmatprep.subr.mxu0 0.0
      %1281 = vmatpush1.msra.mxu0 0.0
      %1282 = vmatprep.subr.mxu0 0.0
      %1283 = vmatpush1.msra.mxu0 0.0
      %1284 = vmatprep.subr.mxu0 0.0
      %1285 = vmatpush1.msra.mxu0 0.0
      %1286 = vmatprep.subr.mxu0 0.0
      %1287 = vmatpush1.msra.mxu0 0.0
      %1288 = vmatprep.subr.mxu0 0.0
      %1289 = vmatpush1.msra.mxu0 0.0
      %1290 = vmatprep.subr.mxu0 0.0
      %1291 = vmatpush1.msra.mxu0 0.0
      %1292 = vmatprep.subr.mxu0 0.0
      %1293 = vmatpush1.msra.mxu0 %v1251
      %1294 = vmatprep.subr.mxu0 0.0
      %1295 = vmatpush1.msra.mxu0 %v1250
      %1296 = vmatprep.subr.mxu0 0.0
      %1297 = vmatpush1.msra.mxu0 %v1249
      %1298 = vmatprep.subr.mxu0 0.0
      %1299 = vmatpush1.msra.mxu0 %v1248
      %1300 = vmatprep.subr.mxu0 0.0
      %1301 = vmatpush1.msra.mxu0 %v1247
      %1302 = vmatprep.subr.mxu0 0.0
      %1303 = vmatpush1.msra.mxu0 %v1246
      %1304 = vmatprep.subr.mxu0 0.0
      %1305 = vmatpush1.msra.mxu0 %v1245
      %1306 = vmatprep.subr.mxu0 0.0
      %1307 = vmatpush1.msra.mxu0 %v1244
      %1308 = vmatprep.subr.mxu0 0.0
      %1309 = vmatpush2.msra.mxu0 0.0
      %1310 = vmatprep.subr.mxu0 0.0
      %1311 = vmatpush2.msra.mxu0 0.0
      %1312 = vmatprep.subr.mxu0 0.0
      %1313 = vmatpush2.msra.mxu0 0.0
      %1314 = vmatprep.subr.mxu0 0.0
      %1315 = vmatpush2.msra.mxu0 0.0
      %1316 = vmatprep.subr.mxu0 0.0
      %1317 = vmatpush2.msra.mxu0 0.0
      %1318 = vmatprep.subr.mxu0 0.0
      %1319 = vmatpush2.msra.mxu0 0.0
      %1320 = vmatprep.subr.mxu0 0.0
      %1321 = vmatpush2.msra.mxu0 0.0
      %1322 = vmatprep.subr.mxu0 0.0
      %1323 = vmatpush2.msra.mxu0 0.0
      %1324 = vmatprep.subr.mxu0 0.0
      %1325 = vmatpush2.msra.mxu0 0.0
      %1326 = vmatprep.subr.mxu0 0.0
      %1327 = vmatpush2.msra.mxu0 0.0
      %1328 = vmatprep.subr.mxu0 0.0
      %1329 = vmatpush2.msra.mxu0 0.0
      %1330 = vmatprep.subr.mxu0 0.0
      %1331 = vmatpush2.msra.mxu0 0.0
      %1332 = vmatprep.subr.mxu0 0.0
      %1333 = vmatpush2.msra.mxu0 0.0
      %1334 = vmatprep.subr.mxu0 0.0
      %1335 = vmatpush2.msra.mxu0 0.0
      %1336 = vmatprep.subr.mxu0 0.0
      %1337 = vmatpush2.msra.mxu0 0.0
      %1338 = vmatprep.subr.mxu0 0.0
      %1339 = vmatpush2.msra.mxu0 0.0
      %1340 = vmatprep.mubr.f32.mxu0 0.0
      %1341 = vmatmul.mubr.f32.gmra.mxu0 %v1253
      %v1342 = vpop.f32.mrf.mxu0
      %v1343 = vadd.f32 0.0, %v1342
      %v1344 = vpop.f32.mrf.mxu0
      %1345 = vmatprep.mubr.f32.mxu0 0.0
      %1346 = vmatmul.mubr.f32.gmra.mxu0 %v1256
      %v1347 = vpop.f32.mrf.mxu0
      %v1348 = vadd.f32 0.0, %v1347
      %v1349 = vpop.f32.mrf.mxu0
      %1350 = vmatprep.mubr.f32.mxu0 0.0
      %1351 = vmatmul.mubr.f32.gmra.mxu0 %v1259
      %v1352 = vpop.f32.mrf.mxu0
      %v1353 = vadd.f32 0.0, %v1352
      %v1354 = vpop.f32.mrf.mxu0
      %1355 = vmatprep.mubr.f32.mxu0 0.0
      %1356 = vmatmul.mubr.f32.gmra.mxu0 %v1262
      %v1357 = vpop.f32.mrf.mxu0
      %v1358 = vadd.f32 0.0, %v1357
      %v1359 = vpop.f32.mrf.mxu0
      %1360 = vmatprep.mubr.f32.mxu0 0.0
      %1361 = vmatmul.mubr.f32.gmra.mxu0 %v1265
      %v1362 = vpop.f32.mrf.mxu0
      %v1363 = vadd.f32 0.0, %v1362
      %v1364 = vpop.f32.mrf.mxu0
      %1365 = vmatprep.mubr.f32.mxu0 0.0
      %1366 = vmatmul.mubr.f32.gmra.mxu0 %v1268
      %v1367 = vpop.f32.mrf.mxu0
      %v1368 = vadd.f32 0.0, %v1367
      %v1369 = vpop.f32.mrf.mxu0
      %1370 = vmatprep.mubr.f32.mxu0 0.0
      %1371 = vmatmul.mubr.f32.gmra.mxu0 %v1271
      %v1372 = vpop.f32.mrf.mxu0
      %v1373 = vadd.f32 0.0, %v1372
      %v1374 = vpop.f32.mrf.mxu0
      %1375 = vmatprep.mubr.f32.mxu0 0.0
      %1376 = vmatmul.mubr.f32.gmra.mxu0 %v1274
      %v1377 = vpop.f32.mrf.mxu0
      %v1378 = vadd.f32 0.0, %v1377
      %v1379 = vpop.f32.mrf.mxu0
      %1380 = vdwg.mxu0
      %v1381 = vadd.f32 %v1227, %v1343
      %v1382 = vadd.f32 %v1228, %v1348
      %v1383 = vadd.f32 %v1229, %v1353
      %v1384 = vadd.f32 %v1230, %v1358
      %v1385 = vadd.f32 %v1231, %v1363
      %v1386 = vadd.f32 %v1232, %v1368
      %v1387 = vadd.f32 %v1233, %v1373
      %v1388 = vadd.f32 %v1234, %v1378
      %v1389 = vld [vmem:[%s1080 + $0x2] sm:$0xff]
      %v1390 = vld [vmem:[%s1080 + $0x12] sm:$0xff]
      %v1391 = vld [vmem:[%s1080 + $0x22] sm:$0xff]
      %v1392 = vld [vmem:[%s1080 + $0x32] sm:$0xff]
      %v1393 = vld [vmem:[%s1080 + $0x42] sm:$0xff]
      %v1394 = vld [vmem:[%s1080 + $0x52] sm:$0xff]
      %v1395 = vld [vmem:[%s1080 + $0x62] sm:$0xff]
      %v1396 = vld [vmem:[%s1080 + $0x72] sm:$0xff]
      %s1397 = scalar_lea.vmem %s1, 512
      %v1398 = vld [vmem:[%s1397] sm:$0xff]
      %v1399 = vld [vmem:[%s1397 + $0x8] sm:$0xff]
      %v1400 = vld [vmem:[%s1397 + $0x10] sm:$0xff]
      %v1401 = vld [vmem:[%s1397 + $0x18] sm:$0xff]
      %v1402 = vld [vmem:[%s1397 + $0x20] sm:$0xff]
      %v1403 = vld [vmem:[%s1397 + $0x28] sm:$0xff]
      %v1404 = vld [vmem:[%s1397 + $0x30] sm:$0xff]
      %v1405 = vld [vmem:[%s1397 + $0x38] sm:$0xff]
      %v1407 = vsel %vm204, %v1389, 0
      %v1410 = vsel %vm204, %v1390, 0
      %v1413 = vsel %vm204, %v1391, 0
      %v1416 = vsel %vm204, %v1392, 0
      %v1419 = vsel %vm204, %v1393, 0
      %v1422 = vsel %vm204, %v1394, 0
      %v1425 = vsel %vm204, %v1395, 0
      %v1428 = vsel %vm204, %v1396, 0
      %1430 = vmatprep.subr.mxu0 0.0
      %1431 = vmatpush1.msra.mxu0 0.0
      %1432 = vmatprep.subr.mxu0 0.0
      %1433 = vmatpush1.msra.mxu0 0.0
      %1434 = vmatprep.subr.mxu0 0.0
      %1435 = vmatpush1.msra.mxu0 0.0
      %1436 = vmatprep.subr.mxu0 0.0
      %1437 = vmatpush1.msra.mxu0 0.0
      %1438 = vmatprep.subr.mxu0 0.0
      %1439 = vmatpush1.msra.mxu0 0.0
      %1440 = vmatprep.subr.mxu0 0.0
      %1441 = vmatpush1.msra.mxu0 0.0
      %1442 = vmatprep.subr.mxu0 0.0
      %1443 = vmatpush1.msra.mxu0 0.0
      %1444 = vmatprep.subr.mxu0 0.0
      %1445 = vmatpush1.msra.mxu0 0.0
      %1446 = vmatprep.subr.mxu0 0.0
      %1447 = vmatpush1.msra.mxu0 %v1405
      %1448 = vmatprep.subr.mxu0 0.0
      %1449 = vmatpush1.msra.mxu0 %v1404
      %1450 = vmatprep.subr.mxu0 0.0
      %1451 = vmatpush1.msra.mxu0 %v1403
      %1452 = vmatprep.subr.mxu0 0.0
      %1453 = vmatpush1.msra.mxu0 %v1402
      %1454 = vmatprep.subr.mxu0 0.0
      %1455 = vmatpush1.msra.mxu0 %v1401
      %1456 = vmatprep.subr.mxu0 0.0
      %1457 = vmatpush1.msra.mxu0 %v1400
      %1458 = vmatprep.subr.mxu0 0.0
      %1459 = vmatpush1.msra.mxu0 %v1399
      %1460 = vmatprep.subr.mxu0 0.0
      %1461 = vmatpush1.msra.mxu0 %v1398
      %1462 = vmatprep.subr.mxu0 0.0
      %1463 = vmatpush2.msra.mxu0 0.0
      %1464 = vmatprep.subr.mxu0 0.0
      %1465 = vmatpush2.msra.mxu0 0.0
      %1466 = vmatprep.subr.mxu0 0.0
      %1467 = vmatpush2.msra.mxu0 0.0
      %1468 = vmatprep.subr.mxu0 0.0
      %1469 = vmatpush2.msra.mxu0 0.0
      %1470 = vmatprep.subr.mxu0 0.0
      %1471 = vmatpush2.msra.mxu0 0.0
      %1472 = vmatprep.subr.mxu0 0.0
      %1473 = vmatpush2.msra.mxu0 0.0
      %1474 = vmatprep.subr.mxu0 0.0
      %1475 = vmatpush2.msra.mxu0 0.0
      %1476 = vmatprep.subr.mxu0 0.0
      %1477 = vmatpush2.msra.mxu0 0.0
      %1478 = vmatprep.subr.mxu0 0.0
      %1479 = vmatpush2.msra.mxu0 0.0
      %1480 = vmatprep.subr.mxu0 0.0
      %1481 = vmatpush2.msra.mxu0 0.0
      %1482 = vmatprep.subr.mxu0 0.0
      %1483 = vmatpush2.msra.mxu0 0.0
      %1484 = vmatprep.subr.mxu0 0.0
      %1485 = vmatpush2.msra.mxu0 0.0
      %1486 = vmatprep.subr.mxu0 0.0
      %1487 = vmatpush2.msra.mxu0 0.0
      %1488 = vmatprep.subr.mxu0 0.0
      %1489 = vmatpush2.msra.mxu0 0.0
      %1490 = vmatprep.subr.mxu0 0.0
      %1491 = vmatpush2.msra.mxu0 0.0
      %1492 = vmatprep.subr.mxu0 0.0
      %1493 = vmatpush2.msra.mxu0 0.0
      %1494 = vmatprep.mubr.f32.mxu0 0.0
      %1495 = vmatmul.mubr.f32.gmra.mxu0 %v1407
      %v1496 = vpop.f32.mrf.mxu0
      %v1497 = vadd.f32 0.0, %v1496
      %v1498 = vpop.f32.mrf.mxu0
      %1499 = vmatprep.mubr.f32.mxu0 0.0
      %1500 = vmatmul.mubr.f32.gmra.mxu0 %v1410
      %v1501 = vpop.f32.mrf.mxu0
      %v1502 = vadd.f32 0.0, %v1501
      %v1503 = vpop.f32.mrf.mxu0
      %1504 = vmatprep.mubr.f32.mxu0 0.0
      %1505 = vmatmul.mubr.f32.gmra.mxu0 %v1413
      %v1506 = vpop.f32.mrf.mxu0
      %v1507 = vadd.f32 0.0, %v1506
      %v1508 = vpop.f32.mrf.mxu0
      %1509 = vmatprep.mubr.f32.mxu0 0.0
      %1510 = vmatmul.mubr.f32.gmra.mxu0 %v1416
      %v1511 = vpop.f32.mrf.mxu0
      %v1512 = vadd.f32 0.0, %v1511
      %v1513 = vpop.f32.mrf.mxu0
      %1514 = vmatprep.mubr.f32.mxu0 0.0
      %1515 = vmatmul.mubr.f32.gmra.mxu0 %v1419
      %v1516 = vpop.f32.mrf.mxu0
      %v1517 = vadd.f32 0.0, %v1516
      %v1518 = vpop.f32.mrf.mxu0
      %1519 = vmatprep.mubr.f32.mxu0 0.0
      %1520 = vmatmul.mubr.f32.gmra.mxu0 %v1422
      %v1521 = vpop.f32.mrf.mxu0
      %v1522 = vadd.f32 0.0, %v1521
      %v1523 = vpop.f32.mrf.mxu0
      %1524 = vmatprep.mubr.f32.mxu0 0.0
      %1525 = vmatmul.mubr.f32.gmra.mxu0 %v1425
      %v1526 = vpop.f32.mrf.mxu0
      %v1527 = vadd.f32 0.0, %v1526
      %v1528 = vpop.f32.mrf.mxu0
      %1529 = vmatprep.mubr.f32.mxu0 0.0
      %1530 = vmatmul.mubr.f32.gmra.mxu0 %v1428
      %v1531 = vpop.f32.mrf.mxu0
      %v1532 = vadd.f32 0.0, %v1531
      %v1533 = vpop.f32.mrf.mxu0
      %1534 = vdwg.mxu0
      %v1535 = vadd.f32 %v1381, %v1497
      %v1536 = vadd.f32 %v1382, %v1502
      %v1537 = vadd.f32 %v1383, %v1507
      %v1538 = vadd.f32 %v1384, %v1512
      %v1539 = vadd.f32 %v1385, %v1517
      %v1540 = vadd.f32 %v1386, %v1522
      %v1541 = vadd.f32 %v1387, %v1527
      %v1542 = vadd.f32 %v1388, %v1532
      %v1543 = vld [vmem:[%s2] sm:$0x1]
      %v1545 = vlaneseq
      %v1546 = vshrl.u32 %v1545, 7
      %v1547 = vsub.s32 0, %v1546
      %v1548 = vrot.slane %v1543, %v1547
      %v1550 = vadd.f32 %v1535, %v1548
      %v1551 = vadd.f32 %v1536, %v1548
      %v1552 = vadd.f32 %v1537, %v1548
      %v1553 = vadd.f32 %v1538, %v1548
      %v1554 = vadd.f32 %v1539, %v1548
      %v1555 = vadd.f32 %v1540, %v1548
      %v1556 = vadd.f32 %v1541, %v1548
      %v1557 = vadd.f32 %v1542, %v1548
      %v1558 = vmax.f32 %v1550, 0.0
      %v1559 = vmax.f32 %v1551, 0.0
      %v1560 = vmax.f32 %v1552, 0.0
      %v1561 = vmax.f32 %v1553, 0.0
      %v1562 = vmax.f32 %v1554, 0.0
      %v1563 = vmax.f32 %v1555, 0.0
      %v1564 = vmax.f32 %v1556, 0.0
      %v1565 = vmax.f32 %v1557, 0.0
      %1566 = vst [vmem:[%s170] sm:$0xff] %v1558
      %1567 = vst [vmem:[%s170 + $0x8] sm:$0xff] %v1559
      %1568 = vst [vmem:[%s170 + $0x10] sm:$0xff] %v1560
      %1569 = vst [vmem:[%s170 + $0x18] sm:$0xff] %v1561
      %1570 = vst [vmem:[%s170 + $0x20] sm:$0xff] %v1562
      %1571 = vst [vmem:[%s170 + $0x28] sm:$0xff] %v1563
      %1572 = vst [vmem:[%s170 + $0x30] sm:$0xff] %v1564
      %1573 = vst [vmem:[%s170 + $0x38] sm:$0xff] %v1565
      %p1574 = scmp.lt.s32.totalorder %s14, 1
      %s1575 = scalar_select %p1574, %s14, 1
      %s1576 = smul.addr %s1575, 8
      %s1577 = smul.addr %s1576, 8
      %s1578 = scalar_lea.vmem %s3, %s1577
      // Predicated region
      $region33: #{feature_reconstruction_loss.14} parent=31 // pred_check
        %p1579 = pneg %p100
      $region34: #{feature_reconstruction_loss.14} parent=31 // pred_check_branch
        %1581 = sbr.rel (%p1579) target = $region36
      $region35: #{feature_reconstruction_loss.14} parent=31 // pred_region
        _
      $region36: #{feature_reconstruction_loss.14} parent=31 // pred_fallthru
        _
    $region32: #{feature_reconstruction_loss.14} parent=5 // pred_fallthru
      _
    %p1582 = scmp.le.s32.totalorder 2, %s9
    // Predicated region
    $region37: #{feature_reconstruction_loss.14} parent=5 // pred_check
      %p1583 = pneg %p1582
    $region38: #{feature_reconstruction_loss.14} parent=5 // pred_check_branch
      %1585 = sbr.rel (%p1583) target = $region40
    $region39: #{feature_reconstruction_loss.14} parent=5 // pred_region
      %s1586 = ssub.s32 %s9, 2
      // Predicated region
      $region41: #{feature_reconstruction_loss.14} parent=39 // pred_check
        %p1587 = pneg %p106
      $region42: #{feature_reconstruction_loss.14} parent=39 // pred_check_branch
        %1589 = sbr.rel (%p1587) target = $region44
      $region43: #{feature_reconstruction_loss.14} parent=39 // pred_region
        %p1590 = scmp.lt.s32.totalorder %s15, 1
        %s1591 = scalar_select %p1590, %s15, 1
        %s1592 = smul.addr %s1591, 8
        %s1593 = smul.addr %s1592, 8
        %s1594 = scalar_lea.vmem %s3, %s1593
      $region44: #{feature_reconstruction_loss.14} parent=39 // pred_fallthru
        _
    $region40: #{feature_reconstruction_loss.14} parent=5 // pred_fallthru
      _
  $region6: #{feature_reconstruction_loss.14} parent=0 // loop_footer
    %s13 = sadd.s32 1, %s9
  $region7: #{feature_reconstruction_loss.14} parent=0 // loop_footer_branch
    %8 = sbr.rel target = $region3
  $region8: #{feature_reconstruction_loss.14} parent=0 // loop_exit
    _

// kernel: feature_reconstruction_loss.12
$region0: #{feature_reconstruction_loss.12}
  #allocation0 [shape = 'u32[]', space=smem, size = 0x4, offset = 0x4, fixed_abs, tag = 'smem constant byte address 0x4 - core index']
  #allocation1 [shape = 'u32[144,128]{1,0:T(1,128)}', space=vmem, size = 0x12000, scoped, tag = 'internal scratch']
  %s0 = inlined_call_operand.vmem [shape: f32[2,18,18,64], index: 0, kind: input, shape index: {}]
  %s1 = inlined_call_operand.vmem [shape: f32[9,64,64], index: 1, kind: input, shape index: {}]
  %s2 = inlined_call_operand.vmem [shape: f32[1,64], index: 2, kind: input, shape index: {}]
  %s3 = inlined_call_operand.vmem [shape: f32[2,16,16,64], index: 3, kind: output, shape index: {}]
  %s4 = sld [smem:[#allocation0]]
  $region45: #{feature_reconstruction_loss.12} parent=0
    _
  %s6 = ssub.s32 1, %s4
  %s7 = scalar_select 0, %s6, %s4
  loop: start=0, step=1, limit=4
  $region2: #{feature_reconstruction_loss.12} parent=0 // loop_pre_header
    _
  $region3: #{feature_reconstruction_loss.12} parent=0 // loop_header
    %s9 = sphi 0, %s13
    %p10 = scmp.ge.s32.totalorder %s9, 4
    %s19 = sphi 0, %s21
    %s22 = sphi 0, %s19
    %s23 = sphi 0, %s22
    %s39 = sphi 0, %s23
    %s43 = sphi 0, %s43
    %s45 = sphi 0, %s43
    %s46 = sphi 0, %s45
    %s60 = sphi 0, %s46
    %s64 = sphi 0, %s64
    %s66 = sphi 0, %s64
    %s67 = sphi 0, %s66
    %s81 = sphi 0, %s67
    %s87 = sphi 0, %s89
    %s90 = sphi 0, %s87
    %s91 = sphi 0, %s90
    %s107 = sphi 0, %s91
  $region4: #{feature_reconstruction_loss.12} parent=0 // loop_header_branch
    %12 = sbr.rel (%p10) target = $region8
  $region5: #{feature_reconstruction_loss.12} parent=0 // loop_body
    %s14 = ssub.s32 %s9, 1
    %s15 = ssub.s32 %s9, 2
    %s16 = sadd.s32 %s9, 1
    %s17 = ssub.s32 %s9, %s16
    %p18 = scmp.eq.s32.totalorder %s17, 0
    %s20 = sadd.s32 %s19, 1
    %s21 = scalar_select %p18, %s19, %s20
    %p24 = pneg %p18
    %p25 = scmp.eq.s32.totalorder %s9, 1
    %p26 = por %p24, %p25
    %p27 = scmp.ne.s32.totalorder %s19, %s22
    %p28 = scmp.eq.s32.totalorder %s9, 0
    %p29 = por %p27, %p28
    %p30 = scmp.ne.s32.totalorder %s19, %s22
    %p31 = scmp.eq.s32.totalorder %s14, 1
    %p32 = por %p30, %p31
    %p33 = scmp.ne.s32.totalorder %s22, %s23
    %p34 = scmp.eq.s32.totalorder %s14, 0
    %p35 = por %p33, %p34
    %p36 = scmp.ne.s32.totalorder %s22, %s23
    %p37 = scmp.eq.s32.totalorder %s15, 1
    %p38 = por %p36, %p37
    %p40 = scmp.ne.s32.totalorder %s23, %s39
    %p41 = scmp.eq.s32.totalorder %s15, 0
    %p42 = por %p40, %p41
    %s44 = sadd.s32 %s43, 1
    %p47 = scmp.eq.s32.totalorder %s9, 1
    %p48 = scmp.ne.s32.totalorder %s43, %s45
    %p49 = scmp.eq.s32.totalorder %s9, 0
    %p50 = por %p48, %p49
    %p51 = scmp.ne.s32.totalorder %s43, %s45
    %p52 = scmp.eq.s32.totalorder %s14, 1
    %p53 = por %p51, %p52
    %p54 = scmp.ne.s32.totalorder %s45, %s46
    %p55 = scmp.eq.s32.totalorder %s14, 0
    %p56 = por %p54, %p55
    %p57 = scmp.ne.s32.totalorder %s45, %s46
    %p58 = scmp.eq.s32.totalorder %s15, 1
    %p59 = por %p57, %p58
    %p61 = scmp.ne.s32.totalorder %s46, %s60
    %p62 = scmp.eq.s32.totalorder %s15, 0
    %p63 = por %p61, %p62
    %s65 = sadd.s32 %s64, 1
    %p68 = scmp.eq.s32.totalorder %s9, 1
    %p69 = scmp.ne.s32.totalorder %s64, %s66
    %p70 = scmp.eq.s32.totalorder %s9, 0
    %p71 = por %p69, %p70
    %p72 = scmp.ne.s32.totalorder %s64, %s66
    %p73 = scmp.eq.s32.totalorder %s14, 1
    %p74 = por %p72, %p73
    %p75 = scmp.ne.s32.totalorder %s66, %s67
    %p76 = scmp.eq.s32.totalorder %s14, 0
    %p77 = por %p75, %p76
    %p78 = scmp.ne.s32.totalorder %s66, %s67
    %p79 = scmp.eq.s32.totalorder %s15, 1
    %p80 = por %p78, %p79
    %p82 = scmp.ne.s32.totalorder %s67, %s81
    %p83 = scmp.eq.s32.totalorder %s15, 0
    %p84 = por %p82, %p83
    %s85 = ssub.s32 %s9, %s16
    %p86 = scmp.eq.s32.totalorder %s85, 0
    %s88 = sadd.s32 %s87, 1
    %s89 = scalar_select %p86, %s87, %s88
    %p92 = pneg %p86
    %p93 = scmp.eq.s32.totalorder %s9, 1
    %p94 = por %p92, %p93
    %p95 = scmp.ne.s32.totalorder %s87, %s90
    %p96 = scmp.eq.s32.totalorder %s9, 0
    %p97 = por %p95, %p96
    %p98 = scmp.ne.s32.totalorder %s87, %s90
    %p99 = scmp.eq.s32.totalorder %s14, 1
    %p100 = por %p98, %p99
    %p101 = scmp.ne.s32.totalorder %s90, %s91
    %p102 = scmp.eq.s32.totalorder %s14, 0
    %p103 = por %p101, %p102
    %p104 = scmp.ne.s32.totalorder %s90, %s91
    %p105 = scmp.eq.s32.totalorder %s15, 1
    %p106 = por %p104, %p105
    %p108 = scmp.ne.s32.totalorder %s91, %s107
    %p109 = scmp.eq.s32.totalorder %s15, 0
    %p110 = por %p108, %p109
    %p111 = scmp.le.s32.totalorder 1, %s9
    %p112 = scmp.lt.s32.totalorder %s9, 3
    %p113 = pnand %p111, %p112
    %p114 = pneg %p113
    // Predicated region
    $region9: #{feature_reconstruction_loss.12} parent=5 // pred_check
      _
    $region10: #{feature_reconstruction_loss.12} parent=5 // pred_check_branch
      %116 = sbr.rel (%p113) target = $region12
    $region11: #{feature_reconstruction_loss.12} parent=5 // pred_region
      %s117 = ssub.s32 %s9, 1
      // Predicated region
      $region13: #{feature_reconstruction_loss.12} parent=11 // pred_check
        %p118 = pneg %p56
      $region14: #{feature_reconstruction_loss.12} parent=11 // pred_check_branch
        %120 = sbr.rel (%p118) target = $region16
      $region15: #{feature_reconstruction_loss.12} parent=11 // pred_region
        _
      $region16: #{feature_reconstruction_loss.12} parent=11 // pred_fallthru
        _
      // Predicated region
      $region17: #{feature_reconstruction_loss.12} parent=11 // pred_check
        %p121 = pneg %p77
      $region18: #{feature_reconstruction_loss.12} parent=11 // pred_check_branch
        %123 = sbr.rel (%p121) target = $region20
      $region19: #{feature_reconstruction_loss.12} parent=11 // pred_region
        _
      $region20: #{feature_reconstruction_loss.12} parent=11 // pred_fallthru
        _
    $region12: #{feature_reconstruction_loss.12} parent=5 // pred_fallthru
      _
    %p124 = scmp.lt.s32.totalorder %s9, 2
    // Predicated region
    $region21: #{feature_reconstruction_loss.12} parent=5 // pred_check
      %p125 = pneg %p124
    $region22: #{feature_reconstruction_loss.12} parent=5 // pred_check_branch
      %127 = sbr.rel (%p125) target = $region24
    $region23: #{feature_reconstruction_loss.12} parent=5 // pred_region
      // Predicated region
      $region25: #{feature_reconstruction_loss.12} parent=23 // pred_check
        %p128 = pneg %p29
      $region26: #{feature_reconstruction_loss.12} parent=23 // pred_check_branch
        %130 = sbr.rel (%p128) target = $region28
      $region27: #{feature_reconstruction_loss.12} parent=23 // pred_region
        %p131 = scmp.lt.s32.totalorder %s9, 1
        %s132 = scalar_select %p131, %s9, 1
        %s133 = smul.addr %s132, 54
        %s134 = smul.addr %s133, 8
        %s135 = scalar_lea.vmem %s0, %s134
      $region28: #{feature_reconstruction_loss.12} parent=23 // pred_fallthru
        _
    $region24: #{feature_reconstruction_loss.12} parent=5 // pred_fallthru
      _
    %p136 = scmp.le.s32.totalorder 1, %s9
    %p137 = scmp.lt.s32.totalorder %s9, 3
    %p138 = pnand %p136, %p137
    %p139 = pneg %p138
    // Predicated region
    $region29: #{feature_reconstruction_loss.12} parent=5 // pred_check
      _
    $region30: #{feature_reconstruction_loss.12} parent=5 // pred_check_branch
      %141 = sbr.rel (%p138) target = $region32
    $region31: #{feature_reconstruction_loss.12} parent=5 // pred_region
      %s142 = ssub.s32 %s9, 1
      %p143 = scmp.lt.s32.totalorder %s14, 1
      %s144 = scalar_select %p143, %s14, 1
      %s145 = smul.addr %s144, 54
      %s146 = smul.addr %s145, 8
      %s147 = scalar_lea.vmem %s0, %s146
      %p148 = pneg %p35
      %p149 = pneg %p32
      %p150 = pneg %p56
      %p151 = pneg %p53
      %p152 = pneg %p77
      %p153 = pneg %p74
      %p154 = pneg %p103
      %p155 = pneg %p100
      %p156 = scmp.lt.s32.totalorder %s14, 1
      %s157 = scalar_select %p156, %s14, 1
      %s158 = smul.addr %s157, 32
      %s159 = smul.addr %s158, 8
      %s160 = scalar_lea.vmem %s3, %s159
      %p161 = scmp.lt.s32.totalorder %s14, 1
      %s162 = scalar_select %p161, %s14, 1
      %s163 = smul.addr %s162, 54
      %s164 = smul.addr %s163, 8
      %s165 = scalar_lea.vmem %s0, %s164
      %p166 = scmp.lt.s32.totalorder %s14, 1
      %s167 = scalar_select %p166, %s14, 1
      %s168 = smul.addr %s167, 32
      %s169 = smul.addr %s168, 8
      %s170 = scalar_lea.vmem %s3, %s169
      %v171 = vld [vmem:[%s165] sm:$0xff]
      %v172 = vld [vmem:[%s165 + $0x8] sm:$0xff]
      %v173 = vld [vmem:[%s165 + $0x18] sm:$0xff]
      %v174 = vld [vmem:[%s165 + $0x20] sm:$0xff]
      %v175 = vld [vmem:[%s165 + $0x30] sm:$0xff]
      %v176 = vld [vmem:[%s165 + $0x38] sm:$0xff]
      %v177 = vld [vmem:[%s165 + $0x48] sm:$0xff]
      %v178 = vld [vmem:[%s165 + $0x50] sm:$0xff]
      %v179 = vld [vmem:[%s165 + $0x60] sm:$0xff]
      %v180 = vld [vmem:[%s165 + $0x68] sm:$0xff]
      %v181 = vld [vmem:[%s165 + $0x78] sm:$0xff]
      %v182 = vld [vmem:[%s165 + $0x80] sm:$0xff]
      %v183 = vld [vmem:[%s165 + $0x90] sm:$0xff]
      %v184 = vld [vmem:[%s165 + $0x98] sm:$0xff]
      %v185 = vld [vmem:[%s165 + $0xa8] sm:$0xff]
      %v186 = vld [vmem:[%s165 + $0xb0] sm:$0xff]
      %v187 = vld [vmem:[%s165 + $0xc0] sm:$0xff]
      %v188 = vld [vmem:[%s165 + $0xc8] sm:$0xff]
      %v189 = vld [vmem:[%s165 + $0xd8] sm:$0xff]
      %v190 = vld [vmem:[%s165 + $0xe0] sm:$0xff]
      %v191 = vld [vmem:[%s165 + $0xf0] sm:$0xff]
      %v192 = vld [vmem:[%s165 + $0xf8] sm:$0xff]
      %v193 = vld [vmem:[%s165 + $0x108] sm:$0xff]
      %v194 = vld [vmem:[%s165 + $0x110] sm:$0xff]
      %v195 = vld [vmem:[%s165 + $0x120] sm:$0xff]
      %v196 = vld [vmem:[%s165 + $0x128] sm:$0xff]
      %v197 = vld [vmem:[%s165 + $0x138] sm:$0xff]
      %v198 = vld [vmem:[%s165 + $0x140] sm:$0xff]
      %v199 = vld [vmem:[%s165 + $0x150] sm:$0xff]
      %v200 = vld [vmem:[%s165 + $0x158] sm:$0xff]
      %v201 = vld [vmem:[%s165 + $0x168] sm:$0xff]
      %v202 = vld [vmem:[%s165 + $0x170] sm:$0xff]
      %v203 = vld [vmem:[%s1] sm:$0xff]
      %v204 = vld [vmem:[%s1 + $0x8] sm:$0xff]
      %v205 = vld [vmem:[%s1 + $0x10] sm:$0xff]
      %v206 = vld [vmem:[%s1 + $0x18] sm:$0xff]
      %v207 = vld [vmem:[%s1 + $0x20] sm:$0xff]
      %v208 = vld [vmem:[%s1 + $0x28] sm:$0xff]
      %v209 = vld [vmem:[%s1 + $0x30] sm:$0xff]
      %v210 = vld [vmem:[%s1 + $0x38] sm:$0xff]
      %v211 = vld [vmem:[%s165 + $0x1] sm:$0xff]
      %v212 = vld [vmem:[%s165 + $0x9] sm:$0xff]
      %v213 = vld [vmem:[%s165 + $0x19] sm:$0xff]
      %v214 = vld [vmem:[%s165 + $0x21] sm:$0xff]
      %v215 = vld [vmem:[%s165 + $0x31] sm:$0xff]
      %v216 = vld [vmem:[%s165 + $0x39] sm:$0xff]
      %v217 = vld [vmem:[%s165 + $0x49] sm:$0xff]
      %v218 = vld [vmem:[%s165 + $0x51] sm:$0xff]
      %v219 = vld [vmem:[%s165 + $0x61] sm:$0xff]
      %v220 = vld [vmem:[%s165 + $0x69] sm:$0xff]
      %v221 = vld [vmem:[%s165 + $0x79] sm:$0xff]
      %v222 = vld [vmem:[%s165 + $0x81] sm:$0xff]
      %v223 = vld [vmem:[%s165 + $0x91] sm:$0xff]
      %v224 = vld [vmem:[%s165 + $0x99] sm:$0xff]
      %v225 = vld [vmem:[%s165 + $0xa9] sm:$0xff]
      %v226 = vld [vmem:[%s165 + $0xb1] sm:$0xff]
      %v227 = vld [vmem:[%s165 + $0xc1] sm:$0xff]
      %v228 = vld [vmem:[%s165 + $0xc9] sm:$0xff]
      %v229 = vld [vmem:[%s165 + $0xd9] sm:$0xff]
      %v230 = vld [vmem:[%s165 + $0xe1] sm:$0xff]
      %v231 = vld [vmem:[%s165 + $0xf1] sm:$0xff]
      %v232 = vld [vmem:[%s165 + $0xf9] sm:$0xff]
      %v233 = vld [vmem:[%s165 + $0x109] sm:$0xff]
      %v234 = vld [vmem:[%s165 + $0x111] sm:$0xff]
      %v235 = vld [vmem:[%s165 + $0x121] sm:$0xff]
      %v236 = vld [vmem:[%s165 + $0x129] sm:$0xff]
      %v237 = vld [vmem:[%s165 + $0x139] sm:$0xff]
      %v238 = vld [vmem:[%s165 + $0x141] sm:$0xff]
      %v239 = vld [vmem:[%s165 + $0x151] sm:$0xff]
      %v240 = vld [vmem:[%s165 + $0x159] sm:$0xff]
      %v241 = vld [vmem:[%s165 + $0x169] sm:$0xff]
      %v242 = vld [vmem:[%s165 + $0x171] sm:$0xff]
      %s243 = scalar_lea.vmem %s1, 64
      %v244 = vld [vmem:[%s243] sm:$0xff]
      %v245 = vld [vmem:[%s243 + $0x8] sm:$0xff]
      %v246 = vld [vmem:[%s243 + $0x10] sm:$0xff]
      %v247 = vld [vmem:[%s243 + $0x18] sm:$0xff]
      %v248 = vld [vmem:[%s243 + $0x20] sm:$0xff]
      %v249 = vld [vmem:[%s243 + $0x28] sm:$0xff]
      %v250 = vld [vmem:[%s243 + $0x30] sm:$0xff]
      %v251 = vld [vmem:[%s243 + $0x38] sm:$0xff]
      %vm252 = vcmask 523264
      %v254 = vsel %vm252, %v211, 0
      %v257 = vsel %vm252, %v212, 0
      %v260 = vsel %vm252, %v213, 0
      %v263 = vsel %vm252, %v214, 0
      %v266 = vsel %vm252, %v215, 0
      %v269 = vsel %vm252, %v216, 0
      %v272 = vsel %vm252, %v217, 0
      %v275 = vsel %vm252, %v218, 0
      %v278 = vsel %vm252, %v219, 0
      %v281 = vsel %vm252, %v220, 0
      %v284 = vsel %vm252, %v221, 0
      %v287 = vsel %vm252, %v222, 0
      %v290 = vsel %vm252, %v223, 0
      %v293 = vsel %vm252, %v224, 0
      %v296 = vsel %vm252, %v225, 0
      %v299 = vsel %vm252, %v226, 0
      %v302 = vsel %vm252, %v227, 0
      %v305 = vsel %vm252, %v228, 0
      %v308 = vsel %vm252, %v229, 0
      %v311 = vsel %vm252, %v230, 0
      %v314 = vsel %vm252, %v231, 0
      %v317 = vsel %vm252, %v232, 0
      %v320 = vsel %vm252, %v233, 0
      %v323 = vsel %vm252, %v234, 0
      %v326 = vsel %vm252, %v235, 0
      %v329 = vsel %vm252, %v236, 0
      %v332 = vsel %vm252, %v237, 0
      %v335 = vsel %vm252, %v238, 0
      %v338 = vsel %vm252, %v239, 0
      %v341 = vsel %vm252, %v240, 0
      %v344 = vsel %vm252, %v241, 0
      %v347 = vsel %vm252, %v242, 0
      %349 = vmatprep.subr.mxu0 0.0
      %350 = vmatpush1.msra.mxu0 0.0
      %351 = vmatprep.subr.mxu0 0.0
      %352 = vmatpush1.msra.mxu0 0.0
      %353 = vmatprep.subr.mxu0 0.0
      %354 = vmatpush1.msra.mxu0 0.0
      %355 = vmatprep.subr.mxu0 0.0
      %356 = vmatpush1.msra.mxu0 0.0
      %357 = vmatprep.subr.mxu0 0.0
      %358 = vmatpush1.msra.mxu0 0.0
      %359 = vmatprep.subr.mxu0 0.0
      %360 = vmatpush1.msra.mxu0 0.0
      %361 = vmatprep.subr.mxu0 0.0
      %362 = vmatpush1.msra.mxu0 0.0
      %363 = vmatprep.subr.mxu0 0.0
      %364 = vmatpush1.msra.mxu0 0.0
      %365 = vmatprep.subr.mxu0 0.0
      %366 = vmatpush1.msra.mxu0 %v251
      %367 = vmatprep.subr.mxu0 0.0
      %368 = vmatpush1.msra.mxu0 %v250
      %369 = vmatprep.subr.mxu0 0.0
      %370 = vmatpush1.msra.mxu0 %v249
      %371 = vmatprep.subr.mxu0 0.0
      %372 = vmatpush1.msra.mxu0 %v248
      %373 = vmatprep.subr.mxu0 0.0
      %374 = vmatpush1.msra.mxu0 %v247
      %375 = vmatprep.subr.mxu0 0.0
      %376 = vmatpush1.msra.mxu0 %v246
      %377 = vmatprep.subr.mxu0 0.0
      %378 = vmatpush1.msra.mxu0 %v245
      %379 = vmatprep.subr.mxu0 0.0
      %380 = vmatpush1.msra.mxu0 %v244
      %381 = vmatprep.subr.mxu0 0.0
      %382 = vmatpush2.msra.mxu0 0.0
      %383 = vmatprep.subr.mxu0 0.0
      %384 = vmatpush2.msra.mxu0 0.0
      %385 = vmatprep.subr.mxu0 0.0
      %386 = vmatpush2.msra.mxu0 0.0
      %387 = vmatprep.subr.mxu0 0.0
      %388 = vmatpush2.msra.mxu0 0.0
      %389 = vmatprep.subr.mxu0 0.0
      %390 = vmatpush2.msra.mxu0 0.0
      %391 = vmatprep.subr.mxu0 0.0
      %392 = vmatpush2.msra.mxu0 0.0
      %393 = vmatprep.subr.mxu0 0.0
      %394 = vmatpush2.msra.mxu0 0.0
      %395 = vmatprep.subr.mxu0 0.0
      %396 = vmatpush2.msra.mxu0 0.0
      %397 = vmatprep.subr.mxu0 0.0
      %398 = vmatpush2.msra.mxu0 0.0
      %399 = vmatprep.subr.mxu0 0.0
      %400 = vmatpush2.msra.mxu0 0.0
      %401 = vmatprep.subr.mxu0 0.0
      %402 = vmatpush2.msra.mxu0 0.0
      %403 = vmatprep.subr.mxu0 0.0
      %404 = vmatpush2.msra.mxu0 0.0
      %405 = vmatprep.subr.mxu0 0.0
      %406 = vmatpush2.msra.mxu0 0.0
      %407 = vmatprep.subr.mxu0 0.0
      %408 = vmatpush2.msra.mxu0 0.0
      %409 = vmatprep.subr.mxu0 0.0
      %410 = vmatpush2.msra.mxu0 0.0
      %411 = vmatprep.subr.mxu0 0.0
      %412 = vmatpush2.msra.mxu0 0.0
      %413 = vmatprep.mubr.f32.mxu0 0.0
      %414 = vmatmul.mubr.f32.gmra.mxu0 %v254
      %v415 = vpop.f32.mrf.mxu0
      %v416 = vadd.f32 0.0, %v415
      %v417 = vpop.f32.mrf.mxu0
      %418 = vmatprep.mubr.f32.mxu0 0.0
      %419 = vmatmul.mubr.f32.gmra.mxu0 %v257
      %v420 = vpop.f32.mrf.mxu0
      %v421 = vadd.f32 0.0, %v420
      %v422 = vpop.f32.mrf.mxu0
      %423 = vmatprep.mubr.f32.mxu0 0.0
      %424 = vmatmul.mubr.f32.gmra.mxu0 %v260
      %v425 = vpop.f32.mrf.mxu0
      %v426 = vadd.f32 0.0, %v425
      %v427 = vpop.f32.mrf.mxu0
      %428 = vmatprep.mubr.f32.mxu0 0.0
      %429 = vmatmul.mubr.f32.gmra.mxu0 %v263
      %v430 = vpop.f32.mrf.mxu0
      %v431 = vadd.f32 0.0, %v430
      %v432 = vpop.f32.mrf.mxu0
      %433 = vmatprep.mubr.f32.mxu0 0.0
      %434 = vmatmul.mubr.f32.gmra.mxu0 %v266
      %v435 = vpop.f32.mrf.mxu0
      %v436 = vadd.f32 0.0, %v435
      %v437 = vpop.f32.mrf.mxu0
      %438 = vmatprep.mubr.f32.mxu0 0.0
      %439 = vmatmul.mubr.f32.gmra.mxu0 %v269
      %v440 = vpop.f32.mrf.mxu0
      %v441 = vadd.f32 0.0, %v440
      %v442 = vpop.f32.mrf.mxu0
      %443 = vmatprep.mubr.f32.mxu0 0.0
      %444 = vmatmul.mubr.f32.gmra.mxu0 %v272
      %v445 = vpop.f32.mrf.mxu0
      %v446 = vadd.f32 0.0, %v445
      %v447 = vpop.f32.mrf.mxu0
      %448 = vmatprep.mubr.f32.mxu0 0.0
      %449 = vmatmul.mubr.f32.gmra.mxu0 %v275
      %v450 = vpop.f32.mrf.mxu0
      %v451 = vadd.f32 0.0, %v450
      %v452 = vpop.f32.mrf.mxu0
      %453 = vmatprep.mubr.f32.mxu0 0.0
      %454 = vmatmul.mubr.f32.gmra.mxu0 %v278
      %v455 = vpop.f32.mrf.mxu0
      %v456 = vadd.f32 0.0, %v455
      %v457 = vpop.f32.mrf.mxu0
      %458 = vmatprep.mubr.f32.mxu0 0.0
      %459 = vmatmul.mubr.f32.gmra.mxu0 %v281
      %v460 = vpop.f32.mrf.mxu0
      %v461 = vadd.f32 0.0, %v460
      %v462 = vpop.f32.mrf.mxu0
      %463 = vmatprep.mubr.f32.mxu0 0.0
      %464 = vmatmul.mubr.f32.gmra.mxu0 %v284
      %v465 = vpop.f32.mrf.mxu0
      %v466 = vadd.f32 0.0, %v465
      %v467 = vpop.f32.mrf.mxu0
      %468 = vmatprep.mubr.f32.mxu0 0.0
      %469 = vmatmul.mubr.f32.gmra.mxu0 %v287
      %v470 = vpop.f32.mrf.mxu0
      %v471 = vadd.f32 0.0, %v470
      %v472 = vpop.f32.mrf.mxu0
      %473 = vmatprep.mubr.f32.mxu0 0.0
      %474 = vmatmul.mubr.f32.gmra.mxu0 %v290
      %v475 = vpop.f32.mrf.mxu0
      %v476 = vadd.f32 0.0, %v475
      %v477 = vpop.f32.mrf.mxu0
      %478 = vmatprep.mubr.f32.mxu0 0.0
      %479 = vmatmul.mubr.f32.gmra.mxu0 %v293
      %v480 = vpop.f32.mrf.mxu0
      %v481 = vadd.f32 0.0, %v480
      %v482 = vpop.f32.mrf.mxu0
      %483 = vmatprep.mubr.f32.mxu0 0.0
      %484 = vmatmul.mubr.f32.gmra.mxu0 %v296
      %v485 = vpop.f32.mrf.mxu0
      %v486 = vadd.f32 0.0, %v485
      %v487 = vpop.f32.mrf.mxu0
      %488 = vmatprep.mubr.f32.mxu0 0.0
      %489 = vmatmul.mubr.f32.gmra.mxu0 %v299
      %v490 = vpop.f32.mrf.mxu0
      %v491 = vadd.f32 0.0, %v490
      %v492 = vpop.f32.mrf.mxu0
      %493 = vmatprep.mubr.f32.mxu0 0.0
      %494 = vmatmul.mubr.f32.gmra.mxu0 %v302
      %v495 = vpop.f32.mrf.mxu0
      %v496 = vadd.f32 0.0, %v495
      %v497 = vpop.f32.mrf.mxu0
      %498 = vmatprep.mubr.f32.mxu0 0.0
      %499 = vmatmul.mubr.f32.gmra.mxu0 %v305
      %v500 = vpop.f32.mrf.mxu0
      %v501 = vadd.f32 0.0, %v500
      %v502 = vpop.f32.mrf.mxu0
      %503 = vmatprep.mubr.f32.mxu0 0.0
      %504 = vmatmul.mubr.f32.gmra.mxu0 %v308
      %v505 = vpop.f32.mrf.mxu0
      %v506 = vadd.f32 0.0, %v505
      %v507 = vpop.f32.mrf.mxu0
      %508 = vmatprep.mubr.f32.mxu0 0.0
      %509 = vmatmul.mubr.f32.gmra.mxu0 %v311
      %v510 = vpop.f32.mrf.mxu0
      %v511 = vadd.f32 0.0, %v510
      %v512 = vpop.f32.mrf.mxu0
      %513 = vmatprep.mubr.f32.mxu0 0.0
      %514 = vmatmul.mubr.f32.gmra.mxu0 %v314
      %v515 = vpop.f32.mrf.mxu0
      %v516 = vadd.f32 0.0, %v515
      %v517 = vpop.f32.mrf.mxu0
      %518 = vmatprep.mubr.f32.mxu0 0.0
      %519 = vmatmul.mubr.f32.gmra.mxu0 %v317
      %v520 = vpop.f32.mrf.mxu0
      %v521 = vadd.f32 0.0, %v520
      %v522 = vpop.f32.mrf.mxu0
      %523 = vmatprep.mubr.f32.mxu0 0.0
      %524 = vmatmul.mubr.f32.gmra.mxu0 %v320
      %v525 = vpop.f32.mrf.mxu0
      %v526 = vadd.f32 0.0, %v525
      %v527 = vpop.f32.mrf.mxu0
      %528 = vmatprep.mubr.f32.mxu0 0.0
      %529 = vmatmul.mubr.f32.gmra.mxu0 %v323
      %v530 = vpop.f32.mrf.mxu0
      %v531 = vadd.f32 0.0, %v530
      %v532 = vpop.f32.mrf.mxu0
      %533 = vmatprep.mubr.f32.mxu0 0.0
      %534 = vmatmul.mubr.f32.gmra.mxu0 %v326
      %v535 = vpop.f32.mrf.mxu0
      %v536 = vadd.f32 0.0, %v535
      %v537 = vpop.f32.mrf.mxu0
      %538 = vmatprep.mubr.f32.mxu0 0.0
      %539 = vmatmul.mubr.f32.gmra.mxu0 %v329
      %v540 = vpop.f32.mrf.mxu0
      %v541 = vadd.f32 0.0, %v540
      %v542 = vpop.f32.mrf.mxu0
      %543 = vmatprep.mubr.f32.mxu0 0.0
      %544 = vmatmul.mubr.f32.gmra.mxu0 %v332
      %v545 = vpop.f32.mrf.mxu0
      %v546 = vadd.f32 0.0, %v545
      %v547 = vpop.f32.mrf.mxu0
      %548 = vmatprep.mubr.f32.mxu0 0.0
      %549 = vmatmul.mubr.f32.gmra.mxu0 %v335
      %v550 = vpop.f32.mrf.mxu0
      %v551 = vadd.f32 0.0, %v550
      %v552 = vpop.f32.mrf.mxu0
      %553 = vmatprep.mubr.f32.mxu0 0.0
      %554 = vmatmul.mubr.f32.gmra.mxu0 %v338
      %v555 = vpop.f32.mrf.mxu0
      %v556 = vadd.f32 0.0, %v555
      %v557 = vpop.f32.mrf.mxu0
      %558 = vmatprep.mubr.f32.mxu0 0.0
      %559 = vmatmul.mubr.f32.gmra.mxu0 %v341
      %v560 = vpop.f32.mrf.mxu0
      %v561 = vadd.f32 0.0, %v560
      %v562 = vpop.f32.mrf.mxu0
      %563 = vmatprep.mubr.f32.mxu0 0.0
      %564 = vmatmul.mubr.f32.gmra.mxu0 %v344
      %v565 = vpop.f32.mrf.mxu0
      %v566 = vadd.f32 0.0, %v565
      %v567 = vpop.f32.mrf.mxu0
      %568 = vmatprep.mubr.f32.mxu0 0.0
      %569 = vmatmul.mubr.f32.gmra.mxu0 %v347
      %v570 = vpop.f32.mrf.mxu0
      %v571 = vadd.f32 0.0, %v570
      %v572 = vpop.f32.mrf.mxu0
      %573 = vdwg.mxu0
      %v575 = vsel %vm252, %v171, 0
      %v578 = vsel %vm252, %v172, 0
      %v581 = vsel %vm252, %v173, 0
      %v584 = vsel %vm252, %v174, 0
      %v587 = vsel %vm252, %v175, 0
      %v590 = vsel %vm252, %v176, 0
      %v593 = vsel %vm252, %v177, 0
      %v596 = vsel %vm252, %v178, 0
      %v599 = vsel %vm252, %v179, 0
      %v602 = vsel %vm252, %v180, 0
      %v605 = vsel %vm252, %v181, 0
      %v608 = vsel %vm252, %v182, 0
      %v611 = vsel %vm252, %v183, 0
      %v614 = vsel %vm252, %v184, 0
      %v617 = vsel %vm252, %v185, 0
      %v620 = vsel %vm252, %v186, 0
      %v623 = vsel %vm252, %v187, 0
      %v626 = vsel %vm252, %v188, 0
      %v629 = vsel %vm252, %v189, 0
      %v632 = vsel %vm252, %v190, 0
      %v635 = vsel %vm252, %v191, 0
      %v638 = vsel %vm252, %v192, 0
      %v641 = vsel %vm252, %v193, 0
      %v644 = vsel %vm252, %v194, 0
      %v647 = vsel %vm252, %v195, 0
      %v650 = vsel %vm252, %v196, 0
      %v653 = vsel %vm252, %v197, 0
      %v656 = vsel %vm252, %v198, 0
      %v659 = vsel %vm252, %v199, 0
      %v662 = vsel %vm252, %v200, 0
      %v665 = vsel %vm252, %v201, 0
      %v668 = vsel %vm252, %v202, 0
      %670 = vmatprep.subr.mxu0 0.0
      %671 = vmatpush1.msra.mxu0 0.0
      %672 = vmatprep.subr.mxu0 0.0
      %673 = vmatpush1.msra.mxu0 0.0
      %674 = vmatprep.subr.mxu0 0.0
      %675 = vmatpush1.msra.mxu0 0.0
      %676 = vmatprep.subr.mxu0 0.0
      %677 = vmatpush1.msra.mxu0 0.0
      %678 = vmatprep.subr.mxu0 0.0
      %679 = vmatpush1.msra.mxu0 0.0
      %680 = vmatprep.subr.mxu0 0.0
      %681 = vmatpush1.msra.mxu0 0.0
      %682 = vmatprep.subr.mxu0 0.0
      %683 = vmatpush1.msra.mxu0 0.0
      %684 = vmatprep.subr.mxu0 0.0
      %685 = vmatpush1.msra.mxu0 0.0
      %686 = vmatprep.subr.mxu0 0.0
      %687 = vmatpush1.msra.mxu0 %v210
      %688 = vmatprep.subr.mxu0 0.0
      %689 = vmatpush1.msra.mxu0 %v209
      %690 = vmatprep.subr.mxu0 0.0
      %691 = vmatpush1.msra.mxu0 %v208
      %692 = vmatprep.subr.mxu0 0.0
      %693 = vmatpush1.msra.mxu0 %v207
      %694 = vmatprep.subr.mxu0 0.0
      %695 = vmatpush1.msra.mxu0 %v206
      %696 = vmatprep.subr.mxu0 0.0
      %697 = vmatpush1.msra.mxu0 %v205
      %698 = vmatprep.subr.mxu0 0.0
      %699 = vmatpush1.msra.mxu0 %v204
      %700 = vmatprep.subr.mxu0 0.0
      %701 = vmatpush1.msra.mxu0 %v203
      %702 = vmatprep.subr.mxu0 0.0
      %703 = vmatpush2.msra.mxu0 0.0
      %704 = vmatprep.subr.mxu0 0.0
      %705 = vmatpush2.msra.mxu0 0.0
      %706 = vmatprep.subr.mxu0 0.0
      %707 = vmatpush2.msra.mxu0 0.0
      %708 = vmatprep.subr.mxu0 0.0
      %709 = vmatpush2.msra.mxu0 0.0
      %710 = vmatprep.subr.mxu0 0.0
      %711 = vmatpush2.msra.mxu0 0.0
      %712 = vmatprep.subr.mxu0 0.0
      %713 = vmatpush2.msra.mxu0 0.0
      %714 = vmatprep.subr.mxu0 0.0
      %715 = vmatpush2.msra.mxu0 0.0
      %716 = vmatprep.subr.mxu0 0.0
      %717 = vmatpush2.msra.mxu0 0.0
      %718 = vmatprep.subr.mxu0 0.0
      %719 = vmatpush2.msra.mxu0 0.0
      %720 = vmatprep.subr.mxu0 0.0
      %721 = vmatpush2.msra.mxu0 0.0
      %722 = vmatprep.subr.mxu0 0.0
      %723 = vmatpush2.msra.mxu0 0.0
      %724 = vmatprep.subr.mxu0 0.0
      %725 = vmatpush2.msra.mxu0 0.0
      %726 = vmatprep.subr.mxu0 0.0
      %727 = vmatpush2.msra.mxu0 0.0
      %728 = vmatprep.subr.mxu0 0.0
      %729 = vmatpush2.msra.mxu0 0.0
      %730 = vmatprep.subr.mxu0 0.0
      %731 = vmatpush2.msra.mxu0 0.0
      %732 = vmatprep.subr.mxu0 0.0
      %733 = vmatpush2.msra.mxu0 0.0
      %734 = vmatprep.mubr.f32.mxu0 0.0
      %735 = vmatmul.mubr.f32.gmra.mxu0 %v575
      %v736 = vpop.f32.mrf.mxu0
      %v737 = vadd.f32 %v416, %v736
      %v738 = vpop.f32.mrf.mxu0
      %739 = vmatprep.mubr.f32.mxu0 0.0
      %740 = vmatmul.mubr.f32.gmra.mxu0 %v578
      %v741 = vpop.f32.mrf.mxu0
      %v742 = vadd.f32 %v421, %v741
      %v743 = vpop.f32.mrf.mxu0
      %744 = vmatprep.mubr.f32.mxu0 0.0
      %745 = vmatmul.mubr.f32.gmra.mxu0 %v581
      %v746 = vpop.f32.mrf.mxu0
      %v747 = vadd.f32 %v426, %v746
      %v748 = vpop.f32.mrf.mxu0
      %749 = vmatprep.mubr.f32.mxu0 0.0
      %750 = vmatmul.mubr.f32.gmra.mxu0 %v584
      %v751 = vpop.f32.mrf.mxu0
      %v752 = vadd.f32 %v431, %v751
      %v753 = vpop.f32.mrf.mxu0
      %754 = vmatprep.mubr.f32.mxu0 0.0
      %755 = vmatmul.mubr.f32.gmra.mxu0 %v587
      %v756 = vpop.f32.mrf.mxu0
      %v757 = vadd.f32 %v436, %v756
      %v758 = vpop.f32.mrf.mxu0
      %759 = vmatprep.mubr.f32.mxu0 0.0
      %760 = vmatmul.mubr.f32.gmra.mxu0 %v590
      %v761 = vpop.f32.mrf.mxu0
      %v762 = vadd.f32 %v441, %v761
      %v763 = vpop.f32.mrf.mxu0
      %764 = vmatprep.mubr.f32.mxu0 0.0
      %765 = vmatmul.mubr.f32.gmra.mxu0 %v593
      %v766 = vpop.f32.mrf.mxu0
      %v767 = vadd.f32 %v446, %v766
      %v768 = vpop.f32.mrf.mxu0
      %769 = vmatprep.mubr.f32.mxu0 0.0
      %770 = vmatmul.mubr.f32.gmra.mxu0 %v596
      %v771 = vpop.f32.mrf.mxu0
      %v772 = vadd.f32 %v451, %v771
      %v773 = vpop.f32.mrf.mxu0
      %774 = vmatprep.mubr.f32.mxu0 0.0
      %775 = vmatmul.mubr.f32.gmra.mxu0 %v599
      %v776 = vpop.f32.mrf.mxu0
      %v777 = vadd.f32 %v456, %v776
      %v778 = vpop.f32.mrf.mxu0
      %779 = vmatprep.mubr.f32.mxu0 0.0
      %780 = vmatmul.mubr.f32.gmra.mxu0 %v602
      %v781 = vpop.f32.mrf.mxu0
      %v782 = vadd.f32 %v461, %v781
      %v783 = vpop.f32.mrf.mxu0
      %784 = vmatprep.mubr.f32.mxu0 0.0
      %785 = vmatmul.mubr.f32.gmra.mxu0 %v605
      %v786 = vpop.f32.mrf.mxu0
      %v787 = vadd.f32 %v466, %v786
      %v788 = vpop.f32.mrf.mxu0
      %789 = vmatprep.mubr.f32.mxu0 0.0
      %790 = vmatmul.mubr.f32.gmra.mxu0 %v608
      %v791 = vpop.f32.mrf.mxu0
      %v792 = vadd.f32 %v471, %v791
      %v793 = vpop.f32.mrf.mxu0
      %794 = vmatprep.mubr.f32.mxu0 0.0
      %795 = vmatmul.mubr.f32.gmra.mxu0 %v611
      %v796 = vpop.f32.mrf.mxu0
      %v797 = vadd.f32 %v476, %v796
      %v798 = vpop.f32.mrf.mxu0
      %799 = vmatprep.mubr.f32.mxu0 0.0
      %800 = vmatmul.mubr.f32.gmra.mxu0 %v614
      %v801 = vpop.f32.mrf.mxu0
      %v802 = vadd.f32 %v481, %v801
      %v803 = vpop.f32.mrf.mxu0
      %804 = vmatprep.mubr.f32.mxu0 0.0
      %805 = vmatmul.mubr.f32.gmra.mxu0 %v617
      %v806 = vpop.f32.mrf.mxu0
      %v807 = vadd.f32 %v486, %v806
      %v808 = vpop.f32.mrf.mxu0
      %809 = vmatprep.mubr.f32.mxu0 0.0
      %810 = vmatmul.mubr.f32.gmra.mxu0 %v620
      %v811 = vpop.f32.mrf.mxu0
      %v812 = vadd.f32 %v491, %v811
      %v813 = vpop.f32.mrf.mxu0
      %814 = vmatprep.mubr.f32.mxu0 0.0
      %815 = vmatmul.mubr.f32.gmra.mxu0 %v623
      %v816 = vpop.f32.mrf.mxu0
      %v817 = vadd.f32 %v496, %v816
      %v818 = vpop.f32.mrf.mxu0
      %819 = vmatprep.mubr.f32.mxu0 0.0
      %820 = vmatmul.mubr.f32.gmra.mxu0 %v626
      %v821 = vpop.f32.mrf.mxu0
      %v822 = vadd.f32 %v501, %v821
      %v823 = vpop.f32.mrf.mxu0
      %824 = vmatprep.mubr.f32.mxu0 0.0
      %825 = vmatmul.mubr.f32.gmra.mxu0 %v629
      %v826 = vpop.f32.mrf.mxu0
      %v827 = vadd.f32 %v506, %v826
      %v828 = vpop.f32.mrf.mxu0
      %829 = vmatprep.mubr.f32.mxu0 0.0
      %830 = vmatmul.mubr.f32.gmra.mxu0 %v632
      %v831 = vpop.f32.mrf.mxu0
      %v832 = vadd.f32 %v511, %v831
      %v833 = vpop.f32.mrf.mxu0
      %834 = vmatprep.mubr.f32.mxu0 0.0
      %835 = vmatmul.mubr.f32.gmra.mxu0 %v635
      %v836 = vpop.f32.mrf.mxu0
      %v837 = vadd.f32 %v516, %v836
      %v838 = vpop.f32.mrf.mxu0
      %839 = vmatprep.mubr.f32.mxu0 0.0
      %840 = vmatmul.mubr.f32.gmra.mxu0 %v638
      %v841 = vpop.f32.mrf.mxu0
      %v842 = vadd.f32 %v521, %v841
      %v843 = vpop.f32.mrf.mxu0
      %844 = vmatprep.mubr.f32.mxu0 0.0
      %845 = vmatmul.mubr.f32.gmra.mxu0 %v641
      %v846 = vpop.f32.mrf.mxu0
      %v847 = vadd.f32 %v526, %v846
      %v848 = vpop.f32.mrf.mxu0
      %849 = vmatprep.mubr.f32.mxu0 0.0
      %850 = vmatmul.mubr.f32.gmra.mxu0 %v644
      %v851 = vpop.f32.mrf.mxu0
      %v852 = vadd.f32 %v531, %v851
      %v853 = vpop.f32.mrf.mxu0
      %854 = vmatprep.mubr.f32.mxu0 0.0
      %855 = vmatmul.mubr.f32.gmra.mxu0 %v647
      %v856 = vpop.f32.mrf.mxu0
      %v857 = vadd.f32 %v536, %v856
      %v858 = vpop.f32.mrf.mxu0
      %859 = vmatprep.mubr.f32.mxu0 0.0
      %860 = vmatmul.mubr.f32.gmra.mxu0 %v650
      %v861 = vpop.f32.mrf.mxu0
      %v862 = vadd.f32 %v541, %v861
      %v863 = vpop.f32.mrf.mxu0
      %864 = vmatprep.mubr.f32.mxu0 0.0
      %865 = vmatmul.mubr.f32.gmra.mxu0 %v653
      %v866 = vpop.f32.mrf.mxu0
      %v867 = vadd.f32 %v546, %v866
      %v868 = vpop.f32.mrf.mxu0
      %869 = vmatprep.mubr.f32.mxu0 0.0
      %870 = vmatmul.mubr.f32.gmra.mxu0 %v656
      %v871 = vpop.f32.mrf.mxu0
      %v872 = vadd.f32 %v551, %v871
      %v873 = vpop.f32.mrf.mxu0
      %874 = vmatprep.mubr.f32.mxu0 0.0
      %875 = vmatmul.mubr.f32.gmra.mxu0 %v659
      %v876 = vpop.f32.mrf.mxu0
      %v877 = vadd.f32 %v556, %v876
      %v878 = vpop.f32.mrf.mxu0
      %879 = vmatprep.mubr.f32.mxu0 0.0
      %880 = vmatmul.mubr.f32.gmra.mxu0 %v662
      %v881 = vpop.f32.mrf.mxu0
      %v882 = vadd.f32 %v561, %v881
      %v883 = vpop.f32.mrf.mxu0
      %884 = vmatprep.mubr.f32.mxu0 0.0
      %885 = vmatmul.mubr.f32.gmra.mxu0 %v665
      %v886 = vpop.f32.mrf.mxu0
      %v887 = vadd.f32 %v566, %v886
      %v888 = vpop.f32.mrf.mxu0
      %889 = vmatprep.mubr.f32.mxu0 0.0
      %890 = vmatmul.mubr.f32.gmra.mxu0 %v668
      %v891 = vpop.f32.mrf.mxu0
      %v892 = vadd.f32 %v571, %v891
      %v893 = vpop.f32.mrf.mxu0
      %894 = vdwg.mxu0
      %v895 = vld [vmem:[%s165 + $0x2] sm:$0xff]
      %v896 = vld [vmem:[%s165 + $0xa] sm:$0xff]
      %v897 = vld [vmem:[%s165 + $0x1a] sm:$0xff]
      %v898 = vld [vmem:[%s165 + $0x22] sm:$0xff]
      %v899 = vld [vmem:[%s165 + $0x32] sm:$0xff]
      %v900 = vld [vmem:[%s165 + $0x3a] sm:$0xff]
      %v901 = vld [vmem:[%s165 + $0x4a] sm:$0xff]
      %v902 = vld [vmem:[%s165 + $0x52] sm:$0xff]
      %v903 = vld [vmem:[%s165 + $0x62] sm:$0xff]
      %v904 = vld [vmem:[%s165 + $0x6a] sm:$0xff]
      %v905 = vld [vmem:[%s165 + $0x7a] sm:$0xff]
      %v906 = vld [vmem:[%s165 + $0x82] sm:$0xff]
      %v907 = vld [vmem:[%s165 + $0x92] sm:$0xff]
      %v908 = vld [vmem:[%s165 + $0x9a] sm:$0xff]
      %v909 = vld [vmem:[%s165 + $0xaa] sm:$0xff]
      %v910 = vld [vmem:[%s165 + $0xb2] sm:$0xff]
      %v911 = vld [vmem:[%s165 + $0xc2] sm:$0xff]
      %v912 = vld [vmem:[%s165 + $0xca] sm:$0xff]
      %v913 = vld [vmem:[%s165 + $0xda] sm:$0xff]
      %v914 = vld [vmem:[%s165 + $0xe2] sm:$0xff]
      %v915 = vld [vmem:[%s165 + $0xf2] sm:$0xff]
      %v916 = vld [vmem:[%s165 + $0xfa] sm:$0xff]
      %v917 = vld [vmem:[%s165 + $0x10a] sm:$0xff]
      %v918 = vld [vmem:[%s165 + $0x112] sm:$0xff]
      %v919 = vld [vmem:[%s165 + $0x122] sm:$0xff]
      %v920 = vld [vmem:[%s165 + $0x12a] sm:$0xff]
      %v921 = vld [vmem:[%s165 + $0x13a] sm:$0xff]
      %v922 = vld [vmem:[%s165 + $0x142] sm:$0xff]
      %v923 = vld [vmem:[%s165 + $0x152] sm:$0xff]
      %v924 = vld [vmem:[%s165 + $0x15a] sm:$0xff]
      %v925 = vld [vmem:[%s165 + $0x16a] sm:$0xff]
      %v926 = vld [vmem:[%s165 + $0x172] sm:$0xff]
      %s927 = scalar_lea.vmem %s1, 128
      %v928 = vld [vmem:[%s927] sm:$0xff]
      %v929 = vld [vmem:[%s927 + $0x8] sm:$0xff]
      %v930 = vld [vmem:[%s927 + $0x10] sm:$0xff]
      %v931 = vld [vmem:[%s927 + $0x18] sm:$0xff]
      %v932 = vld [vmem:[%s927 + $0x20] sm:$0xff]
      %v933 = vld [vmem:[%s927 + $0x28] sm:$0xff]
      %v934 = vld [vmem:[%s927 + $0x30] sm:$0xff]
      %v935 = vld [vmem:[%s927 + $0x38] sm:$0xff]
      %v937 = vsel %vm252, %v895, 0
      %v940 = vsel %vm252, %v896, 0
      %v943 = vsel %vm252, %v897, 0
      %v946 = vsel %vm252, %v898, 0
      %v949 = vsel %vm252, %v899, 0
      %v952 = vsel %vm252, %v900, 0
      %v955 = vsel %vm252, %v901, 0
      %v958 = vsel %vm252, %v902, 0
      %v961 = vsel %vm252, %v903, 0
      %v964 = vsel %vm252, %v904, 0
      %v967 = vsel %vm252, %v905, 0
      %v970 = vsel %vm252, %v906, 0
      %v973 = vsel %vm252, %v907, 0
      %v976 = vsel %vm252, %v908, 0
      %v979 = vsel %vm252, %v909, 0
      %v982 = vsel %vm252, %v910, 0
      %v985 = vsel %vm252, %v911, 0
      %v988 = vsel %vm252, %v912, 0
      %v991 = vsel %vm252, %v913, 0
      %v994 = vsel %vm252, %v914, 0
      %v997 = vsel %vm252, %v915, 0
      %v1000 = vsel %vm252, %v916, 0
      %v1003 = vsel %vm252, %v917, 0
      %v1006 = vsel %vm252, %v918, 0
      %v1009 = vsel %vm252, %v919, 0
      %v1012 = vsel %vm252, %v920, 0
      %v1015 = vsel %vm252, %v921, 0
      %v1018 = vsel %vm252, %v922, 0
      %v1021 = vsel %vm252, %v923, 0
      %v1024 = vsel %vm252, %v924, 0
      %v1027 = vsel %vm252, %v925, 0
      %v1030 = vsel %vm252, %v926, 0
      %1032 = vmatprep.subr.mxu0 0.0
      %1033 = vmatpush1.msra.mxu0 0.0
      %1034 = vmatprep.subr.mxu0 0.0
      %1035 = vmatpush1.msra.mxu0 0.0
      %1036 = vmatprep.subr.mxu0 0.0
      %1037 = vmatpush1.msra.mxu0 0.0
      %1038 = vmatprep.subr.mxu0 0.0
      %1039 = vmatpush1.msra.mxu0 0.0
      %1040 = vmatprep.subr.mxu0 0.0
      %1041 = vmatpush1.msra.mxu0 0.0
      %1042 = vmatprep.subr.mxu0 0.0
      %1043 = vmatpush1.msra.mxu0 0.0
      %1044 = vmatprep.subr.mxu0 0.0
      %1045 = vmatpush1.msra.mxu0 0.0
      %1046 = vmatprep.subr.mxu0 0.0
      %1047 = vmatpush1.msra.mxu0 0.0
      %1048 = vmatprep.subr.mxu0 0.0
      %1049 = vmatpush1.msra.mxu0 %v935
      %1050 = vmatprep.subr.mxu0 0.0
      %1051 = vmatpush1.msra.mxu0 %v934
      %1052 = vmatprep.subr.mxu0 0.0
      %1053 = vmatpush1.msra.mxu0 %v933
      %1054 = vmatprep.subr.mxu0 0.0
      %1055 = vmatpush1.msra.mxu0 %v932
      %1056 = vmatprep.subr.mxu0 0.0
      %1057 = vmatpush1.msra.mxu0 %v931
      %1058 = vmatprep.subr.mxu0 0.0
      %1059 = vmatpush1.msra.mxu0 %v930
      %1060 = vmatprep.subr.mxu0 0.0
      %1061 = vmatpush1.msra.mxu0 %v929
      %1062 = vmatprep.subr.mxu0 0.0
      %1063 = vmatpush1.msra.mxu0 %v928
      %1064 = vmatprep.subr.mxu0 0.0
      %1065 = vmatpush2.msra.mxu0 0.0
      %1066 = vmatprep.subr.mxu0 0.0
      %1067 = vmatpush2.msra.mxu0 0.0
      %1068 = vmatprep.subr.mxu0 0.0
      %1069 = vmatpush2.msra.mxu0 0.0
      %1070 = vmatprep.subr.mxu0 0.0
      %1071 = vmatpush2.msra.mxu0 0.0
      %1072 = vmatprep.subr.mxu0 0.0
      %1073 = vmatpush2.msra.mxu0 0.0
      %1074 = vmatprep.subr.mxu0 0.0
      %1075 = vmatpush2.msra.mxu0 0.0
      %1076 = vmatprep.subr.mxu0 0.0
      %1077 = vmatpush2.msra.mxu0 0.0
      %1078 = vmatprep.subr.mxu0 0.0
      %1079 = vmatpush2.msra.mxu0 0.0
      %1080 = vmatprep.subr.mxu0 0.0
      %1081 = vmatpush2.msra.mxu0 0.0
      %1082 = vmatprep.subr.mxu0 0.0
      %1083 = vmatpush2.msra.mxu0 0.0
      %1084 = vmatprep.subr.mxu0 0.0
      %1085 = vmatpush2.msra.mxu0 0.0
      %1086 = vmatprep.subr.mxu0 0.0
      %1087 = vmatpush2.msra.mxu0 0.0
      %1088 = vmatprep.subr.mxu0 0.0
      %1089 = vmatpush2.msra.mxu0 0.0
      %1090 = vmatprep.subr.mxu0 0.0
      %1091 = vmatpush2.msra.mxu0 0.0
      %1092 = vmatprep.subr.mxu0 0.0
      %1093 = vmatpush2.msra.mxu0 0.0
      %1094 = vmatprep.subr.mxu0 0.0
      %1095 = vmatpush2.msra.mxu0 0.0
      %1096 = vmatprep.mubr.f32.mxu0 0.0
      %1097 = vmatmul.mubr.f32.gmra.mxu0 %v937
      %v1098 = vpop.f32.mrf.mxu0
      %v1099 = vadd.f32 0.0, %v1098
      %v1100 = vpop.f32.mrf.mxu0
      %1101 = vmatprep.mubr.f32.mxu0 0.0
      %1102 = vmatmul.mubr.f32.gmra.mxu0 %v940
      %v1103 = vpop.f32.mrf.mxu0
      %v1104 = vadd.f32 0.0, %v1103
      %v1105 = vpop.f32.mrf.mxu0
      %1106 = vmatprep.mubr.f32.mxu0 0.0
      %1107 = vmatmul.mubr.f32.gmra.mxu0 %v943
      %v1108 = vpop.f32.mrf.mxu0
      %v1109 = vadd.f32 0.0, %v1108
      %v1110 = vpop.f32.mrf.mxu0
      %1111 = vmatprep.mubr.f32.mxu0 0.0
      %1112 = vmatmul.mubr.f32.gmra.mxu0 %v946
      %v1113 = vpop.f32.mrf.mxu0
      %v1114 = vadd.f32 0.0, %v1113
      %v1115 = vpop.f32.mrf.mxu0
      %1116 = vmatprep.mubr.f32.mxu0 0.0
      %1117 = vmatmul.mubr.f32.gmra.mxu0 %v949
      %v1118 = vpop.f32.mrf.mxu0
      %v1119 = vadd.f32 0.0, %v1118
      %v1120 = vpop.f32.mrf.mxu0
      %1121 = vmatprep.mubr.f32.mxu0 0.0
      %1122 = vmatmul.mubr.f32.gmra.mxu0 %v952
      %v1123 = vpop.f32.mrf.mxu0
      %v1124 = vadd.f32 0.0, %v1123
      %v1125 = vpop.f32.mrf.mxu0
      %1126 = vmatprep.mubr.f32.mxu0 0.0
      %1127 = vmatmul.mubr.f32.gmra.mxu0 %v955
      %v1128 = vpop.f32.mrf.mxu0
      %v1129 = vadd.f32 0.0, %v1128
      %v1130 = vpop.f32.mrf.mxu0
      %1131 = vmatprep.mubr.f32.mxu0 0.0
      %1132 = vmatmul.mubr.f32.gmra.mxu0 %v958
      %v1133 = vpop.f32.mrf.mxu0
      %v1134 = vadd.f32 0.0, %v1133
      %v1135 = vpop.f32.mrf.mxu0
      %1136 = vmatprep.mubr.f32.mxu0 0.0
      %1137 = vmatmul.mubr.f32.gmra.mxu0 %v961
      %v1138 = vpop.f32.mrf.mxu0
      %v1139 = vadd.f32 0.0, %v1138
      %v1140 = vpop.f32.mrf.mxu0
      %1141 = vmatprep.mubr.f32.mxu0 0.0
      %1142 = vmatmul.mubr.f32.gmra.mxu0 %v964
      %v1143 = vpop.f32.mrf.mxu0
      %v1144 = vadd.f32 0.0, %v1143
      %v1145 = vpop.f32.mrf.mxu0
      %1146 = vmatprep.mubr.f32.mxu0 0.0
      %1147 = vmatmul.mubr.f32.gmra.mxu0 %v967
      %v1148 = vpop.f32.mrf.mxu0
      %v1149 = vadd.f32 0.0, %v1148
      %v1150 = vpop.f32.mrf.mxu0
      %1151 = vmatprep.mubr.f32.mxu0 0.0
      %1152 = vmatmul.mubr.f32.gmra.mxu0 %v970
      %v1153 = vpop.f32.mrf.mxu0
      %v1154 = vadd.f32 0.0, %v1153
      %v1155 = vpop.f32.mrf.mxu0
      %1156 = vmatprep.mubr.f32.mxu0 0.0
      %1157 = vmatmul.mubr.f32.gmra.mxu0 %v973
      %v1158 = vpop.f32.mrf.mxu0
      %v1159 = vadd.f32 0.0, %v1158
      %v1160 = vpop.f32.mrf.mxu0
      %1161 = vmatprep.mubr.f32.mxu0 0.0
      %1162 = vmatmul.mubr.f32.gmra.mxu0 %v976
      %v1163 = vpop.f32.mrf.mxu0
      %v1164 = vadd.f32 0.0, %v1163
      %v1165 = vpop.f32.mrf.mxu0
      %1166 = vmatprep.mubr.f32.mxu0 0.0
      %1167 = vmatmul.mubr.f32.gmra.mxu0 %v979
      %v1168 = vpop.f32.mrf.mxu0
      %v1169 = vadd.f32 0.0, %v1168
      %v1170 = vpop.f32.mrf.mxu0
      %1171 = vmatprep.mubr.f32.mxu0 0.0
      %1172 = vmatmul.mubr.f32.gmra.mxu0 %v982
      %v1173 = vpop.f32.mrf.mxu0
      %v1174 = vadd.f32 0.0, %v1173
      %v1175 = vpop.f32.mrf.mxu0
      %1176 = vmatprep.mubr.f32.mxu0 0.0
      %1177 = vmatmul.mubr.f32.gmra.mxu0 %v985
      %v1178 = vpop.f32.mrf.mxu0
      %v1179 = vadd.f32 0.0, %v1178
      %v1180 = vpop.f32.mrf.mxu0
      %1181 = vmatprep.mubr.f32.mxu0 0.0
      %1182 = vmatmul.mubr.f32.gmra.mxu0 %v988
      %v1183 = vpop.f32.mrf.mxu0
      %v1184 = vadd.f32 0.0, %v1183
      %v1185 = vpop.f32.mrf.mxu0
      %1186 = vmatprep.mubr.f32.mxu0 0.0
      %1187 = vmatmul.mubr.f32.gmra.mxu0 %v991
      %v1188 = vpop.f32.mrf.mxu0
      %v1189 = vadd.f32 0.0, %v1188
      %v1190 = vpop.f32.mrf.mxu0
      %1191 = vmatprep.mubr.f32.mxu0 0.0
      %1192 = vmatmul.mubr.f32.gmra.mxu0 %v994
      %v1193 = vpop.f32.mrf.mxu0
      %v1194 = vadd.f32 0.0, %v1193
      %v1195 = vpop.f32.mrf.mxu0
      %1196 = vmatprep.mubr.f32.mxu0 0.0
      %1197 = vmatmul.mubr.f32.gmra.mxu0 %v997
      %v1198 = vpop.f32.mrf.mxu0
      %v1199 = vadd.f32 0.0, %v1198
      %v1200 = vpop.f32.mrf.mxu0
      %1201 = vmatprep.mubr.f32.mxu0 0.0
      %1202 = vmatmul.mubr.f32.gmra.mxu0 %v1000
      %v1203 = vpop.f32.mrf.mxu0
      %v1204 = vadd.f32 0.0, %v1203
      %v1205 = vpop.f32.mrf.mxu0
      %1206 = vmatprep.mubr.f32.mxu0 0.0
      %1207 = vmatmul.mubr.f32.gmra.mxu0 %v1003
      %v1208 = vpop.f32.mrf.mxu0
      %v1209 = vadd.f32 0.0, %v1208
      %v1210 = vpop.f32.mrf.mxu0
      %1211 = vmatprep.mubr.f32.mxu0 0.0
      %1212 = vmatmul.mubr.f32.gmra.mxu0 %v1006
      %v1213 = vpop.f32.mrf.mxu0
      %v1214 = vadd.f32 0.0, %v1213
      %v1215 = vpop.f32.mrf.mxu0
      %1216 = vmatprep.mubr.f32.mxu0 0.0
      %1217 = vmatmul.mubr.f32.gmra.mxu0 %v1009
      %v1218 = vpop.f32.mrf.mxu0
      %v1219 = vadd.f32 0.0, %v1218
      %v1220 = vpop.f32.mrf.mxu0
      %1221 = vmatprep.mubr.f32.mxu0 0.0
      %1222 = vmatmul.mubr.f32.gmra.mxu0 %v1012
      %v1223 = vpop.f32.mrf.mxu0
      %v1224 = vadd.f32 0.0, %v1223
      %v1225 = vpop.f32.mrf.mxu0
      %1226 = vmatprep.mubr.f32.mxu0 0.0
      %1227 = vmatmul.mubr.f32.gmra.mxu0 %v1015
      %v1228 = vpop.f32.mrf.mxu0
      %v1229 = vadd.f32 0.0, %v1228
      %v1230 = vpop.f32.mrf.mxu0
      %1231 = vmatprep.mubr.f32.mxu0 0.0
      %1232 = vmatmul.mubr.f32.gmra.mxu0 %v1018
      %v1233 = vpop.f32.mrf.mxu0
      %v1234 = vadd.f32 0.0, %v1233
      %v1235 = vpop.f32.mrf.mxu0
      %1236 = vmatprep.mubr.f32.mxu0 0.0
      %1237 = vmatmul.mubr.f32.gmra.mxu0 %v1021
      %v1238 = vpop.f32.mrf.mxu0
      %v1239 = vadd.f32 0.0, %v1238
      %v1240 = vpop.f32.mrf.mxu0
      %1241 = vmatprep.mubr.f32.mxu0 0.0
      %1242 = vmatmul.mubr.f32.gmra.mxu0 %v1024
      %v1243 = vpop.f32.mrf.mxu0
      %v1244 = vadd.f32 0.0, %v1243
      %v1245 = vpop.f32.mrf.mxu0
      %1246 = vmatprep.mubr.f32.mxu0 0.0
      %1247 = vmatmul.mubr.f32.gmra.mxu0 %v1027
      %v1248 = vpop.f32.mrf.mxu0
      %v1249 = vadd.f32 0.0, %v1248
      %v1250 = vpop.f32.mrf.mxu0
      %1251 = vmatprep.mubr.f32.mxu0 0.0
      %1252 = vmatmul.mubr.f32.gmra.mxu0 %v1030
      %v1253 = vpop.f32.mrf.mxu0
      %v1254 = vadd.f32 0.0, %v1253
      %v1255 = vpop.f32.mrf.mxu0
      %1256 = vdwg.mxu0
      %v1257 = vadd.f32 %v737, %v1099
      %v1258 = vadd.f32 %v742, %v1104
      %v1259 = vadd.f32 %v747, %v1109
      %v1260 = vadd.f32 %v752, %v1114
      %v1261 = vadd.f32 %v757, %v1119
      %v1262 = vadd.f32 %v762, %v1124
      %v1263 = vadd.f32 %v767, %v1129
      %v1264 = vadd.f32 %v772, %v1134
      %v1265 = vadd.f32 %v777, %v1139
      %v1266 = vadd.f32 %v782, %v1144
      %v1267 = vadd.f32 %v787, %v1149
      %v1268 = vadd.f32 %v792, %v1154
      %v1269 = vadd.f32 %v797, %v1159
      %v1270 = vadd.f32 %v802, %v1164
      %v1271 = vadd.f32 %v807, %v1169
      %v1272 = vadd.f32 %v812, %v1174
      %v1273 = vadd.f32 %v817, %v1179
      %v1274 = vadd.f32 %v822, %v1184
      %v1275 = vadd.f32 %v827, %v1189
      %v1276 = vadd.f32 %v832, %v1194
      %v1277 = vadd.f32 %v837, %v1199
      %v1278 = vadd.f32 %v842, %v1204
      %v1279 = vadd.f32 %v847, %v1209
      %v1280 = vadd.f32 %v852, %v1214
      %v1281 = vadd.f32 %v857, %v1219
      %v1282 = vadd.f32 %v862, %v1224
      %v1283 = vadd.f32 %v867, %v1229
      %v1284 = vadd.f32 %v872, %v1234
      %v1285 = vadd.f32 %v877, %v1239
      %v1286 = vadd.f32 %v882, %v1244
      %v1287 = vadd.f32 %v887, %v1249
      %v1288 = vadd.f32 %v892, %v1254
      %s1289 = scalar_lea.vmem %s165, 24
      %v1290 = vld [vmem:[%s1289] sm:$0xff]
      %v1291 = vld [vmem:[%s1289 + $0x8] sm:$0xff]
      %v1292 = vld [vmem:[%s1289 + $0x18] sm:$0xff]
      %v1293 = vld [vmem:[%s1289 + $0x20] sm:$0xff]
      %v1294 = vld [vmem:[%s1289 + $0x30] sm:$0xff]
      %v1295 = vld [vmem:[%s1289 + $0x38] sm:$0xff]
      %v1296 = vld [vmem:[%s1289 + $0x48] sm:$0xff]
      %v1297 = vld [vmem:[%s1289 + $0x50] sm:$0xff]
      %v1298 = vld [vmem:[%s1289 + $0x60] sm:$0xff]
      %v1299 = vld [vmem:[%s1289 + $0x68] sm:$0xff]
      %v1300 = vld [vmem:[%s1289 + $0x78] sm:$0xff]
      %v1301 = vld [vmem:[%s1289 + $0x80] sm:$0xff]
      %v1302 = vld [vmem:[%s1289 + $0x90] sm:$0xff]
      %v1303 = vld [vmem:[%s1289 + $0x98] sm:$0xff]
      %v1304 = vld [vmem:[%s1289 + $0xa8] sm:$0xff]
      %v1305 = vld [vmem:[%s1289 + $0xb0] sm:$0xff]
      %v1306 = vld [vmem:[%s1289 + $0xc0] sm:$0xff]
      %v1307 = vld [vmem:[%s1289 + $0xc8] sm:$0xff]
      %v1308 = vld [vmem:[%s1289 + $0xd8] sm:$0xff]
      %v1309 = vld [vmem:[%s1289 + $0xe0] sm:$0xff]
      %v1310 = vld [vmem:[%s1289 + $0xf0] sm:$0xff]
      %v1311 = vld [vmem:[%s1289 + $0xf8] sm:$0xff]
      %v1312 = vld [vmem:[%s1289 + $0x108] sm:$0xff]
      %v1313 = vld [vmem:[%s1289 + $0x110] sm:$0xff]
      %v1314 = vld [vmem:[%s1289 + $0x120] sm:$0xff]
      %v1315 = vld [vmem:[%s1289 + $0x128] sm:$0xff]
      %v1316 = vld [vmem:[%s1289 + $0x138] sm:$0xff]
      %v1317 = vld [vmem:[%s1289 + $0x140] sm:$0xff]
      %v1318 = vld [vmem:[%s1289 + $0x150] sm:$0xff]
      %v1319 = vld [vmem:[%s1289 + $0x158] sm:$0xff]
      %v1320 = vld [vmem:[%s1289 + $0x168] sm:$0xff]
      %v1321 = vld [vmem:[%s1289 + $0x170] sm:$0xff]
      %s1322 = scalar_lea.vmem %s1, 192
      %v1323 = vld [vmem:[%s1322] sm:$0xff]
      %v1324 = vld [vmem:[%s1322 + $0x8] sm:$0xff]
      %v1325 = vld [vmem:[%s1322 + $0x10] sm:$0xff]
      %v1326 = vld [vmem:[%s1322 + $0x18] sm:$0xff]
      %v1327 = vld [vmem:[%s1322 + $0x20] sm:$0xff]
      %v1328 = vld [vmem:[%s1322 + $0x28] sm:$0xff]
      %v1329 = vld [vmem:[%s1322 + $0x30] sm:$0xff]
      %v1330 = vld [vmem:[%s1322 + $0x38] sm:$0xff]
      %v1332 = vsel %vm252, %v1290, 0
      %v1335 = vsel %vm252, %v1291, 0
      %v1338 = vsel %vm252, %v1292, 0
      %v1341 = vsel %vm252, %v1293, 0
      %v1344 = vsel %vm252, %v1294, 0
      %v1347 = vsel %vm252, %v1295, 0
      %v1350 = vsel %vm252, %v1296, 0
      %v1353 = vsel %vm252, %v1297, 0
      %v1356 = vsel %vm252, %v1298, 0
      %v1359 = vsel %vm252, %v1299, 0
      %v1362 = vsel %vm252, %v1300, 0
      %v1365 = vsel %vm252, %v1301, 0
      %v1368 = vsel %vm252, %v1302, 0
      %v1371 = vsel %vm252, %v1303, 0
      %v1374 = vsel %vm252, %v1304, 0
      %v1377 = vsel %vm252, %v1305, 0
      %v1380 = vsel %vm252, %v1306, 0
      %v1383 = vsel %vm252, %v1307, 0
      %v1386 = vsel %vm252, %v1308, 0
      %v1389 = vsel %vm252, %v1309, 0
      %v1392 = vsel %vm252, %v1310, 0
      %v1395 = vsel %vm252, %v1311, 0
      %v1398 = vsel %vm252, %v1312, 0
      %v1401 = vsel %vm252, %v1313, 0
      %v1404 = vsel %vm252, %v1314, 0
      %v1407 = vsel %vm252, %v1315, 0
      %v1410 = vsel %vm252, %v1316, 0
      %v1413 = vsel %vm252, %v1317, 0
      %v1416 = vsel %vm252, %v1318, 0
      %v1419 = vsel %vm252, %v1319, 0
      %v1422 = vsel %vm252, %v1320, 0
      %v1425 = vsel %vm252, %v1321, 0
      %1427 = vmatprep.subr.mxu0 0.0
      %1428 = vmatpush1.msra.mxu0 0.0
      %1429 = vmatprep.subr.mxu0 0.0
      %1430 = vmatpush1.msra.mxu0 0.0
      %1431 = vmatprep.subr.mxu0 0.0
      %1432 = vmatpush1.msra.mxu0 0.0
      %1433 = vmatprep.subr.mxu0 0.0
      %1434 = vmatpush1.msra.mxu0 0.0
      %1435 = vmatprep.subr.mxu0 0.0
      %1436 = vmatpush1.msra.mxu0 0.0
      %1437 = vmatprep.subr.mxu0 0.0
      %1438 = vmatpush1.msra.mxu0 0.0
      %1439 = vmatprep.subr.mxu0 0.0
      %1440 = vmatpush1.msra.mxu0 0.0
      %1441 = vmatprep.subr.mxu0 0.0
      %1442 = vmatpush1.msra.mxu0 0.0
      %1443 = vmatprep.subr.mxu0 0.0
      %1444 = vmatpush1.msra.mxu0 %v1330
      %1445 = vmatprep.subr.mxu0 0.0
      %1446 = vmatpush1.msra.mxu0 %v1329
      %1447 = vmatprep.subr.mxu0 0.0
      %1448 = vmatpush1.msra.mxu0 %v1328
      %1449 = vmatprep.subr.mxu0 0.0
      %1450 = vmatpush1.msra.mxu0 %v1327
      %1451 = vmatprep.subr.mxu0 0.0
      %1452 = vmatpush1.msra.mxu0 %v1326
      %1453 = vmatprep.subr.mxu0 0.0
      %1454 = vmatpush1.msra.mxu0 %v1325
      %1455 = vmatprep.subr.mxu0 0.0
      %1456 = vmatpush1.msra.mxu0 %v1324
      %1457 = vmatprep.subr.mxu0 0.0
      %1458 = vmatpush1.msra.mxu0 %v1323
      %1459 = vmatprep.subr.mxu0 0.0
      %1460 = vmatpush2.msra.mxu0 0.0
      %1461 = vmatprep.subr.mxu0 0.0
      %1462 = vmatpush2.msra.mxu0 0.0
      %1463 = vmatprep.subr.mxu0 0.0
      %1464 = vmatpush2.msra.mxu0 0.0
      %1465 = vmatprep.subr.mxu0 0.0
      %1466 = vmatpush2.msra.mxu0 0.0
      %1467 = vmatprep.subr.mxu0 0.0
      %1468 = vmatpush2.msra.mxu0 0.0
      %1469 = vmatprep.subr.mxu0 0.0
      %1470 = vmatpush2.msra.mxu0 0.0
      %1471 = vmatprep.subr.mxu0 0.0
      %1472 = vmatpush2.msra.mxu0 0.0
      %1473 = vmatprep.subr.mxu0 0.0
      %1474 = vmatpush2.msra.mxu0 0.0
      %1475 = vmatprep.subr.mxu0 0.0
      %1476 = vmatpush2.msra.mxu0 0.0
      %1477 = vmatprep.subr.mxu0 0.0
      %1478 = vmatpush2.msra.mxu0 0.0
      %1479 = vmatprep.subr.mxu0 0.0
      %1480 = vmatpush2.msra.mxu0 0.0
      %1481 = vmatprep.subr.mxu0 0.0
      %1482 = vmatpush2.msra.mxu0 0.0
      %1483 = vmatprep.subr.mxu0 0.0
      %1484 = vmatpush2.msra.mxu0 0.0
      %1485 = vmatprep.subr.mxu0 0.0
      %1486 = vmatpush2.msra.mxu0 0.0
      %1487 = vmatprep.subr.mxu0 0.0
      %1488 = vmatpush2.msra.mxu0 0.0
      %1489 = vmatprep.subr.mxu0 0.0
      %1490 = vmatpush2.msra.mxu0 0.0
      %1491 = vmatprep.mubr.f32.mxu0 0.0
      %1492 = vmatmul.mubr.f32.gmra.mxu0 %v1332
      %v1493 = vpop.f32.mrf.mxu0
      %v1494 = vadd.f32 0.0, %v1493
      %v1495 = vpop.f32.mrf.mxu0
      %1496 = vmatprep.mubr.f32.mxu0 0.0
      %1497 = vmatmul.mubr.f32.gmra.mxu0 %v1335
      %v1498 = vpop.f32.mrf.mxu0
      %v1499 = vadd.f32 0.0, %v1498
      %v1500 = vpop.f32.mrf.mxu0
      %1501 = vmatprep.mubr.f32.mxu0 0.0
      %1502 = vmatmul.mubr.f32.gmra.mxu0 %v1338
      %v1503 = vpop.f32.mrf.mxu0
      %v1504 = vadd.f32 0.0, %v1503
      %v1505 = vpop.f32.mrf.mxu0
      %1506 = vmatprep.mubr.f32.mxu0 0.0
      %1507 = vmatmul.mubr.f32.gmra.mxu0 %v1341
      %v1508 = vpop.f32.mrf.mxu0
      %v1509 = vadd.f32 0.0, %v1508
      %v1510 = vpop.f32.mrf.mxu0
      %1511 = vmatprep.mubr.f32.mxu0 0.0
      %1512 = vmatmul.mubr.f32.gmra.mxu0 %v1344
      %v1513 = vpop.f32.mrf.mxu0
      %v1514 = vadd.f32 0.0, %v1513
      %v1515 = vpop.f32.mrf.mxu0
      %1516 = vmatprep.mubr.f32.mxu0 0.0
      %1517 = vmatmul.mubr.f32.gmra.mxu0 %v1347
      %v1518 = vpop.f32.mrf.mxu0
      %v1519 = vadd.f32 0.0, %v1518
      %v1520 = vpop.f32.mrf.mxu0
      %1521 = vmatprep.mubr.f32.mxu0 0.0
      %1522 = vmatmul.mubr.f32.gmra.mxu0 %v1350
      %v1523 = vpop.f32.mrf.mxu0
      %v1524 = vadd.f32 0.0, %v1523
      %v1525 = vpop.f32.mrf.mxu0
      %1526 = vmatprep.mubr.f32.mxu0 0.0
      %1527 = vmatmul.mubr.f32.gmra.mxu0 %v1353
      %v1528 = vpop.f32.mrf.mxu0
      %v1529 = vadd.f32 0.0, %v1528
      %v1530 = vpop.f32.mrf.mxu0
      %1531 = vmatprep.mubr.f32.mxu0 0.0
      %1532 = vmatmul.mubr.f32.gmra.mxu0 %v1356
      %v1533 = vpop.f32.mrf.mxu0
      %v1534 = vadd.f32 0.0, %v1533
      %v1535 = vpop.f32.mrf.mxu0
      %1536 = vmatprep.mubr.f32.mxu0 0.0
      %1537 = vmatmul.mubr.f32.gmra.mxu0 %v1359
      %v1538 = vpop.f32.mrf.mxu0
      %v1539 = vadd.f32 0.0, %v1538
      %v1540 = vpop.f32.mrf.mxu0
      %1541 = vmatprep.mubr.f32.mxu0 0.0
      %1542 = vmatmul.mubr.f32.gmra.mxu0 %v1362
      %v1543 = vpop.f32.mrf.mxu0
      %v1544 = vadd.f32 0.0, %v1543
      %v1545 = vpop.f32.mrf.mxu0
      %1546 = vmatprep.mubr.f32.mxu0 0.0
      %1547 = vmatmul.mubr.f32.gmra.mxu0 %v1365
      %v1548 = vpop.f32.mrf.mxu0
      %v1549 = vadd.f32 0.0, %v1548
      %v1550 = vpop.f32.mrf.mxu0
      %1551 = vmatprep.mubr.f32.mxu0 0.0
      %1552 = vmatmul.mubr.f32.gmra.mxu0 %v1368
      %v1553 = vpop.f32.mrf.mxu0
      %v1554 = vadd.f32 0.0, %v1553
      %v1555 = vpop.f32.mrf.mxu0
      %1556 = vmatprep.mubr.f32.mxu0 0.0
      %1557 = vmatmul.mubr.f32.gmra.mxu0 %v1371
      %v1558 = vpop.f32.mrf.mxu0
      %v1559 = vadd.f32 0.0, %v1558
      %v1560 = vpop.f32.mrf.mxu0
      %1561 = vmatprep.mubr.f32.mxu0 0.0
      %1562 = vmatmul.mubr.f32.gmra.mxu0 %v1374
      %v1563 = vpop.f32.mrf.mxu0
      %v1564 = vadd.f32 0.0, %v1563
      %v1565 = vpop.f32.mrf.mxu0
      %1566 = vmatprep.mubr.f32.mxu0 0.0
      %1567 = vmatmul.mubr.f32.gmra.mxu0 %v1377
      %v1568 = vpop.f32.mrf.mxu0
      %v1569 = vadd.f32 0.0, %v1568
      %v1570 = vpop.f32.mrf.mxu0
      %1571 = vmatprep.mubr.f32.mxu0 0.0
      %1572 = vmatmul.mubr.f32.gmra.mxu0 %v1380
      %v1573 = vpop.f32.mrf.mxu0
      %v1574 = vadd.f32 0.0, %v1573
      %v1575 = vpop.f32.mrf.mxu0
      %1576 = vmatprep.mubr.f32.mxu0 0.0
      %1577 = vmatmul.mubr.f32.gmra.mxu0 %v1383
      %v1578 = vpop.f32.mrf.mxu0
      %v1579 = vadd.f32 0.0, %v1578
      %v1580 = vpop.f32.mrf.mxu0
      %1581 = vmatprep.mubr.f32.mxu0 0.0
      %1582 = vmatmul.mubr.f32.gmra.mxu0 %v1386
      %v1583 = vpop.f32.mrf.mxu0
      %v1584 = vadd.f32 0.0, %v1583
      %v1585 = vpop.f32.mrf.mxu0
      %1586 = vmatprep.mubr.f32.mxu0 0.0
      %1587 = vmatmul.mubr.f32.gmra.mxu0 %v1389
      %v1588 = vpop.f32.mrf.mxu0
      %v1589 = vadd.f32 0.0, %v1588
      %v1590 = vpop.f32.mrf.mxu0
      %1591 = vmatprep.mubr.f32.mxu0 0.0
      %1592 = vmatmul.mubr.f32.gmra.mxu0 %v1392
      %v1593 = vpop.f32.mrf.mxu0
      %v1594 = vadd.f32 0.0, %v1593
      %v1595 = vpop.f32.mrf.mxu0
      %1596 = vmatprep.mubr.f32.mxu0 0.0
      %1597 = vmatmul.mubr.f32.gmra.mxu0 %v1395
      %v1598 = vpop.f32.mrf.mxu0
      %v1599 = vadd.f32 0.0, %v1598
      %v1600 = vpop.f32.mrf.mxu0
      %1601 = vmatprep.mubr.f32.mxu0 0.0
      %1602 = vmatmul.mubr.f32.gmra.mxu0 %v1398
      %v1603 = vpop.f32.mrf.mxu0
      %v1604 = vadd.f32 0.0, %v1603
      %v1605 = vpop.f32.mrf.mxu0
      %1606 = vmatprep.mubr.f32.mxu0 0.0
      %1607 = vmatmul.mubr.f32.gmra.mxu0 %v1401
      %v1608 = vpop.f32.mrf.mxu0
      %v1609 = vadd.f32 0.0, %v1608
      %v1610 = vpop.f32.mrf.mxu0
      %1611 = vmatprep.mubr.f32.mxu0 0.0
      %1612 = vmatmul.mubr.f32.gmra.mxu0 %v1404
      %v1613 = vpop.f32.mrf.mxu0
      %v1614 = vadd.f32 0.0, %v1613
      %v1615 = vpop.f32.mrf.mxu0
      %1616 = vmatprep.mubr.f32.mxu0 0.0
      %1617 = vmatmul.mubr.f32.gmra.mxu0 %v1407
      %v1618 = vpop.f32.mrf.mxu0
      %v1619 = vadd.f32 0.0, %v1618
      %v1620 = vpop.f32.mrf.mxu0
      %1621 = vmatprep.mubr.f32.mxu0 0.0
      %1622 = vmatmul.mubr.f32.gmra.mxu0 %v1410
      %v1623 = vpop.f32.mrf.mxu0
      %v1624 = vadd.f32 0.0, %v1623
      %v1625 = vpop.f32.mrf.mxu0
      %1626 = vmatprep.mubr.f32.mxu0 0.0
      %1627 = vmatmul.mubr.f32.gmra.mxu0 %v1413
      %v1628 = vpop.f32.mrf.mxu0
      %v1629 = vadd.f32 0.0, %v1628
      %v1630 = vpop.f32.mrf.mxu0
      %1631 = vmatprep.mubr.f32.mxu0 0.0
      %1632 = vmatmul.mubr.f32.gmra.mxu0 %v1416
      %v1633 = vpop.f32.mrf.mxu0
      %v1634 = vadd.f32 0.0, %v1633
      %v1635 = vpop.f32.mrf.mxu0
      %1636 = vmatprep.mubr.f32.mxu0 0.0
      %1637 = vmatmul.mubr.f32.gmra.mxu0 %v1419
      %v1638 = vpop.f32.mrf.mxu0
      %v1639 = vadd.f32 0.0, %v1638
      %v1640 = vpop.f32.mrf.mxu0
      %1641 = vmatprep.mubr.f32.mxu0 0.0
      %1642 = vmatmul.mubr.f32.gmra.mxu0 %v1422
      %v1643 = vpop.f32.mrf.mxu0
      %v1644 = vadd.f32 0.0, %v1643
      %v1645 = vpop.f32.mrf.mxu0
      %1646 = vmatprep.mubr.f32.mxu0 0.0
      %1647 = vmatmul.mubr.f32.gmra.mxu0 %v1425
      %v1648 = vpop.f32.mrf.mxu0
      %v1649 = vadd.f32 0.0, %v1648
      %v1650 = vpop.f32.mrf.mxu0
      %1651 = vdwg.mxu0
      %v1652 = vadd.f32 %v1257, %v1494
      %v1653 = vadd.f32 %v1258, %v1499
      %v1654 = vadd.f32 %v1259, %v1504
      %v1655 = vadd.f32 %v1260, %v1509
      %v1656 = vadd.f32 %v1261, %v1514
      %v1657 = vadd.f32 %v1262, %v1519
      %v1658 = vadd.f32 %v1263, %v1524
      %v1659 = vadd.f32 %v1264, %v1529
      %v1660 = vadd.f32 %v1265, %v1534
      %v1661 = vadd.f32 %v1266, %v1539
      %v1662 = vadd.f32 %v1267, %v1544
      %v1663 = vadd.f32 %v1268, %v1549
      %v1664 = vadd.f32 %v1269, %v1554
      %v1665 = vadd.f32 %v1270, %v1559
      %v1666 = vadd.f32 %v1271, %v1564
      %v1667 = vadd.f32 %v1272, %v1569
      %v1668 = vadd.f32 %v1273, %v1574
      %v1669 = vadd.f32 %v1274, %v1579
      %v1670 = vadd.f32 %v1275, %v1584
      %v1671 = vadd.f32 %v1276, %v1589
      %v1672 = vadd.f32 %v1277, %v1594
      %v1673 = vadd.f32 %v1278, %v1599
      %v1674 = vadd.f32 %v1279, %v1604
      %v1675 = vadd.f32 %v1280, %v1609
      %v1676 = vadd.f32 %v1281, %v1614
      %v1677 = vadd.f32 %v1282, %v1619
      %v1678 = vadd.f32 %v1283, %v1624
      %v1679 = vadd.f32 %v1284, %v1629
      %v1680 = vadd.f32 %v1285, %v1634
      %v1681 = vadd.f32 %v1286, %v1639
      %v1682 = vadd.f32 %v1287, %v1644
      %v1683 = vadd.f32 %v1288, %v1649
      %v1684 = vld [vmem:[%s1289 + $0x1] sm:$0xff]
      %v1685 = vld [vmem:[%s1289 + $0x9] sm:$0xff]
      %v1686 = vld [vmem:[%s1289 + $0x19] sm:$0xff]
      %v1687 = vld [vmem:[%s1289 + $0x21] sm:$0xff]
      %v1688 = vld [vmem:[%s1289 + $0x31] sm:$0xff]
      %v1689 = vld [vmem:[%s1289 + $0x39] sm:$0xff]
      %v1690 = vld [vmem:[%s1289 + $0x49] sm:$0xff]
      %v1691 = vld [vmem:[%s1289 + $0x51] sm:$0xff]
      %v1692 = vld [vmem:[%s1289 + $0x61] sm:$0xff]
      %v1693 = vld [vmem:[%s1289 + $0x69] sm:$0xff]
      %v1694 = vld [vmem:[%s1289 + $0x79] sm:$0xff]
      %v1695 = vld [vmem:[%s1289 + $0x81] sm:$0xff]
      %v1696 = vld [vmem:[%s1289 + $0x91] sm:$0xff]
      %v1697 = vld [vmem:[%s1289 + $0x99] sm:$0xff]
      %v1698 = vld [vmem:[%s1289 + $0xa9] sm:$0xff]
      %v1699 = vld [vmem:[%s1289 + $0xb1] sm:$0xff]
      %v1700 = vld [vmem:[%s1289 + $0xc1] sm:$0xff]
      %v1701 = vld [vmem:[%s1289 + $0xc9] sm:$0xff]
      %v1702 = vld [vmem:[%s1289 + $0xd9] sm:$0xff]
      %v1703 = vld [vmem:[%s1289 + $0xe1] sm:$0xff]
      %v1704 = vld [vmem:[%s1289 + $0xf1] sm:$0xff]
      %v1705 = vld [vmem:[%s1289 + $0xf9] sm:$0xff]
      %v1706 = vld [vmem:[%s1289 + $0x109] sm:$0xff]
      %v1707 = vld [vmem:[%s1289 + $0x111] sm:$0xff]
      %v1708 = vld [vmem:[%s1289 + $0x121] sm:$0xff]
      %v1709 = vld [vmem:[%s1289 + $0x129] sm:$0xff]
      %v1710 = vld [vmem:[%s1289 + $0x139] sm:$0xff]
      %v1711 = vld [vmem:[%s1289 + $0x141] sm:$0xff]
      %v1712 = vld [vmem:[%s1289 + $0x151] sm:$0xff]
      %v1713 = vld [vmem:[%s1289 + $0x159] sm:$0xff]
      %v1714 = vld [vmem:[%s1289 + $0x169] sm:$0xff]
      %v1715 = vld [vmem:[%s1289 + $0x171] sm:$0xff]
      %s1716 = scalar_lea.vmem %s1, 256
      %v1717 = vld [vmem:[%s1716] sm:$0xff]
      %v1718 = vld [vmem:[%s1716 + $0x8] sm:$0xff]
      %v1719 = vld [vmem:[%s1716 + $0x10] sm:$0xff]
      %v1720 = vld [vmem:[%s1716 + $0x18] sm:$0xff]
      %v1721 = vld [vmem:[%s1716 + $0x20] sm:$0xff]
      %v1722 = vld [vmem:[%s1716 + $0x28] sm:$0xff]
      %v1723 = vld [vmem:[%s1716 + $0x30] sm:$0xff]
      %v1724 = vld [vmem:[%s1716 + $0x38] sm:$0xff]
      %v1726 = vsel %vm252, %v1684, 0
      %v1729 = vsel %vm252, %v1685, 0
      %v1732 = vsel %vm252, %v1686, 0
      %v1735 = vsel %vm252, %v1687, 0
      %v1738 = vsel %vm252, %v1688, 0
      %v1741 = vsel %vm252, %v1689, 0
      %v1744 = vsel %vm252, %v1690, 0
      %v1747 = vsel %vm252, %v1691, 0
      %v1750 = vsel %vm252, %v1692, 0
      %v1753 = vsel %vm252, %v1693, 0
      %v1756 = vsel %vm252, %v1694, 0
      %v1759 = vsel %vm252, %v1695, 0
      %v1762 = vsel %vm252, %v1696, 0
      %v1765 = vsel %vm252, %v1697, 0
      %v1768 = vsel %vm252, %v1698, 0
      %v1771 = vsel %vm252, %v1699, 0
      %v1774 = vsel %vm252, %v1700, 0
      %v1777 = vsel %vm252, %v1701, 0
      %v1780 = vsel %vm252, %v1702, 0
      %v1783 = vsel %vm252, %v1703, 0
      %v1786 = vsel %vm252, %v1704, 0
      %v1789 = vsel %vm252, %v1705, 0
      %v1792 = vsel %vm252, %v1706, 0
      %v1795 = vsel %vm252, %v1707, 0
      %v1798 = vsel %vm252, %v1708, 0
      %v1801 = vsel %vm252, %v1709, 0
      %v1804 = vsel %vm252, %v1710, 0
      %v1807 = vsel %vm252, %v1711, 0
      %v1810 = vsel %vm252, %v1712, 0
      %v1813 = vsel %vm252, %v1713, 0
      %v1816 = vsel %vm252, %v1714, 0
      %v1819 = vsel %vm252, %v1715, 0
      %1821 = vmatprep.subr.mxu0 0.0
      %1822 = vmatpush1.msra.mxu0 0.0
      %1823 = vmatprep.subr.mxu0 0.0
      %1824 = vmatpush1.msra.mxu0 0.0
      %1825 = vmatprep.subr.mxu0 0.0
      %1826 = vmatpush1.msra.mxu0 0.0
      %1827 = vmatprep.subr.mxu0 0.0
      %1828 = vmatpush1.msra.mxu0 0.0
      %1829 = vmatprep.subr.mxu0 0.0
      %1830 = vmatpush1.msra.mxu0 0.0
      %1831 = vmatprep.subr.mxu0 0.0
      %1832 = vmatpush1.msra.mxu0 0.0
      %1833 = vmatprep.subr.mxu0 0.0
      %1834 = vmatpush1.msra.mxu0 0.0
      %1835 = vmatprep.subr.mxu0 0.0
      %1836 = vmatpush1.msra.mxu0 0.0
      %1837 = vmatprep.subr.mxu0 0.0
      %1838 = vmatpush1.msra.mxu0 %v1724
      %1839 = vmatprep.subr.mxu0 0.0
      %1840 = vmatpush1.msra.mxu0 %v1723
      %1841 = vmatprep.subr.mxu0 0.0
      %1842 = vmatpush1.msra.mxu0 %v1722
      %1843 = vmatprep.subr.mxu0 0.0
      %1844 = vmatpush1.msra.mxu0 %v1721
      %1845 = vmatprep.subr.mxu0 0.0
      %1846 = vmatpush1.msra.mxu0 %v1720
      %1847 = vmatprep.subr.mxu0 0.0
      %1848 = vmatpush1.msra.mxu0 %v1719
      %1849 = vmatprep.subr.mxu0 0.0
      %1850 = vmatpush1.msra.mxu0 %v1718
      %1851 = vmatprep.subr.mxu0 0.0
      %1852 = vmatpush1.msra.mxu0 %v1717
      %1853 = vmatprep.subr.mxu0 0.0
      %1854 = vmatpush2.msra.mxu0 0.0
      %1855 = vmatprep.subr.mxu0 0.0
      %1856 = vmatpush2.msra.mxu0 0.0
      %1857 = vmatprep.subr.mxu0 0.0
      %1858 = vmatpush2.msra.mxu0 0.0
      %1859 = vmatprep.subr.mxu0 0.0
      %1860 = vmatpush2.msra.mxu0 0.0
      %1861 = vmatprep.subr.mxu0 0.0
      %1862 = vmatpush2.msra.mxu0 0.0
      %1863 = vmatprep.subr.mxu0 0.0
      %1864 = vmatpush2.msra.mxu0 0.0
      %1865 = vmatprep.subr.mxu0 0.0
      %1866 = vmatpush2.msra.mxu0 0.0
      %1867 = vmatprep.subr.mxu0 0.0
      %1868 = vmatpush2.msra.mxu0 0.0
      %1869 = vmatprep.subr.mxu0 0.0
      %1870 = vmatpush2.msra.mxu0 0.0
      %1871 = vmatprep.subr.mxu0 0.0
      %1872 = vmatpush2.msra.mxu0 0.0
      %1873 = vmatprep.subr.mxu0 0.0
      %1874 = vmatpush2.msra.mxu0 0.0
      %1875 = vmatprep.subr.mxu0 0.0
      %1876 = vmatpush2.msra.mxu0 0.0
      %1877 = vmatprep.subr.mxu0 0.0
      %1878 = vmatpush2.msra.mxu0 0.0
      %1879 = vmatprep.subr.mxu0 0.0
      %1880 = vmatpush2.msra.mxu0 0.0
      %1881 = vmatprep.subr.mxu0 0.0
      %1882 = vmatpush2.msra.mxu0 0.0
      %1883 = vmatprep.subr.mxu0 0.0
      %1884 = vmatpush2.msra.mxu0 0.0
      %1885 = vmatprep.mubr.f32.mxu0 0.0
      %1886 = vmatmul.mubr.f32.gmra.mxu0 %v1726
      %v1887 = vpop.f32.mrf.mxu0
      %v1888 = vadd.f32 0.0, %v1887
      %v1889 = vpop.f32.mrf.mxu0
      %1890 = vmatprep.mubr.f32.mxu0 0.0
      %1891 = vmatmul.mubr.f32.gmra.mxu0 %v1729
      %v1892 = vpop.f32.mrf.mxu0
      %v1893 = vadd.f32 0.0, %v1892
      %v1894 = vpop.f32.mrf.mxu0
      %1895 = vmatprep.mubr.f32.mxu0 0.0
      %1896 = vmatmul.mubr.f32.gmra.mxu0 %v1732
      %v1897 = vpop.f32.mrf.mxu0
      %v1898 = vadd.f32 0.0, %v1897
      %v1899 = vpop.f32.mrf.mxu0
      %1900 = vmatprep.mubr.f32.mxu0 0.0
      %1901 = vmatmul.mubr.f32.gmra.mxu0 %v1735
      %v1902 = vpop.f32.mrf.mxu0
      %v1903 = vadd.f32 0.0, %v1902
      %v1904 = vpop.f32.mrf.mxu0
      %1905 = vmatprep.mubr.f32.mxu0 0.0
      %1906 = vmatmul.mubr.f32.gmra.mxu0 %v1738
      %v1907 = vpop.f32.mrf.mxu0
      %v1908 = vadd.f32 0.0, %v1907
      %v1909 = vpop.f32.mrf.mxu0
      %1910 = vmatprep.mubr.f32.mxu0 0.0
      %1911 = vmatmul.mubr.f32.gmra.mxu0 %v1741
      %v1912 = vpop.f32.mrf.mxu0
      %v1913 = vadd.f32 0.0, %v1912
      %v1914 = vpop.f32.mrf.mxu0
      %1915 = vmatprep.mubr.f32.mxu0 0.0
      %1916 = vmatmul.mubr.f32.gmra.mxu0 %v1744
      %v1917 = vpop.f32.mrf.mxu0
      %v1918 = vadd.f32 0.0, %v1917
      %v1919 = vpop.f32.mrf.mxu0
      %1920 = vmatprep.mubr.f32.mxu0 0.0
      %1921 = vmatmul.mubr.f32.gmra.mxu0 %v1747
      %v1922 = vpop.f32.mrf.mxu0
      %v1923 = vadd.f32 0.0, %v1922
      %v1924 = vpop.f32.mrf.mxu0
      %1925 = vmatprep.mubr.f32.mxu0 0.0
      %1926 = vmatmul.mubr.f32.gmra.mxu0 %v1750
      %v1927 = vpop.f32.mrf.mxu0
      %v1928 = vadd.f32 0.0, %v1927
      %v1929 = vpop.f32.mrf.mxu0
      %1930 = vmatprep.mubr.f32.mxu0 0.0
      %1931 = vmatmul.mubr.f32.gmra.mxu0 %v1753
      %v1932 = vpop.f32.mrf.mxu0
      %v1933 = vadd.f32 0.0, %v1932
      %v1934 = vpop.f32.mrf.mxu0
      %1935 = vmatprep.mubr.f32.mxu0 0.0
      %1936 = vmatmul.mubr.f32.gmra.mxu0 %v1756
      %v1937 = vpop.f32.mrf.mxu0
      %v1938 = vadd.f32 0.0, %v1937
      %v1939 = vpop.f32.mrf.mxu0
      %1940 = vmatprep.mubr.f32.mxu0 0.0
      %1941 = vmatmul.mubr.f32.gmra.mxu0 %v1759
      %v1942 = vpop.f32.mrf.mxu0
      %v1943 = vadd.f32 0.0, %v1942
      %v1944 = vpop.f32.mrf.mxu0
      %1945 = vmatprep.mubr.f32.mxu0 0.0
      %1946 = vmatmul.mubr.f32.gmra.mxu0 %v1762
      %v1947 = vpop.f32.mrf.mxu0
      %v1948 = vadd.f32 0.0, %v1947
      %v1949 = vpop.f32.mrf.mxu0
      %1950 = vmatprep.mubr.f32.mxu0 0.0
      %1951 = vmatmul.mubr.f32.gmra.mxu0 %v1765
      %v1952 = vpop.f32.mrf.mxu0
      %v1953 = vadd.f32 0.0, %v1952
      %v1954 = vpop.f32.mrf.mxu0
      %1955 = vmatprep.mubr.f32.mxu0 0.0
      %1956 = vmatmul.mubr.f32.gmra.mxu0 %v1768
      %v1957 = vpop.f32.mrf.mxu0
      %v1958 = vadd.f32 0.0, %v1957
      %v1959 = vpop.f32.mrf.mxu0
      %1960 = vmatprep.mubr.f32.mxu0 0.0
      %1961 = vmatmul.mubr.f32.gmra.mxu0 %v1771
      %v1962 = vpop.f32.mrf.mxu0
      %v1963 = vadd.f32 0.0, %v1962
      %v1964 = vpop.f32.mrf.mxu0
      %1965 = vmatprep.mubr.f32.mxu0 0.0
      %1966 = vmatmul.mubr.f32.gmra.mxu0 %v1774
      %v1967 = vpop.f32.mrf.mxu0
      %v1968 = vadd.f32 0.0, %v1967
      %v1969 = vpop.f32.mrf.mxu0
      %1970 = vmatprep.mubr.f32.mxu0 0.0
      %1971 = vmatmul.mubr.f32.gmra.mxu0 %v1777
      %v1972 = vpop.f32.mrf.mxu0
      %v1973 = vadd.f32 0.0, %v1972
      %v1974 = vpop.f32.mrf.mxu0
      %1975 = vmatprep.mubr.f32.mxu0 0.0
      %1976 = vmatmul.mubr.f32.gmra.mxu0 %v1780
      %v1977 = vpop.f32.mrf.mxu0
      %v1978 = vadd.f32 0.0, %v1977
      %v1979 = vpop.f32.mrf.mxu0
      %1980 = vmatprep.mubr.f32.mxu0 0.0
      %1981 = vmatmul.mubr.f32.gmra.mxu0 %v1783
      %v1982 = vpop.f32.mrf.mxu0
      %v1983 = vadd.f32 0.0, %v1982
      %v1984 = vpop.f32.mrf.mxu0
      %1985 = vmatprep.mubr.f32.mxu0 0.0
      %1986 = vmatmul.mubr.f32.gmra.mxu0 %v1786
      %v1987 = vpop.f32.mrf.mxu0
      %v1988 = vadd.f32 0.0, %v1987
      %v1989 = vpop.f32.mrf.mxu0
      %1990 = vmatprep.mubr.f32.mxu0 0.0
      %1991 = vmatmul.mubr.f32.gmra.mxu0 %v1789
      %v1992 = vpop.f32.mrf.mxu0
      %v1993 = vadd.f32 0.0, %v1992
      %v1994 = vpop.f32.mrf.mxu0
      %1995 = vmatprep.mubr.f32.mxu0 0.0
      %1996 = vmatmul.mubr.f32.gmra.mxu0 %v1792
      %v1997 = vpop.f32.mrf.mxu0
      %v1998 = vadd.f32 0.0, %v1997
      %v1999 = vpop.f32.mrf.mxu0
      %2000 = vmatprep.mubr.f32.mxu0 0.0
      %2001 = vmatmul.mubr.f32.gmra.mxu0 %v1795
      %v2002 = vpop.f32.mrf.mxu0
      %v2003 = vadd.f32 0.0, %v2002
      %v2004 = vpop.f32.mrf.mxu0
      %2005 = vmatprep.mubr.f32.mxu0 0.0
      %2006 = vmatmul.mubr.f32.gmra.mxu0 %v1798
      %v2007 = vpop.f32.mrf.mxu0
      %v2008 = vadd.f32 0.0, %v2007
      %v2009 = vpop.f32.mrf.mxu0
      %2010 = vmatprep.mubr.f32.mxu0 0.0
      %2011 = vmatmul.mubr.f32.gmra.mxu0 %v1801
      %v2012 = vpop.f32.mrf.mxu0
      %v2013 = vadd.f32 0.0, %v2012
      %v2014 = vpop.f32.mrf.mxu0
      %2015 = vmatprep.mubr.f32.mxu0 0.0
      %2016 = vmatmul.mubr.f32.gmra.mxu0 %v1804
      %v2017 = vpop.f32.mrf.mxu0
      %v2018 = vadd.f32 0.0, %v2017
      %v2019 = vpop.f32.mrf.mxu0
      %2020 = vmatprep.mubr.f32.mxu0 0.0
      %2021 = vmatmul.mubr.f32.gmra.mxu0 %v1807
      %v2022 = vpop.f32.mrf.mxu0
      %v2023 = vadd.f32 0.0, %v2022
      %v2024 = vpop.f32.mrf.mxu0
      %2025 = vmatprep.mubr.f32.mxu0 0.0
      %2026 = vmatmul.mubr.f32.gmra.mxu0 %v1810
      %v2027 = vpop.f32.mrf.mxu0
      %v2028 = vadd.f32 0.0, %v2027
      %v2029 = vpop.f32.mrf.mxu0
      %2030 = vmatprep.mubr.f32.mxu0 0.0
      %2031 = vmatmul.mubr.f32.gmra.mxu0 %v1813
      %v2032 = vpop.f32.mrf.mxu0
      %v2033 = vadd.f32 0.0, %v2032
      %v2034 = vpop.f32.mrf.mxu0
      %2035 = vmatprep.mubr.f32.mxu0 0.0
      %2036 = vmatmul.mubr.f32.gmra.mxu0 %v1816
      %v2037 = vpop.f32.mrf.mxu0
      %v2038 = vadd.f32 0.0, %v2037
      %v2039 = vpop.f32.mrf.mxu0
      %2040 = vmatprep.mubr.f32.mxu0 0.0
      %2041 = vmatmul.mubr.f32.gmra.mxu0 %v1819
      %v2042 = vpop.f32.mrf.mxu0
      %v2043 = vadd.f32 0.0, %v2042
      %v2044 = vpop.f32.mrf.mxu0
      %2045 = vdwg.mxu0
      %v2046 = vadd.f32 %v1652, %v1888
      %v2047 = vadd.f32 %v1653, %v1893
      %v2048 = vadd.f32 %v1654, %v1898
      %v2049 = vadd.f32 %v1655, %v1903
      %v2050 = vadd.f32 %v1656, %v1908
      %v2051 = vadd.f32 %v1657, %v1913
      %v2052 = vadd.f32 %v1658, %v1918
      %v2053 = vadd.f32 %v1659, %v1923
      %v2054 = vadd.f32 %v1660, %v1928
      %v2055 = vadd.f32 %v1661, %v1933
      %v2056 = vadd.f32 %v1662, %v1938
      %v2057 = vadd.f32 %v1663, %v1943
      %v2058 = vadd.f32 %v1664, %v1948
      %v2059 = vadd.f32 %v1665, %v1953
      %v2060 = vadd.f32 %v1666, %v1958
      %v2061 = vadd.f32 %v1667, %v1963
      %v2062 = vadd.f32 %v1668, %v1968
      %v2063 = vadd.f32 %v1669, %v1973
      %v2064 = vadd.f32 %v1670, %v1978
      %v2065 = vadd.f32 %v1671, %v1983
      %v2066 = vadd.f32 %v1672, %v1988
      %v2067 = vadd.f32 %v1673, %v1993
      %v2068 = vadd.f32 %v1674, %v1998
      %v2069 = vadd.f32 %v1675, %v2003
      %v2070 = vadd.f32 %v1676, %v2008
      %v2071 = vadd.f32 %v1677, %v2013
      %v2072 = vadd.f32 %v1678, %v2018
      %v2073 = vadd.f32 %v1679, %v2023
      %v2074 = vadd.f32 %v1680, %v2028
      %v2075 = vadd.f32 %v1681, %v2033
      %v2076 = vadd.f32 %v1682, %v2038
      %v2077 = vadd.f32 %v1683, %v2043
      %v2078 = vld [vmem:[%s1289 + $0x2] sm:$0xff]
      %v2079 = vld [vmem:[%s1289 + $0xa] sm:$0xff]
      %v2080 = vld [vmem:[%s1289 + $0x1a] sm:$0xff]
      %v2081 = vld [vmem:[%s1289 + $0x22] sm:$0xff]
      %v2082 = vld [vmem:[%s1289 + $0x32] sm:$0xff]
      %v2083 = vld [vmem:[%s1289 + $0x3a] sm:$0xff]
      %v2084 = vld [vmem:[%s1289 + $0x4a] sm:$0xff]
      %v2085 = vld [vmem:[%s1289 + $0x52] sm:$0xff]
      %v2086 = vld [vmem:[%s1289 + $0x62] sm:$0xff]
      %v2087 = vld [vmem:[%s1289 + $0x6a] sm:$0xff]
      %v2088 = vld [vmem:[%s1289 + $0x7a] sm:$0xff]
      %v2089 = vld [vmem:[%s1289 + $0x82] sm:$0xff]
      %v2090 = vld [vmem:[%s1289 + $0x92] sm:$0xff]
      %v2091 = vld [vmem:[%s1289 + $0x9a] sm:$0xff]
      %v2092 = vld [vmem:[%s1289 + $0xaa] sm:$0xff]
      %v2093 = vld [vmem:[%s1289 + $0xb2] sm:$0xff]
      %v2094 = vld [vmem:[%s1289 + $0xc2] sm:$0xff]
      %v2095 = vld [vmem:[%s1289 + $0xca] sm:$0xff]
      %v2096 = vld [vmem:[%s1289 + $0xda] sm:$0xff]
      %v2097 = vld [vmem:[%s1289 + $0xe2] sm:$0xff]
      %v2098 = vld [vmem:[%s1289 + $0xf2] sm:$0xff]
      %v2099 = vld [vmem:[%s1289 + $0xfa] sm:$0xff]
      %v2100 = vld [vmem:[%s1289 + $0x10a] sm:$0xff]
      %v2101 = vld [vmem:[%s1289 + $0x112] sm:$0xff]
      %v2102 = vld [vmem:[%s1289 + $0x122] sm:$0xff]
      %v2103 = vld [vmem:[%s1289 + $0x12a] sm:$0xff]
      %v2104 = vld [vmem:[%s1289 + $0x13a] sm:$0xff]
      %v2105 = vld [vmem:[%s1289 + $0x142] sm:$0xff]
      %v2106 = vld [vmem:[%s1289 + $0x152] sm:$0xff]
      %v2107 = vld [vmem:[%s1289 + $0x15a] sm:$0xff]
      %v2108 = vld [vmem:[%s1289 + $0x16a] sm:$0xff]
      %v2109 = vld [vmem:[%s1289 + $0x172] sm:$0xff]
      %s2110 = scalar_lea.vmem %s1, 320
      %v2111 = vld [vmem:[%s2110] sm:$0xff]
      %v2112 = vld [vmem:[%s2110 + $0x8] sm:$0xff]
      %v2113 = vld [vmem:[%s2110 + $0x10] sm:$0xff]
      %v2114 = vld [vmem:[%s2110 + $0x18] sm:$0xff]
      %v2115 = vld [vmem:[%s2110 + $0x20] sm:$0xff]
      %v2116 = vld [vmem:[%s2110 + $0x28] sm:$0xff]
      %v2117 = vld [vmem:[%s2110 + $0x30] sm:$0xff]
      %v2118 = vld [vmem:[%s2110 + $0x38] sm:$0xff]
      %v2120 = vsel %vm252, %v2078, 0
      %v2123 = vsel %vm252, %v2079, 0
      %v2126 = vsel %vm252, %v2080, 0
      %v2129 = vsel %vm252, %v2081, 0
      %v2132 = vsel %vm252, %v2082, 0
      %v2135 = vsel %vm252, %v2083, 0
      %v2138 = vsel %vm252, %v2084, 0
      %v2141 = vsel %vm252, %v2085, 0
      %v2144 = vsel %vm252, %v2086, 0
      %v2147 = vsel %vm252, %v2087, 0
      %v2150 = vsel %vm252, %v2088, 0
      %v2153 = vsel %vm252, %v2089, 0
      %v2156 = vsel %vm252, %v2090, 0
      %v2159 = vsel %vm252, %v2091, 0
      %v2162 = vsel %vm252, %v2092, 0
      %v2165 = vsel %vm252, %v2093, 0
      %v2168 = vsel %vm252, %v2094, 0
      %v2171 = vsel %vm252, %v2095, 0
      %v2174 = vsel %vm252, %v2096, 0
      %v2177 = vsel %vm252, %v2097, 0
      %v2180 = vsel %vm252, %v2098, 0
      %v2183 = vsel %vm252, %v2099, 0
      %v2186 = vsel %vm252, %v2100, 0
      %v2189 = vsel %vm252, %v2101, 0
      %v2192 = vsel %vm252, %v2102, 0
      %v2195 = vsel %vm252, %v2103, 0
      %v2198 = vsel %vm252, %v2104, 0
      %v2201 = vsel %vm252, %v2105, 0
      %v2204 = vsel %vm252, %v2106, 0
      %v2207 = vsel %vm252, %v2107, 0
      %v2210 = vsel %vm252, %v2108, 0
      %v2213 = vsel %vm252, %v2109, 0
      %2215 = vmatprep.subr.mxu0 0.0
      %2216 = vmatpush1.msra.mxu0 0.0
      %2217 = vmatprep.subr.mxu0 0.0
      %2218 = vmatpush1.msra.mxu0 0.0
      %2219 = vmatprep.subr.mxu0 0.0
      %2220 = vmatpush1.msra.mxu0 0.0
      %2221 = vmatprep.subr.mxu0 0.0
      %2222 = vmatpush1.msra.mxu0 0.0
      %2223 = vmatprep.subr.mxu0 0.0
      %2224 = vmatpush1.msra.mxu0 0.0
      %2225 = vmatprep.subr.mxu0 0.0
      %2226 = vmatpush1.msra.mxu0 0.0
      %2227 = vmatprep.subr.mxu0 0.0
      %2228 = vmatpush1.msra.mxu0 0.0
      %2229 = vmatprep.subr.mxu0 0.0
      %2230 = vmatpush1.msra.mxu0 0.0
      %2231 = vmatprep.subr.mxu0 0.0
      %2232 = vmatpush1.msra.mxu0 %v2118
      %2233 = vmatprep.subr.mxu0 0.0
      %2234 = vmatpush1.msra.mxu0 %v2117
      %2235 = vmatprep.subr.mxu0 0.0
      %2236 = vmatpush1.msra.mxu0 %v2116
      %2237 = vmatprep.subr.mxu0 0.0
      %2238 = vmatpush1.msra.mxu0 %v2115
      %2239 = vmatprep.subr.mxu0 0.0
      %2240 = vmatpush1.msra.mxu0 %v2114
      %2241 = vmatprep.subr.mxu0 0.0
      %2242 = vmatpush1.msra.mxu0 %v2113
      %2243 = vmatprep.subr.mxu0 0.0
      %2244 = vmatpush1.msra.mxu0 %v2112
      %2245 = vmatprep.subr.mxu0 0.0
      %2246 = vmatpush1.msra.mxu0 %v2111
      %2247 = vmatprep.subr.mxu0 0.0
      %2248 = vmatpush2.msra.mxu0 0.0
      %2249 = vmatprep.subr.mxu0 0.0
      %2250 = vmatpush2.msra.mxu0 0.0
      %2251 = vmatprep.subr.mxu0 0.0
      %2252 = vmatpush2.msra.mxu0 0.0
      %2253 = vmatprep.subr.mxu0 0.0
      %2254 = vmatpush2.msra.mxu0 0.0
      %2255 = vmatprep.subr.mxu0 0.0
      %2256 = vmatpush2.msra.mxu0 0.0
      %2257 = vmatprep.subr.mxu0 0.0
      %2258 = vmatpush2.msra.mxu0 0.0
      %2259 = vmatprep.subr.mxu0 0.0
      %2260 = vmatpush2.msra.mxu0 0.0
      %2261 = vmatprep.subr.mxu0 0.0
      %2262 = vmatpush2.msra.mxu0 0.0
      %2263 = vmatprep.subr.mxu0 0.0
      %2264 = vmatpush2.msra.mxu0 0.0
      %2265 = vmatprep.subr.mxu0 0.0
      %2266 = vmatpush2.msra.mxu0 0.0
      %2267 = vmatprep.subr.mxu0 0.0
      %2268 = vmatpush2.msra.mxu0 0.0
      %2269 = vmatprep.subr.mxu0 0.0
      %2270 = vmatpush2.msra.mxu0 0.0
      %2271 = vmatprep.subr.mxu0 0.0
      %2272 = vmatpush2.msra.mxu0 0.0
      %2273 = vmatprep.subr.mxu0 0.0
      %2274 = vmatpush2.msra.mxu0 0.0
      %2275 = vmatprep.subr.mxu0 0.0
      %2276 = vmatpush2.msra.mxu0 0.0
      %2277 = vmatprep.subr.mxu0 0.0
      %2278 = vmatpush2.msra.mxu0 0.0
      %2279 = vmatprep.mubr.f32.mxu0 0.0
      %2280 = vmatmul.mubr.f32.gmra.mxu0 %v2120
      %v2281 = vpop.f32.mrf.mxu0
      %v2282 = vadd.f32 0.0, %v2281
      %v2283 = vpop.f32.mrf.mxu0
      %2284 = vmatprep.mubr.f32.mxu0 0.0
      %2285 = vmatmul.mubr.f32.gmra.mxu0 %v2123
      %v2286 = vpop.f32.mrf.mxu0
      %v2287 = vadd.f32 0.0, %v2286
      %v2288 = vpop.f32.mrf.mxu0
      %2289 = vmatprep.mubr.f32.mxu0 0.0
      %2290 = vmatmul.mubr.f32.gmra.mxu0 %v2126
      %v2291 = vpop.f32.mrf.mxu0
      %v2292 = vadd.f32 0.0, %v2291
      %v2293 = vpop.f32.mrf.mxu0
      %2294 = vmatprep.mubr.f32.mxu0 0.0
      %2295 = vmatmul.mubr.f32.gmra.mxu0 %v2129
      %v2296 = vpop.f32.mrf.mxu0
      %v2297 = vadd.f32 0.0, %v2296
      %v2298 = vpop.f32.mrf.mxu0
      %2299 = vmatprep.mubr.f32.mxu0 0.0
      %2300 = vmatmul.mubr.f32.gmra.mxu0 %v2132
      %v2301 = vpop.f32.mrf.mxu0
      %v2302 = vadd.f32 0.0, %v2301
      %v2303 = vpop.f32.mrf.mxu0
      %2304 = vmatprep.mubr.f32.mxu0 0.0
      %2305 = vmatmul.mubr.f32.gmra.mxu0 %v2135
      %v2306 = vpop.f32.mrf.mxu0
      %v2307 = vadd.f32 0.0, %v2306
      %v2308 = vpop.f32.mrf.mxu0
      %2309 = vmatprep.mubr.f32.mxu0 0.0
      %2310 = vmatmul.mubr.f32.gmra.mxu0 %v2138
      %v2311 = vpop.f32.mrf.mxu0
      %v2312 = vadd.f32 0.0, %v2311
      %v2313 = vpop.f32.mrf.mxu0
      %2314 = vmatprep.mubr.f32.mxu0 0.0
      %2315 = vmatmul.mubr.f32.gmra.mxu0 %v2141
      %v2316 = vpop.f32.mrf.mxu0
      %v2317 = vadd.f32 0.0, %v2316
      %v2318 = vpop.f32.mrf.mxu0
      %2319 = vmatprep.mubr.f32.mxu0 0.0
      %2320 = vmatmul.mubr.f32.gmra.mxu0 %v2144
      %v2321 = vpop.f32.mrf.mxu0
      %v2322 = vadd.f32 0.0, %v2321
      %v2323 = vpop.f32.mrf.mxu0
      %2324 = vmatprep.mubr.f32.mxu0 0.0
      %2325 = vmatmul.mubr.f32.gmra.mxu0 %v2147
      %v2326 = vpop.f32.mrf.mxu0
      %v2327 = vadd.f32 0.0, %v2326
      %v2328 = vpop.f32.mrf.mxu0
      %2329 = vmatprep.mubr.f32.mxu0 0.0
      %2330 = vmatmul.mubr.f32.gmra.mxu0 %v2150
      %v2331 = vpop.f32.mrf.mxu0
      %v2332 = vadd.f32 0.0, %v2331
      %v2333 = vpop.f32.mrf.mxu0
      %2334 = vmatprep.mubr.f32.mxu0 0.0
      %2335 = vmatmul.mubr.f32.gmra.mxu0 %v2153
      %v2336 = vpop.f32.mrf.mxu0
      %v2337 = vadd.f32 0.0, %v2336
      %v2338 = vpop.f32.mrf.mxu0
      %2339 = vmatprep.mubr.f32.mxu0 0.0
      %2340 = vmatmul.mubr.f32.gmra.mxu0 %v2156
      %v2341 = vpop.f32.mrf.mxu0
      %v2342 = vadd.f32 0.0, %v2341
      %v2343 = vpop.f32.mrf.mxu0
      %2344 = vmatprep.mubr.f32.mxu0 0.0
      %2345 = vmatmul.mubr.f32.gmra.mxu0 %v2159
      %v2346 = vpop.f32.mrf.mxu0
      %v2347 = vadd.f32 0.0, %v2346
      %v2348 = vpop.f32.mrf.mxu0
      %2349 = vmatprep.mubr.f32.mxu0 0.0
      %2350 = vmatmul.mubr.f32.gmra.mxu0 %v2162
      %v2351 = vpop.f32.mrf.mxu0
      %v2352 = vadd.f32 0.0, %v2351
      %v2353 = vpop.f32.mrf.mxu0
      %2354 = vmatprep.mubr.f32.mxu0 0.0
      %2355 = vmatmul.mubr.f32.gmra.mxu0 %v2165
      %v2356 = vpop.f32.mrf.mxu0
      %v2357 = vadd.f32 0.0, %v2356
      %v2358 = vpop.f32.mrf.mxu0
      %2359 = vmatprep.mubr.f32.mxu0 0.0
      %2360 = vmatmul.mubr.f32.gmra.mxu0 %v2168
      %v2361 = vpop.f32.mrf.mxu0
      %v2362 = vadd.f32 0.0, %v2361
      %v2363 = vpop.f32.mrf.mxu0
      %2364 = vmatprep.mubr.f32.mxu0 0.0
      %2365 = vmatmul.mubr.f32.gmra.mxu0 %v2171
      %v2366 = vpop.f32.mrf.mxu0
      %v2367 = vadd.f32 0.0, %v2366
      %v2368 = vpop.f32.mrf.mxu0
      %2369 = vmatprep.mubr.f32.mxu0 0.0
      %2370 = vmatmul.mubr.f32.gmra.mxu0 %v2174
      %v2371 = vpop.f32.mrf.mxu0
      %v2372 = vadd.f32 0.0, %v2371
      %v2373 = vpop.f32.mrf.mxu0
      %2374 = vmatprep.mubr.f32.mxu0 0.0
      %2375 = vmatmul.mubr.f32.gmra.mxu0 %v2177
      %v2376 = vpop.f32.mrf.mxu0
      %v2377 = vadd.f32 0.0, %v2376
      %v2378 = vpop.f32.mrf.mxu0
      %2379 = vmatprep.mubr.f32.mxu0 0.0
      %2380 = vmatmul.mubr.f32.gmra.mxu0 %v2180
      %v2381 = vpop.f32.mrf.mxu0
      %v2382 = vadd.f32 0.0, %v2381
      %v2383 = vpop.f32.mrf.mxu0
      %2384 = vmatprep.mubr.f32.mxu0 0.0
      %2385 = vmatmul.mubr.f32.gmra.mxu0 %v2183
      %v2386 = vpop.f32.mrf.mxu0
      %v2387 = vadd.f32 0.0, %v2386
      %v2388 = vpop.f32.mrf.mxu0
      %2389 = vmatprep.mubr.f32.mxu0 0.0
      %2390 = vmatmul.mubr.f32.gmra.mxu0 %v2186
      %v2391 = vpop.f32.mrf.mxu0
      %v2392 = vadd.f32 0.0, %v2391
      %v2393 = vpop.f32.mrf.mxu0
      %2394 = vmatprep.mubr.f32.mxu0 0.0
      %2395 = vmatmul.mubr.f32.gmra.mxu0 %v2189
      %v2396 = vpop.f32.mrf.mxu0
      %v2397 = vadd.f32 0.0, %v2396
      %v2398 = vpop.f32.mrf.mxu0
      %2399 = vmatprep.mubr.f32.mxu0 0.0
      %2400 = vmatmul.mubr.f32.gmra.mxu0 %v2192
      %v2401 = vpop.f32.mrf.mxu0
      %v2402 = vadd.f32 0.0, %v2401
      %v2403 = vpop.f32.mrf.mxu0
      %2404 = vmatprep.mubr.f32.mxu0 0.0
      %2405 = vmatmul.mubr.f32.gmra.mxu0 %v2195
      %v2406 = vpop.f32.mrf.mxu0
      %v2407 = vadd.f32 0.0, %v2406
      %v2408 = vpop.f32.mrf.mxu0
      %2409 = vmatprep.mubr.f32.mxu0 0.0
      %2410 = vmatmul.mubr.f32.gmra.mxu0 %v2198
      %v2411 = vpop.f32.mrf.mxu0
      %v2412 = vadd.f32 0.0, %v2411
      %v2413 = vpop.f32.mrf.mxu0
      %2414 = vmatprep.mubr.f32.mxu0 0.0
      %2415 = vmatmul.mubr.f32.gmra.mxu0 %v2201
      %v2416 = vpop.f32.mrf.mxu0
      %v2417 = vadd.f32 0.0, %v2416
      %v2418 = vpop.f32.mrf.mxu0
      %2419 = vmatprep.mubr.f32.mxu0 0.0
      %2420 = vmatmul.mubr.f32.gmra.mxu0 %v2204
      %v2421 = vpop.f32.mrf.mxu0
      %v2422 = vadd.f32 0.0, %v2421
      %v2423 = vpop.f32.mrf.mxu0
      %2424 = vmatprep.mubr.f32.mxu0 0.0
      %2425 = vmatmul.mubr.f32.gmra.mxu0 %v2207
      %v2426 = vpop.f32.mrf.mxu0
      %v2427 = vadd.f32 0.0, %v2426
      %v2428 = vpop.f32.mrf.mxu0
      %2429 = vmatprep.mubr.f32.mxu0 0.0
      %2430 = vmatmul.mubr.f32.gmra.mxu0 %v2210
      %v2431 = vpop.f32.mrf.mxu0
      %v2432 = vadd.f32 0.0, %v2431
      %v2433 = vpop.f32.mrf.mxu0
      %2434 = vmatprep.mubr.f32.mxu0 0.0
      %2435 = vmatmul.mubr.f32.gmra.mxu0 %v2213
      %v2436 = vpop.f32.mrf.mxu0
      %v2437 = vadd.f32 0.0, %v2436
      %v2438 = vpop.f32.mrf.mxu0
      %2439 = vdwg.mxu0
      %v2440 = vadd.f32 %v2046, %v2282
      %v2441 = vadd.f32 %v2047, %v2287
      %v2442 = vadd.f32 %v2048, %v2292
      %v2443 = vadd.f32 %v2049, %v2297
      %v2444 = vadd.f32 %v2050, %v2302
      %v2445 = vadd.f32 %v2051, %v2307
      %v2446 = vadd.f32 %v2052, %v2312
      %v2447 = vadd.f32 %v2053, %v2317
      %v2448 = vadd.f32 %v2054, %v2322
      %v2449 = vadd.f32 %v2055, %v2327
      %v2450 = vadd.f32 %v2056, %v2332
      %v2451 = vadd.f32 %v2057, %v2337
      %v2452 = vadd.f32 %v2058, %v2342
      %v2453 = vadd.f32 %v2059, %v2347
      %v2454 = vadd.f32 %v2060, %v2352
      %v2455 = vadd.f32 %v2061, %v2357
      %v2456 = vadd.f32 %v2062, %v2362
      %v2457 = vadd.f32 %v2063, %v2367
      %v2458 = vadd.f32 %v2064, %v2372
      %v2459 = vadd.f32 %v2065, %v2377
      %v2460 = vadd.f32 %v2066, %v2382
      %v2461 = vadd.f32 %v2067, %v2387
      %v2462 = vadd.f32 %v2068, %v2392
      %v2463 = vadd.f32 %v2069, %v2397
      %v2464 = vadd.f32 %v2070, %v2402
      %v2465 = vadd.f32 %v2071, %v2407
      %v2466 = vadd.f32 %v2072, %v2412
      %v2467 = vadd.f32 %v2073, %v2417
      %v2468 = vadd.f32 %v2074, %v2422
      %v2469 = vadd.f32 %v2075, %v2427
      %v2470 = vadd.f32 %v2076, %v2432
      %v2471 = vadd.f32 %v2077, %v2437
      %s2472 = scalar_lea.vmem %s165, 48
      %v2473 = vld [vmem:[%s2472] sm:$0xff]
      %v2474 = vld [vmem:[%s2472 + $0x8] sm:$0xff]
      %v2475 = vld [vmem:[%s2472 + $0x18] sm:$0xff]
      %v2476 = vld [vmem:[%s2472 + $0x20] sm:$0xff]
      %v2477 = vld [vmem:[%s2472 + $0x30] sm:$0xff]
      %v2478 = vld [vmem:[%s2472 + $0x38] sm:$0xff]
      %v2479 = vld [vmem:[%s2472 + $0x48] sm:$0xff]
      %v2480 = vld [vmem:[%s2472 + $0x50] sm:$0xff]
      %v2481 = vld [vmem:[%s2472 + $0x60] sm:$0xff]
      %v2482 = vld [vmem:[%s2472 + $0x68] sm:$0xff]
      %v2483 = vld [vmem:[%s2472 + $0x78] sm:$0xff]
      %v2484 = vld [vmem:[%s2472 + $0x80] sm:$0xff]
      %v2485 = vld [vmem:[%s2472 + $0x90] sm:$0xff]
      %v2486 = vld [vmem:[%s2472 + $0x98] sm:$0xff]
      %v2487 = vld [vmem:[%s2472 + $0xa8] sm:$0xff]
      %v2488 = vld [vmem:[%s2472 + $0xb0] sm:$0xff]
      %v2489 = vld [vmem:[%s2472 + $0xc0] sm:$0xff]
      %v2490 = vld [vmem:[%s2472 + $0xc8] sm:$0xff]
      %v2491 = vld [vmem:[%s2472 + $0xd8] sm:$0xff]
      %v2492 = vld [vmem:[%s2472 + $0xe0] sm:$0xff]
      %v2493 = vld [vmem:[%s2472 + $0xf0] sm:$0xff]
      %v2494 = vld [vmem:[%s2472 + $0xf8] sm:$0xff]
      %v2495 = vld [vmem:[%s2472 + $0x108] sm:$0xff]
      %v2496 = vld [vmem:[%s2472 + $0x110] sm:$0xff]
      %v2497 = vld [vmem:[%s2472 + $0x120] sm:$0xff]
      %v2498 = vld [vmem:[%s2472 + $0x128] sm:$0xff]
      %v2499 = vld [vmem:[%s2472 + $0x138] sm:$0xff]
      %v2500 = vld [vmem:[%s2472 + $0x140] sm:$0xff]
      %v2501 = vld [vmem:[%s2472 + $0x150] sm:$0xff]
      %v2502 = vld [vmem:[%s2472 + $0x158] sm:$0xff]
      %v2503 = vld [vmem:[%s2472 + $0x168] sm:$0xff]
      %v2504 = vld [vmem:[%s2472 + $0x170] sm:$0xff]
      %s2505 = scalar_lea.vmem %s1, 384
      %v2506 = vld [vmem:[%s2505] sm:$0xff]
      %v2507 = vld [vmem:[%s2505 + $0x8] sm:$0xff]
      %v2508 = vld [vmem:[%s2505 + $0x10] sm:$0xff]
      %v2509 = vld [vmem:[%s2505 + $0x18] sm:$0xff]
      %v2510 = vld [vmem:[%s2505 + $0x20] sm:$0xff]
      %v2511 = vld [vmem:[%s2505 + $0x28] sm:$0xff]
      %v2512 = vld [vmem:[%s2505 + $0x30] sm:$0xff]
      %v2513 = vld [vmem:[%s2505 + $0x38] sm:$0xff]
      %v2515 = vsel %vm252, %v2473, 0
      %v2518 = vsel %vm252, %v2474, 0
      %v2521 = vsel %vm252, %v2475, 0
      %v2524 = vsel %vm252, %v2476, 0
      %v2527 = vsel %vm252, %v2477, 0
      %v2530 = vsel %vm252, %v2478, 0
      %v2533 = vsel %vm252, %v2479, 0
      %v2536 = vsel %vm252, %v2480, 0
      %v2539 = vsel %vm252, %v2481, 0
      %v2542 = vsel %vm252, %v2482, 0
      %v2545 = vsel %vm252, %v2483, 0
      %v2548 = vsel %vm252, %v2484, 0
      %v2551 = vsel %vm252, %v2485, 0
      %v2554 = vsel %vm252, %v2486, 0
      %v2557 = vsel %vm252, %v2487, 0
      %v2560 = vsel %vm252, %v2488, 0
      %v2563 = vsel %vm252, %v2489, 0
      %v2566 = vsel %vm252, %v2490, 0
      %v2569 = vsel %vm252, %v2491, 0
      %v2572 = vsel %vm252, %v2492, 0
      %v2575 = vsel %vm252, %v2493, 0
      %v2578 = vsel %vm252, %v2494, 0
      %v2581 = vsel %vm252, %v2495, 0
      %v2584 = vsel %vm252, %v2496, 0
      %v2587 = vsel %vm252, %v2497, 0
      %v2590 = vsel %vm252, %v2498, 0
      %v2593 = vsel %vm252, %v2499, 0
      %v2596 = vsel %vm252, %v2500, 0
      %v2599 = vsel %vm252, %v2501, 0
      %v2602 = vsel %vm252, %v2502, 0
      %v2605 = vsel %vm252, %v2503, 0
      %v2608 = vsel %vm252, %v2504, 0
      %2610 = vmatprep.subr.mxu0 0.0
      %2611 = vmatpush1.msra.mxu0 0.0
      %2612 = vmatprep.subr.mxu0 0.0
      %2613 = vmatpush1.msra.mxu0 0.0
      %2614 = vmatprep.subr.mxu0 0.0
      %2615 = vmatpush1.msra.mxu0 0.0
      %2616 = vmatprep.subr.mxu0 0.0
      %2617 = vmatpush1.msra.mxu0 0.0
      %2618 = vmatprep.subr.mxu0 0.0
      %2619 = vmatpush1.msra.mxu0 0.0
      %2620 = vmatprep.subr.mxu0 0.0
      %2621 = vmatpush1.msra.mxu0 0.0
      %2622 = vmatprep.subr.mxu0 0.0
      %2623 = vmatpush1.msra.mxu0 0.0
      %2624 = vmatprep.subr.mxu0 0.0
      %2625 = vmatpush1.msra.mxu0 0.0
      %2626 = vmatprep.subr.mxu0 0.0
      %2627 = vmatpush1.msra.mxu0 %v2513
      %2628 = vmatprep.subr.mxu0 0.0
      %2629 = vmatpush1.msra.mxu0 %v2512
      %2630 = vmatprep.subr.mxu0 0.0
      %2631 = vmatpush1.msra.mxu0 %v2511
      %2632 = vmatprep.subr.mxu0 0.0
      %2633 = vmatpush1.msra.mxu0 %v2510
      %2634 = vmatprep.subr.mxu0 0.0
      %2635 = vmatpush1.msra.mxu0 %v2509
      %2636 = vmatprep.subr.mxu0 0.0
      %2637 = vmatpush1.msra.mxu0 %v2508
      %2638 = vmatprep.subr.mxu0 0.0
      %2639 = vmatpush1.msra.mxu0 %v2507
      %2640 = vmatprep.subr.mxu0 0.0
      %2641 = vmatpush1.msra.mxu0 %v2506
      %2642 = vmatprep.subr.mxu0 0.0
      %2643 = vmatpush2.msra.mxu0 0.0
      %2644 = vmatprep.subr.mxu0 0.0
      %2645 = vmatpush2.msra.mxu0 0.0
      %2646 = vmatprep.subr.mxu0 0.0
      %2647 = vmatpush2.msra.mxu0 0.0
      %2648 = vmatprep.subr.mxu0 0.0
      %2649 = vmatpush2.msra.mxu0 0.0
      %2650 = vmatprep.subr.mxu0 0.0
      %2651 = vmatpush2.msra.mxu0 0.0
      %2652 = vmatprep.subr.mxu0 0.0
      %2653 = vmatpush2.msra.mxu0 0.0
      %2654 = vmatprep.subr.mxu0 0.0
      %2655 = vmatpush2.msra.mxu0 0.0
      %2656 = vmatprep.subr.mxu0 0.0
      %2657 = vmatpush2.msra.mxu0 0.0
      %2658 = vmatprep.subr.mxu0 0.0
      %2659 = vmatpush2.msra.mxu0 0.0
      %2660 = vmatprep.subr.mxu0 0.0
      %2661 = vmatpush2.msra.mxu0 0.0
      %2662 = vmatprep.subr.mxu0 0.0
      %2663 = vmatpush2.msra.mxu0 0.0
      %2664 = vmatprep.subr.mxu0 0.0
      %2665 = vmatpush2.msra.mxu0 0.0
      %2666 = vmatprep.subr.mxu0 0.0
      %2667 = vmatpush2.msra.mxu0 0.0
      %2668 = vmatprep.subr.mxu0 0.0
      %2669 = vmatpush2.msra.mxu0 0.0
      %2670 = vmatprep.subr.mxu0 0.0
      %2671 = vmatpush2.msra.mxu0 0.0
      %2672 = vmatprep.subr.mxu0 0.0
      %2673 = vmatpush2.msra.mxu0 0.0
      %2674 = vmatprep.mubr.f32.mxu0 0.0
      %2675 = vmatmul.mubr.f32.gmra.mxu0 %v2515
      %v2676 = vpop.f32.mrf.mxu0
      %v2677 = vadd.f32 0.0, %v2676
      %v2678 = vpop.f32.mrf.mxu0
      %2679 = vmatprep.mubr.f32.mxu0 0.0
      %2680 = vmatmul.mubr.f32.gmra.mxu0 %v2518
      %v2681 = vpop.f32.mrf.mxu0
      %v2682 = vadd.f32 0.0, %v2681
      %v2683 = vpop.f32.mrf.mxu0
      %2684 = vmatprep.mubr.f32.mxu0 0.0
      %2685 = vmatmul.mubr.f32.gmra.mxu0 %v2521
      %v2686 = vpop.f32.mrf.mxu0
      %v2687 = vadd.f32 0.0, %v2686
      %v2688 = vpop.f32.mrf.mxu0
      %2689 = vmatprep.mubr.f32.mxu0 0.0
      %2690 = vmatmul.mubr.f32.gmra.mxu0 %v2524
      %v2691 = vpop.f32.mrf.mxu0
      %v2692 = vadd.f32 0.0, %v2691
      %v2693 = vpop.f32.mrf.mxu0
      %2694 = vmatprep.mubr.f32.mxu0 0.0
      %2695 = vmatmul.mubr.f32.gmra.mxu0 %v2527
      %v2696 = vpop.f32.mrf.mxu0
      %v2697 = vadd.f32 0.0, %v2696
      %v2698 = vpop.f32.mrf.mxu0
      %2699 = vmatprep.mubr.f32.mxu0 0.0
      %2700 = vmatmul.mubr.f32.gmra.mxu0 %v2530
      %v2701 = vpop.f32.mrf.mxu0
      %v2702 = vadd.f32 0.0, %v2701
      %v2703 = vpop.f32.mrf.mxu0
      %2704 = vmatprep.mubr.f32.mxu0 0.0
      %2705 = vmatmul.mubr.f32.gmra.mxu0 %v2533
      %v2706 = vpop.f32.mrf.mxu0
      %v2707 = vadd.f32 0.0, %v2706
      %v2708 = vpop.f32.mrf.mxu0
      %2709 = vmatprep.mubr.f32.mxu0 0.0
      %2710 = vmatmul.mubr.f32.gmra.mxu0 %v2536
      %v2711 = vpop.f32.mrf.mxu0
      %v2712 = vadd.f32 0.0, %v2711
      %v2713 = vpop.f32.mrf.mxu0
      %2714 = vmatprep.mubr.f32.mxu0 0.0
      %2715 = vmatmul.mubr.f32.gmra.mxu0 %v2539
      %v2716 = vpop.f32.mrf.mxu0
      %v2717 = vadd.f32 0.0, %v2716
      %v2718 = vpop.f32.mrf.mxu0
      %2719 = vmatprep.mubr.f32.mxu0 0.0
      %2720 = vmatmul.mubr.f32.gmra.mxu0 %v2542
      %v2721 = vpop.f32.mrf.mxu0
      %v2722 = vadd.f32 0.0, %v2721
      %v2723 = vpop.f32.mrf.mxu0
      %2724 = vmatprep.mubr.f32.mxu0 0.0
      %2725 = vmatmul.mubr.f32.gmra.mxu0 %v2545
      %v2726 = vpop.f32.mrf.mxu0
      %v2727 = vadd.f32 0.0, %v2726
      %v2728 = vpop.f32.mrf.mxu0
      %2729 = vmatprep.mubr.f32.mxu0 0.0
      %2730 = vmatmul.mubr.f32.gmra.mxu0 %v2548
      %v2731 = vpop.f32.mrf.mxu0
      %v2732 = vadd.f32 0.0, %v2731
      %v2733 = vpop.f32.mrf.mxu0
      %2734 = vmatprep.mubr.f32.mxu0 0.0
      %2735 = vmatmul.mubr.f32.gmra.mxu0 %v2551
      %v2736 = vpop.f32.mrf.mxu0
      %v2737 = vadd.f32 0.0, %v2736
      %v2738 = vpop.f32.mrf.mxu0
      %2739 = vmatprep.mubr.f32.mxu0 0.0
      %2740 = vmatmul.mubr.f32.gmra.mxu0 %v2554
      %v2741 = vpop.f32.mrf.mxu0
      %v2742 = vadd.f32 0.0, %v2741
      %v2743 = vpop.f32.mrf.mxu0
      %2744 = vmatprep.mubr.f32.mxu0 0.0
      %2745 = vmatmul.mubr.f32.gmra.mxu0 %v2557
      %v2746 = vpop.f32.mrf.mxu0
      %v2747 = vadd.f32 0.0, %v2746
      %v2748 = vpop.f32.mrf.mxu0
      %2749 = vmatprep.mubr.f32.mxu0 0.0
      %2750 = vmatmul.mubr.f32.gmra.mxu0 %v2560
      %v2751 = vpop.f32.mrf.mxu0
      %v2752 = vadd.f32 0.0, %v2751
      %v2753 = vpop.f32.mrf.mxu0
      %2754 = vmatprep.mubr.f32.mxu0 0.0
      %2755 = vmatmul.mubr.f32.gmra.mxu0 %v2563
      %v2756 = vpop.f32.mrf.mxu0
      %v2757 = vadd.f32 0.0, %v2756
      %v2758 = vpop.f32.mrf.mxu0
      %2759 = vmatprep.mubr.f32.mxu0 0.0
      %2760 = vmatmul.mubr.f32.gmra.mxu0 %v2566
      %v2761 = vpop.f32.mrf.mxu0
      %v2762 = vadd.f32 0.0, %v2761
      %v2763 = vpop.f32.mrf.mxu0
      %2764 = vmatprep.mubr.f32.mxu0 0.0
      %2765 = vmatmul.mubr.f32.gmra.mxu0 %v2569
      %v2766 = vpop.f32.mrf.mxu0
      %v2767 = vadd.f32 0.0, %v2766
      %v2768 = vpop.f32.mrf.mxu0
      %2769 = vmatprep.mubr.f32.mxu0 0.0
      %2770 = vmatmul.mubr.f32.gmra.mxu0 %v2572
      %v2771 = vpop.f32.mrf.mxu0
      %v2772 = vadd.f32 0.0, %v2771
      %v2773 = vpop.f32.mrf.mxu0
      %2774 = vmatprep.mubr.f32.mxu0 0.0
      %2775 = vmatmul.mubr.f32.gmra.mxu0 %v2575
      %v2776 = vpop.f32.mrf.mxu0
      %v2777 = vadd.f32 0.0, %v2776
      %v2778 = vpop.f32.mrf.mxu0
      %2779 = vmatprep.mubr.f32.mxu0 0.0
      %2780 = vmatmul.mubr.f32.gmra.mxu0 %v2578
      %v2781 = vpop.f32.mrf.mxu0
      %v2782 = vadd.f32 0.0, %v2781
      %v2783 = vpop.f32.mrf.mxu0
      %2784 = vmatprep.mubr.f32.mxu0 0.0
      %2785 = vmatmul.mubr.f32.gmra.mxu0 %v2581
      %v2786 = vpop.f32.mrf.mxu0
      %v2787 = vadd.f32 0.0, %v2786
      %v2788 = vpop.f32.mrf.mxu0
      %2789 = vmatprep.mubr.f32.mxu0 0.0
      %2790 = vmatmul.mubr.f32.gmra.mxu0 %v2584
      %v2791 = vpop.f32.mrf.mxu0
      %v2792 = vadd.f32 0.0, %v2791
      %v2793 = vpop.f32.mrf.mxu0
      %2794 = vmatprep.mubr.f32.mxu0 0.0
      %2795 = vmatmul.mubr.f32.gmra.mxu0 %v2587
      %v2796 = vpop.f32.mrf.mxu0
      %v2797 = vadd.f32 0.0, %v2796
      %v2798 = vpop.f32.mrf.mxu0
      %2799 = vmatprep.mubr.f32.mxu0 0.0
      %2800 = vmatmul.mubr.f32.gmra.mxu0 %v2590
      %v2801 = vpop.f32.mrf.mxu0
      %v2802 = vadd.f32 0.0, %v2801
      %v2803 = vpop.f32.mrf.mxu0
      %2804 = vmatprep.mubr.f32.mxu0 0.0
      %2805 = vmatmul.mubr.f32.gmra.mxu0 %v2593
      %v2806 = vpop.f32.mrf.mxu0
      %v2807 = vadd.f32 0.0, %v2806
      %v2808 = vpop.f32.mrf.mxu0
      %2809 = vmatprep.mubr.f32.mxu0 0.0
      %2810 = vmatmul.mubr.f32.gmra.mxu0 %v2596
      %v2811 = vpop.f32.mrf.mxu0
      %v2812 = vadd.f32 0.0, %v2811
      %v2813 = vpop.f32.mrf.mxu0
      %2814 = vmatprep.mubr.f32.mxu0 0.0
      %2815 = vmatmul.mubr.f32.gmra.mxu0 %v2599
      %v2816 = vpop.f32.mrf.mxu0
      %v2817 = vadd.f32 0.0, %v2816
      %v2818 = vpop.f32.mrf.mxu0
      %2819 = vmatprep.mubr.f32.mxu0 0.0
      %2820 = vmatmul.mubr.f32.gmra.mxu0 %v2602
      %v2821 = vpop.f32.mrf.mxu0
      %v2822 = vadd.f32 0.0, %v2821
      %v2823 = vpop.f32.mrf.mxu0
      %2824 = vmatprep.mubr.f32.mxu0 0.0
      %2825 = vmatmul.mubr.f32.gmra.mxu0 %v2605
      %v2826 = vpop.f32.mrf.mxu0
      %v2827 = vadd.f32 0.0, %v2826
      %v2828 = vpop.f32.mrf.mxu0
      %2829 = vmatprep.mubr.f32.mxu0 0.0
      %2830 = vmatmul.mubr.f32.gmra.mxu0 %v2608
      %v2831 = vpop.f32.mrf.mxu0
      %v2832 = vadd.f32 0.0, %v2831
      %v2833 = vpop.f32.mrf.mxu0
      %2834 = vdwg.mxu0
      %v2835 = vadd.f32 %v2440, %v2677
      %v2836 = vadd.f32 %v2441, %v2682
      %v2837 = vadd.f32 %v2442, %v2687
      %v2838 = vadd.f32 %v2443, %v2692
      %v2839 = vadd.f32 %v2444, %v2697
      %v2840 = vadd.f32 %v2445, %v2702
      %v2841 = vadd.f32 %v2446, %v2707
      %v2842 = vadd.f32 %v2447, %v2712
      %v2843 = vadd.f32 %v2448, %v2717
      %v2844 = vadd.f32 %v2449, %v2722
      %v2845 = vadd.f32 %v2450, %v2727
      %v2846 = vadd.f32 %v2451, %v2732
      %v2847 = vadd.f32 %v2452, %v2737
      %v2848 = vadd.f32 %v2453, %v2742
      %v2849 = vadd.f32 %v2454, %v2747
      %v2850 = vadd.f32 %v2455, %v2752
      %v2851 = vadd.f32 %v2456, %v2757
      %v2852 = vadd.f32 %v2457, %v2762
      %v2853 = vadd.f32 %v2458, %v2767
      %v2854 = vadd.f32 %v2459, %v2772
      %v2855 = vadd.f32 %v2460, %v2777
      %v2856 = vadd.f32 %v2461, %v2782
      %v2857 = vadd.f32 %v2462, %v2787
      %v2858 = vadd.f32 %v2463, %v2792
      %v2859 = vadd.f32 %v2464, %v2797
      %v2860 = vadd.f32 %v2465, %v2802
      %v2861 = vadd.f32 %v2466, %v2807
      %v2862 = vadd.f32 %v2467, %v2812
      %v2863 = vadd.f32 %v2468, %v2817
      %v2864 = vadd.f32 %v2469, %v2822
      %v2865 = vadd.f32 %v2470, %v2827
      %v2866 = vadd.f32 %v2471, %v2832
      %v2867 = vld [vmem:[%s2472 + $0x1] sm:$0xff]
      %v2868 = vld [vmem:[%s2472 + $0x9] sm:$0xff]
      %v2869 = vld [vmem:[%s2472 + $0x19] sm:$0xff]
      %v2870 = vld [vmem:[%s2472 + $0x21] sm:$0xff]
      %v2871 = vld [vmem:[%s2472 + $0x31] sm:$0xff]
      %v2872 = vld [vmem:[%s2472 + $0x39] sm:$0xff]
      %v2873 = vld [vmem:[%s2472 + $0x49] sm:$0xff]
      %v2874 = vld [vmem:[%s2472 + $0x51] sm:$0xff]
      %v2875 = vld [vmem:[%s2472 + $0x61] sm:$0xff]
      %v2876 = vld [vmem:[%s2472 + $0x69] sm:$0xff]
      %v2877 = vld [vmem:[%s2472 + $0x79] sm:$0xff]
      %v2878 = vld [vmem:[%s2472 + $0x81] sm:$0xff]
      %v2879 = vld [vmem:[%s2472 + $0x91] sm:$0xff]
      %v2880 = vld [vmem:[%s2472 + $0x99] sm:$0xff]
      %v2881 = vld [vmem:[%s2472 + $0xa9] sm:$0xff]
      %v2882 = vld [vmem:[%s2472 + $0xb1] sm:$0xff]
      %v2883 = vld [vmem:[%s2472 + $0xc1] sm:$0xff]
      %v2884 = vld [vmem:[%s2472 + $0xc9] sm:$0xff]
      %v2885 = vld [vmem:[%s2472 + $0xd9] sm:$0xff]
      %v2886 = vld [vmem:[%s2472 + $0xe1] sm:$0xff]
      %v2887 = vld [vmem:[%s2472 + $0xf1] sm:$0xff]
      %v2888 = vld [vmem:[%s2472 + $0xf9] sm:$0xff]
      %v2889 = vld [vmem:[%s2472 + $0x109] sm:$0xff]
      %v2890 = vld [vmem:[%s2472 + $0x111] sm:$0xff]
      %v2891 = vld [vmem:[%s2472 + $0x121] sm:$0xff]
      %v2892 = vld [vmem:[%s2472 + $0x129] sm:$0xff]
      %v2893 = vld [vmem:[%s2472 + $0x139] sm:$0xff]
      %v2894 = vld [vmem:[%s2472 + $0x141] sm:$0xff]
      %v2895 = vld [vmem:[%s2472 + $0x151] sm:$0xff]
      %v2896 = vld [vmem:[%s2472 + $0x159] sm:$0xff]
      %v2897 = vld [vmem:[%s2472 + $0x169] sm:$0xff]
      %v2898 = vld [vmem:[%s2472 + $0x171] sm:$0xff]
      %s2899 = scalar_lea.vmem %s1, 448
      %v2900 = vld [vmem:[%s2899] sm:$0xff]
      %v2901 = vld [vmem:[%s2899 + $0x8] sm:$0xff]
      %v2902 = vld [vmem:[%s2899 + $0x10] sm:$0xff]
      %v2903 = vld [vmem:[%s2899 + $0x18] sm:$0xff]
      %v2904 = vld [vmem:[%s2899 + $0x20] sm:$0xff]
      %v2905 = vld [vmem:[%s2899 + $0x28] sm:$0xff]
      %v2906 = vld [vmem:[%s2899 + $0x30] sm:$0xff]
      %v2907 = vld [vmem:[%s2899 + $0x38] sm:$0xff]
      %v2909 = vsel %vm252, %v2867, 0
      %v2912 = vsel %vm252, %v2868, 0
      %v2915 = vsel %vm252, %v2869, 0
      %v2918 = vsel %vm252, %v2870, 0
      %v2921 = vsel %vm252, %v2871, 0
      %v2924 = vsel %vm252, %v2872, 0
      %v2927 = vsel %vm252, %v2873, 0
      %v2930 = vsel %vm252, %v2874, 0
      %v2933 = vsel %vm252, %v2875, 0
      %v2936 = vsel %vm252, %v2876, 0
      %v2939 = vsel %vm252, %v2877, 0
      %v2942 = vsel %vm252, %v2878, 0
      %v2945 = vsel %vm252, %v2879, 0
      %v2948 = vsel %vm252, %v2880, 0
      %v2951 = vsel %vm252, %v2881, 0
      %v2954 = vsel %vm252, %v2882, 0
      %v2957 = vsel %vm252, %v2883, 0
      %v2960 = vsel %vm252, %v2884, 0
      %v2963 = vsel %vm252, %v2885, 0
      %v2966 = vsel %vm252, %v2886, 0
      %v2969 = vsel %vm252, %v2887, 0
      %v2972 = vsel %vm252, %v2888, 0
      %v2975 = vsel %vm252, %v2889, 0
      %v2978 = vsel %vm252, %v2890, 0
      %v2981 = vsel %vm252, %v2891, 0
      %v2984 = vsel %vm252, %v2892, 0
      %v2987 = vsel %vm252, %v2893, 0
      %v2990 = vsel %vm252, %v2894, 0
      %v2993 = vsel %vm252, %v2895, 0
      %v2996 = vsel %vm252, %v2896, 0
      %v2999 = vsel %vm252, %v2897, 0
      %v3002 = vsel %vm252, %v2898, 0
      %3004 = vmatprep.subr.mxu0 0.0
      %3005 = vmatpush1.msra.mxu0 0.0
      %3006 = vmatprep.subr.mxu0 0.0
      %3007 = vmatpush1.msra.mxu0 0.0
      %3008 = vmatprep.subr.mxu0 0.0
      %3009 = vmatpush1.msra.mxu0 0.0
      %3010 = vmatprep.subr.mxu0 0.0
      %3011 = vmatpush1.msra.mxu0 0.0
      %3012 = vmatprep.subr.mxu0 0.0
      %3013 = vmatpush1.msra.mxu0 0.0
      %3014 = vmatprep.subr.mxu0 0.0
      %3015 = vmatpush1.msra.mxu0 0.0
      %3016 = vmatprep.subr.mxu0 0.0
      %3017 = vmatpush1.msra.mxu0 0.0
      %3018 = vmatprep.subr.mxu0 0.0
      %3019 = vmatpush1.msra.mxu0 0.0
      %3020 = vmatprep.subr.mxu0 0.0
      %3021 = vmatpush1.msra.mxu0 %v2907
      %3022 = vmatprep.subr.mxu0 0.0
      %3023 = vmatpush1.msra.mxu0 %v2906
      %3024 = vmatprep.subr.mxu0 0.0
      %3025 = vmatpush1.msra.mxu0 %v2905
      %3026 = vmatprep.subr.mxu0 0.0
      %3027 = vmatpush1.msra.mxu0 %v2904
      %3028 = vmatprep.subr.mxu0 0.0
      %3029 = vmatpush1.msra.mxu0 %v2903
      %3030 = vmatprep.subr.mxu0 0.0
      %3031 = vmatpush1.msra.mxu0 %v2902
      %3032 = vmatprep.subr.mxu0 0.0
      %3033 = vmatpush1.msra.mxu0 %v2901
      %3034 = vmatprep.subr.mxu0 0.0
      %3035 = vmatpush1.msra.mxu0 %v2900
      %3036 = vmatprep.subr.mxu0 0.0
      %3037 = vmatpush2.msra.mxu0 0.0
      %3038 = vmatprep.subr.mxu0 0.0
      %3039 = vmatpush2.msra.mxu0 0.0
      %3040 = vmatprep.subr.mxu0 0.0
      %3041 = vmatpush2.msra.mxu0 0.0
      %3042 = vmatprep.subr.mxu0 0.0
      %3043 = vmatpush2.msra.mxu0 0.0
      %3044 = vmatprep.subr.mxu0 0.0
      %3045 = vmatpush2.msra.mxu0 0.0
      %3046 = vmatprep.subr.mxu0 0.0
      %3047 = vmatpush2.msra.mxu0 0.0
      %3048 = vmatprep.subr.mxu0 0.0
      %3049 = vmatpush2.msra.mxu0 0.0
      %3050 = vmatprep.subr.mxu0 0.0
      %3051 = vmatpush2.msra.mxu0 0.0
      %3052 = vmatprep.subr.mxu0 0.0
      %3053 = vmatpush2.msra.mxu0 0.0
      %3054 = vmatprep.subr.mxu0 0.0
      %3055 = vmatpush2.msra.mxu0 0.0
      %3056 = vmatprep.subr.mxu0 0.0
      %3057 = vmatpush2.msra.mxu0 0.0
      %3058 = vmatprep.subr.mxu0 0.0
      %3059 = vmatpush2.msra.mxu0 0.0
      %3060 = vmatprep.subr.mxu0 0.0
      %3061 = vmatpush2.msra.mxu0 0.0
      %3062 = vmatprep.subr.mxu0 0.0
      %3063 = vmatpush2.msra.mxu0 0.0
      %3064 = vmatprep.subr.mxu0 0.0
      %3065 = vmatpush2.msra.mxu0 0.0
      %3066 = vmatprep.subr.mxu0 0.0
      %3067 = vmatpush2.msra.mxu0 0.0
      %3068 = vmatprep.mubr.f32.mxu0 0.0
      %3069 = vmatmul.mubr.f32.gmra.mxu0 %v2909
      %v3070 = vpop.f32.mrf.mxu0
      %v3071 = vadd.f32 0.0, %v3070
      %v3072 = vpop.f32.mrf.mxu0
      %3073 = vmatprep.mubr.f32.mxu0 0.0
      %3074 = vmatmul.mubr.f32.gmra.mxu0 %v2912
      %v3075 = vpop.f32.mrf.mxu0
      %v3076 = vadd.f32 0.0, %v3075
      %v3077 = vpop.f32.mrf.mxu0
      %3078 = vmatprep.mubr.f32.mxu0 0.0
      %3079 = vmatmul.mubr.f32.gmra.mxu0 %v2915
      %v3080 = vpop.f32.mrf.mxu0
      %v3081 = vadd.f32 0.0, %v3080
      %v3082 = vpop.f32.mrf.mxu0
      %3083 = vmatprep.mubr.f32.mxu0 0.0
      %3084 = vmatmul.mubr.f32.gmra.mxu0 %v2918
      %v3085 = vpop.f32.mrf.mxu0
      %v3086 = vadd.f32 0.0, %v3085
      %v3087 = vpop.f32.mrf.mxu0
      %3088 = vmatprep.mubr.f32.mxu0 0.0
      %3089 = vmatmul.mubr.f32.gmra.mxu0 %v2921
      %v3090 = vpop.f32.mrf.mxu0
      %v3091 = vadd.f32 0.0, %v3090
      %v3092 = vpop.f32.mrf.mxu0
      %3093 = vmatprep.mubr.f32.mxu0 0.0
      %3094 = vmatmul.mubr.f32.gmra.mxu0 %v2924
      %v3095 = vpop.f32.mrf.mxu0
      %v3096 = vadd.f32 0.0, %v3095
      %v3097 = vpop.f32.mrf.mxu0
      %3098 = vmatprep.mubr.f32.mxu0 0.0
      %3099 = vmatmul.mubr.f32.gmra.mxu0 %v2927
      %v3100 = vpop.f32.mrf.mxu0
      %v3101 = vadd.f32 0.0, %v3100
      %v3102 = vpop.f32.mrf.mxu0
      %3103 = vmatprep.mubr.f32.mxu0 0.0
      %3104 = vmatmul.mubr.f32.gmra.mxu0 %v2930
      %v3105 = vpop.f32.mrf.mxu0
      %v3106 = vadd.f32 0.0, %v3105
      %v3107 = vpop.f32.mrf.mxu0
      %3108 = vmatprep.mubr.f32.mxu0 0.0
      %3109 = vmatmul.mubr.f32.gmra.mxu0 %v2933
      %v3110 = vpop.f32.mrf.mxu0
      %v3111 = vadd.f32 0.0, %v3110
      %v3112 = vpop.f32.mrf.mxu0
      %3113 = vmatprep.mubr.f32.mxu0 0.0
      %3114 = vmatmul.mubr.f32.gmra.mxu0 %v2936
      %v3115 = vpop.f32.mrf.mxu0
      %v3116 = vadd.f32 0.0, %v3115
      %v3117 = vpop.f32.mrf.mxu0
      %3118 = vmatprep.mubr.f32.mxu0 0.0
      %3119 = vmatmul.mubr.f32.gmra.mxu0 %v2939
      %v3120 = vpop.f32.mrf.mxu0
      %v3121 = vadd.f32 0.0, %v3120
      %v3122 = vpop.f32.mrf.mxu0
      %3123 = vmatprep.mubr.f32.mxu0 0.0
      %3124 = vmatmul.mubr.f32.gmra.mxu0 %v2942
      %v3125 = vpop.f32.mrf.mxu0
      %v3126 = vadd.f32 0.0, %v3125
      %v3127 = vpop.f32.mrf.mxu0
      %3128 = vmatprep.mubr.f32.mxu0 0.0
      %3129 = vmatmul.mubr.f32.gmra.mxu0 %v2945
      %v3130 = vpop.f32.mrf.mxu0
      %v3131 = vadd.f32 0.0, %v3130
      %v3132 = vpop.f32.mrf.mxu0
      %3133 = vmatprep.mubr.f32.mxu0 0.0
      %3134 = vmatmul.mubr.f32.gmra.mxu0 %v2948
      %v3135 = vpop.f32.mrf.mxu0
      %v3136 = vadd.f32 0.0, %v3135
      %v3137 = vpop.f32.mrf.mxu0
      %3138 = vmatprep.mubr.f32.mxu0 0.0
      %3139 = vmatmul.mubr.f32.gmra.mxu0 %v2951
      %v3140 = vpop.f32.mrf.mxu0
      %v3141 = vadd.f32 0.0, %v3140
      %v3142 = vpop.f32.mrf.mxu0
      %3143 = vmatprep.mubr.f32.mxu0 0.0
      %3144 = vmatmul.mubr.f32.gmra.mxu0 %v2954
      %v3145 = vpop.f32.mrf.mxu0
      %v3146 = vadd.f32 0.0, %v3145
      %v3147 = vpop.f32.mrf.mxu0
      %3148 = vmatprep.mubr.f32.mxu0 0.0
      %3149 = vmatmul.mubr.f32.gmra.mxu0 %v2957
      %v3150 = vpop.f32.mrf.mxu0
      %v3151 = vadd.f32 0.0, %v3150
      %v3152 = vpop.f32.mrf.mxu0
      %3153 = vmatprep.mubr.f32.mxu0 0.0
      %3154 = vmatmul.mubr.f32.gmra.mxu0 %v2960
      %v3155 = vpop.f32.mrf.mxu0
      %v3156 = vadd.f32 0.0, %v3155
      %v3157 = vpop.f32.mrf.mxu0
      %3158 = vmatprep.mubr.f32.mxu0 0.0
      %3159 = vmatmul.mubr.f32.gmra.mxu0 %v2963
      %v3160 = vpop.f32.mrf.mxu0
      %v3161 = vadd.f32 0.0, %v3160
      %v3162 = vpop.f32.mrf.mxu0
      %3163 = vmatprep.mubr.f32.mxu0 0.0
      %3164 = vmatmul.mubr.f32.gmra.mxu0 %v2966
      %v3165 = vpop.f32.mrf.mxu0
      %v3166 = vadd.f32 0.0, %v3165
      %v3167 = vpop.f32.mrf.mxu0
      %3168 = vmatprep.mubr.f32.mxu0 0.0
      %3169 = vmatmul.mubr.f32.gmra.mxu0 %v2969
      %v3170 = vpop.f32.mrf.mxu0
      %v3171 = vadd.f32 0.0, %v3170
      %v3172 = vpop.f32.mrf.mxu0
      %3173 = vmatprep.mubr.f32.mxu0 0.0
      %3174 = vmatmul.mubr.f32.gmra.mxu0 %v2972
      %v3175 = vpop.f32.mrf.mxu0
      %v3176 = vadd.f32 0.0, %v3175
      %v3177 = vpop.f32.mrf.mxu0
      %3178 = vmatprep.mubr.f32.mxu0 0.0
      %3179 = vmatmul.mubr.f32.gmra.mxu0 %v2975
      %v3180 = vpop.f32.mrf.mxu0
      %v3181 = vadd.f32 0.0, %v3180
      %v3182 = vpop.f32.mrf.mxu0
      %3183 = vmatprep.mubr.f32.mxu0 0.0
      %3184 = vmatmul.mubr.f32.gmra.mxu0 %v2978
      %v3185 = vpop.f32.mrf.mxu0
      %v3186 = vadd.f32 0.0, %v3185
      %v3187 = vpop.f32.mrf.mxu0
      %3188 = vmatprep.mubr.f32.mxu0 0.0
      %3189 = vmatmul.mubr.f32.gmra.mxu0 %v2981
      %v3190 = vpop.f32.mrf.mxu0
      %v3191 = vadd.f32 0.0, %v3190
      %v3192 = vpop.f32.mrf.mxu0
      %3193 = vmatprep.mubr.f32.mxu0 0.0
      %3194 = vmatmul.mubr.f32.gmra.mxu0 %v2984
      %v3195 = vpop.f32.mrf.mxu0
      %v3196 = vadd.f32 0.0, %v3195
      %v3197 = vpop.f32.mrf.mxu0
      %3198 = vmatprep.mubr.f32.mxu0 0.0
      %3199 = vmatmul.mubr.f32.gmra.mxu0 %v2987
      %v3200 = vpop.f32.mrf.mxu0
      %v3201 = vadd.f32 0.0, %v3200
      %v3202 = vpop.f32.mrf.mxu0
      %3203 = vmatprep.mubr.f32.mxu0 0.0
      %3204 = vmatmul.mubr.f32.gmra.mxu0 %v2990
      %v3205 = vpop.f32.mrf.mxu0
      %v3206 = vadd.f32 0.0, %v3205
      %v3207 = vpop.f32.mrf.mxu0
      %3208 = vmatprep.mubr.f32.mxu0 0.0
      %3209 = vmatmul.mubr.f32.gmra.mxu0 %v2993
      %v3210 = vpop.f32.mrf.mxu0
      %v3211 = vadd.f32 0.0, %v3210
      %v3212 = vpop.f32.mrf.mxu0
      %3213 = vmatprep.mubr.f32.mxu0 0.0
      %3214 = vmatmul.mubr.f32.gmra.mxu0 %v2996
      %v3215 = vpop.f32.mrf.mxu0
      %v3216 = vadd.f32 0.0, %v3215
      %v3217 = vpop.f32.mrf.mxu0
      %3218 = vmatprep.mubr.f32.mxu0 0.0
      %3219 = vmatmul.mubr.f32.gmra.mxu0 %v2999
      %v3220 = vpop.f32.mrf.mxu0
      %v3221 = vadd.f32 0.0, %v3220
      %v3222 = vpop.f32.mrf.mxu0
      %3223 = vmatprep.mubr.f32.mxu0 0.0
      %3224 = vmatmul.mubr.f32.gmra.mxu0 %v3002
      %v3225 = vpop.f32.mrf.mxu0
      %v3226 = vadd.f32 0.0, %v3225
      %v3227 = vpop.f32.mrf.mxu0
      %3228 = vdwg.mxu0
      %v3229 = vadd.f32 %v2835, %v3071
      %v3230 = vadd.f32 %v2836, %v3076
      %v3231 = vadd.f32 %v2837, %v3081
      %v3232 = vadd.f32 %v2838, %v3086
      %v3233 = vadd.f32 %v2839, %v3091
      %v3234 = vadd.f32 %v2840, %v3096
      %v3235 = vadd.f32 %v2841, %v3101
      %v3236 = vadd.f32 %v2842, %v3106
      %v3237 = vadd.f32 %v2843, %v3111
      %v3238 = vadd.f32 %v2844, %v3116
      %v3239 = vadd.f32 %v2845, %v3121
      %v3240 = vadd.f32 %v2846, %v3126
      %v3241 = vadd.f32 %v2847, %v3131
      %v3242 = vadd.f32 %v2848, %v3136
      %v3243 = vadd.f32 %v2849, %v3141
      %v3244 = vadd.f32 %v2850, %v3146
      %v3245 = vadd.f32 %v2851, %v3151
      %v3246 = vadd.f32 %v2852, %v3156
      %v3247 = vadd.f32 %v2853, %v3161
      %v3248 = vadd.f32 %v2854, %v3166
      %v3249 = vadd.f32 %v2855, %v3171
      %v3250 = vadd.f32 %v2856, %v3176
      %v3251 = vadd.f32 %v2857, %v3181
      %v3252 = vadd.f32 %v2858, %v3186
      %v3253 = vadd.f32 %v2859, %v3191
      %v3254 = vadd.f32 %v2860, %v3196
      %v3255 = vadd.f32 %v2861, %v3201
      %v3256 = vadd.f32 %v2862, %v3206
      %v3257 = vadd.f32 %v2863, %v3211
      %v3258 = vadd.f32 %v2864, %v3216
      %v3259 = vadd.f32 %v2865, %v3221
      %v3260 = vadd.f32 %v2866, %v3226
      %v3261 = vld [vmem:[%s2472 + $0x2] sm:$0xff]
      %v3262 = vld [vmem:[%s2472 + $0xa] sm:$0xff]
      %v3263 = vld [vmem:[%s2472 + $0x1a] sm:$0xff]
      %v3264 = vld [vmem:[%s2472 + $0x22] sm:$0xff]
      %v3265 = vld [vmem:[%s2472 + $0x32] sm:$0xff]
      %v3266 = vld [vmem:[%s2472 + $0x3a] sm:$0xff]
      %v3267 = vld [vmem:[%s2472 + $0x4a] sm:$0xff]
      %v3268 = vld [vmem:[%s2472 + $0x52] sm:$0xff]
      %v3269 = vld [vmem:[%s2472 + $0x62] sm:$0xff]
      %v3270 = vld [vmem:[%s2472 + $0x6a] sm:$0xff]
      %v3271 = vld [vmem:[%s2472 + $0x7a] sm:$0xff]
      %v3272 = vld [vmem:[%s2472 + $0x82] sm:$0xff]
      %v3273 = vld [vmem:[%s2472 + $0x92] sm:$0xff]
      %v3274 = vld [vmem:[%s2472 + $0x9a] sm:$0xff]
      %v3275 = vld [vmem:[%s2472 + $0xaa] sm:$0xff]
      %v3276 = vld [vmem:[%s2472 + $0xb2] sm:$0xff]
      %v3277 = vld [vmem:[%s2472 + $0xc2] sm:$0xff]
      %v3278 = vld [vmem:[%s2472 + $0xca] sm:$0xff]
      %v3279 = vld [vmem:[%s2472 + $0xda] sm:$0xff]
      %v3280 = vld [vmem:[%s2472 + $0xe2] sm:$0xff]
      %v3281 = vld [vmem:[%s2472 + $0xf2] sm:$0xff]
      %v3282 = vld [vmem:[%s2472 + $0xfa] sm:$0xff]
      %v3283 = vld [vmem:[%s2472 + $0x10a] sm:$0xff]
      %v3284 = vld [vmem:[%s2472 + $0x112] sm:$0xff]
      %v3285 = vld [vmem:[%s2472 + $0x122] sm:$0xff]
      %v3286 = vld [vmem:[%s2472 + $0x12a] sm:$0xff]
      %v3287 = vld [vmem:[%s2472 + $0x13a] sm:$0xff]
      %v3288 = vld [vmem:[%s2472 + $0x142] sm:$0xff]
      %v3289 = vld [vmem:[%s2472 + $0x152] sm:$0xff]
      %v3290 = vld [vmem:[%s2472 + $0x15a] sm:$0xff]
      %v3291 = vld [vmem:[%s2472 + $0x16a] sm:$0xff]
      %v3292 = vld [vmem:[%s2472 + $0x172] sm:$0xff]
      %s3293 = scalar_lea.vmem %s1, 512
      %v3294 = vld [vmem:[%s3293] sm:$0xff]
      %v3295 = vld [vmem:[%s3293 + $0x8] sm:$0xff]
      %v3296 = vld [vmem:[%s3293 + $0x10] sm:$0xff]
      %v3297 = vld [vmem:[%s3293 + $0x18] sm:$0xff]
      %v3298 = vld [vmem:[%s3293 + $0x20] sm:$0xff]
      %v3299 = vld [vmem:[%s3293 + $0x28] sm:$0xff]
      %v3300 = vld [vmem:[%s3293 + $0x30] sm:$0xff]
      %v3301 = vld [vmem:[%s3293 + $0x38] sm:$0xff]
      %v3303 = vsel %vm252, %v3261, 0
      %v3306 = vsel %vm252, %v3262, 0
      %v3309 = vsel %vm252, %v3263, 0
      %v3312 = vsel %vm252, %v3264, 0
      %v3315 = vsel %vm252, %v3265, 0
      %v3318 = vsel %vm252, %v3266, 0
      %v3321 = vsel %vm252, %v3267, 0
      %v3324 = vsel %vm252, %v3268, 0
      %v3327 = vsel %vm252, %v3269, 0
      %v3330 = vsel %vm252, %v3270, 0
      %v3333 = vsel %vm252, %v3271, 0
      %v3336 = vsel %vm252, %v3272, 0
      %v3339 = vsel %vm252, %v3273, 0
      %v3342 = vsel %vm252, %v3274, 0
      %v3345 = vsel %vm252, %v3275, 0
      %v3348 = vsel %vm252, %v3276, 0
      %v3351 = vsel %vm252, %v3277, 0
      %v3354 = vsel %vm252, %v3278, 0
      %v3357 = vsel %vm252, %v3279, 0
      %v3360 = vsel %vm252, %v3280, 0
      %v3363 = vsel %vm252, %v3281, 0
      %v3366 = vsel %vm252, %v3282, 0
      %v3369 = vsel %vm252, %v3283, 0
      %v3372 = vsel %vm252, %v3284, 0
      %v3375 = vsel %vm252, %v3285, 0
      %v3378 = vsel %vm252, %v3286, 0
      %v3381 = vsel %vm252, %v3287, 0
      %v3384 = vsel %vm252, %v3288, 0
      %v3387 = vsel %vm252, %v3289, 0
      %v3390 = vsel %vm252, %v3290, 0
      %v3393 = vsel %vm252, %v3291, 0
      %v3396 = vsel %vm252, %v3292, 0
      %3398 = vmatprep.subr.mxu0 0.0
      %3399 = vmatpush1.msra.mxu0 0.0
      %3400 = vmatprep.subr.mxu0 0.0
      %3401 = vmatpush1.msra.mxu0 0.0
      %3402 = vmatprep.subr.mxu0 0.0
      %3403 = vmatpush1.msra.mxu0 0.0
      %3404 = vmatprep.subr.mxu0 0.0
      %3405 = vmatpush1.msra.mxu0 0.0
      %3406 = vmatprep.subr.mxu0 0.0
      %3407 = vmatpush1.msra.mxu0 0.0
      %3408 = vmatprep.subr.mxu0 0.0
      %3409 = vmatpush1.msra.mxu0 0.0
      %3410 = vmatprep.subr.mxu0 0.0
      %3411 = vmatpush1.msra.mxu0 0.0
      %3412 = vmatprep.subr.mxu0 0.0
      %3413 = vmatpush1.msra.mxu0 0.0
      %3414 = vmatprep.subr.mxu0 0.0
      %3415 = vmatpush1.msra.mxu0 %v3301
      %3416 = vmatprep.subr.mxu0 0.0
      %3417 = vmatpush1.msra.mxu0 %v3300
      %3418 = vmatprep.subr.mxu0 0.0
      %3419 = vmatpush1.msra.mxu0 %v3299
      %3420 = vmatprep.subr.mxu0 0.0
      %3421 = vmatpush1.msra.mxu0 %v3298
      %3422 = vmatprep.subr.mxu0 0.0
      %3423 = vmatpush1.msra.mxu0 %v3297
      %3424 = vmatprep.subr.mxu0 0.0
      %3425 = vmatpush1.msra.mxu0 %v3296
      %3426 = vmatprep.subr.mxu0 0.0
      %3427 = vmatpush1.msra.mxu0 %v3295
      %3428 = vmatprep.subr.mxu0 0.0
      %3429 = vmatpush1.msra.mxu0 %v3294
      %3430 = vmatprep.subr.mxu0 0.0
      %3431 = vmatpush2.msra.mxu0 0.0
      %3432 = vmatprep.subr.mxu0 0.0
      %3433 = vmatpush2.msra.mxu0 0.0
      %3434 = vmatprep.subr.mxu0 0.0
      %3435 = vmatpush2.msra.mxu0 0.0
      %3436 = vmatprep.subr.mxu0 0.0
      %3437 = vmatpush2.msra.mxu0 0.0
      %3438 = vmatprep.subr.mxu0 0.0
      %3439 = vmatpush2.msra.mxu0 0.0
      %3440 = vmatprep.subr.mxu0 0.0
      %3441 = vmatpush2.msra.mxu0 0.0
      %3442 = vmatprep.subr.mxu0 0.0
      %3443 = vmatpush2.msra.mxu0 0.0
      %3444 = vmatprep.subr.mxu0 0.0
      %3445 = vmatpush2.msra.mxu0 0.0
      %3446 = vmatprep.subr.mxu0 0.0
      %3447 = vmatpush2.msra.mxu0 0.0
      %3448 = vmatprep.subr.mxu0 0.0
      %3449 = vmatpush2.msra.mxu0 0.0
      %3450 = vmatprep.subr.mxu0 0.0
      %3451 = vmatpush2.msra.mxu0 0.0
      %3452 = vmatprep.subr.mxu0 0.0
      %3453 = vmatpush2.msra.mxu0 0.0
      %3454 = vmatprep.subr.mxu0 0.0
      %3455 = vmatpush2.msra.mxu0 0.0
      %3456 = vmatprep.subr.mxu0 0.0
      %3457 = vmatpush2.msra.mxu0 0.0
      %3458 = vmatprep.subr.mxu0 0.0
      %3459 = vmatpush2.msra.mxu0 0.0
      %3460 = vmatprep.subr.mxu0 0.0
      %3461 = vmatpush2.msra.mxu0 0.0
      %3462 = vmatprep.mubr.f32.mxu0 0.0
      %3463 = vmatmul.mubr.f32.gmra.mxu0 %v3303
      %v3464 = vpop.f32.mrf.mxu0
      %v3465 = vadd.f32 0.0, %v3464
      %v3466 = vpop.f32.mrf.mxu0
      %3467 = vmatprep.mubr.f32.mxu0 0.0
      %3468 = vmatmul.mubr.f32.gmra.mxu0 %v3306
      %v3469 = vpop.f32.mrf.mxu0
      %v3470 = vadd.f32 0.0, %v3469
      %v3471 = vpop.f32.mrf.mxu0
      %3472 = vmatprep.mubr.f32.mxu0 0.0
      %3473 = vmatmul.mubr.f32.gmra.mxu0 %v3309
      %v3474 = vpop.f32.mrf.mxu0
      %v3475 = vadd.f32 0.0, %v3474
      %v3476 = vpop.f32.mrf.mxu0
      %3477 = vmatprep.mubr.f32.mxu0 0.0
      %3478 = vmatmul.mubr.f32.gmra.mxu0 %v3312
      %v3479 = vpop.f32.mrf.mxu0
      %v3480 = vadd.f32 0.0, %v3479
      %v3481 = vpop.f32.mrf.mxu0
      %3482 = vmatprep.mubr.f32.mxu0 0.0
      %3483 = vmatmul.mubr.f32.gmra.mxu0 %v3315
      %v3484 = vpop.f32.mrf.mxu0
      %v3485 = vadd.f32 0.0, %v3484
      %v3486 = vpop.f32.mrf.mxu0
      %3487 = vmatprep.mubr.f32.mxu0 0.0
      %3488 = vmatmul.mubr.f32.gmra.mxu0 %v3318
      %v3489 = vpop.f32.mrf.mxu0
      %v3490 = vadd.f32 0.0, %v3489
      %v3491 = vpop.f32.mrf.mxu0
      %3492 = vmatprep.mubr.f32.mxu0 0.0
      %3493 = vmatmul.mubr.f32.gmra.mxu0 %v3321
      %v3494 = vpop.f32.mrf.mxu0
      %v3495 = vadd.f32 0.0, %v3494
      %v3496 = vpop.f32.mrf.mxu0
      %3497 = vmatprep.mubr.f32.mxu0 0.0
      %3498 = vmatmul.mubr.f32.gmra.mxu0 %v3324
      %v3499 = vpop.f32.mrf.mxu0
      %v3500 = vadd.f32 0.0, %v3499
      %v3501 = vpop.f32.mrf.mxu0
      %3502 = vmatprep.mubr.f32.mxu0 0.0
      %3503 = vmatmul.mubr.f32.gmra.mxu0 %v3327
      %v3504 = vpop.f32.mrf.mxu0
      %v3505 = vadd.f32 0.0, %v3504
      %v3506 = vpop.f32.mrf.mxu0
      %3507 = vmatprep.mubr.f32.mxu0 0.0
      %3508 = vmatmul.mubr.f32.gmra.mxu0 %v3330
      %v3509 = vpop.f32.mrf.mxu0
      %v3510 = vadd.f32 0.0, %v3509
      %v3511 = vpop.f32.mrf.mxu0
      %3512 = vmatprep.mubr.f32.mxu0 0.0
      %3513 = vmatmul.mubr.f32.gmra.mxu0 %v3333
      %v3514 = vpop.f32.mrf.mxu0
      %v3515 = vadd.f32 0.0, %v3514
      %v3516 = vpop.f32.mrf.mxu0
      %3517 = vmatprep.mubr.f32.mxu0 0.0
      %3518 = vmatmul.mubr.f32.gmra.mxu0 %v3336
      %v3519 = vpop.f32.mrf.mxu0
      %v3520 = vadd.f32 0.0, %v3519
      %v3521 = vpop.f32.mrf.mxu0
      %3522 = vmatprep.mubr.f32.mxu0 0.0
      %3523 = vmatmul.mubr.f32.gmra.mxu0 %v3339
      %v3524 = vpop.f32.mrf.mxu0
      %v3525 = vadd.f32 0.0, %v3524
      %v3526 = vpop.f32.mrf.mxu0
      %3527 = vmatprep.mubr.f32.mxu0 0.0
      %3528 = vmatmul.mubr.f32.gmra.mxu0 %v3342
      %v3529 = vpop.f32.mrf.mxu0
      %v3530 = vadd.f32 0.0, %v3529
      %v3531 = vpop.f32.mrf.mxu0
      %3532 = vmatprep.mubr.f32.mxu0 0.0
      %3533 = vmatmul.mubr.f32.gmra.mxu0 %v3345
      %v3534 = vpop.f32.mrf.mxu0
      %v3535 = vadd.f32 0.0, %v3534
      %v3536 = vpop.f32.mrf.mxu0
      %3537 = vmatprep.mubr.f32.mxu0 0.0
      %3538 = vmatmul.mubr.f32.gmra.mxu0 %v3348
      %v3539 = vpop.f32.mrf.mxu0
      %v3540 = vadd.f32 0.0, %v3539
      %v3541 = vpop.f32.mrf.mxu0
      %3542 = vmatprep.mubr.f32.mxu0 0.0
      %3543 = vmatmul.mubr.f32.gmra.mxu0 %v3351
      %v3544 = vpop.f32.mrf.mxu0
      %v3545 = vadd.f32 0.0, %v3544
      %v3546 = vpop.f32.mrf.mxu0
      %3547 = vmatprep.mubr.f32.mxu0 0.0
      %3548 = vmatmul.mubr.f32.gmra.mxu0 %v3354
      %v3549 = vpop.f32.mrf.mxu0
      %v3550 = vadd.f32 0.0, %v3549
      %v3551 = vpop.f32.mrf.mxu0
      %3552 = vmatprep.mubr.f32.mxu0 0.0
      %3553 = vmatmul.mubr.f32.gmra.mxu0 %v3357
      %v3554 = vpop.f32.mrf.mxu0
      %v3555 = vadd.f32 0.0, %v3554
      %v3556 = vpop.f32.mrf.mxu0
      %3557 = vmatprep.mubr.f32.mxu0 0.0
      %3558 = vmatmul.mubr.f32.gmra.mxu0 %v3360
      %v3559 = vpop.f32.mrf.mxu0
      %v3560 = vadd.f32 0.0, %v3559
      %v3561 = vpop.f32.mrf.mxu0
      %3562 = vmatprep.mubr.f32.mxu0 0.0
      %3563 = vmatmul.mubr.f32.gmra.mxu0 %v3363
      %v3564 = vpop.f32.mrf.mxu0
      %v3565 = vadd.f32 0.0, %v3564
      %v3566 = vpop.f32.mrf.mxu0
      %3567 = vmatprep.mubr.f32.mxu0 0.0
      %3568 = vmatmul.mubr.f32.gmra.mxu0 %v3366
      %v3569 = vpop.f32.mrf.mxu0
      %v3570 = vadd.f32 0.0, %v3569
      %v3571 = vpop.f32.mrf.mxu0
      %3572 = vmatprep.mubr.f32.mxu0 0.0
      %3573 = vmatmul.mubr.f32.gmra.mxu0 %v3369
      %v3574 = vpop.f32.mrf.mxu0
      %v3575 = vadd.f32 0.0, %v3574
      %v3576 = vpop.f32.mrf.mxu0
      %3577 = vmatprep.mubr.f32.mxu0 0.0
      %3578 = vmatmul.mubr.f32.gmra.mxu0 %v3372
      %v3579 = vpop.f32.mrf.mxu0
      %v3580 = vadd.f32 0.0, %v3579
      %v3581 = vpop.f32.mrf.mxu0
      %3582 = vmatprep.mubr.f32.mxu0 0.0
      %3583 = vmatmul.mubr.f32.gmra.mxu0 %v3375
      %v3584 = vpop.f32.mrf.mxu0
      %v3585 = vadd.f32 0.0, %v3584
      %v3586 = vpop.f32.mrf.mxu0
      %3587 = vmatprep.mubr.f32.mxu0 0.0
      %3588 = vmatmul.mubr.f32.gmra.mxu0 %v3378
      %v3589 = vpop.f32.mrf.mxu0
      %v3590 = vadd.f32 0.0, %v3589
      %v3591 = vpop.f32.mrf.mxu0
      %3592 = vmatprep.mubr.f32.mxu0 0.0
      %3593 = vmatmul.mubr.f32.gmra.mxu0 %v3381
      %v3594 = vpop.f32.mrf.mxu0
      %v3595 = vadd.f32 0.0, %v3594
      %v3596 = vpop.f32.mrf.mxu0
      %3597 = vmatprep.mubr.f32.mxu0 0.0
      %3598 = vmatmul.mubr.f32.gmra.mxu0 %v3384
      %v3599 = vpop.f32.mrf.mxu0
      %v3600 = vadd.f32 0.0, %v3599
      %v3601 = vpop.f32.mrf.mxu0
      %3602 = vmatprep.mubr.f32.mxu0 0.0
      %3603 = vmatmul.mubr.f32.gmra.mxu0 %v3387
      %v3604 = vpop.f32.mrf.mxu0
      %v3605 = vadd.f32 0.0, %v3604
      %v3606 = vpop.f32.mrf.mxu0
      %3607 = vmatprep.mubr.f32.mxu0 0.0
      %3608 = vmatmul.mubr.f32.gmra.mxu0 %v3390
      %v3609 = vpop.f32.mrf.mxu0
      %v3610 = vadd.f32 0.0, %v3609
      %v3611 = vpop.f32.mrf.mxu0
      %3612 = vmatprep.mubr.f32.mxu0 0.0
      %3613 = vmatmul.mubr.f32.gmra.mxu0 %v3393
      %v3614 = vpop.f32.mrf.mxu0
      %v3615 = vadd.f32 0.0, %v3614
      %v3616 = vpop.f32.mrf.mxu0
      %3617 = vmatprep.mubr.f32.mxu0 0.0
      %3618 = vmatmul.mubr.f32.gmra.mxu0 %v3396
      %v3619 = vpop.f32.mrf.mxu0
      %v3620 = vadd.f32 0.0, %v3619
      %v3621 = vpop.f32.mrf.mxu0
      %3622 = vdwg.mxu0
      %v3623 = vadd.f32 %v3229, %v3465
      %v3624 = vadd.f32 %v3230, %v3470
      %v3625 = vadd.f32 %v3231, %v3475
      %v3626 = vadd.f32 %v3232, %v3480
      %v3627 = vadd.f32 %v3233, %v3485
      %v3628 = vadd.f32 %v3234, %v3490
      %v3629 = vadd.f32 %v3235, %v3495
      %v3630 = vadd.f32 %v3236, %v3500
      %v3631 = vadd.f32 %v3237, %v3505
      %v3632 = vadd.f32 %v3238, %v3510
      %v3633 = vadd.f32 %v3239, %v3515
      %v3634 = vadd.f32 %v3240, %v3520
      %v3635 = vadd.f32 %v3241, %v3525
      %v3636 = vadd.f32 %v3242, %v3530
      %v3637 = vadd.f32 %v3243, %v3535
      %v3638 = vadd.f32 %v3244, %v3540
      %v3639 = vadd.f32 %v3245, %v3545
      %v3640 = vadd.f32 %v3246, %v3550
      %v3641 = vadd.f32 %v3247, %v3555
      %v3642 = vadd.f32 %v3248, %v3560
      %v3643 = vadd.f32 %v3249, %v3565
      %v3644 = vadd.f32 %v3250, %v3570
      %v3645 = vadd.f32 %v3251, %v3575
      %v3646 = vadd.f32 %v3252, %v3580
      %v3647 = vadd.f32 %v3253, %v3585
      %v3648 = vadd.f32 %v3254, %v3590
      %v3649 = vadd.f32 %v3255, %v3595
      %v3650 = vadd.f32 %v3256, %v3600
      %v3651 = vadd.f32 %v3257, %v3605
      %v3652 = vadd.f32 %v3258, %v3610
      %v3653 = vadd.f32 %v3259, %v3615
      %v3654 = vadd.f32 %v3260, %v3620
      %v3655 = vld [vmem:[%s2] sm:$0x1]
      %v3657 = vlaneseq
      %v3658 = vshrl.u32 %v3657, 7
      %v3659 = vsub.s32 0, %v3658
      %v3660 = vrot.slane %v3655, %v3659
      %v3662 = vadd.f32 %v3623, %v3660
      %v3663 = vadd.f32 %v3624, %v3660
      %v3664 = vadd.f32 %v3625, %v3660
      %v3665 = vadd.f32 %v3626, %v3660
      %v3666 = vadd.f32 %v3627, %v3660
      %v3667 = vadd.f32 %v3628, %v3660
      %v3668 = vadd.f32 %v3629, %v3660
      %v3669 = vadd.f32 %v3630, %v3660
      %v3670 = vadd.f32 %v3631, %v3660
      %v3671 = vadd.f32 %v3632, %v3660
      %v3672 = vadd.f32 %v3633, %v3660
      %v3673 = vadd.f32 %v3634, %v3660
      %v3674 = vadd.f32 %v3635, %v3660
      %v3675 = vadd.f32 %v3636, %v3660
      %v3676 = vadd.f32 %v3637, %v3660
      %v3677 = vadd.f32 %v3638, %v3660
      %v3678 = vadd.f32 %v3639, %v3660
      %v3679 = vadd.f32 %v3640, %v3660
      %v3680 = vadd.f32 %v3641, %v3660
      %v3681 = vadd.f32 %v3642, %v3660
      %v3682 = vadd.f32 %v3643, %v3660
      %v3683 = vadd.f32 %v3644, %v3660
      %v3684 = vadd.f32 %v3645, %v3660
      %v3685 = vadd.f32 %v3646, %v3660
      %v3686 = vadd.f32 %v3647, %v3660
      %v3687 = vadd.f32 %v3648, %v3660
      %v3688 = vadd.f32 %v3649, %v3660
      %v3689 = vadd.f32 %v3650, %v3660
      %v3690 = vadd.f32 %v3651, %v3660
      %v3691 = vadd.f32 %v3652, %v3660
      %v3692 = vadd.f32 %v3653, %v3660
      %v3693 = vadd.f32 %v3654, %v3660
      %v3694 = vmax.f32 %v3662, 0.0
      %v3695 = vmax.f32 %v3663, 0.0
      %v3696 = vmax.f32 %v3664, 0.0
      %v3697 = vmax.f32 %v3665, 0.0
      %v3698 = vmax.f32 %v3666, 0.0
      %v3699 = vmax.f32 %v3667, 0.0
      %v3700 = vmax.f32 %v3668, 0.0
      %v3701 = vmax.f32 %v3669, 0.0
      %v3702 = vmax.f32 %v3670, 0.0
      %v3703 = vmax.f32 %v3671, 0.0
      %v3704 = vmax.f32 %v3672, 0.0
      %v3705 = vmax.f32 %v3673, 0.0
      %v3706 = vmax.f32 %v3674, 0.0
      %v3707 = vmax.f32 %v3675, 0.0
      %v3708 = vmax.f32 %v3676, 0.0
      %v3709 = vmax.f32 %v3677, 0.0
      %v3710 = vmax.f32 %v3678, 0.0
      %v3711 = vmax.f32 %v3679, 0.0
      %v3712 = vmax.f32 %v3680, 0.0
      %v3713 = vmax.f32 %v3681, 0.0
      %v3714 = vmax.f32 %v3682, 0.0
      %v3715 = vmax.f32 %v3683, 0.0
      %v3716 = vmax.f32 %v3684, 0.0
      %v3717 = vmax.f32 %v3685, 0.0
      %v3718 = vmax.f32 %v3686, 0.0
      %v3719 = vmax.f32 %v3687, 0.0
      %v3720 = vmax.f32 %v3688, 0.0
      %v3721 = vmax.f32 %v3689, 0.0
      %v3722 = vmax.f32 %v3690, 0.0
      %v3723 = vmax.f32 %v3691, 0.0
      %v3724 = vmax.f32 %v3692, 0.0
      %v3725 = vmax.f32 %v3693, 0.0
      %3726 = vst.msk [vmem:[%s170] sm:$0xff] %vm252, %v3694
      %3727 = vst.msk [vmem:[%s170 + $0x8] sm:$0xff] %vm252, %v3695
      %3728 = vst.msk [vmem:[%s170 + $0x10] sm:$0xff] %vm252, %v3696
      %3729 = vst.msk [vmem:[%s170 + $0x18] sm:$0xff] %vm252, %v3697
      %3730 = vst.msk [vmem:[%s170 + $0x20] sm:$0xff] %vm252, %v3698
      %3731 = vst.msk [vmem:[%s170 + $0x28] sm:$0xff] %vm252, %v3699
      %3732 = vst.msk [vmem:[%s170 + $0x30] sm:$0xff] %vm252, %v3700
      %3733 = vst.msk [vmem:[%s170 + $0x38] sm:$0xff] %vm252, %v3701
      %3734 = vst.msk [vmem:[%s170 + $0x40] sm:$0xff] %vm252, %v3702
      %3735 = vst.msk [vmem:[%s170 + $0x48] sm:$0xff] %vm252, %v3703
      %3736 = vst.msk [vmem:[%s170 + $0x50] sm:$0xff] %vm252, %v3704
      %3737 = vst.msk [vmem:[%s170 + $0x58] sm:$0xff] %vm252, %v3705
      %3738 = vst.msk [vmem:[%s170 + $0x60] sm:$0xff] %vm252, %v3706
      %3739 = vst.msk [vmem:[%s170 + $0x68] sm:$0xff] %vm252, %v3707
      %3740 = vst.msk [vmem:[%s170 + $0x70] sm:$0xff] %vm252, %v3708
      %3741 = vst.msk [vmem:[%s170 + $0x78] sm:$0xff] %vm252, %v3709
      %3742 = vst.msk [vmem:[%s170 + $0x80] sm:$0xff] %vm252, %v3710
      %3743 = vst.msk [vmem:[%s170 + $0x88] sm:$0xff] %vm252, %v3711
      %3744 = vst.msk [vmem:[%s170 + $0x90] sm:$0xff] %vm252, %v3712
      %3745 = vst.msk [vmem:[%s170 + $0x98] sm:$0xff] %vm252, %v3713
      %3746 = vst.msk [vmem:[%s170 + $0xa0] sm:$0xff] %vm252, %v3714
      %3747 = vst.msk [vmem:[%s170 + $0xa8] sm:$0xff] %vm252, %v3715
      %3748 = vst.msk [vmem:[%s170 + $0xb0] sm:$0xff] %vm252, %v3716
      %3749 = vst.msk [vmem:[%s170 + $0xb8] sm:$0xff] %vm252, %v3717
      %3750 = vst.msk [vmem:[%s170 + $0xc0] sm:$0xff] %vm252, %v3718
      %3751 = vst.msk [vmem:[%s170 + $0xc8] sm:$0xff] %vm252, %v3719
      %3752 = vst.msk [vmem:[%s170 + $0xd0] sm:$0xff] %vm252, %v3720
      %3753 = vst.msk [vmem:[%s170 + $0xd8] sm:$0xff] %vm252, %v3721
      %3754 = vst.msk [vmem:[%s170 + $0xe0] sm:$0xff] %vm252, %v3722
      %3755 = vst.msk [vmem:[%s170 + $0xe8] sm:$0xff] %vm252, %v3723
      %3756 = vst.msk [vmem:[%s170 + $0xf0] sm:$0xff] %vm252, %v3724
      %3757 = vst.msk [vmem:[%s170 + $0xf8] sm:$0xff] %vm252, %v3725
      %p3758 = scmp.lt.s32.totalorder %s14, 1
      %s3759 = scalar_select %p3758, %s14, 1
      %s3760 = smul.addr %s3759, 32
      %s3761 = smul.addr %s3760, 8
      %s3762 = scalar_lea.vmem %s3, %s3761
      // Predicated region
      $region33: #{feature_reconstruction_loss.12} parent=31 // pred_check
        %p3763 = pneg %p100
      $region34: #{feature_reconstruction_loss.12} parent=31 // pred_check_branch
        %3765 = sbr.rel (%p3763) target = $region36
      $region35: #{feature_reconstruction_loss.12} parent=31 // pred_region
        _
      $region36: #{feature_reconstruction_loss.12} parent=31 // pred_fallthru
        _
    $region32: #{feature_reconstruction_loss.12} parent=5 // pred_fallthru
      _
    %p3766 = scmp.le.s32.totalorder 2, %s9
    // Predicated region
    $region37: #{feature_reconstruction_loss.12} parent=5 // pred_check
      %p3767 = pneg %p3766
    $region38: #{feature_reconstruction_loss.12} parent=5 // pred_check_branch
      %3769 = sbr.rel (%p3767) target = $region40
    $region39: #{feature_reconstruction_loss.12} parent=5 // pred_region
      %s3770 = ssub.s32 %s9, 2
      // Predicated region
      $region41: #{feature_reconstruction_loss.12} parent=39 // pred_check
        %p3771 = pneg %p106
      $region42: #{feature_reconstruction_loss.12} parent=39 // pred_check_branch
        %3773 = sbr.rel (%p3771) target = $region44
      $region43: #{feature_reconstruction_loss.12} parent=39 // pred_region
        %p3774 = scmp.lt.s32.totalorder %s15, 1
        %s3775 = scalar_select %p3774, %s15, 1
        %s3776 = smul.addr %s3775, 32
        %s3777 = smul.addr %s3776, 8
        %s3778 = scalar_lea.vmem %s3, %s3777
      $region44: #{feature_reconstruction_loss.12} parent=39 // pred_fallthru
        _
    $region40: #{feature_reconstruction_loss.12} parent=5 // pred_fallthru
      _
  $region6: #{feature_reconstruction_loss.12} parent=0 // loop_footer
    %s13 = sadd.s32 1, %s9
  $region7: #{feature_reconstruction_loss.12} parent=0 // loop_footer_branch
    %8 = sbr.rel target = $region3
  $region8: #{feature_reconstruction_loss.12} parent=0 // loop_exit
    _

// kernel: feature_reconstruction_loss.15
$region0: #{feature_reconstruction_loss.15}
  #allocation0 [shape = 'u32[]', space=smem, size = 0x4, offset = 0x4, fixed_abs, tag = 'smem constant byte address 0x4 - core index']
  #allocation1 [shape = 'u32[144,128]{1,0:T(1,128)}', space=vmem, size = 0x12000, scoped, tag = 'internal scratch']
  %s0 = inlined_call_operand.vmem [shape: f32[2,10,10,128], index: 0, kind: input, shape index: {}]
  %s1 = inlined_call_operand.vmem [shape: f32[9,128,128], index: 1, kind: input, shape index: {}]
  %s2 = inlined_call_operand.vmem [shape: f32[1,128], index: 2, kind: input, shape index: {}]
  %s3 = inlined_call_operand.vmem [shape: f32[2,8,8,128], index: 3, kind: output, shape index: {}]
  %s4 = sld [smem:[#allocation0]]
  $region45: #{feature_reconstruction_loss.15} parent=0
    _
  %s6 = ssub.s32 1, %s4
  %s7 = scalar_select 0, %s6, %s4
  loop: start=0, step=1, limit=4
  $region2: #{feature_reconstruction_loss.15} parent=0 // loop_pre_header
    _
  $region3: #{feature_reconstruction_loss.15} parent=0 // loop_header
    %s9 = sphi 0, %s13
    %p10 = scmp.ge.s32.totalorder %s9, 4
    %s19 = sphi 0, %s21
    %s22 = sphi 0, %s19
    %s23 = sphi 0, %s22
    %s39 = sphi 0, %s23
    %s43 = sphi 0, %s43
    %s45 = sphi 0, %s43
    %s46 = sphi 0, %s45
    %s60 = sphi 0, %s46
    %s64 = sphi 0, %s64
    %s66 = sphi 0, %s64
    %s67 = sphi 0, %s66
    %s81 = sphi 0, %s67
    %s87 = sphi 0, %s89
    %s90 = sphi 0, %s87
    %s91 = sphi 0, %s90
    %s107 = sphi 0, %s91
  $region4: #{feature_reconstruction_loss.15} parent=0 // loop_header_branch
    %12 = sbr.rel (%p10) target = $region8
  $region5: #{feature_reconstruction_loss.15} parent=0 // loop_body
    %s14 = ssub.s32 %s9, 1
    %s15 = ssub.s32 %s9, 2
    %s16 = sadd.s32 %s9, 1
    %s17 = ssub.s32 %s9, %s16
    %p18 = scmp.eq.s32.totalorder %s17, 0
    %s20 = sadd.s32 %s19, 1
    %s21 = scalar_select %p18, %s19, %s20
    %p24 = pneg %p18
    %p25 = scmp.eq.s32.totalorder %s9, 1
    %p26 = por %p24, %p25
    %p27 = scmp.ne.s32.totalorder %s19, %s22
    %p28 = scmp.eq.s32.totalorder %s9, 0
    %p29 = por %p27, %p28
    %p30 = scmp.ne.s32.totalorder %s19, %s22
    %p31 = scmp.eq.s32.totalorder %s14, 1
    %p32 = por %p30, %p31
    %p33 = scmp.ne.s32.totalorder %s22, %s23
    %p34 = scmp.eq.s32.totalorder %s14, 0
    %p35 = por %p33, %p34
    %p36 = scmp.ne.s32.totalorder %s22, %s23
    %p37 = scmp.eq.s32.totalorder %s15, 1
    %p38 = por %p36, %p37
    %p40 = scmp.ne.s32.totalorder %s23, %s39
    %p41 = scmp.eq.s32.totalorder %s15, 0
    %p42 = por %p40, %p41
    %s44 = sadd.s32 %s43, 1
    %p47 = scmp.eq.s32.totalorder %s9, 1
    %p48 = scmp.ne.s32.totalorder %s43, %s45
    %p49 = scmp.eq.s32.totalorder %s9, 0
    %p50 = por %p48, %p49
    %p51 = scmp.ne.s32.totalorder %s43, %s45
    %p52 = scmp.eq.s32.totalorder %s14, 1
    %p53 = por %p51, %p52
    %p54 = scmp.ne.s32.totalorder %s45, %s46
    %p55 = scmp.eq.s32.totalorder %s14, 0
    %p56 = por %p54, %p55
    %p57 = scmp.ne.s32.totalorder %s45, %s46
    %p58 = scmp.eq.s32.totalorder %s15, 1
    %p59 = por %p57, %p58
    %p61 = scmp.ne.s32.totalorder %s46, %s60
    %p62 = scmp.eq.s32.totalorder %s15, 0
    %p63 = por %p61, %p62
    %s65 = sadd.s32 %s64, 1
    %p68 = scmp.eq.s32.totalorder %s9, 1
    %p69 = scmp.ne.s32.totalorder %s64, %s66
    %p70 = scmp.eq.s32.totalorder %s9, 0
    %p71 = por %p69, %p70
    %p72 = scmp.ne.s32.totalorder %s64, %s66
    %p73 = scmp.eq.s32.totalorder %s14, 1
    %p74 = por %p72, %p73
    %p75 = scmp.ne.s32.totalorder %s66, %s67
    %p76 = scmp.eq.s32.totalorder %s14, 0
    %p77 = por %p75, %p76
    %p78 = scmp.ne.s32.totalorder %s66, %s67
    %p79 = scmp.eq.s32.totalorder %s15, 1
    %p80 = por %p78, %p79
    %p82 = scmp.ne.s32.totalorder %s67, %s81
    %p83 = scmp.eq.s32.totalorder %s15, 0
    %p84 = por %p82, %p83
    %s85 = ssub.s32 %s9, %s16
    %p86 = scmp.eq.s32.totalorder %s85, 0
    %s88 = sadd.s32 %s87, 1
    %s89 = scalar_select %p86, %s87, %s88
    %p92 = pneg %p86
    %p93 = scmp.eq.s32.totalorder %s9, 1
    %p94 = por %p92, %p93
    %p95 = scmp.ne.s32.totalorder %s87, %s90
    %p96 = scmp.eq.s32.totalorder %s9, 0
    %p97 = por %p95, %p96
    %p98 = scmp.ne.s32.totalorder %s87, %s90
    %p99 = scmp.eq.s32.totalorder %s14, 1
    %p100 = por %p98, %p99
    %p101 = scmp.ne.s32.totalorder %s90, %s91
    %p102 = scmp.eq.s32.totalorder %s14, 0
    %p103 = por %p101, %p102
    %p104 = scmp.ne.s32.totalorder %s90, %s91
    %p105 = scmp.eq.s32.totalorder %s15, 1
    %p106 = por %p104, %p105
    %p108 = scmp.ne.s32.totalorder %s91, %s107
    %p109 = scmp.eq.s32.totalorder %s15, 0
    %p110 = por %p108, %p109
    %p111 = scmp.le.s32.totalorder 1, %s9
    %p112 = scmp.lt.s32.totalorder %s9, 3
    %p113 = pnand %p111, %p112
    %p114 = pneg %p113
    // Predicated region
    $region9: #{feature_reconstruction_loss.15} parent=5 // pred_check
      _
    $region10: #{feature_reconstruction_loss.15} parent=5 // pred_check_branch
      %116 = sbr.rel (%p113) target = $region12
    $region11: #{feature_reconstruction_loss.15} parent=5 // pred_region
      %s117 = ssub.s32 %s9, 1
      // Predicated region
      $region13: #{feature_reconstruction_loss.15} parent=11 // pred_check
        %p118 = pneg %p56
      $region14: #{feature_reconstruction_loss.15} parent=11 // pred_check_branch
        %120 = sbr.rel (%p118) target = $region16
      $region15: #{feature_reconstruction_loss.15} parent=11 // pred_region
        _
      $region16: #{feature_reconstruction_loss.15} parent=11 // pred_fallthru
        _
      // Predicated region
      $region17: #{feature_reconstruction_loss.15} parent=11 // pred_check
        %p121 = pneg %p77
      $region18: #{feature_reconstruction_loss.15} parent=11 // pred_check_branch
        %123 = sbr.rel (%p121) target = $region20
      $region19: #{feature_reconstruction_loss.15} parent=11 // pred_region
        _
      $region20: #{feature_reconstruction_loss.15} parent=11 // pred_fallthru
        _
    $region12: #{feature_reconstruction_loss.15} parent=5 // pred_fallthru
      _
    %p124 = scmp.lt.s32.totalorder %s9, 2
    // Predicated region
    $region21: #{feature_reconstruction_loss.15} parent=5 // pred_check
      %p125 = pneg %p124
    $region22: #{feature_reconstruction_loss.15} parent=5 // pred_check_branch
      %127 = sbr.rel (%p125) target = $region24
    $region23: #{feature_reconstruction_loss.15} parent=5 // pred_region
      // Predicated region
      $region25: #{feature_reconstruction_loss.15} parent=23 // pred_check
        %p128 = pneg %p29
      $region26: #{feature_reconstruction_loss.15} parent=23 // pred_check_branch
        %130 = sbr.rel (%p128) target = $region28
      $region27: #{feature_reconstruction_loss.15} parent=23 // pred_region
        %p131 = scmp.lt.s32.totalorder %s9, 1
        %s132 = scalar_select %p131, %s9, 1
        %s133 = smul.addr %s132, 20
        %s134 = smul.addr %s133, 8
        %s135 = scalar_lea.vmem %s0, %s134
      $region28: #{feature_reconstruction_loss.15} parent=23 // pred_fallthru
        _
    $region24: #{feature_reconstruction_loss.15} parent=5 // pred_fallthru
      _
    %p136 = scmp.le.s32.totalorder 1, %s9
    %p137 = scmp.lt.s32.totalorder %s9, 3
    %p138 = pnand %p136, %p137
    %p139 = pneg %p138
    // Predicated region
    $region29: #{feature_reconstruction_loss.15} parent=5 // pred_check
      _
    $region30: #{feature_reconstruction_loss.15} parent=5 // pred_check_branch
      %141 = sbr.rel (%p138) target = $region32
    $region31: #{feature_reconstruction_loss.15} parent=5 // pred_region
      %s142 = ssub.s32 %s9, 1
      %p143 = scmp.lt.s32.totalorder %s14, 1
      %s144 = scalar_select %p143, %s14, 1
      %s145 = smul.addr %s144, 20
      %s146 = smul.addr %s145, 8
      %s147 = scalar_lea.vmem %s0, %s146
      %p148 = pneg %p35
      %p149 = pneg %p32
      %p150 = pneg %p56
      %p151 = pneg %p53
      %p152 = pneg %p77
      %p153 = pneg %p74
      %p154 = pneg %p103
      %p155 = pneg %p100
      %p156 = scmp.lt.s32.totalorder %s14, 1
      %s157 = scalar_select %p156, %s14, 1
      %s158 = smul.addr %s157, 8
      %s159 = smul.addr %s158, 8
      %s160 = scalar_lea.vmem %s3, %s159
      %p161 = scmp.lt.s32.totalorder %s14, 1
      %s162 = scalar_select %p161, %s14, 1
      %s163 = smul.addr %s162, 20
      %s164 = smul.addr %s163, 8
      %s165 = scalar_lea.vmem %s0, %s164
      %p166 = scmp.lt.s32.totalorder %s14, 1
      %s167 = scalar_select %p166, %s14, 1
      %s168 = smul.addr %s167, 8
      %s169 = smul.addr %s168, 8
      %s170 = scalar_lea.vmem %s3, %s169
      %v171 = vld [vmem:[%s165] sm:$0xff]
      %v172 = vld [vmem:[%s165 + $0x10] sm:$0xff]
      %v173 = vld [vmem:[%s165 + $0x20] sm:$0xff]
      %v174 = vld [vmem:[%s165 + $0x30] sm:$0xff]
      %v175 = vld [vmem:[%s165 + $0x40] sm:$0xff]
      %v176 = vld [vmem:[%s165 + $0x50] sm:$0xff]
      %v177 = vld [vmem:[%s165 + $0x60] sm:$0xff]
      %v178 = vld [vmem:[%s165 + $0x70] sm:$0xff]
      %v179 = vld [vmem:[%s1] sm:$0xff]
      %v180 = vld [vmem:[%s1 + $0x8] sm:$0xff]
      %v181 = vld [vmem:[%s1 + $0x10] sm:$0xff]
      %v182 = vld [vmem:[%s1 + $0x18] sm:$0xff]
      %v183 = vld [vmem:[%s1 + $0x20] sm:$0xff]
      %v184 = vld [vmem:[%s1 + $0x28] sm:$0xff]
      %v185 = vld [vmem:[%s1 + $0x30] sm:$0xff]
      %v186 = vld [vmem:[%s1 + $0x38] sm:$0xff]
      %v187 = vld [vmem:[%s1 + $0x40] sm:$0xff]
      %v188 = vld [vmem:[%s1 + $0x48] sm:$0xff]
      %v189 = vld [vmem:[%s1 + $0x50] sm:$0xff]
      %v190 = vld [vmem:[%s1 + $0x58] sm:$0xff]
      %v191 = vld [vmem:[%s1 + $0x60] sm:$0xff]
      %v192 = vld [vmem:[%s1 + $0x68] sm:$0xff]
      %v193 = vld [vmem:[%s1 + $0x70] sm:$0xff]
      %v194 = vld [vmem:[%s1 + $0x78] sm:$0xff]
      %v195 = vld [vmem:[%s165 + $0x1] sm:$0xff]
      %v196 = vld [vmem:[%s165 + $0x11] sm:$0xff]
      %v197 = vld [vmem:[%s165 + $0x21] sm:$0xff]
      %v198 = vld [vmem:[%s165 + $0x31] sm:$0xff]
      %v199 = vld [vmem:[%s165 + $0x41] sm:$0xff]
      %v200 = vld [vmem:[%s165 + $0x51] sm:$0xff]
      %v201 = vld [vmem:[%s165 + $0x61] sm:$0xff]
      %v202 = vld [vmem:[%s165 + $0x71] sm:$0xff]
      %s203 = scalar_lea.vmem %s1, 128
      %v204 = vld [vmem:[%s203] sm:$0xff]
      %v205 = vld [vmem:[%s203 + $0x8] sm:$0xff]
      %v206 = vld [vmem:[%s203 + $0x10] sm:$0xff]
      %v207 = vld [vmem:[%s203 + $0x18] sm:$0xff]
      %v208 = vld [vmem:[%s203 + $0x20] sm:$0xff]
      %v209 = vld [vmem:[%s203 + $0x28] sm:$0xff]
      %v210 = vld [vmem:[%s203 + $0x30] sm:$0xff]
      %v211 = vld [vmem:[%s203 + $0x38] sm:$0xff]
      %v212 = vld [vmem:[%s203 + $0x40] sm:$0xff]
      %v213 = vld [vmem:[%s203 + $0x48] sm:$0xff]
      %v214 = vld [vmem:[%s203 + $0x50] sm:$0xff]
      %v215 = vld [vmem:[%s203 + $0x58] sm:$0xff]
      %v216 = vld [vmem:[%s203 + $0x60] sm:$0xff]
      %v217 = vld [vmem:[%s203 + $0x68] sm:$0xff]
      %v218 = vld [vmem:[%s203 + $0x70] sm:$0xff]
      %v219 = vld [vmem:[%s203 + $0x78] sm:$0xff]
      %220 = vmatprep.subr.mxu0 0.0
      %221 = vmatpush1.msra.mxu0 %v219
      %222 = vmatprep.subr.mxu0 0.0
      %223 = vmatpush1.msra.mxu0 %v218
      %224 = vmatprep.subr.mxu0 0.0
      %225 = vmatpush1.msra.mxu0 %v217
      %226 = vmatprep.subr.mxu0 0.0
      %227 = vmatpush1.msra.mxu0 %v216
      %228 = vmatprep.subr.mxu0 0.0
      %229 = vmatpush1.msra.mxu0 %v215
      %230 = vmatprep.subr.mxu0 0.0
      %231 = vmatpush1.msra.mxu0 %v214
      %232 = vmatprep.subr.mxu0 0.0
      %233 = vmatpush1.msra.mxu0 %v213
      %234 = vmatprep.subr.mxu0 0.0
      %235 = vmatpush1.msra.mxu0 %v212
      %236 = vmatprep.subr.mxu0 0.0
      %237 = vmatpush1.msra.mxu0 %v211
      %238 = vmatprep.subr.mxu0 0.0
      %239 = vmatpush1.msra.mxu0 %v210
      %240 = vmatprep.subr.mxu0 0.0
      %241 = vmatpush1.msra.mxu0 %v209
      %242 = vmatprep.subr.mxu0 0.0
      %243 = vmatpush1.msra.mxu0 %v208
      %244 = vmatprep.subr.mxu0 0.0
      %245 = vmatpush1.msra.mxu0 %v207
      %246 = vmatprep.subr.mxu0 0.0
      %247 = vmatpush1.msra.mxu0 %v206
      %248 = vmatprep.subr.mxu0 0.0
      %249 = vmatpush1.msra.mxu0 %v205
      %250 = vmatprep.subr.mxu0 0.0
      %251 = vmatpush1.msra.mxu0 %v204
      %252 = vmatprep.subr.mxu0 0.0
      %253 = vmatpush2.msra.mxu0 0.0
      %254 = vmatprep.subr.mxu0 0.0
      %255 = vmatpush2.msra.mxu0 0.0
      %256 = vmatprep.subr.mxu0 0.0
      %257 = vmatpush2.msra.mxu0 0.0
      %258 = vmatprep.subr.mxu0 0.0
      %259 = vmatpush2.msra.mxu0 0.0
      %260 = vmatprep.subr.mxu0 0.0
      %261 = vmatpush2.msra.mxu0 0.0
      %262 = vmatprep.subr.mxu0 0.0
      %263 = vmatpush2.msra.mxu0 0.0
      %264 = vmatprep.subr.mxu0 0.0
      %265 = vmatpush2.msra.mxu0 0.0
      %266 = vmatprep.subr.mxu0 0.0
      %267 = vmatpush2.msra.mxu0 0.0
      %268 = vmatprep.subr.mxu0 0.0
      %269 = vmatpush2.msra.mxu0 0.0
      %270 = vmatprep.subr.mxu0 0.0
      %271 = vmatpush2.msra.mxu0 0.0
      %272 = vmatprep.subr.mxu0 0.0
      %273 = vmatpush2.msra.mxu0 0.0
      %274 = vmatprep.subr.mxu0 0.0
      %275 = vmatpush2.msra.mxu0 0.0
      %276 = vmatprep.subr.mxu0 0.0
      %277 = vmatpush2.msra.mxu0 0.0
      %278 = vmatprep.subr.mxu0 0.0
      %279 = vmatpush2.msra.mxu0 0.0
      %280 = vmatprep.subr.mxu0 0.0
      %281 = vmatpush2.msra.mxu0 0.0
      %282 = vmatprep.subr.mxu0 0.0
      %283 = vmatpush2.msra.mxu0 0.0
      %284 = vmatprep.mubr.f32.mxu0 0.0
      %285 = vmatmul.mubr.f32.gmra.mxu0 %v195
      %v286 = vpop.f32.mrf.mxu0
      %v287 = vadd.f32 0.0, %v286
      %v288 = vpop.f32.mrf.mxu0
      %289 = vmatprep.mubr.f32.mxu0 0.0
      %290 = vmatmul.mubr.f32.gmra.mxu0 %v196
      %v291 = vpop.f32.mrf.mxu0
      %v292 = vadd.f32 0.0, %v291
      %v293 = vpop.f32.mrf.mxu0
      %294 = vmatprep.mubr.f32.mxu0 0.0
      %295 = vmatmul.mubr.f32.gmra.mxu0 %v197
      %v296 = vpop.f32.mrf.mxu0
      %v297 = vadd.f32 0.0, %v296
      %v298 = vpop.f32.mrf.mxu0
      %299 = vmatprep.mubr.f32.mxu0 0.0
      %300 = vmatmul.mubr.f32.gmra.mxu0 %v198
      %v301 = vpop.f32.mrf.mxu0
      %v302 = vadd.f32 0.0, %v301
      %v303 = vpop.f32.mrf.mxu0
      %304 = vmatprep.mubr.f32.mxu0 0.0
      %305 = vmatmul.mubr.f32.gmra.mxu0 %v199
      %v306 = vpop.f32.mrf.mxu0
      %v307 = vadd.f32 0.0, %v306
      %v308 = vpop.f32.mrf.mxu0
      %309 = vmatprep.mubr.f32.mxu0 0.0
      %310 = vmatmul.mubr.f32.gmra.mxu0 %v200
      %v311 = vpop.f32.mrf.mxu0
      %v312 = vadd.f32 0.0, %v311
      %v313 = vpop.f32.mrf.mxu0
      %314 = vmatprep.mubr.f32.mxu0 0.0
      %315 = vmatmul.mubr.f32.gmra.mxu0 %v201
      %v316 = vpop.f32.mrf.mxu0
      %v317 = vadd.f32 0.0, %v316
      %v318 = vpop.f32.mrf.mxu0
      %319 = vmatprep.mubr.f32.mxu0 0.0
      %320 = vmatmul.mubr.f32.gmra.mxu0 %v202
      %v321 = vpop.f32.mrf.mxu0
      %v322 = vadd.f32 0.0, %v321
      %v323 = vpop.f32.mrf.mxu0
      %324 = vdwg.mxu0
      %325 = vmatprep.subr.mxu0 0.0
      %326 = vmatpush1.msra.mxu0 %v194
      %327 = vmatprep.subr.mxu0 0.0
      %328 = vmatpush1.msra.mxu0 %v193
      %329 = vmatprep.subr.mxu0 0.0
      %330 = vmatpush1.msra.mxu0 %v192
      %331 = vmatprep.subr.mxu0 0.0
      %332 = vmatpush1.msra.mxu0 %v191
      %333 = vmatprep.subr.mxu0 0.0
      %334 = vmatpush1.msra.mxu0 %v190
      %335 = vmatprep.subr.mxu0 0.0
      %336 = vmatpush1.msra.mxu0 %v189
      %337 = vmatprep.subr.mxu0 0.0
      %338 = vmatpush1.msra.mxu0 %v188
      %339 = vmatprep.subr.mxu0 0.0
      %340 = vmatpush1.msra.mxu0 %v187
      %341 = vmatprep.subr.mxu0 0.0
      %342 = vmatpush1.msra.mxu0 %v186
      %343 = vmatprep.subr.mxu0 0.0
      %344 = vmatpush1.msra.mxu0 %v185
      %345 = vmatprep.subr.mxu0 0.0
      %346 = vmatpush1.msra.mxu0 %v184
      %347 = vmatprep.subr.mxu0 0.0
      %348 = vmatpush1.msra.mxu0 %v183
      %349 = vmatprep.subr.mxu0 0.0
      %350 = vmatpush1.msra.mxu0 %v182
      %351 = vmatprep.subr.mxu0 0.0
      %352 = vmatpush1.msra.mxu0 %v181
      %353 = vmatprep.subr.mxu0 0.0
      %354 = vmatpush1.msra.mxu0 %v180
      %355 = vmatprep.subr.mxu0 0.0
      %356 = vmatpush1.msra.mxu0 %v179
      %357 = vmatprep.subr.mxu0 0.0
      %358 = vmatpush2.msra.mxu0 0.0
      %359 = vmatprep.subr.mxu0 0.0
      %360 = vmatpush2.msra.mxu0 0.0
      %361 = vmatprep.subr.mxu0 0.0
      %362 = vmatpush2.msra.mxu0 0.0
      %363 = vmatprep.subr.mxu0 0.0
      %364 = vmatpush2.msra.mxu0 0.0
      %365 = vmatprep.subr.mxu0 0.0
      %366 = vmatpush2.msra.mxu0 0.0
      %367 = vmatprep.subr.mxu0 0.0
      %368 = vmatpush2.msra.mxu0 0.0
      %369 = vmatprep.subr.mxu0 0.0
      %370 = vmatpush2.msra.mxu0 0.0
      %371 = vmatprep.subr.mxu0 0.0
      %372 = vmatpush2.msra.mxu0 0.0
      %373 = vmatprep.subr.mxu0 0.0
      %374 = vmatpush2.msra.mxu0 0.0
      %375 = vmatprep.subr.mxu0 0.0
      %376 = vmatpush2.msra.mxu0 0.0
      %377 = vmatprep.subr.mxu0 0.0
      %378 = vmatpush2.msra.mxu0 0.0
      %379 = vmatprep.subr.mxu0 0.0
      %380 = vmatpush2.msra.mxu0 0.0
      %381 = vmatprep.subr.mxu0 0.0
      %382 = vmatpush2.msra.mxu0 0.0
      %383 = vmatprep.subr.mxu0 0.0
      %384 = vmatpush2.msra.mxu0 0.0
      %385 = vmatprep.subr.mxu0 0.0
      %386 = vmatpush2.msra.mxu0 0.0
      %387 = vmatprep.subr.mxu0 0.0
      %388 = vmatpush2.msra.mxu0 0.0
      %389 = vmatprep.mubr.f32.mxu0 0.0
      %390 = vmatmul.mubr.f32.gmra.mxu0 %v171
      %v391 = vpop.f32.mrf.mxu0
      %v392 = vadd.f32 %v287, %v391
      %v393 = vpop.f32.mrf.mxu0
      %394 = vmatprep.mubr.f32.mxu0 0.0
      %395 = vmatmul.mubr.f32.gmra.mxu0 %v172
      %v396 = vpop.f32.mrf.mxu0
      %v397 = vadd.f32 %v292, %v396
      %v398 = vpop.f32.mrf.mxu0
      %399 = vmatprep.mubr.f32.mxu0 0.0
      %400 = vmatmul.mubr.f32.gmra.mxu0 %v173
      %v401 = vpop.f32.mrf.mxu0
      %v402 = vadd.f32 %v297, %v401
      %v403 = vpop.f32.mrf.mxu0
      %404 = vmatprep.mubr.f32.mxu0 0.0
      %405 = vmatmul.mubr.f32.gmra.mxu0 %v174
      %v406 = vpop.f32.mrf.mxu0
      %v407 = vadd.f32 %v302, %v406
      %v408 = vpop.f32.mrf.mxu0
      %409 = vmatprep.mubr.f32.mxu0 0.0
      %410 = vmatmul.mubr.f32.gmra.mxu0 %v175
      %v411 = vpop.f32.mrf.mxu0
      %v412 = vadd.f32 %v307, %v411
      %v413 = vpop.f32.mrf.mxu0
      %414 = vmatprep.mubr.f32.mxu0 0.0
      %415 = vmatmul.mubr.f32.gmra.mxu0 %v176
      %v416 = vpop.f32.mrf.mxu0
      %v417 = vadd.f32 %v312, %v416
      %v418 = vpop.f32.mrf.mxu0
      %419 = vmatprep.mubr.f32.mxu0 0.0
      %420 = vmatmul.mubr.f32.gmra.mxu0 %v177
      %v421 = vpop.f32.mrf.mxu0
      %v422 = vadd.f32 %v317, %v421
      %v423 = vpop.f32.mrf.mxu0
      %424 = vmatprep.mubr.f32.mxu0 0.0
      %425 = vmatmul.mubr.f32.gmra.mxu0 %v178
      %v426 = vpop.f32.mrf.mxu0
      %v427 = vadd.f32 %v322, %v426
      %v428 = vpop.f32.mrf.mxu0
      %429 = vdwg.mxu0
      %v430 = vld [vmem:[%s165 + $0x2] sm:$0xff]
      %v431 = vld [vmem:[%s165 + $0x12] sm:$0xff]
      %v432 = vld [vmem:[%s165 + $0x22] sm:$0xff]
      %v433 = vld [vmem:[%s165 + $0x32] sm:$0xff]
      %v434 = vld [vmem:[%s165 + $0x42] sm:$0xff]
      %v435 = vld [vmem:[%s165 + $0x52] sm:$0xff]
      %v436 = vld [vmem:[%s165 + $0x62] sm:$0xff]
      %v437 = vld [vmem:[%s165 + $0x72] sm:$0xff]
      %s438 = scalar_lea.vmem %s1, 256
      %v439 = vld [vmem:[%s438] sm:$0xff]
      %v440 = vld [vmem:[%s438 + $0x8] sm:$0xff]
      %v441 = vld [vmem:[%s438 + $0x10] sm:$0xff]
      %v442 = vld [vmem:[%s438 + $0x18] sm:$0xff]
      %v443 = vld [vmem:[%s438 + $0x20] sm:$0xff]
      %v444 = vld [vmem:[%s438 + $0x28] sm:$0xff]
      %v445 = vld [vmem:[%s438 + $0x30] sm:$0xff]
      %v446 = vld [vmem:[%s438 + $0x38] sm:$0xff]
      %v447 = vld [vmem:[%s438 + $0x40] sm:$0xff]
      %v448 = vld [vmem:[%s438 + $0x48] sm:$0xff]
      %v449 = vld [vmem:[%s438 + $0x50] sm:$0xff]
      %v450 = vld [vmem:[%s438 + $0x58] sm:$0xff]
      %v451 = vld [vmem:[%s438 + $0x60] sm:$0xff]
      %v452 = vld [vmem:[%s438 + $0x68] sm:$0xff]
      %v453 = vld [vmem:[%s438 + $0x70] sm:$0xff]
      %v454 = vld [vmem:[%s438 + $0x78] sm:$0xff]
      %455 = vmatprep.subr.mxu0 0.0
      %456 = vmatpush1.msra.mxu0 %v454
      %457 = vmatprep.subr.mxu0 0.0
      %458 = vmatpush1.msra.mxu0 %v453
      %459 = vmatprep.subr.mxu0 0.0
      %460 = vmatpush1.msra.mxu0 %v452
      %461 = vmatprep.subr.mxu0 0.0
      %462 = vmatpush1.msra.mxu0 %v451
      %463 = vmatprep.subr.mxu0 0.0
      %464 = vmatpush1.msra.mxu0 %v450
      %465 = vmatprep.subr.mxu0 0.0
      %466 = vmatpush1.msra.mxu0 %v449
      %467 = vmatprep.subr.mxu0 0.0
      %468 = vmatpush1.msra.mxu0 %v448
      %469 = vmatprep.subr.mxu0 0.0
      %470 = vmatpush1.msra.mxu0 %v447
      %471 = vmatprep.subr.mxu0 0.0
      %472 = vmatpush1.msra.mxu0 %v446
      %473 = vmatprep.subr.mxu0 0.0
      %474 = vmatpush1.msra.mxu0 %v445
      %475 = vmatprep.subr.mxu0 0.0
      %476 = vmatpush1.msra.mxu0 %v444
      %477 = vmatprep.subr.mxu0 0.0
      %478 = vmatpush1.msra.mxu0 %v443
      %479 = vmatprep.subr.mxu0 0.0
      %480 = vmatpush1.msra.mxu0 %v442
      %481 = vmatprep.subr.mxu0 0.0
      %482 = vmatpush1.msra.mxu0 %v441
      %483 = vmatprep.subr.mxu0 0.0
      %484 = vmatpush1.msra.mxu0 %v440
      %485 = vmatprep.subr.mxu0 0.0
      %486 = vmatpush1.msra.mxu0 %v439
      %487 = vmatprep.subr.mxu0 0.0
      %488 = vmatpush2.msra.mxu0 0.0
      %489 = vmatprep.subr.mxu0 0.0
      %490 = vmatpush2.msra.mxu0 0.0
      %491 = vmatprep.subr.mxu0 0.0
      %492 = vmatpush2.msra.mxu0 0.0
      %493 = vmatprep.subr.mxu0 0.0
      %494 = vmatpush2.msra.mxu0 0.0
      %495 = vmatprep.subr.mxu0 0.0
      %496 = vmatpush2.msra.mxu0 0.0
      %497 = vmatprep.subr.mxu0 0.0
      %498 = vmatpush2.msra.mxu0 0.0
      %499 = vmatprep.subr.mxu0 0.0
      %500 = vmatpush2.msra.mxu0 0.0
      %501 = vmatprep.subr.mxu0 0.0
      %502 = vmatpush2.msra.mxu0 0.0
      %503 = vmatprep.subr.mxu0 0.0
      %504 = vmatpush2.msra.mxu0 0.0
      %505 = vmatprep.subr.mxu0 0.0
      %506 = vmatpush2.msra.mxu0 0.0
      %507 = vmatprep.subr.mxu0 0.0
      %508 = vmatpush2.msra.mxu0 0.0
      %509 = vmatprep.subr.mxu0 0.0
      %510 = vmatpush2.msra.mxu0 0.0
      %511 = vmatprep.subr.mxu0 0.0
      %512 = vmatpush2.msra.mxu0 0.0
      %513 = vmatprep.subr.mxu0 0.0
      %514 = vmatpush2.msra.mxu0 0.0
      %515 = vmatprep.subr.mxu0 0.0
      %516 = vmatpush2.msra.mxu0 0.0
      %517 = vmatprep.subr.mxu0 0.0
      %518 = vmatpush2.msra.mxu0 0.0
      %519 = vmatprep.mubr.f32.mxu0 0.0
      %520 = vmatmul.mubr.f32.gmra.mxu0 %v430
      %v521 = vpop.f32.mrf.mxu0
      %v522 = vadd.f32 0.0, %v521
      %v523 = vpop.f32.mrf.mxu0
      %524 = vmatprep.mubr.f32.mxu0 0.0
      %525 = vmatmul.mubr.f32.gmra.mxu0 %v431
      %v526 = vpop.f32.mrf.mxu0
      %v527 = vadd.f32 0.0, %v526
      %v528 = vpop.f32.mrf.mxu0
      %529 = vmatprep.mubr.f32.mxu0 0.0
      %530 = vmatmul.mubr.f32.gmra.mxu0 %v432
      %v531 = vpop.f32.mrf.mxu0
      %v532 = vadd.f32 0.0, %v531
      %v533 = vpop.f32.mrf.mxu0
      %534 = vmatprep.mubr.f32.mxu0 0.0
      %535 = vmatmul.mubr.f32.gmra.mxu0 %v433
      %v536 = vpop.f32.mrf.mxu0
      %v537 = vadd.f32 0.0, %v536
      %v538 = vpop.f32.mrf.mxu0
      %539 = vmatprep.mubr.f32.mxu0 0.0
      %540 = vmatmul.mubr.f32.gmra.mxu0 %v434
      %v541 = vpop.f32.mrf.mxu0
      %v542 = vadd.f32 0.0, %v541
      %v543 = vpop.f32.mrf.mxu0
      %544 = vmatprep.mubr.f32.mxu0 0.0
      %545 = vmatmul.mubr.f32.gmra.mxu0 %v435
      %v546 = vpop.f32.mrf.mxu0
      %v547 = vadd.f32 0.0, %v546
      %v548 = vpop.f32.mrf.mxu0
      %549 = vmatprep.mubr.f32.mxu0 0.0
      %550 = vmatmul.mubr.f32.gmra.mxu0 %v436
      %v551 = vpop.f32.mrf.mxu0
      %v552 = vadd.f32 0.0, %v551
      %v553 = vpop.f32.mrf.mxu0
      %554 = vmatprep.mubr.f32.mxu0 0.0
      %555 = vmatmul.mubr.f32.gmra.mxu0 %v437
      %v556 = vpop.f32.mrf.mxu0
      %v557 = vadd.f32 0.0, %v556
      %v558 = vpop.f32.mrf.mxu0
      %559 = vdwg.mxu0
      %v560 = vadd.f32 %v392, %v522
      %v561 = vadd.f32 %v397, %v527
      %v562 = vadd.f32 %v402, %v532
      %v563 = vadd.f32 %v407, %v537
      %v564 = vadd.f32 %v412, %v542
      %v565 = vadd.f32 %v417, %v547
      %v566 = vadd.f32 %v422, %v552
      %v567 = vadd.f32 %v427, %v557
      %s568 = scalar_lea.vmem %s165, 16
      %v569 = vld [vmem:[%s568] sm:$0xff]
      %v570 = vld [vmem:[%s568 + $0x10] sm:$0xff]
      %v571 = vld [vmem:[%s568 + $0x20] sm:$0xff]
      %v572 = vld [vmem:[%s568 + $0x30] sm:$0xff]
      %v573 = vld [vmem:[%s568 + $0x40] sm:$0xff]
      %v574 = vld [vmem:[%s568 + $0x50] sm:$0xff]
      %v575 = vld [vmem:[%s568 + $0x60] sm:$0xff]
      %v576 = vld [vmem:[%s568 + $0x70] sm:$0xff]
      %s577 = scalar_lea.vmem %s1, 384
      %v578 = vld [vmem:[%s577] sm:$0xff]
      %v579 = vld [vmem:[%s577 + $0x8] sm:$0xff]
      %v580 = vld [vmem:[%s577 + $0x10] sm:$0xff]
      %v581 = vld [vmem:[%s577 + $0x18] sm:$0xff]
      %v582 = vld [vmem:[%s577 + $0x20] sm:$0xff]
      %v583 = vld [vmem:[%s577 + $0x28] sm:$0xff]
      %v584 = vld [vmem:[%s577 + $0x30] sm:$0xff]
      %v585 = vld [vmem:[%s577 + $0x38] sm:$0xff]
      %v586 = vld [vmem:[%s577 + $0x40] sm:$0xff]
      %v587 = vld [vmem:[%s577 + $0x48] sm:$0xff]
      %v588 = vld [vmem:[%s577 + $0x50] sm:$0xff]
      %v589 = vld [vmem:[%s577 + $0x58] sm:$0xff]
      %v590 = vld [vmem:[%s577 + $0x60] sm:$0xff]
      %v591 = vld [vmem:[%s577 + $0x68] sm:$0xff]
      %v592 = vld [vmem:[%s577 + $0x70] sm:$0xff]
      %v593 = vld [vmem:[%s577 + $0x78] sm:$0xff]
      %594 = vmatprep.subr.mxu0 0.0
      %595 = vmatpush1.msra.mxu0 %v593
      %596 = vmatprep.subr.mxu0 0.0
      %597 = vmatpush1.msra.mxu0 %v592
      %598 = vmatprep.subr.mxu0 0.0
      %599 = vmatpush1.msra.mxu0 %v591
      %600 = vmatprep.subr.mxu0 0.0
      %601 = vmatpush1.msra.mxu0 %v590
      %602 = vmatprep.subr.mxu0 0.0
      %603 = vmatpush1.msra.mxu0 %v589
      %604 = vmatprep.subr.mxu0 0.0
      %605 = vmatpush1.msra.mxu0 %v588
      %606 = vmatprep.subr.mxu0 0.0
      %607 = vmatpush1.msra.mxu0 %v587
      %608 = vmatprep.subr.mxu0 0.0
      %609 = vmatpush1.msra.mxu0 %v586
      %610 = vmatprep.subr.mxu0 0.0
      %611 = vmatpush1.msra.mxu0 %v585
      %612 = vmatprep.subr.mxu0 0.0
      %613 = vmatpush1.msra.mxu0 %v584
      %614 = vmatprep.subr.mxu0 0.0
      %615 = vmatpush1.msra.mxu0 %v583
      %616 = vmatprep.subr.mxu0 0.0
      %617 = vmatpush1.msra.mxu0 %v582
      %618 = vmatprep.subr.mxu0 0.0
      %619 = vmatpush1.msra.mxu0 %v581
      %620 = vmatprep.subr.mxu0 0.0
      %621 = vmatpush1.msra.mxu0 %v580
      %622 = vmatprep.subr.mxu0 0.0
      %623 = vmatpush1.msra.mxu0 %v579
      %624 = vmatprep.subr.mxu0 0.0
      %625 = vmatpush1.msra.mxu0 %v578
      %626 = vmatprep.subr.mxu0 0.0
      %627 = vmatpush2.msra.mxu0 0.0
      %628 = vmatprep.subr.mxu0 0.0
      %629 = vmatpush2.msra.mxu0 0.0
      %630 = vmatprep.subr.mxu0 0.0
      %631 = vmatpush2.msra.mxu0 0.0
      %632 = vmatprep.subr.mxu0 0.0
      %633 = vmatpush2.msra.mxu0 0.0
      %634 = vmatprep.subr.mxu0 0.0
      %635 = vmatpush2.msra.mxu0 0.0
      %636 = vmatprep.subr.mxu0 0.0
      %637 = vmatpush2.msra.mxu0 0.0
      %638 = vmatprep.subr.mxu0 0.0
      %639 = vmatpush2.msra.mxu0 0.0
      %640 = vmatprep.subr.mxu0 0.0
      %641 = vmatpush2.msra.mxu0 0.0
      %642 = vmatprep.subr.mxu0 0.0
      %643 = vmatpush2.msra.mxu0 0.0
      %644 = vmatprep.subr.mxu0 0.0
      %645 = vmatpush2.msra.mxu0 0.0
      %646 = vmatprep.subr.mxu0 0.0
      %647 = vmatpush2.msra.mxu0 0.0
      %648 = vmatprep.subr.mxu0 0.0
      %649 = vmatpush2.msra.mxu0 0.0
      %650 = vmatprep.subr.mxu0 0.0
      %651 = vmatpush2.msra.mxu0 0.0
      %652 = vmatprep.subr.mxu0 0.0
      %653 = vmatpush2.msra.mxu0 0.0
      %654 = vmatprep.subr.mxu0 0.0
      %655 = vmatpush2.msra.mxu0 0.0
      %656 = vmatprep.subr.mxu0 0.0
      %657 = vmatpush2.msra.mxu0 0.0
      %658 = vmatprep.mubr.f32.mxu0 0.0
      %659 = vmatmul.mubr.f32.gmra.mxu0 %v569
      %v660 = vpop.f32.mrf.mxu0
      %v661 = vadd.f32 0.0, %v660
      %v662 = vpop.f32.mrf.mxu0
      %663 = vmatprep.mubr.f32.mxu0 0.0
      %664 = vmatmul.mubr.f32.gmra.mxu0 %v570
      %v665 = vpop.f32.mrf.mxu0
      %v666 = vadd.f32 0.0, %v665
      %v667 = vpop.f32.mrf.mxu0
      %668 = vmatprep.mubr.f32.mxu0 0.0
      %669 = vmatmul.mubr.f32.gmra.mxu0 %v571
      %v670 = vpop.f32.mrf.mxu0
      %v671 = vadd.f32 0.0, %v670
      %v672 = vpop.f32.mrf.mxu0
      %673 = vmatprep.mubr.f32.mxu0 0.0
      %674 = vmatmul.mubr.f32.gmra.mxu0 %v572
      %v675 = vpop.f32.mrf.mxu0
      %v676 = vadd.f32 0.0, %v675
      %v677 = vpop.f32.mrf.mxu0
      %678 = vmatprep.mubr.f32.mxu0 0.0
      %679 = vmatmul.mubr.f32.gmra.mxu0 %v573
      %v680 = vpop.f32.mrf.mxu0
      %v681 = vadd.f32 0.0, %v680
      %v682 = vpop.f32.mrf.mxu0
      %683 = vmatprep.mubr.f32.mxu0 0.0
      %684 = vmatmul.mubr.f32.gmra.mxu0 %v574
      %v685 = vpop.f32.mrf.mxu0
      %v686 = vadd.f32 0.0, %v685
      %v687 = vpop.f32.mrf.mxu0
      %688 = vmatprep.mubr.f32.mxu0 0.0
      %689 = vmatmul.mubr.f32.gmra.mxu0 %v575
      %v690 = vpop.f32.mrf.mxu0
      %v691 = vadd.f32 0.0, %v690
      %v692 = vpop.f32.mrf.mxu0
      %693 = vmatprep.mubr.f32.mxu0 0.0
      %694 = vmatmul.mubr.f32.gmra.mxu0 %v576
      %v695 = vpop.f32.mrf.mxu0
      %v696 = vadd.f32 0.0, %v695
      %v697 = vpop.f32.mrf.mxu0
      %698 = vdwg.mxu0
      %v699 = vadd.f32 %v560, %v661
      %v700 = vadd.f32 %v561, %v666
      %v701 = vadd.f32 %v562, %v671
      %v702 = vadd.f32 %v563, %v676
      %v703 = vadd.f32 %v564, %v681
      %v704 = vadd.f32 %v565, %v686
      %v705 = vadd.f32 %v566, %v691
      %v706 = vadd.f32 %v567, %v696
      %v707 = vld [vmem:[%s568 + $0x1] sm:$0xff]
      %v708 = vld [vmem:[%s568 + $0x11] sm:$0xff]
      %v709 = vld [vmem:[%s568 + $0x21] sm:$0xff]
      %v710 = vld [vmem:[%s568 + $0x31] sm:$0xff]
      %v711 = vld [vmem:[%s568 + $0x41] sm:$0xff]
      %v712 = vld [vmem:[%s568 + $0x51] sm:$0xff]
      %v713 = vld [vmem:[%s568 + $0x61] sm:$0xff]
      %v714 = vld [vmem:[%s568 + $0x71] sm:$0xff]
      %s715 = scalar_lea.vmem %s1, 512
      %v716 = vld [vmem:[%s715] sm:$0xff]
      %v717 = vld [vmem:[%s715 + $0x8] sm:$0xff]
      %v718 = vld [vmem:[%s715 + $0x10] sm:$0xff]
      %v719 = vld [vmem:[%s715 + $0x18] sm:$0xff]
      %v720 = vld [vmem:[%s715 + $0x20] sm:$0xff]
      %v721 = vld [vmem:[%s715 + $0x28] sm:$0xff]
      %v722 = vld [vmem:[%s715 + $0x30] sm:$0xff]
      %v723 = vld [vmem:[%s715 + $0x38] sm:$0xff]
      %v724 = vld [vmem:[%s715 + $0x40] sm:$0xff]
      %v725 = vld [vmem:[%s715 + $0x48] sm:$0xff]
      %v726 = vld [vmem:[%s715 + $0x50] sm:$0xff]
      %v727 = vld [vmem:[%s715 + $0x58] sm:$0xff]
      %v728 = vld [vmem:[%s715 + $0x60] sm:$0xff]
      %v729 = vld [vmem:[%s715 + $0x68] sm:$0xff]
      %v730 = vld [vmem:[%s715 + $0x70] sm:$0xff]
      %v731 = vld [vmem:[%s715 + $0x78] sm:$0xff]
      %732 = vmatprep.subr.mxu0 0.0
      %733 = vmatpush1.msra.mxu0 %v731
      %734 = vmatprep.subr.mxu0 0.0
      %735 = vmatpush1.msra.mxu0 %v730
      %736 = vmatprep.subr.mxu0 0.0
      %737 = vmatpush1.msra.mxu0 %v729
      %738 = vmatprep.subr.mxu0 0.0
      %739 = vmatpush1.msra.mxu0 %v728
      %740 = vmatprep.subr.mxu0 0.0
      %741 = vmatpush1.msra.mxu0 %v727
      %742 = vmatprep.subr.mxu0 0.0
      %743 = vmatpush1.msra.mxu0 %v726
      %744 = vmatprep.subr.mxu0 0.0
      %745 = vmatpush1.msra.mxu0 %v725
      %746 = vmatprep.subr.mxu0 0.0
      %747 = vmatpush1.msra.mxu0 %v724
      %748 = vmatprep.subr.mxu0 0.0
      %749 = vmatpush1.msra.mxu0 %v723
      %750 = vmatprep.subr.mxu0 0.0
      %751 = vmatpush1.msra.mxu0 %v722
      %752 = vmatprep.subr.mxu0 0.0
      %753 = vmatpush1.msra.mxu0 %v721
      %754 = vmatprep.subr.mxu0 0.0
      %755 = vmatpush1.msra.mxu0 %v720
      %756 = vmatprep.subr.mxu0 0.0
      %757 = vmatpush1.msra.mxu0 %v719
      %758 = vmatprep.subr.mxu0 0.0
      %759 = vmatpush1.msra.mxu0 %v718
      %760 = vmatprep.subr.mxu0 0.0
      %761 = vmatpush1.msra.mxu0 %v717
      %762 = vmatprep.subr.mxu0 0.0
      %763 = vmatpush1.msra.mxu0 %v716
      %764 = vmatprep.subr.mxu0 0.0
      %765 = vmatpush2.msra.mxu0 0.0
      %766 = vmatprep.subr.mxu0 0.0
      %767 = vmatpush2.msra.mxu0 0.0
      %768 = vmatprep.subr.mxu0 0.0
      %769 = vmatpush2.msra.mxu0 0.0
      %770 = vmatprep.subr.mxu0 0.0
      %771 = vmatpush2.msra.mxu0 0.0
      %772 = vmatprep.subr.mxu0 0.0
      %773 = vmatpush2.msra.mxu0 0.0
      %774 = vmatprep.subr.mxu0 0.0
      %775 = vmatpush2.msra.mxu0 0.0
      %776 = vmatprep.subr.mxu0 0.0
      %777 = vmatpush2.msra.mxu0 0.0
      %778 = vmatprep.subr.mxu0 0.0
      %779 = vmatpush2.msra.mxu0 0.0
      %780 = vmatprep.subr.mxu0 0.0
      %781 = vmatpush2.msra.mxu0 0.0
      %782 = vmatprep.subr.mxu0 0.0
      %783 = vmatpush2.msra.mxu0 0.0
      %784 = vmatprep.subr.mxu0 0.0
      %785 = vmatpush2.msra.mxu0 0.0
      %786 = vmatprep.subr.mxu0 0.0
      %787 = vmatpush2.msra.mxu0 0.0
      %788 = vmatprep.subr.mxu0 0.0
      %789 = vmatpush2.msra.mxu0 0.0
      %790 = vmatprep.subr.mxu0 0.0
      %791 = vmatpush2.msra.mxu0 0.0
      %792 = vmatprep.subr.mxu0 0.0
      %793 = vmatpush2.msra.mxu0 0.0
      %794 = vmatprep.subr.mxu0 0.0
      %795 = vmatpush2.msra.mxu0 0.0
      %796 = vmatprep.mubr.f32.mxu0 0.0
      %797 = vmatmul.mubr.f32.gmra.mxu0 %v707
      %v798 = vpop.f32.mrf.mxu0
      %v799 = vadd.f32 0.0, %v798
      %v800 = vpop.f32.mrf.mxu0
      %801 = vmatprep.mubr.f32.mxu0 0.0
      %802 = vmatmul.mubr.f32.gmra.mxu0 %v708
      %v803 = vpop.f32.mrf.mxu0
      %v804 = vadd.f32 0.0, %v803
      %v805 = vpop.f32.mrf.mxu0
      %806 = vmatprep.mubr.f32.mxu0 0.0
      %807 = vmatmul.mubr.f32.gmra.mxu0 %v709
      %v808 = vpop.f32.mrf.mxu0
      %v809 = vadd.f32 0.0, %v808
      %v810 = vpop.f32.mrf.mxu0
      %811 = vmatprep.mubr.f32.mxu0 0.0
      %812 = vmatmul.mubr.f32.gmra.mxu0 %v710
      %v813 = vpop.f32.mrf.mxu0
      %v814 = vadd.f32 0.0, %v813
      %v815 = vpop.f32.mrf.mxu0
      %816 = vmatprep.mubr.f32.mxu0 0.0
      %817 = vmatmul.mubr.f32.gmra.mxu0 %v711
      %v818 = vpop.f32.mrf.mxu0
      %v819 = vadd.f32 0.0, %v818
      %v820 = vpop.f32.mrf.mxu0
      %821 = vmatprep.mubr.f32.mxu0 0.0
      %822 = vmatmul.mubr.f32.gmra.mxu0 %v712
      %v823 = vpop.f32.mrf.mxu0
      %v824 = vadd.f32 0.0, %v823
      %v825 = vpop.f32.mrf.mxu0
      %826 = vmatprep.mubr.f32.mxu0 0.0
      %827 = vmatmul.mubr.f32.gmra.mxu0 %v713
      %v828 = vpop.f32.mrf.mxu0
      %v829 = vadd.f32 0.0, %v828
      %v830 = vpop.f32.mrf.mxu0
      %831 = vmatprep.mubr.f32.mxu0 0.0
      %832 = vmatmul.mubr.f32.gmra.mxu0 %v714
      %v833 = vpop.f32.mrf.mxu0
      %v834 = vadd.f32 0.0, %v833
      %v835 = vpop.f32.mrf.mxu0
      %836 = vdwg.mxu0
      %v837 = vadd.f32 %v699, %v799
      %v838 = vadd.f32 %v700, %v804
      %v839 = vadd.f32 %v701, %v809
      %v840 = vadd.f32 %v702, %v814
      %v841 = vadd.f32 %v703, %v819
      %v842 = vadd.f32 %v704, %v824
      %v843 = vadd.f32 %v705, %v829
      %v844 = vadd.f32 %v706, %v834
      %v845 = vld [vmem:[%s568 + $0x2] sm:$0xff]
      %v846 = vld [vmem:[%s568 + $0x12] sm:$0xff]
      %v847 = vld [vmem:[%s568 + $0x22] sm:$0xff]
      %v848 = vld [vmem:[%s568 + $0x32] sm:$0xff]
      %v849 = vld [vmem:[%s568 + $0x42] sm:$0xff]
      %v850 = vld [vmem:[%s568 + $0x52] sm:$0xff]
      %v851 = vld [vmem:[%s568 + $0x62] sm:$0xff]
      %v852 = vld [vmem:[%s568 + $0x72] sm:$0xff]
      %s853 = scalar_lea.vmem %s1, 640
      %v854 = vld [vmem:[%s853] sm:$0xff]
      %v855 = vld [vmem:[%s853 + $0x8] sm:$0xff]
      %v856 = vld [vmem:[%s853 + $0x10] sm:$0xff]
      %v857 = vld [vmem:[%s853 + $0x18] sm:$0xff]
      %v858 = vld [vmem:[%s853 + $0x20] sm:$0xff]
      %v859 = vld [vmem:[%s853 + $0x28] sm:$0xff]
      %v860 = vld [vmem:[%s853 + $0x30] sm:$0xff]
      %v861 = vld [vmem:[%s853 + $0x38] sm:$0xff]
      %v862 = vld [vmem:[%s853 + $0x40] sm:$0xff]
      %v863 = vld [vmem:[%s853 + $0x48] sm:$0xff]
      %v864 = vld [vmem:[%s853 + $0x50] sm:$0xff]
      %v865 = vld [vmem:[%s853 + $0x58] sm:$0xff]
      %v866 = vld [vmem:[%s853 + $0x60] sm:$0xff]
      %v867 = vld [vmem:[%s853 + $0x68] sm:$0xff]
      %v868 = vld [vmem:[%s853 + $0x70] sm:$0xff]
      %v869 = vld [vmem:[%s853 + $0x78] sm:$0xff]
      %870 = vmatprep.subr.mxu0 0.0
      %871 = vmatpush1.msra.mxu0 %v869
      %872 = vmatprep.subr.mxu0 0.0
      %873 = vmatpush1.msra.mxu0 %v868
      %874 = vmatprep.subr.mxu0 0.0
      %875 = vmatpush1.msra.mxu0 %v867
      %876 = vmatprep.subr.mxu0 0.0
      %877 = vmatpush1.msra.mxu0 %v866
      %878 = vmatprep.subr.mxu0 0.0
      %879 = vmatpush1.msra.mxu0 %v865
      %880 = vmatprep.subr.mxu0 0.0
      %881 = vmatpush1.msra.mxu0 %v864
      %882 = vmatprep.subr.mxu0 0.0
      %883 = vmatpush1.msra.mxu0 %v863
      %884 = vmatprep.subr.mxu0 0.0
      %885 = vmatpush1.msra.mxu0 %v862
      %886 = vmatprep.subr.mxu0 0.0
      %887 = vmatpush1.msra.mxu0 %v861
      %888 = vmatprep.subr.mxu0 0.0
      %889 = vmatpush1.msra.mxu0 %v860
      %890 = vmatprep.subr.mxu0 0.0
      %891 = vmatpush1.msra.mxu0 %v859
      %892 = vmatprep.subr.mxu0 0.0
      %893 = vmatpush1.msra.mxu0 %v858
      %894 = vmatprep.subr.mxu0 0.0
      %895 = vmatpush1.msra.mxu0 %v857
      %896 = vmatprep.subr.mxu0 0.0
      %897 = vmatpush1.msra.mxu0 %v856
      %898 = vmatprep.subr.mxu0 0.0
      %899 = vmatpush1.msra.mxu0 %v855
      %900 = vmatprep.subr.mxu0 0.0
      %901 = vmatpush1.msra.mxu0 %v854
      %902 = vmatprep.subr.mxu0 0.0
      %903 = vmatpush2.msra.mxu0 0.0
      %904 = vmatprep.subr.mxu0 0.0
      %905 = vmatpush2.msra.mxu0 0.0
      %906 = vmatprep.subr.mxu0 0.0
      %907 = vmatpush2.msra.mxu0 0.0
      %908 = vmatprep.subr.mxu0 0.0
      %909 = vmatpush2.msra.mxu0 0.0
      %910 = vmatprep.subr.mxu0 0.0
      %911 = vmatpush2.msra.mxu0 0.0
      %912 = vmatprep.subr.mxu0 0.0
      %913 = vmatpush2.msra.mxu0 0.0
      %914 = vmatprep.subr.mxu0 0.0
      %915 = vmatpush2.msra.mxu0 0.0
      %916 = vmatprep.subr.mxu0 0.0
      %917 = vmatpush2.msra.mxu0 0.0
      %918 = vmatprep.subr.mxu0 0.0
      %919 = vmatpush2.msra.mxu0 0.0
      %920 = vmatprep.subr.mxu0 0.0
      %921 = vmatpush2.msra.mxu0 0.0
      %922 = vmatprep.subr.mxu0 0.0
      %923 = vmatpush2.msra.mxu0 0.0
      %924 = vmatprep.subr.mxu0 0.0
      %925 = vmatpush2.msra.mxu0 0.0
      %926 = vmatprep.subr.mxu0 0.0
      %927 = vmatpush2.msra.mxu0 0.0
      %928 = vmatprep.subr.mxu0 0.0
      %929 = vmatpush2.msra.mxu0 0.0
      %930 = vmatprep.subr.mxu0 0.0
      %931 = vmatpush2.msra.mxu0 0.0
      %932 = vmatprep.subr.mxu0 0.0
      %933 = vmatpush2.msra.mxu0 0.0
      %934 = vmatprep.mubr.f32.mxu0 0.0
      %935 = vmatmul.mubr.f32.gmra.mxu0 %v845
      %v936 = vpop.f32.mrf.mxu0
      %v937 = vadd.f32 0.0, %v936
      %v938 = vpop.f32.mrf.mxu0
      %939 = vmatprep.mubr.f32.mxu0 0.0
      %940 = vmatmul.mubr.f32.gmra.mxu0 %v846
      %v941 = vpop.f32.mrf.mxu0
      %v942 = vadd.f32 0.0, %v941
      %v943 = vpop.f32.mrf.mxu0
      %944 = vmatprep.mubr.f32.mxu0 0.0
      %945 = vmatmul.mubr.f32.gmra.mxu0 %v847
      %v946 = vpop.f32.mrf.mxu0
      %v947 = vadd.f32 0.0, %v946
      %v948 = vpop.f32.mrf.mxu0
      %949 = vmatprep.mubr.f32.mxu0 0.0
      %950 = vmatmul.mubr.f32.gmra.mxu0 %v848
      %v951 = vpop.f32.mrf.mxu0
      %v952 = vadd.f32 0.0, %v951
      %v953 = vpop.f32.mrf.mxu0
      %954 = vmatprep.mubr.f32.mxu0 0.0
      %955 = vmatmul.mubr.f32.gmra.mxu0 %v849
      %v956 = vpop.f32.mrf.mxu0
      %v957 = vadd.f32 0.0, %v956
      %v958 = vpop.f32.mrf.mxu0
      %959 = vmatprep.mubr.f32.mxu0 0.0
      %960 = vmatmul.mubr.f32.gmra.mxu0 %v850
      %v961 = vpop.f32.mrf.mxu0
      %v962 = vadd.f32 0.0, %v961
      %v963 = vpop.f32.mrf.mxu0
      %964 = vmatprep.mubr.f32.mxu0 0.0
      %965 = vmatmul.mubr.f32.gmra.mxu0 %v851
      %v966 = vpop.f32.mrf.mxu0
      %v967 = vadd.f32 0.0, %v966
      %v968 = vpop.f32.mrf.mxu0
      %969 = vmatprep.mubr.f32.mxu0 0.0
      %970 = vmatmul.mubr.f32.gmra.mxu0 %v852
      %v971 = vpop.f32.mrf.mxu0
      %v972 = vadd.f32 0.0, %v971
      %v973 = vpop.f32.mrf.mxu0
      %974 = vdwg.mxu0
      %v975 = vadd.f32 %v837, %v937
      %v976 = vadd.f32 %v838, %v942
      %v977 = vadd.f32 %v839, %v947
      %v978 = vadd.f32 %v840, %v952
      %v979 = vadd.f32 %v841, %v957
      %v980 = vadd.f32 %v842, %v962
      %v981 = vadd.f32 %v843, %v967
      %v982 = vadd.f32 %v844, %v972
      %s983 = scalar_lea.vmem %s165, 32
      %v984 = vld [vmem:[%s983] sm:$0xff]
      %v985 = vld [vmem:[%s983 + $0x10] sm:$0xff]
      %v986 = vld [vmem:[%s983 + $0x20] sm:$0xff]
      %v987 = vld [vmem:[%s983 + $0x30] sm:$0xff]
      %v988 = vld [vmem:[%s983 + $0x40] sm:$0xff]
      %v989 = vld [vmem:[%s983 + $0x50] sm:$0xff]
      %v990 = vld [vmem:[%s983 + $0x60] sm:$0xff]
      %v991 = vld [vmem:[%s983 + $0x70] sm:$0xff]
      %s992 = scalar_lea.vmem %s1, 768
      %v993 = vld [vmem:[%s992] sm:$0xff]
      %v994 = vld [vmem:[%s992 + $0x8] sm:$0xff]
      %v995 = vld [vmem:[%s992 + $0x10] sm:$0xff]
      %v996 = vld [vmem:[%s992 + $0x18] sm:$0xff]
      %v997 = vld [vmem:[%s992 + $0x20] sm:$0xff]
      %v998 = vld [vmem:[%s992 + $0x28] sm:$0xff]
      %v999 = vld [vmem:[%s992 + $0x30] sm:$0xff]
      %v1000 = vld [vmem:[%s992 + $0x38] sm:$0xff]
      %v1001 = vld [vmem:[%s992 + $0x40] sm:$0xff]
      %v1002 = vld [vmem:[%s992 + $0x48] sm:$0xff]
      %v1003 = vld [vmem:[%s992 + $0x50] sm:$0xff]
      %v1004 = vld [vmem:[%s992 + $0x58] sm:$0xff]
      %v1005 = vld [vmem:[%s992 + $0x60] sm:$0xff]
      %v1006 = vld [vmem:[%s992 + $0x68] sm:$0xff]
      %v1007 = vld [vmem:[%s992 + $0x70] sm:$0xff]
      %v1008 = vld [vmem:[%s992 + $0x78] sm:$0xff]
      %1009 = vmatprep.subr.mxu0 0.0
      %1010 = vmatpush1.msra.mxu0 %v1008
      %1011 = vmatprep.subr.mxu0 0.0
      %1012 = vmatpush1.msra.mxu0 %v1007
      %1013 = vmatprep.subr.mxu0 0.0
      %1014 = vmatpush1.msra.mxu0 %v1006
      %1015 = vmatprep.subr.mxu0 0.0
      %1016 = vmatpush1.msra.mxu0 %v1005
      %1017 = vmatprep.subr.mxu0 0.0
      %1018 = vmatpush1.msra.mxu0 %v1004
      %1019 = vmatprep.subr.mxu0 0.0
      %1020 = vmatpush1.msra.mxu0 %v1003
      %1021 = vmatprep.subr.mxu0 0.0
      %1022 = vmatpush1.msra.mxu0 %v1002
      %1023 = vmatprep.subr.mxu0 0.0
      %1024 = vmatpush1.msra.mxu0 %v1001
      %1025 = vmatprep.subr.mxu0 0.0
      %1026 = vmatpush1.msra.mxu0 %v1000
      %1027 = vmatprep.subr.mxu0 0.0
      %1028 = vmatpush1.msra.mxu0 %v999
      %1029 = vmatprep.subr.mxu0 0.0
      %1030 = vmatpush1.msra.mxu0 %v998
      %1031 = vmatprep.subr.mxu0 0.0
      %1032 = vmatpush1.msra.mxu0 %v997
      %1033 = vmatprep.subr.mxu0 0.0
      %1034 = vmatpush1.msra.mxu0 %v996
      %1035 = vmatprep.subr.mxu0 0.0
      %1036 = vmatpush1.msra.mxu0 %v995
      %1037 = vmatprep.subr.mxu0 0.0
      %1038 = vmatpush1.msra.mxu0 %v994
      %1039 = vmatprep.subr.mxu0 0.0
      %1040 = vmatpush1.msra.mxu0 %v993
      %1041 = vmatprep.subr.mxu0 0.0
      %1042 = vmatpush2.msra.mxu0 0.0
      %1043 = vmatprep.subr.mxu0 0.0
      %1044 = vmatpush2.msra.mxu0 0.0
      %1045 = vmatprep.subr.mxu0 0.0
      %1046 = vmatpush2.msra.mxu0 0.0
      %1047 = vmatprep.subr.mxu0 0.0
      %1048 = vmatpush2.msra.mxu0 0.0
      %1049 = vmatprep.subr.mxu0 0.0
      %1050 = vmatpush2.msra.mxu0 0.0
      %1051 = vmatprep.subr.mxu0 0.0
      %1052 = vmatpush2.msra.mxu0 0.0
      %1053 = vmatprep.subr.mxu0 0.0
      %1054 = vmatpush2.msra.mxu0 0.0
      %1055 = vmatprep.subr.mxu0 0.0
      %1056 = vmatpush2.msra.mxu0 0.0
      %1057 = vmatprep.subr.mxu0 0.0
      %1058 = vmatpush2.msra.mxu0 0.0
      %1059 = vmatprep.subr.mxu0 0.0
      %1060 = vmatpush2.msra.mxu0 0.0
      %1061 = vmatprep.subr.mxu0 0.0
      %1062 = vmatpush2.msra.mxu0 0.0
      %1063 = vmatprep.subr.mxu0 0.0
      %1064 = vmatpush2.msra.mxu0 0.0
      %1065 = vmatprep.subr.mxu0 0.0
      %1066 = vmatpush2.msra.mxu0 0.0
      %1067 = vmatprep.subr.mxu0 0.0
      %1068 = vmatpush2.msra.mxu0 0.0
      %1069 = vmatprep.subr.mxu0 0.0
      %1070 = vmatpush2.msra.mxu0 0.0
      %1071 = vmatprep.subr.mxu0 0.0
      %1072 = vmatpush2.msra.mxu0 0.0
      %1073 = vmatprep.mubr.f32.mxu0 0.0
      %1074 = vmatmul.mubr.f32.gmra.mxu0 %v984
      %v1075 = vpop.f32.mrf.mxu0
      %v1076 = vadd.f32 0.0, %v1075
      %v1077 = vpop.f32.mrf.mxu0
      %1078 = vmatprep.mubr.f32.mxu0 0.0
      %1079 = vmatmul.mubr.f32.gmra.mxu0 %v985
      %v1080 = vpop.f32.mrf.mxu0
      %v1081 = vadd.f32 0.0, %v1080
      %v1082 = vpop.f32.mrf.mxu0
      %1083 = vmatprep.mubr.f32.mxu0 0.0
      %1084 = vmatmul.mubr.f32.gmra.mxu0 %v986
      %v1085 = vpop.f32.mrf.mxu0
      %v1086 = vadd.f32 0.0, %v1085
      %v1087 = vpop.f32.mrf.mxu0
      %1088 = vmatprep.mubr.f32.mxu0 0.0
      %1089 = vmatmul.mubr.f32.gmra.mxu0 %v987
      %v1090 = vpop.f32.mrf.mxu0
      %v1091 = vadd.f32 0.0, %v1090
      %v1092 = vpop.f32.mrf.mxu0
      %1093 = vmatprep.mubr.f32.mxu0 0.0
      %1094 = vmatmul.mubr.f32.gmra.mxu0 %v988
      %v1095 = vpop.f32.mrf.mxu0
      %v1096 = vadd.f32 0.0, %v1095
      %v1097 = vpop.f32.mrf.mxu0
      %1098 = vmatprep.mubr.f32.mxu0 0.0
      %1099 = vmatmul.mubr.f32.gmra.mxu0 %v989
      %v1100 = vpop.f32.mrf.mxu0
      %v1101 = vadd.f32 0.0, %v1100
      %v1102 = vpop.f32.mrf.mxu0
      %1103 = vmatprep.mubr.f32.mxu0 0.0
      %1104 = vmatmul.mubr.f32.gmra.mxu0 %v990
      %v1105 = vpop.f32.mrf.mxu0
      %v1106 = vadd.f32 0.0, %v1105
      %v1107 = vpop.f32.mrf.mxu0
      %1108 = vmatprep.mubr.f32.mxu0 0.0
      %1109 = vmatmul.mubr.f32.gmra.mxu0 %v991
      %v1110 = vpop.f32.mrf.mxu0
      %v1111 = vadd.f32 0.0, %v1110
      %v1112 = vpop.f32.mrf.mxu0
      %1113 = vdwg.mxu0
      %v1114 = vadd.f32 %v975, %v1076
      %v1115 = vadd.f32 %v976, %v1081
      %v1116 = vadd.f32 %v977, %v1086
      %v1117 = vadd.f32 %v978, %v1091
      %v1118 = vadd.f32 %v979, %v1096
      %v1119 = vadd.f32 %v980, %v1101
      %v1120 = vadd.f32 %v981, %v1106
      %v1121 = vadd.f32 %v982, %v1111
      %v1122 = vld [vmem:[%s983 + $0x1] sm:$0xff]
      %v1123 = vld [vmem:[%s983 + $0x11] sm:$0xff]
      %v1124 = vld [vmem:[%s983 + $0x21] sm:$0xff]
      %v1125 = vld [vmem:[%s983 + $0x31] sm:$0xff]
      %v1126 = vld [vmem:[%s983 + $0x41] sm:$0xff]
      %v1127 = vld [vmem:[%s983 + $0x51] sm:$0xff]
      %v1128 = vld [vmem:[%s983 + $0x61] sm:$0xff]
      %v1129 = vld [vmem:[%s983 + $0x71] sm:$0xff]
      %s1130 = scalar_lea.vmem %s1, 896
      %v1131 = vld [vmem:[%s1130] sm:$0xff]
      %v1132 = vld [vmem:[%s1130 + $0x8] sm:$0xff]
      %v1133 = vld [vmem:[%s1130 + $0x10] sm:$0xff]
      %v1134 = vld [vmem:[%s1130 + $0x18] sm:$0xff]
      %v1135 = vld [vmem:[%s1130 + $0x20] sm:$0xff]
      %v1136 = vld [vmem:[%s1130 + $0x28] sm:$0xff]
      %v1137 = vld [vmem:[%s1130 + $0x30] sm:$0xff]
      %v1138 = vld [vmem:[%s1130 + $0x38] sm:$0xff]
      %v1139 = vld [vmem:[%s1130 + $0x40] sm:$0xff]
      %v1140 = vld [vmem:[%s1130 + $0x48] sm:$0xff]
      %v1141 = vld [vmem:[%s1130 + $0x50] sm:$0xff]
      %v1142 = vld [vmem:[%s1130 + $0x58] sm:$0xff]
      %v1143 = vld [vmem:[%s1130 + $0x60] sm:$0xff]
      %v1144 = vld [vmem:[%s1130 + $0x68] sm:$0xff]
      %v1145 = vld [vmem:[%s1130 + $0x70] sm:$0xff]
      %v1146 = vld [vmem:[%s1130 + $0x78] sm:$0xff]
      %1147 = vmatprep.subr.mxu0 0.0
      %1148 = vmatpush1.msra.mxu0 %v1146
      %1149 = vmatprep.subr.mxu0 0.0
      %1150 = vmatpush1.msra.mxu0 %v1145
      %1151 = vmatprep.subr.mxu0 0.0
      %1152 = vmatpush1.msra.mxu0 %v1144
      %1153 = vmatprep.subr.mxu0 0.0
      %1154 = vmatpush1.msra.mxu0 %v1143
      %1155 = vmatprep.subr.mxu0 0.0
      %1156 = vmatpush1.msra.mxu0 %v1142
      %1157 = vmatprep.subr.mxu0 0.0
      %1158 = vmatpush1.msra.mxu0 %v1141
      %1159 = vmatprep.subr.mxu0 0.0
      %1160 = vmatpush1.msra.mxu0 %v1140
      %1161 = vmatprep.subr.mxu0 0.0
      %1162 = vmatpush1.msra.mxu0 %v1139
      %1163 = vmatprep.subr.mxu0 0.0
      %1164 = vmatpush1.msra.mxu0 %v1138
      %1165 = vmatprep.subr.mxu0 0.0
      %1166 = vmatpush1.msra.mxu0 %v1137
      %1167 = vmatprep.subr.mxu0 0.0
      %1168 = vmatpush1.msra.mxu0 %v1136
      %1169 = vmatprep.subr.mxu0 0.0
      %1170 = vmatpush1.msra.mxu0 %v1135
      %1171 = vmatprep.subr.mxu0 0.0
      %1172 = vmatpush1.msra.mxu0 %v1134
      %1173 = vmatprep.subr.mxu0 0.0
      %1174 = vmatpush1.msra.mxu0 %v1133
      %1175 = vmatprep.subr.mxu0 0.0
      %1176 = vmatpush1.msra.mxu0 %v1132
      %1177 = vmatprep.subr.mxu0 0.0
      %1178 = vmatpush1.msra.mxu0 %v1131
      %1179 = vmatprep.subr.mxu0 0.0
      %1180 = vmatpush2.msra.mxu0 0.0
      %1181 = vmatprep.subr.mxu0 0.0
      %1182 = vmatpush2.msra.mxu0 0.0
      %1183 = vmatprep.subr.mxu0 0.0
      %1184 = vmatpush2.msra.mxu0 0.0
      %1185 = vmatprep.subr.mxu0 0.0
      %1186 = vmatpush2.msra.mxu0 0.0
      %1187 = vmatprep.subr.mxu0 0.0
      %1188 = vmatpush2.msra.mxu0 0.0
      %1189 = vmatprep.subr.mxu0 0.0
      %1190 = vmatpush2.msra.mxu0 0.0
      %1191 = vmatprep.subr.mxu0 0.0
      %1192 = vmatpush2.msra.mxu0 0.0
      %1193 = vmatprep.subr.mxu0 0.0
      %1194 = vmatpush2.msra.mxu0 0.0
      %1195 = vmatprep.subr.mxu0 0.0
      %1196 = vmatpush2.msra.mxu0 0.0
      %1197 = vmatprep.subr.mxu0 0.0
      %1198 = vmatpush2.msra.mxu0 0.0
      %1199 = vmatprep.subr.mxu0 0.0
      %1200 = vmatpush2.msra.mxu0 0.0
      %1201 = vmatprep.subr.mxu0 0.0
      %1202 = vmatpush2.msra.mxu0 0.0
      %1203 = vmatprep.subr.mxu0 0.0
      %1204 = vmatpush2.msra.mxu0 0.0
      %1205 = vmatprep.subr.mxu0 0.0
      %1206 = vmatpush2.msra.mxu0 0.0
      %1207 = vmatprep.subr.mxu0 0.0
      %1208 = vmatpush2.msra.mxu0 0.0
      %1209 = vmatprep.subr.mxu0 0.0
      %1210 = vmatpush2.msra.mxu0 0.0
      %1211 = vmatprep.mubr.f32.mxu0 0.0
      %1212 = vmatmul.mubr.f32.gmra.mxu0 %v1122
      %v1213 = vpop.f32.mrf.mxu0
      %v1214 = vadd.f32 0.0, %v1213
      %v1215 = vpop.f32.mrf.mxu0
      %1216 = vmatprep.mubr.f32.mxu0 0.0
      %1217 = vmatmul.mubr.f32.gmra.mxu0 %v1123
      %v1218 = vpop.f32.mrf.mxu0
      %v1219 = vadd.f32 0.0, %v1218
      %v1220 = vpop.f32.mrf.mxu0
      %1221 = vmatprep.mubr.f32.mxu0 0.0
      %1222 = vmatmul.mubr.f32.gmra.mxu0 %v1124
      %v1223 = vpop.f32.mrf.mxu0
      %v1224 = vadd.f32 0.0, %v1223
      %v1225 = vpop.f32.mrf.mxu0
      %1226 = vmatprep.mubr.f32.mxu0 0.0
      %1227 = vmatmul.mubr.f32.gmra.mxu0 %v1125
      %v1228 = vpop.f32.mrf.mxu0
      %v1229 = vadd.f32 0.0, %v1228
      %v1230 = vpop.f32.mrf.mxu0
      %1231 = vmatprep.mubr.f32.mxu0 0.0
      %1232 = vmatmul.mubr.f32.gmra.mxu0 %v1126
      %v1233 = vpop.f32.mrf.mxu0
      %v1234 = vadd.f32 0.0, %v1233
      %v1235 = vpop.f32.mrf.mxu0
      %1236 = vmatprep.mubr.f32.mxu0 0.0
      %1237 = vmatmul.mubr.f32.gmra.mxu0 %v1127
      %v1238 = vpop.f32.mrf.mxu0
      %v1239 = vadd.f32 0.0, %v1238
      %v1240 = vpop.f32.mrf.mxu0
      %1241 = vmatprep.mubr.f32.mxu0 0.0
      %1242 = vmatmul.mubr.f32.gmra.mxu0 %v1128
      %v1243 = vpop.f32.mrf.mxu0
      %v1244 = vadd.f32 0.0, %v1243
      %v1245 = vpop.f32.mrf.mxu0
      %1246 = vmatprep.mubr.f32.mxu0 0.0
      %1247 = vmatmul.mubr.f32.gmra.mxu0 %v1129
      %v1248 = vpop.f32.mrf.mxu0
      %v1249 = vadd.f32 0.0, %v1248
      %v1250 = vpop.f32.mrf.mxu0
      %1251 = vdwg.mxu0
      %v1252 = vadd.f32 %v1114, %v1214
      %v1253 = vadd.f32 %v1115, %v1219
      %v1254 = vadd.f32 %v1116, %v1224
      %v1255 = vadd.f32 %v1117, %v1229
      %v1256 = vadd.f32 %v1118, %v1234
      %v1257 = vadd.f32 %v1119, %v1239
      %v1258 = vadd.f32 %v1120, %v1244
      %v1259 = vadd.f32 %v1121, %v1249
      %v1260 = vld [vmem:[%s983 + $0x2] sm:$0xff]
      %v1261 = vld [vmem:[%s983 + $0x12] sm:$0xff]
      %v1262 = vld [vmem:[%s983 + $0x22] sm:$0xff]
      %v1263 = vld [vmem:[%s983 + $0x32] sm:$0xff]
      %v1264 = vld [vmem:[%s983 + $0x42] sm:$0xff]
      %v1265 = vld [vmem:[%s983 + $0x52] sm:$0xff]
      %v1266 = vld [vmem:[%s983 + $0x62] sm:$0xff]
      %v1267 = vld [vmem:[%s983 + $0x72] sm:$0xff]
      %s1268 = scalar_lea.vmem %s1, 1024
      %v1269 = vld [vmem:[%s1268] sm:$0xff]
      %v1270 = vld [vmem:[%s1268 + $0x8] sm:$0xff]
      %v1271 = vld [vmem:[%s1268 + $0x10] sm:$0xff]
      %v1272 = vld [vmem:[%s1268 + $0x18] sm:$0xff]
      %v1273 = vld [vmem:[%s1268 + $0x20] sm:$0xff]
      %v1274 = vld [vmem:[%s1268 + $0x28] sm:$0xff]
      %v1275 = vld [vmem:[%s1268 + $0x30] sm:$0xff]
      %v1276 = vld [vmem:[%s1268 + $0x38] sm:$0xff]
      %v1277 = vld [vmem:[%s1268 + $0x40] sm:$0xff]
      %v1278 = vld [vmem:[%s1268 + $0x48] sm:$0xff]
      %v1279 = vld [vmem:[%s1268 + $0x50] sm:$0xff]
      %v1280 = vld [vmem:[%s1268 + $0x58] sm:$0xff]
      %v1281 = vld [vmem:[%s1268 + $0x60] sm:$0xff]
      %v1282 = vld [vmem:[%s1268 + $0x68] sm:$0xff]
      %v1283 = vld [vmem:[%s1268 + $0x70] sm:$0xff]
      %v1284 = vld [vmem:[%s1268 + $0x78] sm:$0xff]
      %1285 = vmatprep.subr.mxu0 0.0
      %1286 = vmatpush1.msra.mxu0 %v1284
      %1287 = vmatprep.subr.mxu0 0.0
      %1288 = vmatpush1.msra.mxu0 %v1283
      %1289 = vmatprep.subr.mxu0 0.0
      %1290 = vmatpush1.msra.mxu0 %v1282
      %1291 = vmatprep.subr.mxu0 0.0
      %1292 = vmatpush1.msra.mxu0 %v1281
      %1293 = vmatprep.subr.mxu0 0.0
      %1294 = vmatpush1.msra.mxu0 %v1280
      %1295 = vmatprep.subr.mxu0 0.0
      %1296 = vmatpush1.msra.mxu0 %v1279
      %1297 = vmatprep.subr.mxu0 0.0
      %1298 = vmatpush1.msra.mxu0 %v1278
      %1299 = vmatprep.subr.mxu0 0.0
      %1300 = vmatpush1.msra.mxu0 %v1277
      %1301 = vmatprep.subr.mxu0 0.0
      %1302 = vmatpush1.msra.mxu0 %v1276
      %1303 = vmatprep.subr.mxu0 0.0
      %1304 = vmatpush1.msra.mxu0 %v1275
      %1305 = vmatprep.subr.mxu0 0.0
      %1306 = vmatpush1.msra.mxu0 %v1274
      %1307 = vmatprep.subr.mxu0 0.0
      %1308 = vmatpush1.msra.mxu0 %v1273
      %1309 = vmatprep.subr.mxu0 0.0
      %1310 = vmatpush1.msra.mxu0 %v1272
      %1311 = vmatprep.subr.mxu0 0.0
      %1312 = vmatpush1.msra.mxu0 %v1271
      %1313 = vmatprep.subr.mxu0 0.0
      %1314 = vmatpush1.msra.mxu0 %v1270
      %1315 = vmatprep.subr.mxu0 0.0
      %1316 = vmatpush1.msra.mxu0 %v1269
      %1317 = vmatprep.subr.mxu0 0.0
      %1318 = vmatpush2.msra.mxu0 0.0
      %1319 = vmatprep.subr.mxu0 0.0
      %1320 = vmatpush2.msra.mxu0 0.0
      %1321 = vmatprep.subr.mxu0 0.0
      %1322 = vmatpush2.msra.mxu0 0.0
      %1323 = vmatprep.subr.mxu0 0.0
      %1324 = vmatpush2.msra.mxu0 0.0
      %1325 = vmatprep.subr.mxu0 0.0
      %1326 = vmatpush2.msra.mxu0 0.0
      %1327 = vmatprep.subr.mxu0 0.0
      %1328 = vmatpush2.msra.mxu0 0.0
      %1329 = vmatprep.subr.mxu0 0.0
      %1330 = vmatpush2.msra.mxu0 0.0
      %1331 = vmatprep.subr.mxu0 0.0
      %1332 = vmatpush2.msra.mxu0 0.0
      %1333 = vmatprep.subr.mxu0 0.0
      %1334 = vmatpush2.msra.mxu0 0.0
      %1335 = vmatprep.subr.mxu0 0.0
      %1336 = vmatpush2.msra.mxu0 0.0
      %1337 = vmatprep.subr.mxu0 0.0
      %1338 = vmatpush2.msra.mxu0 0.0
      %1339 = vmatprep.subr.mxu0 0.0
      %1340 = vmatpush2.msra.mxu0 0.0
      %1341 = vmatprep.subr.mxu0 0.0
      %1342 = vmatpush2.msra.mxu0 0.0
      %1343 = vmatprep.subr.mxu0 0.0
      %1344 = vmatpush2.msra.mxu0 0.0
      %1345 = vmatprep.subr.mxu0 0.0
      %1346 = vmatpush2.msra.mxu0 0.0
      %1347 = vmatprep.subr.mxu0 0.0
      %1348 = vmatpush2.msra.mxu0 0.0
      %1349 = vmatprep.mubr.f32.mxu0 0.0
      %1350 = vmatmul.mubr.f32.gmra.mxu0 %v1260
      %v1351 = vpop.f32.mrf.mxu0
      %v1352 = vadd.f32 0.0, %v1351
      %v1353 = vpop.f32.mrf.mxu0
      %1354 = vmatprep.mubr.f32.mxu0 0.0
      %1355 = vmatmul.mubr.f32.gmra.mxu0 %v1261
      %v1356 = vpop.f32.mrf.mxu0
      %v1357 = vadd.f32 0.0, %v1356
      %v1358 = vpop.f32.mrf.mxu0
      %1359 = vmatprep.mubr.f32.mxu0 0.0
      %1360 = vmatmul.mubr.f32.gmra.mxu0 %v1262
      %v1361 = vpop.f32.mrf.mxu0
      %v1362 = vadd.f32 0.0, %v1361
      %v1363 = vpop.f32.mrf.mxu0
      %1364 = vmatprep.mubr.f32.mxu0 0.0
      %1365 = vmatmul.mubr.f32.gmra.mxu0 %v1263
      %v1366 = vpop.f32.mrf.mxu0
      %v1367 = vadd.f32 0.0, %v1366
      %v1368 = vpop.f32.mrf.mxu0
      %1369 = vmatprep.mubr.f32.mxu0 0.0
      %1370 = vmatmul.mubr.f32.gmra.mxu0 %v1264
      %v1371 = vpop.f32.mrf.mxu0
      %v1372 = vadd.f32 0.0, %v1371
      %v1373 = vpop.f32.mrf.mxu0
      %1374 = vmatprep.mubr.f32.mxu0 0.0
      %1375 = vmatmul.mubr.f32.gmra.mxu0 %v1265
      %v1376 = vpop.f32.mrf.mxu0
      %v1377 = vadd.f32 0.0, %v1376
      %v1378 = vpop.f32.mrf.mxu0
      %1379 = vmatprep.mubr.f32.mxu0 0.0
      %1380 = vmatmul.mubr.f32.gmra.mxu0 %v1266
      %v1381 = vpop.f32.mrf.mxu0
      %v1382 = vadd.f32 0.0, %v1381
      %v1383 = vpop.f32.mrf.mxu0
      %1384 = vmatprep.mubr.f32.mxu0 0.0
      %1385 = vmatmul.mubr.f32.gmra.mxu0 %v1267
      %v1386 = vpop.f32.mrf.mxu0
      %v1387 = vadd.f32 0.0, %v1386
      %v1388 = vpop.f32.mrf.mxu0
      %1389 = vdwg.mxu0
      %v1390 = vadd.f32 %v1252, %v1352
      %v1391 = vadd.f32 %v1253, %v1357
      %v1392 = vadd.f32 %v1254, %v1362
      %v1393 = vadd.f32 %v1255, %v1367
      %v1394 = vadd.f32 %v1256, %v1372
      %v1395 = vadd.f32 %v1257, %v1377
      %v1396 = vadd.f32 %v1258, %v1382
      %v1397 = vadd.f32 %v1259, %v1387
      %v1398 = vld [vmem:[%s2] sm:$0x1]
      %v1400 = vlaneseq
      %v1401 = vshrl.u32 %v1400, 7
      %v1402 = vsub.s32 0, %v1401
      %v1403 = vrot.slane %v1398, %v1402
      %v1405 = vadd.f32 %v1390, %v1403
      %v1406 = vadd.f32 %v1391, %v1403
      %v1407 = vadd.f32 %v1392, %v1403
      %v1408 = vadd.f32 %v1393, %v1403
      %v1409 = vadd.f32 %v1394, %v1403
      %v1410 = vadd.f32 %v1395, %v1403
      %v1411 = vadd.f32 %v1396, %v1403
      %v1412 = vadd.f32 %v1397, %v1403
      %1413 = vst [vmem:[%s170] sm:$0xff] %v1405
      %1414 = vst [vmem:[%s170 + $0x8] sm:$0xff] %v1406
      %1415 = vst [vmem:[%s170 + $0x10] sm:$0xff] %v1407
      %1416 = vst [vmem:[%s170 + $0x18] sm:$0xff] %v1408
      %1417 = vst [vmem:[%s170 + $0x20] sm:$0xff] %v1409
      %1418 = vst [vmem:[%s170 + $0x28] sm:$0xff] %v1410
      %1419 = vst [vmem:[%s170 + $0x30] sm:$0xff] %v1411
      %1420 = vst [vmem:[%s170 + $0x38] sm:$0xff] %v1412
      %p1421 = scmp.lt.s32.totalorder %s14, 1
      %s1422 = scalar_select %p1421, %s14, 1
      %s1423 = smul.addr %s1422, 8
      %s1424 = smul.addr %s1423, 8
      %s1425 = scalar_lea.vmem %s3, %s1424
      // Predicated region
      $region33: #{feature_reconstruction_loss.15} parent=31 // pred_check
        %p1426 = pneg %p100
      $region34: #{feature_reconstruction_loss.15} parent=31 // pred_check_branch
        %1428 = sbr.rel (%p1426) target = $region36
      $region35: #{feature_reconstruction_loss.15} parent=31 // pred_region
        _
      $region36: #{feature_reconstruction_loss.15} parent=31 // pred_fallthru
        _
    $region32: #{feature_reconstruction_loss.15} parent=5 // pred_fallthru
      _
    %p1429 = scmp.le.s32.totalorder 2, %s9
    // Predicated region
    $region37: #{feature_reconstruction_loss.15} parent=5 // pred_check
      %p1430 = pneg %p1429
    $region38: #{feature_reconstruction_loss.15} parent=5 // pred_check_branch
      %1432 = sbr.rel (%p1430) target = $region40
    $region39: #{feature_reconstruction_loss.15} parent=5 // pred_region
      %s1433 = ssub.s32 %s9, 2
      // Predicated region
      $region41: #{feature_reconstruction_loss.15} parent=39 // pred_check
        %p1434 = pneg %p106
      $region42: #{feature_reconstruction_loss.15} parent=39 // pred_check_branch
        %1436 = sbr.rel (%p1434) target = $region44
      $region43: #{feature_reconstruction_loss.15} parent=39 // pred_region
        %p1437 = scmp.lt.s32.totalorder %s15, 1
        %s1438 = scalar_select %p1437, %s15, 1
        %s1439 = smul.addr %s1438, 8
        %s1440 = smul.addr %s1439, 8
        %s1441 = scalar_lea.vmem %s3, %s1440
      $region44: #{feature_reconstruction_loss.15} parent=39 // pred_fallthru
        _
    $region40: #{feature_reconstruction_loss.15} parent=5 // pred_fallthru
      _
  $region6: #{feature_reconstruction_loss.15} parent=0 // loop_footer
    %s13 = sadd.s32 1, %s9
  $region7: #{feature_reconstruction_loss.15} parent=0 // loop_footer_branch
    %8 = sbr.rel target = $region3
  $region8: #{feature_reconstruction_loss.15} parent=0 // loop_exit
    _

// kernel: feature_reconstruction_loss.21
$region0: #{feature_reconstruction_loss.21}
  #allocation0 [shape = 'u32[]', space=smem, size = 0x4, offset = 0x4, fixed_abs, tag = 'smem constant byte address 0x4 - core index']
  #allocation1 [shape = 'u32[144,128]{1,0:T(1,128)}', space=vmem, size = 0x12000, scoped, tag = 'internal scratch']
  %s0 = inlined_call_operand.vmem [shape: f32[2,8,8,128], index: 0, kind: input, shape index: {}]
  %s1 = inlined_call_operand.vmem [shape: f32[2,8,8,128], index: 1, kind: input, shape index: {}]
  %s2 = inlined_call_operand.hbm [shape: f32[1,1], index: 2, kind: output, shape index: {}]
  %s3 = sld [smem:[#allocation0]]
  $region49: #{feature_reconstruction_loss.21} parent=0
    _
  %s5 = ssub.s32 1, %s3
  %s6 = scalar_select 0, %s5, %s3
  $region1: #{feature_reconstruction_loss.21} parent=0
    #allocation2 [shape = 'u8[512]{0}', space=smem, size = 0x200, scoped, tag = 'output window, operand 0, single buffered']
    #allocation3 [shape = 's32[2]{0}', space=sflag, size = 0x8, scoped, tag = 'scoped memory for feature_reconstruction_loss.21']
    %7 = vsyncpa [#allocation3], 0
    loop: start=0, step=1, limit=4
    $region2: #{feature_reconstruction_loss.21} parent=1 // loop_pre_header
      _
    $region3: #{feature_reconstruction_loss.21} parent=1 // loop_header
      %s9 = sphi 0, %s13
      %p10 = scmp.ge.s32.totalorder %s9, 4
      %s19 = sphi 0, %s21
      %s22 = sphi 0, %s19
      %s23 = sphi 0, %s22
      %s39 = sphi 0, %s23
      %s45 = sphi 0, %s47
      %s48 = sphi 0, %s45
      %s49 = sphi 0, %s48
      %s65 = sphi 0, %s49
      %s69 = sphi 0, %s69
      %s71 = sphi 0, %s69
      %s72 = sphi 0, %s71
      %s86 = sphi 0, %s72
    $region4: #{feature_reconstruction_loss.21} parent=1 // loop_header_branch
      %12 = sbr.rel (%p10) target = $region8
    $region5: #{feature_reconstruction_loss.21} parent=1 // loop_body
      %s14 = ssub.s32 %s9, 1
      %s15 = ssub.s32 %s9, 2
      %s16 = sadd.s32 %s9, 1
      %s17 = ssub.s32 %s9, %s16
      %p18 = scmp.eq.s32.totalorder %s17, 0
      %s20 = sadd.s32 %s19, 1
      %s21 = scalar_select %p18, %s19, %s20
      %p24 = pneg %p18
      %p25 = scmp.eq.s32.totalorder %s9, 1
      %p26 = por %p24, %p25
      %p27 = scmp.ne.s32.totalorder %s19, %s22
      %p28 = scmp.eq.s32.totalorder %s9, 0
      %p29 = por %p27, %p28
      %p30 = scmp.ne.s32.totalorder %s19, %s22
      %p31 = scmp.eq.s32.totalorder %s14, 1
      %p32 = por %p30, %p31
      %p33 = scmp.ne.s32.totalorder %s22, %s23
      %p34 = scmp.eq.s32.totalorder %s14, 0
      %p35 = por %p33, %p34
      %p36 = scmp.ne.s32.totalorder %s22, %s23
      %p37 = scmp.eq.s32.totalorder %s15, 1
      %p38 = por %p36, %p37
      %p40 = scmp.ne.s32.totalorder %s23, %s39
      %p41 = scmp.eq.s32.totalorder %s15, 0
      %p42 = por %p40, %p41
      %s43 = ssub.s32 %s9, %s16
      %p44 = scmp.eq.s32.totalorder %s43, 0
      %s46 = sadd.s32 %s45, 1
      %s47 = scalar_select %p44, %s45, %s46
      %p50 = pneg %p44
      %p51 = scmp.eq.s32.totalorder %s9, 1
      %p52 = por %p50, %p51
      %p53 = scmp.ne.s32.totalorder %s45, %s48
      %p54 = scmp.eq.s32.totalorder %s9, 0
      %p55 = por %p53, %p54
      %p56 = scmp.ne.s32.totalorder %s45, %s48
      %p57 = scmp.eq.s32.totalorder %s14, 1
      %p58 = por %p56, %p57
      %p59 = scmp.ne.s32.totalorder %s48, %s49
      %p60 = scmp.eq.s32.totalorder %s14, 0
      %p61 = por %p59, %p60
      %p62 = scmp.ne.s32.totalorder %s48, %s49
      %p63 = scmp.eq.s32.totalorder %s15, 1
      %p64 = por %p62, %p63
      %p66 = scmp.ne.s32.totalorder %s49, %s65
      %p67 = scmp.eq.s32.totalorder %s15, 0
      %p68 = por %p66, %p67
      %s70 = sadd.s32 %s69, 1
      %p73 = scmp.eq.s32.totalorder %s9, 1
      %p74 = scmp.ne.s32.totalorder %s69, %s71
      %p75 = scmp.eq.s32.totalorder %s9, 0
      %p76 = por %p74, %p75
      %p77 = scmp.ne.s32.totalorder %s69, %s71
      %p78 = scmp.eq.s32.totalorder %s14, 1
      %p79 = por %p77, %p78
      %p80 = scmp.ne.s32.totalorder %s71, %s72
      %p81 = scmp.eq.s32.totalorder %s14, 0
      %p82 = por %p80, %p81
      %p83 = scmp.ne.s32.totalorder %s71, %s72
      %p84 = scmp.eq.s32.totalorder %s15, 1
      %p85 = por %p83, %p84
      %p87 = scmp.ne.s32.totalorder %s72, %s86
      %p88 = scmp.eq.s32.totalorder %s15, 0
      %p89 = por %p87, %p88
      %p90 = scmp.le.s32.totalorder 1, %s9
      %p91 = scmp.lt.s32.totalorder %s9, 3
      %p92 = pnand %p90, %p91
      %p93 = pneg %p92
      // Predicated region
      $region9: #{feature_reconstruction_loss.21} parent=5 // pred_check
        _
      $region10: #{feature_reconstruction_loss.21} parent=5 // pred_check_branch
        %95 = sbr.rel (%p92) target = $region12
      $region11: #{feature_reconstruction_loss.21} parent=5 // pred_region
        %s96 = ssub.s32 %s9, 1
      $region12: #{feature_reconstruction_loss.21} parent=5 // pred_fallthru
        _
      %p97 = scmp.lt.s32.totalorder %s9, 2
      // Predicated region
      $region13: #{feature_reconstruction_loss.21} parent=5 // pred_check
        %p98 = pneg %p97
      $region14: #{feature_reconstruction_loss.21} parent=5 // pred_check_branch
        %100 = sbr.rel (%p98) target = $region16
      $region15: #{feature_reconstruction_loss.21} parent=5 // pred_region
        // Predicated region
        $region17: #{feature_reconstruction_loss.21} parent=15 // pred_check
          %p101 = pneg %p29
        $region18: #{feature_reconstruction_loss.21} parent=15 // pred_check_branch
          %103 = sbr.rel (%p101) target = $region20
        $region19: #{feature_reconstruction_loss.21} parent=15 // pred_region
          %p104 = scmp.lt.s32.totalorder %s9, 1
          %s105 = scalar_select %p104, %s9, 1
          %s106 = smul.addr %s105, 8
          %s107 = smul.addr %s106, 8
          %s108 = scalar_lea.vmem %s0, %s107
        $region20: #{feature_reconstruction_loss.21} parent=15 // pred_fallthru
          _
        // Predicated region
        $region21: #{feature_reconstruction_loss.21} parent=15 // pred_check
          %p109 = pneg %p55
        $region22: #{feature_reconstruction_loss.21} parent=15 // pred_check_branch
          %111 = sbr.rel (%p109) target = $region24
        $region23: #{feature_reconstruction_loss.21} parent=15 // pred_region
          %p112 = scmp.lt.s32.totalorder %s9, 1
          %s113 = scalar_select %p112, %s9, 1
          %s114 = smul.addr %s113, 8
          %s115 = smul.addr %s114, 8
          %s116 = scalar_lea.vmem %s1, %s115
        $region24: #{feature_reconstruction_loss.21} parent=15 // pred_fallthru
          _
      $region16: #{feature_reconstruction_loss.21} parent=5 // pred_fallthru
        _
      %p117 = scmp.le.s32.totalorder 1, %s9
      %p118 = scmp.lt.s32.totalorder %s9, 3
      %p119 = pnand %p117, %p118
      %p120 = pneg %p119
      // Predicated region
      $region25: #{feature_reconstruction_loss.21} parent=5 // pred_check
        _
      $region26: #{feature_reconstruction_loss.21} parent=5 // pred_check_branch
        %122 = sbr.rel (%p119) target = $region28
      $region27: #{feature_reconstruction_loss.21} parent=5 // pred_region
        %s123 = ssub.s32 %s9, 1
        %p124 = scmp.lt.s32.totalorder %s14, 1
        %s125 = scalar_select %p124, %s14, 1
        %s126 = smul.addr %s125, 8
        %s127 = smul.addr %s126, 8
        %s128 = scalar_lea.vmem %s0, %s127
        %p129 = pneg %p35
        %p130 = pneg %p32
        %p131 = scmp.lt.s32.totalorder %s14, 1
        %s132 = scalar_select %p131, %s14, 1
        %s133 = smul.addr %s132, 8
        %s134 = smul.addr %s133, 8
        %s135 = scalar_lea.vmem %s1, %s134
        %p136 = pneg %p61
        %p137 = pneg %p58
        %p138 = pneg %p82
        %p139 = pneg %p79
        %p140 = scmp.lt.s32.totalorder %s14, 1
        %s141 = scalar_select %p140, %s14, 1
        %s142 = smul.addr %s141, 8
        %s143 = smul.addr %s142, 8
        %s144 = scalar_lea.vmem %s0, %s143
        %p145 = scmp.lt.s32.totalorder %s14, 1
        %s146 = scalar_select %p145, %s14, 1
        %s147 = smul.addr %s146, 8
        %s148 = smul.addr %s147, 8
        %s149 = scalar_lea.vmem %s1, %s148
        %p150 = scmp.eq.s32.totalorder %s14, 0
        // Predicated region
        $region29: #{feature_reconstruction_loss.21} parent=27 // pred_check
          %p151 = pneg %p150
        $region30: #{feature_reconstruction_loss.21} parent=27 // pred_check_branch
          %153 = sbr.rel (%p151) target = $region32
        $region31: #{feature_reconstruction_loss.21} parent=27 // pred_region
          %s154 = scalar_lea.smem [#allocation2], 0
          %155 = sst [smem:[%s154]] 0.0
        $region32: #{feature_reconstruction_loss.21} parent=27 // pred_fallthru
          _
        %v156 = vld [vmem:[%s144] sm:$0xff]
        %v157 = vld [vmem:[%s144 + $0x8] sm:$0xff]
        %v158 = vld [vmem:[%s144 + $0x10] sm:$0xff]
        %v159 = vld [vmem:[%s144 + $0x18] sm:$0xff]
        %v160 = vld [vmem:[%s144 + $0x20] sm:$0xff]
        %v161 = vld [vmem:[%s144 + $0x28] sm:$0xff]
        %v162 = vld [vmem:[%s144 + $0x30] sm:$0xff]
        %v163 = vld [vmem:[%s144 + $0x38] sm:$0xff]
        %v164 = vld [vmem:[%s149] sm:$0xff]
        %v165 = vld [vmem:[%s149 + $0x8] sm:$0xff]
        %v166 = vld [vmem:[%s149 + $0x10] sm:$0xff]
        %v167 = vld [vmem:[%s149 + $0x18] sm:$0xff]
        %v168 = vld [vmem:[%s149 + $0x20] sm:$0xff]
        %v169 = vld [vmem:[%s149 + $0x28] sm:$0xff]
        %v170 = vld [vmem:[%s149 + $0x30] sm:$0xff]
        %v171 = vld [vmem:[%s149 + $0x38] sm:$0xff]
        %v172 = vsub.f32 %v156, %v164
        %v173 = vsub.f32 %v157, %v165
        %v174 = vsub.f32 %v158, %v166
        %v175 = vsub.f32 %v159, %v167
        %v176 = vsub.f32 %v160, %v168
        %v177 = vsub.f32 %v161, %v169
        %v178 = vsub.f32 %v162, %v170
        %v179 = vsub.f32 %v163, %v171
        %s180 = sld [smem:[#allocation2]]
        %v181 = vmul.f32 %v172, %v172
        %v182 = vmul.f32 %v173, %v173
        %v183 = vmul.f32 %v174, %v174
        %v184 = vmul.f32 %v175, %v175
        %v185 = vmul.f32 %v176, %v176
        %v186 = vmul.f32 %v177, %v177
        %v187 = vmul.f32 %v178, %v178
        %v188 = vmul.f32 %v179, %v179
        %v189 = vadd.f32 %v181, %v182
        %v190 = vadd.f32 %v189, %v183
        %v191 = vadd.f32 %v190, %v184
        %v192 = vadd.f32 %v191, %v185
        %v193 = vadd.f32 %v192, %v186
        %v194 = vadd.f32 %v193, %v187
        %v195 = vadd.f32 %v194, %v188
        %196 = vadd.xlane.f32.xlu0 %v195
        %v197 = vpop.xlane.xlu0 %196
        %v198 = vrot.slane %v197, 4
        %v199 = vadd.f32 %v197, %v198
        %v200 = vrot.slane %v199, 2
        %v201 = vadd.f32 %v199, %v200
        %v202 = vrot.slane %v201, 1
        %v203 = vadd.f32 %v201, %v202
        %s204 = vtos %v203
        %s205 = sadd.f32 %s180, %s204
        %s206 = scalar_lea.smem [#allocation2], 0
        %207 = sst [smem:[%s206]] %s205
        %p208 = scmp.eq.s32.totalorder %s14, 1
        // Predicated region
        $region33: #{feature_reconstruction_loss.21} parent=27 // pred_check
          %p209 = pneg %p208
        $region34: #{feature_reconstruction_loss.21} parent=27 // pred_check_branch
          %211 = sbr.rel (%p209) target = $region36
        $region35: #{feature_reconstruction_loss.21} parent=27 // pred_region
          %s212 = sld [smem:[#allocation2]]
          %s213 = smul.f32 %s212, 6.1035156e-05
          %214 = sst [smem:[%s206]] %s213
        $region36: #{feature_reconstruction_loss.21} parent=27 // pred_fallthru
          _
        // Predicated region
        $region37: #{feature_reconstruction_loss.21} parent=27 // pred_check
          %p215 = pneg %p79
        $region38: #{feature_reconstruction_loss.21} parent=27 // pred_check_branch
          %217 = sbr.rel (%p215) target = $region40
        $region39: #{feature_reconstruction_loss.21} parent=27 // pred_region
          %s219 = ssub.s32 16, 16
          %220 = vsyncadd [#allocation3], %s219
          %223 = dma.smem_to_hbm [#allocation2], 16, %s2, [#allocation3]
        $region40: #{feature_reconstruction_loss.21} parent=27 // pred_fallthru
          _
        // Predicated region
        $region41: #{feature_reconstruction_loss.21} parent=27 // pred_check
          %p224 = pneg %p79
        $region42: #{feature_reconstruction_loss.21} parent=27 // pred_check_branch
          %226 = sbr.rel (%p224) target = $region44
        $region43: #{feature_reconstruction_loss.21} parent=27 // pred_region
          %227 = dma.done [#allocation3], 16
        $region44: #{feature_reconstruction_loss.21} parent=27 // pred_fallthru
          _
        %228 = sfence
      $region28: #{feature_reconstruction_loss.21} parent=5 // pred_fallthru
        _
      %p229 = scmp.le.s32.totalorder 2, %s9
      // Predicated region
      $region45: #{feature_reconstruction_loss.21} parent=5 // pred_check
        %p230 = pneg %p229
      $region46: #{feature_reconstruction_loss.21} parent=5 // pred_check_branch
        %232 = sbr.rel (%p230) target = $region48
      $region47: #{feature_reconstruction_loss.21} parent=5 // pred_region
        %s233 = ssub.s32 %s9, 2
      $region48: #{feature_reconstruction_loss.21} parent=5 // pred_fallthru
        _
    $region6: #{feature_reconstruction_loss.21} parent=1 // loop_footer
      %s13 = sadd.s32 1, %s9
    $region7: #{feature_reconstruction_loss.21} parent=1 // loop_footer_branch
      %8 = sbr.rel target = $region3
    $region8: #{feature_reconstruction_loss.21} parent=1 // loop_exit
      _
    %234 = vsyncpa [#allocation3], 1
    %s235 = scalar_lea.sflag [#allocation3], 1
    %236 = vsyncpa %s235, 1

</llo_original>
